<compile_context>
chip_gen: v5e
topology: v5e:2x2
jax: 0.10.0
libtpu: 0.0.40
codegen_flags: <defaults>
</compile_context>

<pallas_src>
import jax
import jax.numpy as jnp
from jax.experimental import pallas as pl
from jax.experimental.pallas import tpu as pltpu

LANES = 128
EPS = 1e-5
POS1 = 8            # spatial positions per stage-1 chunk (144 = 18 * 8)


def _ceil8(n):
    return ((n + 7) // 8) * 8


def _bn1_scratch_dtype(Np):
    # conv2 taps read bn1 at dynamic row offsets k*Np; packed bf16 wants
    # (16,128)-tile-aligned sublane offsets, so only use bf16 when Np % 16 == 0.
    return jnp.bfloat16 if Np % 16 == 0 else jnp.float32


# ----------------------------------------------------------------------------
# The fused kernel
# ----------------------------------------------------------------------------
def _make_fused_kernel(N):
    Np = _ceil8(N)
    M1 = 144 * Np            # bn1 rows: 12x12 spatial positions, Np samples each
    TAIL = 4 * Np            # conv2 tap over-read tail (max read row < 148*Np)
    CH1 = POS1 * Np          # stage-1 chunk rows
    NCH1 = 144 // POS1       # 18 chunks
    ROWCH = 12 * Np          # one conv2 output row (oh) = 12 ow positions
    dt1 = _bn1_scratch_dtype(Np)

    def kernel(msk_ref, p1_ref, w1_ref, b1_ref, g1_ref, be1_ref,
               w2_ref, b2_ref, g2_ref, be2_ref,
               wf1_ref, bf1_ref, wf2_ref, bf2_ref,
               o_ref, bn1_scr, p2_scr):
        f32 = jnp.float32
        bf16 = jnp.bfloat16

        # ---- stage 1, pass 1: conv1 + 2x2 max-pool + ReLU (chunked) + stats --
        def s1_body(c, carry):
            s1, q1 = carry
            r0 = pl.multiple_of(c * CH1, 8)
            d = None
            for win in range(4):          # pool window = 4 contiguous row blocks
                start = pl.multiple_of(win * M1 + c * CH1, 8)
                part = jnp.dot(p1_ref[pl.ds(start, CH1), :], w1_ref[...],
                               preferred_element_type=f32)
                d = part if d is None else jnp.maximum(d, part)
            # per-channel bias commutes with max-pool; ReLU after, like PyTorch.
            # Zero the padded samples (n >= N) so BN1 stats stay exact.
            d = jnp.maximum(d + b1_ref[...], 0.0) * msk_ref[...]
            bn1_scr[pl.ds(r0, CH1), :] = d.astype(dt1)
            return (s1 + jnp.sum(d, axis=0, keepdims=True),
                    q1 + jnp.sum(d * d, axis=0, keepdims=True))

        zlane = jnp.zeros((1, LANES), f32)
        s1, q1 = jax.lax.fori_loop(0, NCH1, s1_body, (zlane, zlane))

        inv1 = 1.0 / float(N * 144)
        mean1 = s1 * inv1
        var1 = jnp.maximum(q1 * inv1 - mean1 * mean1, 0.0)
        scale1 = jax.lax.rsqrt(var1 + EPS) * g1_ref[...]
        shift1 = be1_ref[...] - mean1 * scale1

        # ---- stage 1, pass 2: normalize bn1 in place, zero the tail ---------
        def s1_norm(c, carry):
            r0 = pl.multiple_of(c * CH1, 8)
            v = bn1_scr[pl.ds(r0, CH1), :].astype(f32)
            bn1_scr[pl.ds(r0, CH1), :] = (v * scale1 + shift1).astype(dt1)
            return carry

        jax.lax.fori_loop(0, NCH1, s1_norm, 0)
        bn1_scr[pl.ds(M1, TAIL), :] = jnp.zeros((TAIL, LANES), dt1)

        # ---- stage 2: conv2 (register accumulation) + pool + ReLU + stats ---
        mask2 = msk_ref[pl.ds(0, 4 * Np), :]

        def s2_body(qh, carry):
            s2, q2 = carry
            u = []
            for j in range(2):                    # the two conv2 rows oh = 2qh+j
                base = pl.multiple_of((2 * qh + j) * ROWCH, 8)
                acc = None
                for kh in range(5):
                    for kw in range(5):
                        start = pl.multiple_of(base + (12 * kh + kw) * Np, 8)
                        src = bn1_scr[pl.ds(start, ROWCH), :].astype(bf16)
                        part = jnp.dot(src, w2_ref[5 * kh + kw],
                                       preferred_element_type=f32)
                        acc = part if acc is None else acc + part
                # 2x max-pool along w (keep qw = 0..3): contiguous Np-row blocks
                u.append(jnp.concatenate(
                    [jnp.maximum(acc[2 * qw * Np:(2 * qw + 1) * Np, :],
                                 acc[(2 * qw + 1) * Np:(2 * qw + 2) * Np, :])
                     for qw in range(4)], axis=0))
            p2 = jnp.maximum(u[0], u[1])          # max-pool along h
            p2 = jnp.maximum(p2 + b2_ref[...], 0.0) * mask2
            p2_scr[pl.ds(pl.multiple_of(qh * 4 * Np, 8), 4 * Np), :] = p2
            return (s2 + jnp.sum(p2, axis=0, keepdims=True),
                    q2 + jnp.sum(p2 * p2, axis=0, keepdims=True))

        s2, q2 = jax.lax.fori_loop(0, 4, s2_body, (zlane, zlane))

        inv2 = 1.0 / float(N * 16)
        mean2 = s2 * inv2
        var2 = jnp.maximum(q2 * inv2 - mean2 * mean2, 0.0)
        scale2 = jax.lax.rsqrt(var2 + EPS) * g2_ref[...]
        shift2 = be2_ref[...] - mean2 * scale2

        # ---- stage 3: BN2 + fc1 over 16 hw-major blocks of Np rows + ReLU ---
        h1 = jnp.zeros((Np, LANES), f32)
        for hw in range(16):
            blk = p2_scr[pl.ds(hw * Np, Np), :] * scale2 + shift2
            h1 = h1 + jnp.dot(blk.astype(bf16), wf1_ref[hw],
                              preferred_element_type=f32)
        h1 = jnp.maximum(h1 + bf1_ref[...], 0.0)

        # ---- stage 4: fc2 + log_softmax over the 10 real lanes --------------
        logits = jnp.dot(h1.astype(bf16), wf2_ref[...],
                         preferred_element_type=f32) + bf2_ref[...]
        lane = jax.lax.broadcasted_iota(jnp.int32, (Np, LANES), 1)
        lm = jnp.where(lane < 10, logits, -1e30)
        mx = jnp.max(lm, axis=1, keepdims=True)
        sh = lm - mx
        lse = jnp.log(jnp.sum(jnp.exp(sh), axis=1, keepdims=True))
        o_ref[...] = sh - lse

    return kernel


# ----------------------------------------------------------------------------
# Host-side operand preparation (tiny, one-shot layout plumbing)
# ----------------------------------------------------------------------------
def _pad_lane(v, n_real, fill=0.0):
    out = jnp.full((1, LANES), fill, jnp.float32)
    return out.at[0, :n_real].set(v.astype(jnp.float32))


def _prepare_operands(x, params):
    N = x.shape[0]
    Np = _ceil8(N)
    f32, bf16 = jnp.float32, jnp.bfloat16

    # conv1 im2col: rows ordered (pool-window dy,dx ; ph ; pw ; n), the sample
    # axis padded to Np so every sample block is 8-sublane aligned.
    cols = [x[:, 0, kh:kh + 24, kw:kw + 24] for kh in range(5) for kw in range(5)]
    p = jnp.stack(cols, axis=-1)                               # (N,24,24,25)
    p = p.reshape(N, 12, 2, 12, 2, 25)                         # (N,ph,dy,pw,dx,t)
    p = p.transpose(2, 4, 1, 3, 0, 5)                          # (dy,dx,ph,pw,N,t)
    p = p.reshape(4 * 144, N, 25)
    p = jnp.pad(p, ((0, 0), (0, Np - N), (0, LANES - 25)))
    p1 = p.reshape(4 * 144 * Np, LANES).astype(bf16)

    w1 = jnp.zeros((LANES, LANES), f32).at[:25, :10].set(
        params["conv1_w"].reshape(10, 25).T).astype(bf16)
    w2 = jnp.zeros((5, 5, LANES, LANES), f32).at[:, :, :10, :20].set(
        jnp.transpose(params["conv2_w"], (2, 3, 1, 0)))        # (kh,kw,ci,co)
    w2 = w2.reshape(25, LANES, LANES).astype(bf16)

    wf1 = jnp.transpose(params["fc1_w"].reshape(50, 20, 4, 4),
                        (2, 3, 1, 0)).reshape(16, 20, 50)      # [hw, c, j]
    wf1 = jnp.zeros((16, LANES, LANES), f32).at[:, :20, :50].set(wf1).astype(bf16)
    wf2 = jnp.zeros((LANES, LANES), f32).at[:50, :10].set(
        params["fc2_w"].T).astype(bf16)

    b1 = _pad_lane(params["conv1_b"], 10)
    g1 = _pad_lane(params["bn1_g"], 10, fill=1.0)
    be1 = _pad_lane(params["bn1_b"], 10)
    b2 = _pad_lane(params["conv2_b"], 20)
    g2 = _pad_lane(params["bn2_g"], 20, fill=1.0)
    be2 = _pad_lane(params["bn2_b"], 20)
    bf1 = _pad_lane(params["fc1_b"], 50)
    bf2 = _pad_lane(params["fc2_b"], 10)

    # 0/1 row mask: real samples (n < N) within every Np-row sample block.
    msk = (jnp.arange(Np) < N).astype(f32)
    msk = jnp.broadcast_to(msk[None, :, None], (POS1, Np, LANES))
    msk = msk.reshape(POS1 * Np, LANES)

    return (msk, p1, w1, b1, g1, be1, w2, b2, g2, be2,
            wf1, bf1, wf2, bf2)


# ----------------------------------------------------------------------------
# Public forward pass
# ----------------------------------------------------------------------------
def mnist_forward(x, params):
    N, C, H, W = x.shape
    assert (C, H, W) == (1, 28, 28), "MNIST layout required by fc1 (320 = 20*4*4)"
    Np = _ceil8(N)
    kernel = _make_fused_kernel(N)
    operands = _prepare_operands(x, params)
    vmem = pl.BlockSpec(memory_space=pltpu.MemorySpace.VMEM)
    out = pl.pallas_call(
        kernel,
        out_shape=jax.ShapeDtypeStruct((Np, LANES), jnp.float32),
        in_specs=[vmem] * len(operands),
        out_specs=vmem,
        scratch_shapes=[
            pltpu.VMEM((148 * Np, LANES), _bn1_scratch_dtype(Np)),  # bn1 + tail
            pltpu.VMEM((16 * Np, LANES), jnp.float32),              # pooled2
        ],
        compiler_params=pltpu.CompilerParams(
            vmem_limit_bytes=32 * 1024 * 1024),
    )(*operands)
    return out[:N, :10]


# ----------------------------------------------------------------------------
# Pure-JAX reference (PyTorch semantics) for a loose numerical sanity check.
# ----------------------------------------------------------------------------
def mnist_reference(x, params):
    def conv(h, w, b):
        out = jax.lax.conv_general_dilated(
            h, w, (1, 1), "VALID", dimension_numbers=("NCHW", "OIHW", "NCHW"))
        return out + b.reshape(1, -1, 1, 1)

    def max_pool2(h):
        return jax.lax.reduce_window(h, -jnp.inf, jax.lax.max,
                                     (1, 1, 2, 2), (1, 1, 2, 2), "VALID")

    def bn(h, g, b):
        mean = jnp.mean(h, axis=(0, 2, 3), keepdims=True)
        var = jnp.mean(jnp.square(h - mean), axis=(0, 2, 3), keepdims=True)
        return (h - mean) * jax.lax.rsqrt(var + EPS) * g.reshape(1, -1, 1, 1) \
            + b.reshape(1, -1, 1, 1)

    h = bn(jax.nn.relu(max_pool2(conv(x, params["conv1_w"], params["conv1_b"]))),
           params["bn1_g"], params["bn1_b"])
    h = bn(jax.nn.relu(max_pool2(conv(h, params["conv2_w"], params["conv2_b"]))),
           params["bn2_g"], params["bn2_b"])
    h = h.reshape(h.shape[0], -1)
    h = jax.nn.relu(h @ params["fc1_w"].T + params["fc1_b"])
    logits = h @ params["fc2_w"].T + params["fc2_b"]
    return jax.nn.log_softmax(logits, axis=1)


def init_params(key):
    ks = jax.random.split(key, 8)
    f32 = jnp.float32
    return {
        "conv1_w": 0.1 * jax.random.normal(ks[0], (10, 1, 5, 5), f32),
        "conv1_b": 0.1 * jax.random.normal(ks[1], (10,), f32),
        "conv2_w": 0.05 * jax.random.normal(ks[2], (20, 10, 5, 5), f32),
        "conv2_b": 0.1 * jax.random.normal(ks[3], (20,), f32),
        "bn1_g": jnp.ones((10,), f32),
        "bn1_b": jnp.zeros((10,), f32),
        "bn2_g": jnp.ones((20,), f32),
        "bn2_b": jnp.zeros((20,), f32),
        "fc1_w": 0.05 * jax.random.normal(ks[4], (50, 320), f32),
        "fc1_b": 0.1 * jax.random.normal(ks[5], (50,), f32),
        "fc2_w": 0.1 * jax.random.normal(ks[6], (10, 50), f32),
        "fc2_b": 0.1 * jax.random.normal(ks[7], (10,), f32),
    }


if __name__ == "__main__":
    key = jax.random.PRNGKey(0)
    kx, kp = jax.random.split(key)
    # MNIST-shaped input: batch=2, NCHW (28x28 is required by fc1's 320 = 20*4*4)
    x = jax.random.normal(kx, (2, 1, 28, 28), jnp.float32)
    params = init_params(kp)

    fwd = jax.jit(mnist_forward)
    out = jax.block_until_ready(fwd(x, params))
    ref = jax.block_until_ready(jax.jit(mnist_reference)(x, params))

    assert out.shape == (2, 10), out.shape
    assert bool(jnp.all(jnp.isfinite(out)))
    row_sums = jnp.sum(jnp.exp(out), axis=1)          # log_softmax rows sum to 1
    assert bool(jnp.all(jnp.abs(row_sums - 1.0) < 1e-3)), row_sums
    # bf16 MXU operands with f32 accumulation -> loose tolerance vs f32 reference
    assert float(jnp.max(jnp.abs(out - ref))) < 0.1
    print("KERNEL_OK")
</pallas_src>

<mosaic_0001>
module attributes {stable_mosaic.version = 11 : i64} {
  func.func @kernel(%arg0: memref<64x128xf32, #tpu.memory_space<vmem>>, %arg1: memref<4608x128xbf16, #tpu.memory_space<vmem>>, %arg2: memref<128x128xbf16, #tpu.memory_space<vmem>>, %arg3: memref<1x128xf32, #tpu.memory_space<vmem>>, %arg4: memref<1x128xf32, #tpu.memory_space<vmem>>, %arg5: memref<1x128xf32, #tpu.memory_space<vmem>>, %arg6: memref<25x128x128xbf16, #tpu.memory_space<vmem>>, %arg7: memref<1x128xf32, #tpu.memory_space<vmem>>, %arg8: memref<1x128xf32, #tpu.memory_space<vmem>>, %arg9: memref<1x128xf32, #tpu.memory_space<vmem>>, %arg10: memref<16x128x128xbf16, #tpu.memory_space<vmem>>, %arg11: memref<1x128xf32, #tpu.memory_space<vmem>>, %arg12: memref<128x128xbf16, #tpu.memory_space<vmem>>, %arg13: memref<1x128xf32, #tpu.memory_space<vmem>>, %arg14: memref<8x128xf32, #tpu.memory_space<vmem>>, %arg15: memref<1184x128xf32, #tpu.memory_space<vmem>>, %arg16: memref<128x128xf32, #tpu.memory_space<vmem>>) attributes {dimension_semantics = [], scalar_prefetch = 0 : i64, scratch_operands = 2 : i64, tpu.core_type = #tpu.core_type<tc>} {
    %cst = arith.constant 0.000000e+00 : f32
    %0 = vector.broadcast %cst : f32 to vector<1x128xf32>
    %c0_i32 = arith.constant 0 : i32
    %c18_i32 = arith.constant 18 : i32
    %1 = arith.addi %c0_i32, %c18_i32 : i32
    %c1_i32 = arith.constant 1 : i32
    %2:2 = scf.for %arg17 = %c0_i32 to %1 step %c1_i32 iter_args(%arg18 = %0, %arg19 = %0) -> (vector<1x128xf32>, vector<1x128xf32>)  : i32 {
      %c64_i32 = arith.constant 64 : i32
      %229 = arith.muli %arg17, %c64_i32 : i32
      %230 = tpu.assume_multiple %229, 8 : i32
      %c64_i32_108 = arith.constant 64 : i32
      %231 = arith.muli %arg17, %c64_i32_108 : i32
      %c0_i32_109 = arith.constant 0 : i32
      %232 = arith.addi %c0_i32_109, %231 : i32
      %233 = tpu.assume_multiple %232, 8 : i32
      %234 = arith.index_cast %233 : i32 to index
      %c0_110 = arith.constant 0 : index
      %235 = vector.load %arg1[%234, %c0_110] : memref<4608x128xbf16, #tpu.memory_space<vmem>>, vector<64x128xbf16>
      %c0_111 = arith.constant 0 : index
      %c0_112 = arith.constant 0 : index
      %236 = vector.load %arg2[%c0_111, %c0_112] : memref<128x128xbf16, #tpu.memory_space<vmem>>, vector<128x128xbf16>
      %cst_113 = arith.constant dense<0.000000e+00> : vector<64x128xf32>
      %237 = tpu.matmul %235, %236, %cst_113 {dimension_numbers = #tpu.dot_dimension_numbers<[1], [0], [0], [1], [0, 0, 1, 1], [], []>} : vector<64x128xbf16>, vector<128x128xbf16>, vector<64x128xf32> -> vector<64x128xf32>
      %c64_i32_114 = arith.constant 64 : i32
      %238 = arith.muli %arg17, %c64_i32_114 : i32
      %c1152_i32 = arith.constant 1152 : i32
      %239 = arith.addi %c1152_i32, %238 : i32
      %240 = tpu.assume_multiple %239, 8 : i32
      %241 = arith.index_cast %240 : i32 to index
      %c0_115 = arith.constant 0 : index
      %242 = vector.load %arg1[%241, %c0_115] : memref<4608x128xbf16, #tpu.memory_space<vmem>>, vector<64x128xbf16>
      %c0_116 = arith.constant 0 : index
      %c0_117 = arith.constant 0 : index
      %243 = vector.load %arg2[%c0_116, %c0_117] : memref<128x128xbf16, #tpu.memory_space<vmem>>, vector<128x128xbf16>
      %cst_118 = arith.constant dense<0.000000e+00> : vector<64x128xf32>
      %244 = tpu.matmul %242, %243, %cst_118 {dimension_numbers = #tpu.dot_dimension_numbers<[1], [0], [0], [1], [0, 0, 1, 1], [], []>} : vector<64x128xbf16>, vector<128x128xbf16>, vector<64x128xf32> -> vector<64x128xf32>
      %245 = arith.maximumf %237, %244 : vector<64x128xf32>
      %c64_i32_119 = arith.constant 64 : i32
      %246 = arith.muli %arg17, %c64_i32_119 : i32
      %c2304_i32 = arith.constant 2304 : i32
      %247 = arith.addi %c2304_i32, %246 : i32
      %248 = tpu.assume_multiple %247, 8 : i32
      %249 = arith.index_cast %248 : i32 to index
      %c0_120 = arith.constant 0 : index
      %250 = vector.load %arg1[%249, %c0_120] : memref<4608x128xbf16, #tpu.memory_space<vmem>>, vector<64x128xbf16>
      %c0_121 = arith.constant 0 : index
      %c0_122 = arith.constant 0 : index
      %251 = vector.load %arg2[%c0_121, %c0_122] : memref<128x128xbf16, #tpu.memory_space<vmem>>, vector<128x128xbf16>
      %cst_123 = arith.constant dense<0.000000e+00> : vector<64x128xf32>
      %252 = tpu.matmul %250, %251, %cst_123 {dimension_numbers = #tpu.dot_dimension_numbers<[1], [0], [0], [1], [0, 0, 1, 1], [], []>} : vector<64x128xbf16>, vector<128x128xbf16>, vector<64x128xf32> -> vector<64x128xf32>
      %253 = arith.maximumf %245, %252 : vector<64x128xf32>
      %c64_i32_124 = arith.constant 64 : i32
      %254 = arith.muli %arg17, %c64_i32_124 : i32
      %c3456_i32 = arith.constant 3456 : i32
      %255 = arith.addi %c3456_i32, %254 : i32
      %256 = tpu.assume_multiple %255, 8 : i32
      %257 = arith.index_cast %256 : i32 to index
      %c0_125 = arith.constant 0 : index
      %258 = vector.load %arg1[%257, %c0_125] : memref<4608x128xbf16, #tpu.memory_space<vmem>>, vector<64x128xbf16>
      %c0_126 = arith.constant 0 : index
      %c0_127 = arith.constant 0 : index
      %259 = vector.load %arg2[%c0_126, %c0_127] : memref<128x128xbf16, #tpu.memory_space<vmem>>, vector<128x128xbf16>
      %cst_128 = arith.constant dense<0.000000e+00> : vector<64x128xf32>
      %260 = tpu.matmul %258, %259, %cst_128 {dimension_numbers = #tpu.dot_dimension_numbers<[1], [0], [0], [1], [0, 0, 1, 1], [], []>} : vector<64x128xbf16>, vector<128x128xbf16>, vector<64x128xf32> -> vector<64x128xf32>
      %261 = arith.maximumf %253, %260 : vector<64x128xf32>
      %c0_129 = arith.constant 0 : index
      %c0_130 = arith.constant 0 : index
      %262 = vector.load %arg3[%c0_129, %c0_130] : memref<1x128xf32, #tpu.memory_space<vmem>>, vector<1x128xf32>
      %263 = vector.broadcast %262 : vector<1x128xf32> to vector<64x128xf32>
      %264 = arith.addf %261, %263 : vector<64x128xf32>
      %cst_131 = arith.constant 0.000000e+00 : f32
      %265 = vector.broadcast %cst_131 : f32 to vector<64x128xf32>
      %266 = arith.maximumf %264, %265 : vector<64x128xf32>
      %c0_132 = arith.constant 0 : index
      %c0_133 = arith.constant 0 : index
      %267 = vector.load %arg0[%c0_132, %c0_133] : memref<64x128xf32, #tpu.memory_space<vmem>>, vector<64x128xf32>
      %268 = arith.mulf %266, %267 : vector<64x128xf32>
      %269 = arith.index_cast %230 : i32 to index
      %c0_134 = arith.constant 0 : index
      %270 = vector.load %arg15[%269, %c0_134] : memref<1184x128xf32, #tpu.memory_space<vmem>>, vector<64x128xf32>
      tpu.vector_store %arg15[%269, %c0_134], %268 {strides = array<i32>} : memref<1184x128xf32, #tpu.memory_space<vmem>>, vector<64x128xf32>,
      %cst_135 = arith.constant dense<0.000000e+00> : vector<128xf32>
      %271 = vector.multi_reduction <add>, %268, %cst_135 [0] : vector<64x128xf32> to vector<128xf32>
      %272 = vector.shape_cast %271 : vector<128xf32> to vector<1x128xf32>
      %273 = arith.addf %arg18, %272 : vector<1x128xf32>
      %274 = arith.mulf %268, %268 : vector<64x128xf32>
      %cst_136 = arith.constant dense<0.000000e+00> : vector<128xf32>
      %275 = vector.multi_reduction <add>, %274, %cst_136 [0] : vector<64x128xf32> to vector<128xf32>
      %276 = vector.shape_cast %275 : vector<128xf32> to vector<1x128xf32>
      %277 = arith.addf %arg19, %276 : vector<1x128xf32>
      scf.yield %273, %277 : vector<1x128xf32>, vector<1x128xf32>
    }
    %c18_i32_0 = arith.constant 18 : i32
    %cst_1 = arith.constant 0.00347222225 : f32
    %3 = vector.broadcast %cst_1 : f32 to vector<1x128xf32>
    %4 = arith.mulf %2#0, %3 : vector<1x128xf32>
    %cst_2 = arith.constant 0.00347222225 : f32
    %5 = vector.broadcast %cst_2 : f32 to vector<1x128xf32>
    %6 = arith.mulf %2#1, %5 : vector<1x128xf32>
    %7 = arith.mulf %4, %4 : vector<1x128xf32>
    %8 = arith.subf %6, %7 : vector<1x128xf32>
    %cst_3 = arith.constant 0.000000e+00 : f32
    %9 = vector.broadcast %cst_3 : f32 to vector<1x128xf32>
    %10 = arith.maximumf %8, %9 : vector<1x128xf32>
    %cst_4 = arith.constant 9.99999974E-6 : f32
    %11 = vector.broadcast %cst_4 : f32 to vector<1x128xf32>
    %12 = arith.addf %10, %11 : vector<1x128xf32>
    %13 = math.rsqrt %12 : vector<1x128xf32>
    %c0 = arith.constant 0 : index
    %c0_5 = arith.constant 0 : index
    %14 = vector.load %arg4[%c0, %c0_5] : memref<1x128xf32, #tpu.memory_space<vmem>>, vector<1x128xf32>
    %15 = arith.mulf %13, %14 : vector<1x128xf32>
    %c0_6 = arith.constant 0 : index
    %c0_7 = arith.constant 0 : index
    %16 = vector.load %arg5[%c0_6, %c0_7] : memref<1x128xf32, #tpu.memory_space<vmem>>, vector<1x128xf32>
    %17 = arith.mulf %4, %15 : vector<1x128xf32>
    %18 = arith.subf %16, %17 : vector<1x128xf32>
    %c0_i32_8 = arith.constant 0 : i32
    %c18_i32_9 = arith.constant 18 : i32
    %19 = arith.addi %c0_i32_8, %c18_i32_9 : i32
    %c1_i32_10 = arith.constant 1 : i32
    scf.for %arg17 = %c0_i32_8 to %19 step %c1_i32_10  : i32 {
      %c64_i32 = arith.constant 64 : i32
      %229 = arith.muli %arg17, %c64_i32 : i32
      %230 = tpu.assume_multiple %229, 8 : i32
      %231 = arith.index_cast %230 : i32 to index
      %c0_108 = arith.constant 0 : index
      %232 = vector.load %arg15[%231, %c0_108] : memref<1184x128xf32, #tpu.memory_space<vmem>>, vector<64x128xf32>
      %233 = vector.broadcast %15 : vector<1x128xf32> to vector<64x128xf32>
      %234 = arith.mulf %232, %233 : vector<64x128xf32>
      %235 = vector.broadcast %18 : vector<1x128xf32> to vector<64x128xf32>
      %236 = arith.addf %234, %235 : vector<64x128xf32>
      %237 = arith.index_cast %230 : i32 to index
      %c0_109 = arith.constant 0 : index
      %238 = vector.load %arg15[%237, %c0_109] : memref<1184x128xf32, #tpu.memory_space<vmem>>, vector<64x128xf32>
      tpu.vector_store %arg15[%237, %c0_109], %236 {strides = array<i32>} : memref<1184x128xf32, #tpu.memory_space<vmem>>, vector<64x128xf32>,
    }
    %c18_i32_11 = arith.constant 18 : i32
    %cst_12 = arith.constant 0.000000e+00 : f32
    %20 = vector.broadcast %cst_12 : f32 to vector<32x128xf32>
    %c1152 = arith.constant 1152 : index
    %c0_13 = arith.constant 0 : index
    %21 = vector.load %arg15[%c1152, %c0_13] : memref<1184x128xf32, #tpu.memory_space<vmem>>, vector<32x128xf32>
    tpu.vector_store %arg15[%c1152, %c0_13], %20 {strides = array<i32>} : memref<1184x128xf32, #tpu.memory_space<vmem>>, vector<32x128xf32>,
    %c0_14 = arith.constant 0 : index
    %c0_15 = arith.constant 0 : index
    %22 = vector.load %arg0[%c0_14, %c0_15] : memref<64x128xf32, #tpu.memory_space<vmem>>, vector<32x128xf32>
    %c0_i32_16 = arith.constant 0 : i32
    %c4_i32 = arith.constant 4 : i32
    %23 = arith.addi %c0_i32_16, %c4_i32 : i32
    %c1_i32_17 = arith.constant 1 : i32
    %24:2 = scf.for %arg17 = %c0_i32_16 to %23 step %c1_i32_17 iter_args(%arg18 = %0, %arg19 = %0) -> (vector<1x128xf32>, vector<1x128xf32>)  : i32 {
      %c2_i32 = arith.constant 2 : i32
      %229 = arith.muli %c2_i32, %arg17 : i32
      %c0_i32_108 = arith.constant 0 : i32
      %230 = arith.addi %229, %c0_i32_108 : i32
      %c96_i32 = arith.constant 96 : i32
      %231 = arith.muli %230, %c96_i32 : i32
      %232 = tpu.assume_multiple %231, 8 : i32
      %c0_i32_109 = arith.constant 0 : i32
      %233 = arith.addi %232, %c0_i32_109 : i32
      %234 = tpu.assume_multiple %233, 8 : i32
      %235 = arith.index_cast %234 : i32 to index
      %c0_110 = arith.constant 0 : index
      %236 = vector.load %arg15[%235, %c0_110] : memref<1184x128xf32, #tpu.memory_space<vmem>>, vector<96x128xf32>
      %237 = arith.truncf %236 : vector<96x128xf32> to vector<96x128xbf16>
      %c0_111 = arith.constant 0 : index
      %c0_112 = arith.constant 0 : index
      %c0_113 = arith.constant 0 : index
      %238 = vector.load %arg6[%c0_111, %c0_112, %c0_113] : memref<25x128x128xbf16, #tpu.memory_space<vmem>>, vector<1x128x128xbf16>
      %239 = vector.shape_cast %238 : vector<1x128x128xbf16> to vector<128x128xbf16>
      %cst_114 = arith.constant dense<0.000000e+00> : vector<96x128xf32>
      %240 = tpu.matmul %237, %239, %cst_114 {dimension_numbers = #tpu.dot_dimension_numbers<[1], [0], [0], [1], [0, 0, 1, 1], [], []>} : vector<96x128xbf16>, vector<128x128xbf16>, vector<96x128xf32> -> vector<96x128xf32>
      %c8_i32 = arith.constant 8 : i32
      %241 = arith.addi %232, %c8_i32 : i32
      %242 = tpu.assume_multiple %241, 8 : i32
      %243 = arith.index_cast %242 : i32 to index
      %c0_115 = arith.constant 0 : index
      %244 = vector.load %arg15[%243, %c0_115] : memref<1184x128xf32, #tpu.memory_space<vmem>>, vector<96x128xf32>
      %245 = arith.truncf %244 : vector<96x128xf32> to vector<96x128xbf16>
      %c1_116 = arith.constant 1 : index
      %c0_117 = arith.constant 0 : index
      %c0_118 = arith.constant 0 : index
      %246 = vector.load %arg6[%c1_116, %c0_117, %c0_118] : memref<25x128x128xbf16, #tpu.memory_space<vmem>>, vector<1x128x128xbf16>
      %247 = vector.shape_cast %246 : vector<1x128x128xbf16> to vector<128x128xbf16>
      %cst_119 = arith.constant dense<0.000000e+00> : vector<96x128xf32>
      %248 = tpu.matmul %245, %247, %cst_119 {dimension_numbers = #tpu.dot_dimension_numbers<[1], [0], [0], [1], [0, 0, 1, 1], [], []>} : vector<96x128xbf16>, vector<128x128xbf16>, vector<96x128xf32> -> vector<96x128xf32>
      %249 = arith.addf %240, %248 : vector<96x128xf32>
      %c16_i32 = arith.constant 16 : i32
      %250 = arith.addi %232, %c16_i32 : i32
      %251 = tpu.assume_multiple %250, 8 : i32
      %252 = arith.index_cast %251 : i32 to index
      %c0_120 = arith.constant 0 : index
      %253 = vector.load %arg15[%252, %c0_120] : memref<1184x128xf32, #tpu.memory_space<vmem>>, vector<96x128xf32>
      %254 = arith.truncf %253 : vector<96x128xf32> to vector<96x128xbf16>
      %c2_121 = arith.constant 2 : index
      %c0_122 = arith.constant 0 : index
      %c0_123 = arith.constant 0 : index
      %255 = vector.load %arg6[%c2_121, %c0_122, %c0_123] : memref<25x128x128xbf16, #tpu.memory_space<vmem>>, vector<1x128x128xbf16>
      %256 = vector.shape_cast %255 : vector<1x128x128xbf16> to vector<128x128xbf16>
      %cst_124 = arith.constant dense<0.000000e+00> : vector<96x128xf32>
      %257 = tpu.matmul %254, %256, %cst_124 {dimension_numbers = #tpu.dot_dimension_numbers<[1], [0], [0], [1], [0, 0, 1, 1], [], []>} : vector<96x128xbf16>, vector<128x128xbf16>, vector<96x128xf32> -> vector<96x128xf32>
      %258 = arith.addf %249, %257 : vector<96x128xf32>
      %c24_i32 = arith.constant 24 : i32
      %259 = arith.addi %232, %c24_i32 : i32
      %260 = tpu.assume_multiple %259, 8 : i32
      %261 = arith.index_cast %260 : i32 to index
      %c0_125 = arith.constant 0 : index
      %262 = vector.load %arg15[%261, %c0_125] : memref<1184x128xf32, #tpu.memory_space<vmem>>, vector<96x128xf32>
      %263 = arith.truncf %262 : vector<96x128xf32> to vector<96x128xbf16>
      %c3_126 = arith.constant 3 : index
      %c0_127 = arith.constant 0 : index
      %c0_128 = arith.constant 0 : index
      %264 = vector.load %arg6[%c3_126, %c0_127, %c0_128] : memref<25x128x128xbf16, #tpu.memory_space<vmem>>, vector<1x128x128xbf16>
      %265 = vector.shape_cast %264 : vector<1x128x128xbf16> to vector<128x128xbf16>
      %cst_129 = arith.constant dense<0.000000e+00> : vector<96x128xf32>
      %266 = tpu.matmul %263, %265, %cst_129 {dimension_numbers = #tpu.dot_dimension_numbers<[1], [0], [0], [1], [0, 0, 1, 1], [], []>} : vector<96x128xbf16>, vector<128x128xbf16>, vector<96x128xf32> -> vector<96x128xf32>
      %267 = arith.addf %258, %266 : vector<96x128xf32>
      %c32_i32 = arith.constant 32 : i32
      %268 = arith.addi %232, %c32_i32 : i32
      %269 = tpu.assume_multiple %268, 8 : i32
      %270 = arith.index_cast %269 : i32 to index
      %c0_130 = arith.constant 0 : index
      %271 = vector.load %arg15[%270, %c0_130] : memref<1184x128xf32, #tpu.memory_space<vmem>>, vector<96x128xf32>
      %272 = arith.truncf %271 : vector<96x128xf32> to vector<96x128xbf16>
      %c4_131 = arith.constant 4 : index
      %c0_132 = arith.constant 0 : index
      %c0_133 = arith.constant 0 : index
      %273 = vector.load %arg6[%c4_131, %c0_132, %c0_133] : memref<25x128x128xbf16, #tpu.memory_space<vmem>>, vector<1x128x128xbf16>
      %274 = vector.shape_cast %273 : vector<1x128x128xbf16> to vector<128x128xbf16>
      %cst_134 = arith.constant dense<0.000000e+00> : vector<96x128xf32>
      %275 = tpu.matmul %272, %274, %cst_134 {dimension_numbers = #tpu.dot_dimension_numbers<[1], [0], [0], [1], [0, 0, 1, 1], [], []>} : vector<96x128xbf16>, vector<128x128xbf16>, vector<96x128xf32> -> vector<96x128xf32>
      %276 = arith.addf %267, %275 : vector<96x128xf32>
      %c96_i32_135 = arith.constant 96 : i32
      %277 = arith.addi %232, %c96_i32_135 : i32
      %278 = tpu.assume_multiple %277, 8 : i32
      %279 = arith.index_cast %278 : i32 to index
      %c0_136 = arith.constant 0 : index
      %280 = vector.load %arg15[%279, %c0_136] : memref<1184x128xf32, #tpu.memory_space<vmem>>, vector<96x128xf32>
      %281 = arith.truncf %280 : vector<96x128xf32> to vector<96x128xbf16>
      %c5_137 = arith.constant 5 : index
      %c0_138 = arith.constant 0 : index
      %c0_139 = arith.constant 0 : index
      %282 = vector.load %arg6[%c5_137, %c0_138, %c0_139] : memref<25x128x128xbf16, #tpu.memory_space<vmem>>, vector<1x128x128xbf16>
      %283 = vector.shape_cast %282 : vector<1x128x128xbf16> to vector<128x128xbf16>
      %cst_140 = arith.constant dense<0.000000e+00> : vector<96x128xf32>
      %284 = tpu.matmul %281, %283, %cst_140 {dimension_numbers = #tpu.dot_dimension_numbers<[1], [0], [0], [1], [0, 0, 1, 1], [], []>} : vector<96x128xbf16>, vector<128x128xbf16>, vector<96x128xf32> -> vector<96x128xf32>
      %285 = arith.addf %276, %284 : vector<96x128xf32>
      %c104_i32 = arith.constant 104 : i32
      %286 = arith.addi %232, %c104_i32 : i32
      %287 = tpu.assume_multiple %286, 8 : i32
      %288 = arith.index_cast %287 : i32 to index
      %c0_141 = arith.constant 0 : index
      %289 = vector.load %arg15[%288, %c0_141] : memref<1184x128xf32, #tpu.memory_space<vmem>>, vector<96x128xf32>
      %290 = arith.truncf %289 : vector<96x128xf32> to vector<96x128xbf16>
      %c6_142 = arith.constant 6 : index
      %c0_143 = arith.constant 0 : index
      %c0_144 = arith.constant 0 : index
      %291 = vector.load %arg6[%c6_142, %c0_143, %c0_144] : memref<25x128x128xbf16, #tpu.memory_space<vmem>>, vector<1x128x128xbf16>
      %292 = vector.shape_cast %291 : vector<1x128x128xbf16> to vector<128x128xbf16>
      %cst_145 = arith.constant dense<0.000000e+00> : vector<96x128xf32>
      %293 = tpu.matmul %290, %292, %cst_145 {dimension_numbers = #tpu.dot_dimension_numbers<[1], [0], [0], [1], [0, 0, 1, 1], [], []>} : vector<96x128xbf16>, vector<128x128xbf16>, vector<96x128xf32> -> vector<96x128xf32>
      %294 = arith.addf %285, %293 : vector<96x128xf32>
      %c112_i32 = arith.constant 112 : i32
      %295 = arith.addi %232, %c112_i32 : i32
      %296 = tpu.assume_multiple %295, 8 : i32
      %297 = arith.index_cast %296 : i32 to index
      %c0_146 = arith.constant 0 : index
      %298 = vector.load %arg15[%297, %c0_146] : memref<1184x128xf32, #tpu.memory_space<vmem>>, vector<96x128xf32>
      %299 = arith.truncf %298 : vector<96x128xf32> to vector<96x128xbf16>
      %c7_147 = arith.constant 7 : index
      %c0_148 = arith.constant 0 : index
      %c0_149 = arith.constant 0 : index
      %300 = vector.load %arg6[%c7_147, %c0_148, %c0_149] : memref<25x128x128xbf16, #tpu.memory_space<vmem>>, vector<1x128x128xbf16>
      %301 = vector.shape_cast %300 : vector<1x128x128xbf16> to vector<128x128xbf16>
      %cst_150 = arith.constant dense<0.000000e+00> : vector<96x128xf32>
      %302 = tpu.matmul %299, %301, %cst_150 {dimension_numbers = #tpu.dot_dimension_numbers<[1], [0], [0], [1], [0, 0, 1, 1], [], []>} : vector<96x128xbf16>, vector<128x128xbf16>, vector<96x128xf32> -> vector<96x128xf32>
      %303 = arith.addf %294, %302 : vector<96x128xf32>
      %c120_i32 = arith.constant 120 : i32
      %304 = arith.addi %232, %c120_i32 : i32
      %305 = tpu.assume_multiple %304, 8 : i32
      %306 = arith.index_cast %305 : i32 to index
      %c0_151 = arith.constant 0 : index
      %307 = vector.load %arg15[%306, %c0_151] : memref<1184x128xf32, #tpu.memory_space<vmem>>, vector<96x128xf32>
      %308 = arith.truncf %307 : vector<96x128xf32> to vector<96x128xbf16>
      %c8_152 = arith.constant 8 : index
      %c0_153 = arith.constant 0 : index
      %c0_154 = arith.constant 0 : index
      %309 = vector.load %arg6[%c8_152, %c0_153, %c0_154] : memref<25x128x128xbf16, #tpu.memory_space<vmem>>, vector<1x128x128xbf16>
      %310 = vector.shape_cast %309 : vector<1x128x128xbf16> to vector<128x128xbf16>
      %cst_155 = arith.constant dense<0.000000e+00> : vector<96x128xf32>
      %311 = tpu.matmul %308, %310, %cst_155 {dimension_numbers = #tpu.dot_dimension_numbers<[1], [0], [0], [1], [0, 0, 1, 1], [], []>} : vector<96x128xbf16>, vector<128x128xbf16>, vector<96x128xf32> -> vector<96x128xf32>
      %312 = arith.addf %303, %311 : vector<96x128xf32>
      %c128_i32 = arith.constant 128 : i32
      %313 = arith.addi %232, %c128_i32 : i32
      %314 = tpu.assume_multiple %313, 8 : i32
      %315 = arith.index_cast %314 : i32 to index
      %c0_156 = arith.constant 0 : index
      %316 = vector.load %arg15[%315, %c0_156] : memref<1184x128xf32, #tpu.memory_space<vmem>>, vector<96x128xf32>
      %317 = arith.truncf %316 : vector<96x128xf32> to vector<96x128xbf16>
      %c9_157 = arith.constant 9 : index
      %c0_158 = arith.constant 0 : index
      %c0_159 = arith.constant 0 : index
      %318 = vector.load %arg6[%c9_157, %c0_158, %c0_159] : memref<25x128x128xbf16, #tpu.memory_space<vmem>>, vector<1x128x128xbf16>
      %319 = vector.shape_cast %318 : vector<1x128x128xbf16> to vector<128x128xbf16>
      %cst_160 = arith.constant dense<0.000000e+00> : vector<96x128xf32>
      %320 = tpu.matmul %317, %319, %cst_160 {dimension_numbers = #tpu.dot_dimension_numbers<[1], [0], [0], [1], [0, 0, 1, 1], [], []>} : vector<96x128xbf16>, vector<128x128xbf16>, vector<96x128xf32> -> vector<96x128xf32>
      %321 = arith.addf %312, %320 : vector<96x128xf32>
      %c192_i32 = arith.constant 192 : i32
      %322 = arith.addi %232, %c192_i32 : i32
      %323 = tpu.assume_multiple %322, 8 : i32
      %324 = arith.index_cast %323 : i32 to index
      %c0_161 = arith.constant 0 : index
      %325 = vector.load %arg15[%324, %c0_161] : memref<1184x128xf32, #tpu.memory_space<vmem>>, vector<96x128xf32>
      %326 = arith.truncf %325 : vector<96x128xf32> to vector<96x128xbf16>
      %c10_162 = arith.constant 10 : index
      %c0_163 = arith.constant 0 : index
      %c0_164 = arith.constant 0 : index
      %327 = vector.load %arg6[%c10_162, %c0_163, %c0_164] : memref<25x128x128xbf16, #tpu.memory_space<vmem>>, vector<1x128x128xbf16>
      %328 = vector.shape_cast %327 : vector<1x128x128xbf16> to vector<128x128xbf16>
      %cst_165 = arith.constant dense<0.000000e+00> : vector<96x128xf32>
      %329 = tpu.matmul %326, %328, %cst_165 {dimension_numbers = #tpu.dot_dimension_numbers<[1], [0], [0], [1], [0, 0, 1, 1], [], []>} : vector<96x128xbf16>, vector<128x128xbf16>, vector<96x128xf32> -> vector<96x128xf32>
      %330 = arith.addf %321, %329 : vector<96x128xf32>
      %c200_i32 = arith.constant 200 : i32
      %331 = arith.addi %232, %c200_i32 : i32
      %332 = tpu.assume_multiple %331, 8 : i32
      %333 = arith.index_cast %332 : i32 to index
      %c0_166 = arith.constant 0 : index
      %334 = vector.load %arg15[%333, %c0_166] : memref<1184x128xf32, #tpu.memory_space<vmem>>, vector<96x128xf32>
      %335 = arith.truncf %334 : vector<96x128xf32> to vector<96x128xbf16>
      %c11_167 = arith.constant 11 : index
      %c0_168 = arith.constant 0 : index
      %c0_169 = arith.constant 0 : index
      %336 = vector.load %arg6[%c11_167, %c0_168, %c0_169] : memref<25x128x128xbf16, #tpu.memory_space<vmem>>, vector<1x128x128xbf16>
      %337 = vector.shape_cast %336 : vector<1x128x128xbf16> to vector<128x128xbf16>
      %cst_170 = arith.constant dense<0.000000e+00> : vector<96x128xf32>
      %338 = tpu.matmul %335, %337, %cst_170 {dimension_numbers = #tpu.dot_dimension_numbers<[1], [0], [0], [1], [0, 0, 1, 1], [], []>} : vector<96x128xbf16>, vector<128x128xbf16>, vector<96x128xf32> -> vector<96x128xf32>
      %339 = arith.addf %330, %338 : vector<96x128xf32>
      %c208_i32 = arith.constant 208 : i32
      %340 = arith.addi %232, %c208_i32 : i32
      %341 = tpu.assume_multiple %340, 8 : i32
      %342 = arith.index_cast %341 : i32 to index
      %c0_171 = arith.constant 0 : index
      %343 = vector.load %arg15[%342, %c0_171] : memref<1184x128xf32, #tpu.memory_space<vmem>>, vector<96x128xf32>
      %344 = arith.truncf %343 : vector<96x128xf32> to vector<96x128xbf16>
      %c12_172 = arith.constant 12 : index
      %c0_173 = arith.constant 0 : index
      %c0_174 = arith.constant 0 : index
      %345 = vector.load %arg6[%c12_172, %c0_173, %c0_174] : memref<25x128x128xbf16, #tpu.memory_space<vmem>>, vector<1x128x128xbf16>
      %346 = vector.shape_cast %345 : vector<1x128x128xbf16> to vector<128x128xbf16>
      %cst_175 = arith.constant dense<0.000000e+00> : vector<96x128xf32>
      %347 = tpu.matmul %344, %346, %cst_175 {dimension_numbers = #tpu.dot_dimension_numbers<[1], [0], [0], [1], [0, 0, 1, 1], [], []>} : vector<96x128xbf16>, vector<128x128xbf16>, vector<96x128xf32> -> vector<96x128xf32>
      %348 = arith.addf %339, %347 : vector<96x128xf32>
      %c216_i32 = arith.constant 216 : i32
      %349 = arith.addi %232, %c216_i32 : i32
      %350 = tpu.assume_multiple %349, 8 : i32
      %351 = arith.index_cast %350 : i32 to index
      %c0_176 = arith.constant 0 : index
      %352 = vector.load %arg15[%351, %c0_176] : memref<1184x128xf32, #tpu.memory_space<vmem>>, vector<96x128xf32>
      %353 = arith.truncf %352 : vector<96x128xf32> to vector<96x128xbf16>
      %c13_177 = arith.constant 13 : index
      %c0_178 = arith.constant 0 : index
      %c0_179 = arith.constant 0 : index
      %354 = vector.load %arg6[%c13_177, %c0_178, %c0_179] : memref<25x128x128xbf16, #tpu.memory_space<vmem>>, vector<1x128x128xbf16>
      %355 = vector.shape_cast %354 : vector<1x128x128xbf16> to vector<128x128xbf16>
      %cst_180 = arith.constant dense<0.000000e+00> : vector<96x128xf32>
      %356 = tpu.matmul %353, %355, %cst_180 {dimension_numbers = #tpu.dot_dimension_numbers<[1], [0], [0], [1], [0, 0, 1, 1], [], []>} : vector<96x128xbf16>, vector<128x128xbf16>, vector<96x128xf32> -> vector<96x128xf32>
      %357 = arith.addf %348, %356 : vector<96x128xf32>
      %c224_i32 = arith.constant 224 : i32
      %358 = arith.addi %232, %c224_i32 : i32
      %359 = tpu.assume_multiple %358, 8 : i32
      %360 = arith.index_cast %359 : i32 to index
      %c0_181 = arith.constant 0 : index
      %361 = vector.load %arg15[%360, %c0_181] : memref<1184x128xf32, #tpu.memory_space<vmem>>, vector<96x128xf32>
      %362 = arith.truncf %361 : vector<96x128xf32> to vector<96x128xbf16>
      %c14_182 = arith.constant 14 : index
      %c0_183 = arith.constant 0 : index
      %c0_184 = arith.constant 0 : index
      %363 = vector.load %arg6[%c14_182, %c0_183, %c0_184] : memref<25x128x128xbf16, #tpu.memory_space<vmem>>, vector<1x128x128xbf16>
      %364 = vector.shape_cast %363 : vector<1x128x128xbf16> to vector<128x128xbf16>
      %cst_185 = arith.constant dense<0.000000e+00> : vector<96x128xf32>
      %365 = tpu.matmul %362, %364, %cst_185 {dimension_numbers = #tpu.dot_dimension_numbers<[1], [0], [0], [1], [0, 0, 1, 1], [], []>} : vector<96x128xbf16>, vector<128x128xbf16>, vector<96x128xf32> -> vector<96x128xf32>
      %366 = arith.addf %357, %365 : vector<96x128xf32>
      %c288_i32 = arith.constant 288 : i32
      %367 = arith.addi %232, %c288_i32 : i32
      %368 = tpu.assume_multiple %367, 8 : i32
      %369 = arith.index_cast %368 : i32 to index
      %c0_186 = arith.constant 0 : index
      %370 = vector.load %arg15[%369, %c0_186] : memref<1184x128xf32, #tpu.memory_space<vmem>>, vector<96x128xf32>
      %371 = arith.truncf %370 : vector<96x128xf32> to vector<96x128xbf16>
      %c15_187 = arith.constant 15 : index
      %c0_188 = arith.constant 0 : index
      %c0_189 = arith.constant 0 : index
      %372 = vector.load %arg6[%c15_187, %c0_188, %c0_189] : memref<25x128x128xbf16, #tpu.memory_space<vmem>>, vector<1x128x128xbf16>
      %373 = vector.shape_cast %372 : vector<1x128x128xbf16> to vector<128x128xbf16>
      %cst_190 = arith.constant dense<0.000000e+00> : vector<96x128xf32>
      %374 = tpu.matmul %371, %373, %cst_190 {dimension_numbers = #tpu.dot_dimension_numbers<[1], [0], [0], [1], [0, 0, 1, 1], [], []>} : vector<96x128xbf16>, vector<128x128xbf16>, vector<96x128xf32> -> vector<96x128xf32>
      %375 = arith.addf %366, %374 : vector<96x128xf32>
      %c296_i32 = arith.constant 296 : i32
      %376 = arith.addi %232, %c296_i32 : i32
      %377 = tpu.assume_multiple %376, 8 : i32
      %378 = arith.index_cast %377 : i32 to index
      %c0_191 = arith.constant 0 : index
      %379 = vector.load %arg15[%378, %c0_191] : memref<1184x128xf32, #tpu.memory_space<vmem>>, vector<96x128xf32>
      %380 = arith.truncf %379 : vector<96x128xf32> to vector<96x128xbf16>
      %c16_192 = arith.constant 16 : index
      %c0_193 = arith.constant 0 : index
      %c0_194 = arith.constant 0 : index
      %381 = vector.load %arg6[%c16_192, %c0_193, %c0_194] : memref<25x128x128xbf16, #tpu.memory_space<vmem>>, vector<1x128x128xbf16>
      %382 = vector.shape_cast %381 : vector<1x128x128xbf16> to vector<128x128xbf16>
      %cst_195 = arith.constant dense<0.000000e+00> : vector<96x128xf32>
      %383 = tpu.matmul %380, %382, %cst_195 {dimension_numbers = #tpu.dot_dimension_numbers<[1], [0], [0], [1], [0, 0, 1, 1], [], []>} : vector<96x128xbf16>, vector<128x128xbf16>, vector<96x128xf32> -> vector<96x128xf32>
      %384 = arith.addf %375, %383 : vector<96x128xf32>
      %c304_i32 = arith.constant 304 : i32
      %385 = arith.addi %232, %c304_i32 : i32
      %386 = tpu.assume_multiple %385, 8 : i32
      %387 = arith.index_cast %386 : i32 to index
      %c0_196 = arith.constant 0 : index
      %388 = vector.load %arg15[%387, %c0_196] : memref<1184x128xf32, #tpu.memory_space<vmem>>, vector<96x128xf32>
      %389 = arith.truncf %388 : vector<96x128xf32> to vector<96x128xbf16>
      %c17 = arith.constant 17 : index
      %c0_197 = arith.constant 0 : index
      %c0_198 = arith.constant 0 : index
      %390 = vector.load %arg6[%c17, %c0_197, %c0_198] : memref<25x128x128xbf16, #tpu.memory_space<vmem>>, vector<1x128x128xbf16>
      %391 = vector.shape_cast %390 : vector<1x128x128xbf16> to vector<128x128xbf16>
      %cst_199 = arith.constant dense<0.000000e+00> : vector<96x128xf32>
      %392 = tpu.matmul %389, %391, %cst_199 {dimension_numbers = #tpu.dot_dimension_numbers<[1], [0], [0], [1], [0, 0, 1, 1], [], []>} : vector<96x128xbf16>, vector<128x128xbf16>, vector<96x128xf32> -> vector<96x128xf32>
      %393 = arith.addf %384, %392 : vector<96x128xf32>
      %c312_i32 = arith.constant 312 : i32
      %394 = arith.addi %232, %c312_i32 : i32
      %395 = tpu.assume_multiple %394, 8 : i32
      %396 = arith.index_cast %395 : i32 to index
      %c0_200 = arith.constant 0 : index
      %397 = vector.load %arg15[%396, %c0_200] : memref<1184x128xf32, #tpu.memory_space<vmem>>, vector<96x128xf32>
      %398 = arith.truncf %397 : vector<96x128xf32> to vector<96x128xbf16>
      %c18 = arith.constant 18 : index
      %c0_201 = arith.constant 0 : index
      %c0_202 = arith.constant 0 : index
      %399 = vector.load %arg6[%c18, %c0_201, %c0_202] : memref<25x128x128xbf16, #tpu.memory_space<vmem>>, vector<1x128x128xbf16>
      %400 = vector.shape_cast %399 : vector<1x128x128xbf16> to vector<128x128xbf16>
      %cst_203 = arith.constant dense<0.000000e+00> : vector<96x128xf32>
      %401 = tpu.matmul %398, %400, %cst_203 {dimension_numbers = #tpu.dot_dimension_numbers<[1], [0], [0], [1], [0, 0, 1, 1], [], []>} : vector<96x128xbf16>, vector<128x128xbf16>, vector<96x128xf32> -> vector<96x128xf32>
      %402 = arith.addf %393, %401 : vector<96x128xf32>
      %c320_i32 = arith.constant 320 : i32
      %403 = arith.addi %232, %c320_i32 : i32
      %404 = tpu.assume_multiple %403, 8 : i32
      %405 = arith.index_cast %404 : i32 to index
      %c0_204 = arith.constant 0 : index
      %406 = vector.load %arg15[%405, %c0_204] : memref<1184x128xf32, #tpu.memory_space<vmem>>, vector<96x128xf32>
      %407 = arith.truncf %406 : vector<96x128xf32> to vector<96x128xbf16>
      %c19 = arith.constant 19 : index
      %c0_205 = arith.constant 0 : index
      %c0_206 = arith.constant 0 : index
      %408 = vector.load %arg6[%c19, %c0_205, %c0_206] : memref<25x128x128xbf16, #tpu.memory_space<vmem>>, vector<1x128x128xbf16>
      %409 = vector.shape_cast %408 : vector<1x128x128xbf16> to vector<128x128xbf16>
      %cst_207 = arith.constant dense<0.000000e+00> : vector<96x128xf32>
      %410 = tpu.matmul %407, %409, %cst_207 {dimension_numbers = #tpu.dot_dimension_numbers<[1], [0], [0], [1], [0, 0, 1, 1], [], []>} : vector<96x128xbf16>, vector<128x128xbf16>, vector<96x128xf32> -> vector<96x128xf32>
      %411 = arith.addf %402, %410 : vector<96x128xf32>
      %c384_i32 = arith.constant 384 : i32
      %412 = arith.addi %232, %c384_i32 : i32
      %413 = tpu.assume_multiple %412, 8 : i32
      %414 = arith.index_cast %413 : i32 to index
      %c0_208 = arith.constant 0 : index
      %415 = vector.load %arg15[%414, %c0_208] : memref<1184x128xf32, #tpu.memory_space<vmem>>, vector<96x128xf32>
      %416 = arith.truncf %415 : vector<96x128xf32> to vector<96x128xbf16>
      %c20 = arith.constant 20 : index
      %c0_209 = arith.constant 0 : index
      %c0_210 = arith.constant 0 : index
      %417 = vector.load %arg6[%c20, %c0_209, %c0_210] : memref<25x128x128xbf16, #tpu.memory_space<vmem>>, vector<1x128x128xbf16>
      %418 = vector.shape_cast %417 : vector<1x128x128xbf16> to vector<128x128xbf16>
      %cst_211 = arith.constant dense<0.000000e+00> : vector<96x128xf32>
      %419 = tpu.matmul %416, %418, %cst_211 {dimension_numbers = #tpu.dot_dimension_numbers<[1], [0], [0], [1], [0, 0, 1, 1], [], []>} : vector<96x128xbf16>, vector<128x128xbf16>, vector<96x128xf32> -> vector<96x128xf32>
      %420 = arith.addf %411, %419 : vector<96x128xf32>
      %c392_i32 = arith.constant 392 : i32
      %421 = arith.addi %232, %c392_i32 : i32
      %422 = tpu.assume_multiple %421, 8 : i32
      %423 = arith.index_cast %422 : i32 to index
      %c0_212 = arith.constant 0 : index
      %424 = vector.load %arg15[%423, %c0_212] : memref<1184x128xf32, #tpu.memory_space<vmem>>, vector<96x128xf32>
      %425 = arith.truncf %424 : vector<96x128xf32> to vector<96x128xbf16>
      %c21 = arith.constant 21 : index
      %c0_213 = arith.constant 0 : index
      %c0_214 = arith.constant 0 : index
      %426 = vector.load %arg6[%c21, %c0_213, %c0_214] : memref<25x128x128xbf16, #tpu.memory_space<vmem>>, vector<1x128x128xbf16>
      %427 = vector.shape_cast %426 : vector<1x128x128xbf16> to vector<128x128xbf16>
      %cst_215 = arith.constant dense<0.000000e+00> : vector<96x128xf32>
      %428 = tpu.matmul %425, %427, %cst_215 {dimension_numbers = #tpu.dot_dimension_numbers<[1], [0], [0], [1], [0, 0, 1, 1], [], []>} : vector<96x128xbf16>, vector<128x128xbf16>, vector<96x128xf32> -> vector<96x128xf32>
      %429 = arith.addf %420, %428 : vector<96x128xf32>
      %c400_i32 = arith.constant 400 : i32
      %430 = arith.addi %232, %c400_i32 : i32
      %431 = tpu.assume_multiple %430, 8 : i32
      %432 = arith.index_cast %431 : i32 to index
      %c0_216 = arith.constant 0 : index
      %433 = vector.load %arg15[%432, %c0_216] : memref<1184x128xf32, #tpu.memory_space<vmem>>, vector<96x128xf32>
      %434 = arith.truncf %433 : vector<96x128xf32> to vector<96x128xbf16>
      %c22 = arith.constant 22 : index
      %c0_217 = arith.constant 0 : index
      %c0_218 = arith.constant 0 : index
      %435 = vector.load %arg6[%c22, %c0_217, %c0_218] : memref<25x128x128xbf16, #tpu.memory_space<vmem>>, vector<1x128x128xbf16>
      %436 = vector.shape_cast %435 : vector<1x128x128xbf16> to vector<128x128xbf16>
      %cst_219 = arith.constant dense<0.000000e+00> : vector<96x128xf32>
      %437 = tpu.matmul %434, %436, %cst_219 {dimension_numbers = #tpu.dot_dimension_numbers<[1], [0], [0], [1], [0, 0, 1, 1], [], []>} : vector<96x128xbf16>, vector<128x128xbf16>, vector<96x128xf32> -> vector<96x128xf32>
      %438 = arith.addf %429, %437 : vector<96x128xf32>
      %c408_i32 = arith.constant 408 : i32
      %439 = arith.addi %232, %c408_i32 : i32
      %440 = tpu.assume_multiple %439, 8 : i32
      %441 = arith.index_cast %440 : i32 to index
      %c0_220 = arith.constant 0 : index
      %442 = vector.load %arg15[%441, %c0_220] : memref<1184x128xf32, #tpu.memory_space<vmem>>, vector<96x128xf32>
      %443 = arith.truncf %442 : vector<96x128xf32> to vector<96x128xbf16>
      %c23 = arith.constant 23 : index
      %c0_221 = arith.constant 0 : index
      %c0_222 = arith.constant 0 : index
      %444 = vector.load %arg6[%c23, %c0_221, %c0_222] : memref<25x128x128xbf16, #tpu.memory_space<vmem>>, vector<1x128x128xbf16>
      %445 = vector.shape_cast %444 : vector<1x128x128xbf16> to vector<128x128xbf16>
      %cst_223 = arith.constant dense<0.000000e+00> : vector<96x128xf32>
      %446 = tpu.matmul %443, %445, %cst_223 {dimension_numbers = #tpu.dot_dimension_numbers<[1], [0], [0], [1], [0, 0, 1, 1], [], []>} : vector<96x128xbf16>, vector<128x128xbf16>, vector<96x128xf32> -> vector<96x128xf32>
      %447 = arith.addf %438, %446 : vector<96x128xf32>
      %c416_i32 = arith.constant 416 : i32
      %448 = arith.addi %232, %c416_i32 : i32
      %449 = tpu.assume_multiple %448, 8 : i32
      %450 = arith.index_cast %449 : i32 to index
      %c0_224 = arith.constant 0 : index
      %451 = vector.load %arg15[%450, %c0_224] : memref<1184x128xf32, #tpu.memory_space<vmem>>, vector<96x128xf32>
      %452 = arith.truncf %451 : vector<96x128xf32> to vector<96x128xbf16>
      %c24_225 = arith.constant 24 : index
      %c0_226 = arith.constant 0 : index
      %c0_227 = arith.constant 0 : index
      %453 = vector.load %arg6[%c24_225, %c0_226, %c0_227] : memref<25x128x128xbf16, #tpu.memory_space<vmem>>, vector<1x128x128xbf16>
      %454 = vector.shape_cast %453 : vector<1x128x128xbf16> to vector<128x128xbf16>
      %cst_228 = arith.constant dense<0.000000e+00> : vector<96x128xf32>
      %455 = tpu.matmul %452, %454, %cst_228 {dimension_numbers = #tpu.dot_dimension_numbers<[1], [0], [0], [1], [0, 0, 1, 1], [], []>} : vector<96x128xbf16>, vector<128x128xbf16>, vector<96x128xf32> -> vector<96x128xf32>
      %456 = arith.addf %447, %455 : vector<96x128xf32>
      %457 = vector.extract_strided_slice %456 {offsets = [0, 0], sizes = [8, 128], strides = [1, 1]} : vector<96x128xf32> to vector<8x128xf32>
      %458 = vector.extract_strided_slice %456 {offsets = [8, 0], sizes = [8, 128], strides = [1, 1]} : vector<96x128xf32> to vector<8x128xf32>
      %459 = arith.maximumf %457, %458 : vector<8x128xf32>
      %460 = vector.extract_strided_slice %456 {offsets = [16, 0], sizes = [8, 128], strides = [1, 1]} : vector<96x128xf32> to vector<8x128xf32>
      %461 = vector.extract_strided_slice %456 {offsets = [24, 0], sizes = [8, 128], strides = [1, 1]} : vector<96x128xf32> to vector<8x128xf32>
      %462 = arith.maximumf %460, %461 : vector<8x128xf32>
      %463 = vector.extract_strided_slice %456 {offsets = [32, 0], sizes = [8, 128], strides = [1, 1]} : vector<96x128xf32> to vector<8x128xf32>
      %464 = vector.extract_strided_slice %456 {offsets = [40, 0], sizes = [8, 128], strides = [1, 1]} : vector<96x128xf32> to vector<8x128xf32>
      %465 = arith.maximumf %463, %464 : vector<8x128xf32>
      %466 = vector.extract_strided_slice %456 {offsets = [48, 0], sizes = [8, 128], strides = [1, 1]} : vector<96x128xf32> to vector<8x128xf32>
      %467 = vector.extract_strided_slice %456 {offsets = [56, 0], sizes = [8, 128], strides = [1, 1]} : vector<96x128xf32> to vector<8x128xf32>
      %468 = arith.maximumf %466, %467 : vector<8x128xf32>
      %469 = tpu.concatenate %459, %462, %465, %468 in 0 : vector<8x128xf32>, vector<8x128xf32>, vector<8x128xf32>, vector<8x128xf32> -> vector<32x128xf32>
      %c2_i32_229 = arith.constant 2 : i32
      %470 = arith.muli %c2_i32_229, %arg17 : i32
      %c1_i32_230 = arith.constant 1 : i32
      %471 = arith.addi %470, %c1_i32_230 : i32
      %c96_i32_231 = arith.constant 96 : i32
      %472 = arith.muli %471, %c96_i32_231 : i32
      %473 = tpu.assume_multiple %472, 8 : i32
      %c0_i32_232 = arith.constant 0 : i32
      %474 = arith.addi %473, %c0_i32_232 : i32
      %475 = tpu.assume_multiple %474, 8 : i32
      %476 = arith.index_cast %475 : i32 to index
      %c0_233 = arith.constant 0 : index
      %477 = vector.load %arg15[%476, %c0_233] : memref<1184x128xf32, #tpu.memory_space<vmem>>, vector<96x128xf32>
      %478 = arith.truncf %477 : vector<96x128xf32> to vector<96x128xbf16>
      %c0_234 = arith.constant 0 : index
      %c0_235 = arith.constant 0 : index
      %c0_236 = arith.constant 0 : index
      %479 = vector.load %arg6[%c0_234, %c0_235, %c0_236] : memref<25x128x128xbf16, #tpu.memory_space<vmem>>, vector<1x128x128xbf16>
      %480 = vector.shape_cast %479 : vector<1x128x128xbf16> to vector<128x128xbf16>
      %cst_237 = arith.constant dense<0.000000e+00> : vector<96x128xf32>
      %481 = tpu.matmul %478, %480, %cst_237 {dimension_numbers = #tpu.dot_dimension_numbers<[1], [0], [0], [1], [0, 0, 1, 1], [], []>} : vector<96x128xbf16>, vector<128x128xbf16>, vector<96x128xf32> -> vector<96x128xf32>
      %c8_i32_238 = arith.constant 8 : i32
      %482 = arith.addi %473, %c8_i32_238 : i32
      %483 = tpu.assume_multiple %482, 8 : i32
      %484 = arith.index_cast %483 : i32 to index
      %c0_239 = arith.constant 0 : index
      %485 = vector.load %arg15[%484, %c0_239] : memref<1184x128xf32, #tpu.memory_space<vmem>>, vector<96x128xf32>
      %486 = arith.truncf %485 : vector<96x128xf32> to vector<96x128xbf16>
      %c1_240 = arith.constant 1 : index
      %c0_241 = arith.constant 0 : index
      %c0_242 = arith.constant 0 : index
      %487 = vector.load %arg6[%c1_240, %c0_241, %c0_242] : memref<25x128x128xbf16, #tpu.memory_space<vmem>>, vector<1x128x128xbf16>
      %488 = vector.shape_cast %487 : vector<1x128x128xbf16> to vector<128x128xbf16>
      %cst_243 = arith.constant dense<0.000000e+00> : vector<96x128xf32>
      %489 = tpu.matmul %486, %488, %cst_243 {dimension_numbers = #tpu.dot_dimension_numbers<[1], [0], [0], [1], [0, 0, 1, 1], [], []>} : vector<96x128xbf16>, vector<128x128xbf16>, vector<96x128xf32> -> vector<96x128xf32>
      %490 = arith.addf %481, %489 : vector<96x128xf32>
      %c16_i32_244 = arith.constant 16 : i32
      %491 = arith.addi %473, %c16_i32_244 : i32
      %492 = tpu.assume_multiple %491, 8 : i32
      %493 = arith.index_cast %492 : i32 to index
      %c0_245 = arith.constant 0 : index
      %494 = vector.load %arg15[%493, %c0_245] : memref<1184x128xf32, #tpu.memory_space<vmem>>, vector<96x128xf32>
      %495 = arith.truncf %494 : vector<96x128xf32> to vector<96x128xbf16>
      %c2_246 = arith.constant 2 : index
      %c0_247 = arith.constant 0 : index
      %c0_248 = arith.constant 0 : index
      %496 = vector.load %arg6[%c2_246, %c0_247, %c0_248] : memref<25x128x128xbf16, #tpu.memory_space<vmem>>, vector<1x128x128xbf16>
      %497 = vector.shape_cast %496 : vector<1x128x128xbf16> to vector<128x128xbf16>
      %cst_249 = arith.constant dense<0.000000e+00> : vector<96x128xf32>
      %498 = tpu.matmul %495, %497, %cst_249 {dimension_numbers = #tpu.dot_dimension_numbers<[1], [0], [0], [1], [0, 0, 1, 1], [], []>} : vector<96x128xbf16>, vector<128x128xbf16>, vector<96x128xf32> -> vector<96x128xf32>
      %499 = arith.addf %490, %498 : vector<96x128xf32>
      %c24_i32_250 = arith.constant 24 : i32
      %500 = arith.addi %473, %c24_i32_250 : i32
      %501 = tpu.assume_multiple %500, 8 : i32
      %502 = arith.index_cast %501 : i32 to index
      %c0_251 = arith.constant 0 : index
      %503 = vector.load %arg15[%502, %c0_251] : memref<1184x128xf32, #tpu.memory_space<vmem>>, vector<96x128xf32>
      %504 = arith.truncf %503 : vector<96x128xf32> to vector<96x128xbf16>
      %c3_252 = arith.constant 3 : index
      %c0_253 = arith.constant 0 : index
      %c0_254 = arith.constant 0 : index
      %505 = vector.load %arg6[%c3_252, %c0_253, %c0_254] : memref<25x128x128xbf16, #tpu.memory_space<vmem>>, vector<1x128x128xbf16>
      %506 = vector.shape_cast %505 : vector<1x128x128xbf16> to vector<128x128xbf16>
      %cst_255 = arith.constant dense<0.000000e+00> : vector<96x128xf32>
      %507 = tpu.matmul %504, %506, %cst_255 {dimension_numbers = #tpu.dot_dimension_numbers<[1], [0], [0], [1], [0, 0, 1, 1], [], []>} : vector<96x128xbf16>, vector<128x128xbf16>, vector<96x128xf32> -> vector<96x128xf32>
      %508 = arith.addf %499, %507 : vector<96x128xf32>
      %c32_i32_256 = arith.constant 32 : i32
      %509 = arith.addi %473, %c32_i32_256 : i32
      %510 = tpu.assume_multiple %509, 8 : i32
      %511 = arith.index_cast %510 : i32 to index
      %c0_257 = arith.constant 0 : index
      %512 = vector.load %arg15[%511, %c0_257] : memref<1184x128xf32, #tpu.memory_space<vmem>>, vector<96x128xf32>
      %513 = arith.truncf %512 : vector<96x128xf32> to vector<96x128xbf16>
      %c4_258 = arith.constant 4 : index
      %c0_259 = arith.constant 0 : index
      %c0_260 = arith.constant 0 : index
      %514 = vector.load %arg6[%c4_258, %c0_259, %c0_260] : memref<25x128x128xbf16, #tpu.memory_space<vmem>>, vector<1x128x128xbf16>
      %515 = vector.shape_cast %514 : vector<1x128x128xbf16> to vector<128x128xbf16>
      %cst_261 = arith.constant dense<0.000000e+00> : vector<96x128xf32>
      %516 = tpu.matmul %513, %515, %cst_261 {dimension_numbers = #tpu.dot_dimension_numbers<[1], [0], [0], [1], [0, 0, 1, 1], [], []>} : vector<96x128xbf16>, vector<128x128xbf16>, vector<96x128xf32> -> vector<96x128xf32>
      %517 = arith.addf %508, %516 : vector<96x128xf32>
      %c96_i32_262 = arith.constant 96 : i32
      %518 = arith.addi %473, %c96_i32_262 : i32
      %519 = tpu.assume_multiple %518, 8 : i32
      %520 = arith.index_cast %519 : i32 to index
      %c0_263 = arith.constant 0 : index
      %521 = vector.load %arg15[%520, %c0_263] : memref<1184x128xf32, #tpu.memory_space<vmem>>, vector<96x128xf32>
      %522 = arith.truncf %521 : vector<96x128xf32> to vector<96x128xbf16>
      %c5_264 = arith.constant 5 : index
      %c0_265 = arith.constant 0 : index
      %c0_266 = arith.constant 0 : index
      %523 = vector.load %arg6[%c5_264, %c0_265, %c0_266] : memref<25x128x128xbf16, #tpu.memory_space<vmem>>, vector<1x128x128xbf16>
      %524 = vector.shape_cast %523 : vector<1x128x128xbf16> to vector<128x128xbf16>
      %cst_267 = arith.constant dense<0.000000e+00> : vector<96x128xf32>
      %525 = tpu.matmul %522, %524, %cst_267 {dimension_numbers = #tpu.dot_dimension_numbers<[1], [0], [0], [1], [0, 0, 1, 1], [], []>} : vector<96x128xbf16>, vector<128x128xbf16>, vector<96x128xf32> -> vector<96x128xf32>
      %526 = arith.addf %517, %525 : vector<96x128xf32>
      %c104_i32_268 = arith.constant 104 : i32
      %527 = arith.addi %473, %c104_i32_268 : i32
      %528 = tpu.assume_multiple %527, 8 : i32
      %529 = arith.index_cast %528 : i32 to index
      %c0_269 = arith.constant 0 : index
      %530 = vector.load %arg15[%529, %c0_269] : memref<1184x128xf32, #tpu.memory_space<vmem>>, vector<96x128xf32>
      %531 = arith.truncf %530 : vector<96x128xf32> to vector<96x128xbf16>
      %c6_270 = arith.constant 6 : index
      %c0_271 = arith.constant 0 : index
      %c0_272 = arith.constant 0 : index
      %532 = vector.load %arg6[%c6_270, %c0_271, %c0_272] : memref<25x128x128xbf16, #tpu.memory_space<vmem>>, vector<1x128x128xbf16>
      %533 = vector.shape_cast %532 : vector<1x128x128xbf16> to vector<128x128xbf16>
      %cst_273 = arith.constant dense<0.000000e+00> : vector<96x128xf32>
      %534 = tpu.matmul %531, %533, %cst_273 {dimension_numbers = #tpu.dot_dimension_numbers<[1], [0], [0], [1], [0, 0, 1, 1], [], []>} : vector<96x128xbf16>, vector<128x128xbf16>, vector<96x128xf32> -> vector<96x128xf32>
      %535 = arith.addf %526, %534 : vector<96x128xf32>
      %c112_i32_274 = arith.constant 112 : i32
      %536 = arith.addi %473, %c112_i32_274 : i32
      %537 = tpu.assume_multiple %536, 8 : i32
      %538 = arith.index_cast %537 : i32 to index
      %c0_275 = arith.constant 0 : index
      %539 = vector.load %arg15[%538, %c0_275] : memref<1184x128xf32, #tpu.memory_space<vmem>>, vector<96x128xf32>
      %540 = arith.truncf %539 : vector<96x128xf32> to vector<96x128xbf16>
      %c7_276 = arith.constant 7 : index
      %c0_277 = arith.constant 0 : index
      %c0_278 = arith.constant 0 : index
      %541 = vector.load %arg6[%c7_276, %c0_277, %c0_278] : memref<25x128x128xbf16, #tpu.memory_space<vmem>>, vector<1x128x128xbf16>
      %542 = vector.shape_cast %541 : vector<1x128x128xbf16> to vector<128x128xbf16>
      %cst_279 = arith.constant dense<0.000000e+00> : vector<96x128xf32>
      %543 = tpu.matmul %540, %542, %cst_279 {dimension_numbers = #tpu.dot_dimension_numbers<[1], [0], [0], [1], [0, 0, 1, 1], [], []>} : vector<96x128xbf16>, vector<128x128xbf16>, vector<96x128xf32> -> vector<96x128xf32>
      %544 = arith.addf %535, %543 : vector<96x128xf32>
      %c120_i32_280 = arith.constant 120 : i32
      %545 = arith.addi %473, %c120_i32_280 : i32
      %546 = tpu.assume_multiple %545, 8 : i32
      %547 = arith.index_cast %546 : i32 to index
      %c0_281 = arith.constant 0 : index
      %548 = vector.load %arg15[%547, %c0_281] : memref<1184x128xf32, #tpu.memory_space<vmem>>, vector<96x128xf32>
      %549 = arith.truncf %548 : vector<96x128xf32> to vector<96x128xbf16>
      %c8_282 = arith.constant 8 : index
      %c0_283 = arith.constant 0 : index
      %c0_284 = arith.constant 0 : index
      %550 = vector.load %arg6[%c8_282, %c0_283, %c0_284] : memref<25x128x128xbf16, #tpu.memory_space<vmem>>, vector<1x128x128xbf16>
      %551 = vector.shape_cast %550 : vector<1x128x128xbf16> to vector<128x128xbf16>
      %cst_285 = arith.constant dense<0.000000e+00> : vector<96x128xf32>
      %552 = tpu.matmul %549, %551, %cst_285 {dimension_numbers = #tpu.dot_dimension_numbers<[1], [0], [0], [1], [0, 0, 1, 1], [], []>} : vector<96x128xbf16>, vector<128x128xbf16>, vector<96x128xf32> -> vector<96x128xf32>
      %553 = arith.addf %544, %552 : vector<96x128xf32>
      %c128_i32_286 = arith.constant 128 : i32
      %554 = arith.addi %473, %c128_i32_286 : i32
      %555 = tpu.assume_multiple %554, 8 : i32
      %556 = arith.index_cast %555 : i32 to index
      %c0_287 = arith.constant 0 : index
      %557 = vector.load %arg15[%556, %c0_287] : memref<1184x128xf32, #tpu.memory_space<vmem>>, vector<96x128xf32>
      %558 = arith.truncf %557 : vector<96x128xf32> to vector<96x128xbf16>
      %c9_288 = arith.constant 9 : index
      %c0_289 = arith.constant 0 : index
      %c0_290 = arith.constant 0 : index
      %559 = vector.load %arg6[%c9_288, %c0_289, %c0_290] : memref<25x128x128xbf16, #tpu.memory_space<vmem>>, vector<1x128x128xbf16>
      %560 = vector.shape_cast %559 : vector<1x128x128xbf16> to vector<128x128xbf16>
      %cst_291 = arith.constant dense<0.000000e+00> : vector<96x128xf32>
      %561 = tpu.matmul %558, %560, %cst_291 {dimension_numbers = #tpu.dot_dimension_numbers<[1], [0], [0], [1], [0, 0, 1, 1], [], []>} : vector<96x128xbf16>, vector<128x128xbf16>, vector<96x128xf32> -> vector<96x128xf32>
      %562 = arith.addf %553, %561 : vector<96x128xf32>
      %c192_i32_292 = arith.constant 192 : i32
      %563 = arith.addi %473, %c192_i32_292 : i32
      %564 = tpu.assume_multiple %563, 8 : i32
      %565 = arith.index_cast %564 : i32 to index
      %c0_293 = arith.constant 0 : index
      %566 = vector.load %arg15[%565, %c0_293] : memref<1184x128xf32, #tpu.memory_space<vmem>>, vector<96x128xf32>
      %567 = arith.truncf %566 : vector<96x128xf32> to vector<96x128xbf16>
      %c10_294 = arith.constant 10 : index
      %c0_295 = arith.constant 0 : index
      %c0_296 = arith.constant 0 : index
      %568 = vector.load %arg6[%c10_294, %c0_295, %c0_296] : memref<25x128x128xbf16, #tpu.memory_space<vmem>>, vector<1x128x128xbf16>
      %569 = vector.shape_cast %568 : vector<1x128x128xbf16> to vector<128x128xbf16>
      %cst_297 = arith.constant dense<0.000000e+00> : vector<96x128xf32>
      %570 = tpu.matmul %567, %569, %cst_297 {dimension_numbers = #tpu.dot_dimension_numbers<[1], [0], [0], [1], [0, 0, 1, 1], [], []>} : vector<96x128xbf16>, vector<128x128xbf16>, vector<96x128xf32> -> vector<96x128xf32>
      %571 = arith.addf %562, %570 : vector<96x128xf32>
      %c200_i32_298 = arith.constant 200 : i32
      %572 = arith.addi %473, %c200_i32_298 : i32
      %573 = tpu.assume_multiple %572, 8 : i32
      %574 = arith.index_cast %573 : i32 to index
      %c0_299 = arith.constant 0 : index
      %575 = vector.load %arg15[%574, %c0_299] : memref<1184x128xf32, #tpu.memory_space<vmem>>, vector<96x128xf32>
      %576 = arith.truncf %575 : vector<96x128xf32> to vector<96x128xbf16>
      %c11_300 = arith.constant 11 : index
      %c0_301 = arith.constant 0 : index
      %c0_302 = arith.constant 0 : index
      %577 = vector.load %arg6[%c11_300, %c0_301, %c0_302] : memref<25x128x128xbf16, #tpu.memory_space<vmem>>, vector<1x128x128xbf16>
      %578 = vector.shape_cast %577 : vector<1x128x128xbf16> to vector<128x128xbf16>
      %cst_303 = arith.constant dense<0.000000e+00> : vector<96x128xf32>
      %579 = tpu.matmul %576, %578, %cst_303 {dimension_numbers = #tpu.dot_dimension_numbers<[1], [0], [0], [1], [0, 0, 1, 1], [], []>} : vector<96x128xbf16>, vector<128x128xbf16>, vector<96x128xf32> -> vector<96x128xf32>
      %580 = arith.addf %571, %579 : vector<96x128xf32>
      %c208_i32_304 = arith.constant 208 : i32
      %581 = arith.addi %473, %c208_i32_304 : i32
      %582 = tpu.assume_multiple %581, 8 : i32
      %583 = arith.index_cast %582 : i32 to index
      %c0_305 = arith.constant 0 : index
      %584 = vector.load %arg15[%583, %c0_305] : memref<1184x128xf32, #tpu.memory_space<vmem>>, vector<96x128xf32>
      %585 = arith.truncf %584 : vector<96x128xf32> to vector<96x128xbf16>
      %c12_306 = arith.constant 12 : index
      %c0_307 = arith.constant 0 : index
      %c0_308 = arith.constant 0 : index
      %586 = vector.load %arg6[%c12_306, %c0_307, %c0_308] : memref<25x128x128xbf16, #tpu.memory_space<vmem>>, vector<1x128x128xbf16>
      %587 = vector.shape_cast %586 : vector<1x128x128xbf16> to vector<128x128xbf16>
      %cst_309 = arith.constant dense<0.000000e+00> : vector<96x128xf32>
      %588 = tpu.matmul %585, %587, %cst_309 {dimension_numbers = #tpu.dot_dimension_numbers<[1], [0], [0], [1], [0, 0, 1, 1], [], []>} : vector<96x128xbf16>, vector<128x128xbf16>, vector<96x128xf32> -> vector<96x128xf32>
      %589 = arith.addf %580, %588 : vector<96x128xf32>
      %c216_i32_310 = arith.constant 216 : i32
      %590 = arith.addi %473, %c216_i32_310 : i32
      %591 = tpu.assume_multiple %590, 8 : i32
      %592 = arith.index_cast %591 : i32 to index
      %c0_311 = arith.constant 0 : index
      %593 = vector.load %arg15[%592, %c0_311] : memref<1184x128xf32, #tpu.memory_space<vmem>>, vector<96x128xf32>
      %594 = arith.truncf %593 : vector<96x128xf32> to vector<96x128xbf16>
      %c13_312 = arith.constant 13 : index
      %c0_313 = arith.constant 0 : index
      %c0_314 = arith.constant 0 : index
      %595 = vector.load %arg6[%c13_312, %c0_313, %c0_314] : memref<25x128x128xbf16, #tpu.memory_space<vmem>>, vector<1x128x128xbf16>
      %596 = vector.shape_cast %595 : vector<1x128x128xbf16> to vector<128x128xbf16>
      %cst_315 = arith.constant dense<0.000000e+00> : vector<96x128xf32>
      %597 = tpu.matmul %594, %596, %cst_315 {dimension_numbers = #tpu.dot_dimension_numbers<[1], [0], [0], [1], [0, 0, 1, 1], [], []>} : vector<96x128xbf16>, vector<128x128xbf16>, vector<96x128xf32> -> vector<96x128xf32>
      %598 = arith.addf %589, %597 : vector<96x128xf32>
      %c224_i32_316 = arith.constant 224 : i32
      %599 = arith.addi %473, %c224_i32_316 : i32
      %600 = tpu.assume_multiple %599, 8 : i32
      %601 = arith.index_cast %600 : i32 to index
      %c0_317 = arith.constant 0 : index
      %602 = vector.load %arg15[%601, %c0_317] : memref<1184x128xf32, #tpu.memory_space<vmem>>, vector<96x128xf32>
      %603 = arith.truncf %602 : vector<96x128xf32> to vector<96x128xbf16>
      %c14_318 = arith.constant 14 : index
      %c0_319 = arith.constant 0 : index
      %c0_320 = arith.constant 0 : index
      %604 = vector.load %arg6[%c14_318, %c0_319, %c0_320] : memref<25x128x128xbf16, #tpu.memory_space<vmem>>, vector<1x128x128xbf16>
      %605 = vector.shape_cast %604 : vector<1x128x128xbf16> to vector<128x128xbf16>
      %cst_321 = arith.constant dense<0.000000e+00> : vector<96x128xf32>
      %606 = tpu.matmul %603, %605, %cst_321 {dimension_numbers = #tpu.dot_dimension_numbers<[1], [0], [0], [1], [0, 0, 1, 1], [], []>} : vector<96x128xbf16>, vector<128x128xbf16>, vector<96x128xf32> -> vector<96x128xf32>
      %607 = arith.addf %598, %606 : vector<96x128xf32>
      %c288_i32_322 = arith.constant 288 : i32
      %608 = arith.addi %473, %c288_i32_322 : i32
      %609 = tpu.assume_multiple %608, 8 : i32
      %610 = arith.index_cast %609 : i32 to index
      %c0_323 = arith.constant 0 : index
      %611 = vector.load %arg15[%610, %c0_323] : memref<1184x128xf32, #tpu.memory_space<vmem>>, vector<96x128xf32>
      %612 = arith.truncf %611 : vector<96x128xf32> to vector<96x128xbf16>
      %c15_324 = arith.constant 15 : index
      %c0_325 = arith.constant 0 : index
      %c0_326 = arith.constant 0 : index
      %613 = vector.load %arg6[%c15_324, %c0_325, %c0_326] : memref<25x128x128xbf16, #tpu.memory_space<vmem>>, vector<1x128x128xbf16>
      %614 = vector.shape_cast %613 : vector<1x128x128xbf16> to vector<128x128xbf16>
      %cst_327 = arith.constant dense<0.000000e+00> : vector<96x128xf32>
      %615 = tpu.matmul %612, %614, %cst_327 {dimension_numbers = #tpu.dot_dimension_numbers<[1], [0], [0], [1], [0, 0, 1, 1], [], []>} : vector<96x128xbf16>, vector<128x128xbf16>, vector<96x128xf32> -> vector<96x128xf32>
      %616 = arith.addf %607, %615 : vector<96x128xf32>
      %c296_i32_328 = arith.constant 296 : i32
      %617 = arith.addi %473, %c296_i32_328 : i32
      %618 = tpu.assume_multiple %617, 8 : i32
      %619 = arith.index_cast %618 : i32 to index
      %c0_329 = arith.constant 0 : index
      %620 = vector.load %arg15[%619, %c0_329] : memref<1184x128xf32, #tpu.memory_space<vmem>>, vector<96x128xf32>
      %621 = arith.truncf %620 : vector<96x128xf32> to vector<96x128xbf16>
      %c16_330 = arith.constant 16 : index
      %c0_331 = arith.constant 0 : index
      %c0_332 = arith.constant 0 : index
      %622 = vector.load %arg6[%c16_330, %c0_331, %c0_332] : memref<25x128x128xbf16, #tpu.memory_space<vmem>>, vector<1x128x128xbf16>
      %623 = vector.shape_cast %622 : vector<1x128x128xbf16> to vector<128x128xbf16>
      %cst_333 = arith.constant dense<0.000000e+00> : vector<96x128xf32>
      %624 = tpu.matmul %621, %623, %cst_333 {dimension_numbers = #tpu.dot_dimension_numbers<[1], [0], [0], [1], [0, 0, 1, 1], [], []>} : vector<96x128xbf16>, vector<128x128xbf16>, vector<96x128xf32> -> vector<96x128xf32>
      %625 = arith.addf %616, %624 : vector<96x128xf32>
      %c304_i32_334 = arith.constant 304 : i32
      %626 = arith.addi %473, %c304_i32_334 : i32
      %627 = tpu.assume_multiple %626, 8 : i32
      %628 = arith.index_cast %627 : i32 to index
      %c0_335 = arith.constant 0 : index
      %629 = vector.load %arg15[%628, %c0_335] : memref<1184x128xf32, #tpu.memory_space<vmem>>, vector<96x128xf32>
      %630 = arith.truncf %629 : vector<96x128xf32> to vector<96x128xbf16>
      %c17_336 = arith.constant 17 : index
      %c0_337 = arith.constant 0 : index
      %c0_338 = arith.constant 0 : index
      %631 = vector.load %arg6[%c17_336, %c0_337, %c0_338] : memref<25x128x128xbf16, #tpu.memory_space<vmem>>, vector<1x128x128xbf16>
      %632 = vector.shape_cast %631 : vector<1x128x128xbf16> to vector<128x128xbf16>
      %cst_339 = arith.constant dense<0.000000e+00> : vector<96x128xf32>
      %633 = tpu.matmul %630, %632, %cst_339 {dimension_numbers = #tpu.dot_dimension_numbers<[1], [0], [0], [1], [0, 0, 1, 1], [], []>} : vector<96x128xbf16>, vector<128x128xbf16>, vector<96x128xf32> -> vector<96x128xf32>
      %634 = arith.addf %625, %633 : vector<96x128xf32>
      %c312_i32_340 = arith.constant 312 : i32
      %635 = arith.addi %473, %c312_i32_340 : i32
      %636 = tpu.assume_multiple %635, 8 : i32
      %637 = arith.index_cast %636 : i32 to index
      %c0_341 = arith.constant 0 : index
      %638 = vector.load %arg15[%637, %c0_341] : memref<1184x128xf32, #tpu.memory_space<vmem>>, vector<96x128xf32>
      %639 = arith.truncf %638 : vector<96x128xf32> to vector<96x128xbf16>
      %c18_342 = arith.constant 18 : index
      %c0_343 = arith.constant 0 : index
      %c0_344 = arith.constant 0 : index
      %640 = vector.load %arg6[%c18_342, %c0_343, %c0_344] : memref<25x128x128xbf16, #tpu.memory_space<vmem>>, vector<1x128x128xbf16>
      %641 = vector.shape_cast %640 : vector<1x128x128xbf16> to vector<128x128xbf16>
      %cst_345 = arith.constant dense<0.000000e+00> : vector<96x128xf32>
      %642 = tpu.matmul %639, %641, %cst_345 {dimension_numbers = #tpu.dot_dimension_numbers<[1], [0], [0], [1], [0, 0, 1, 1], [], []>} : vector<96x128xbf16>, vector<128x128xbf16>, vector<96x128xf32> -> vector<96x128xf32>
      %643 = arith.addf %634, %642 : vector<96x128xf32>
      %c320_i32_346 = arith.constant 320 : i32
      %644 = arith.addi %473, %c320_i32_346 : i32
      %645 = tpu.assume_multiple %644, 8 : i32
      %646 = arith.index_cast %645 : i32 to index
      %c0_347 = arith.constant 0 : index
      %647 = vector.load %arg15[%646, %c0_347] : memref<1184x128xf32, #tpu.memory_space<vmem>>, vector<96x128xf32>
      %648 = arith.truncf %647 : vector<96x128xf32> to vector<96x128xbf16>
      %c19_348 = arith.constant 19 : index
      %c0_349 = arith.constant 0 : index
      %c0_350 = arith.constant 0 : index
      %649 = vector.load %arg6[%c19_348, %c0_349, %c0_350] : memref<25x128x128xbf16, #tpu.memory_space<vmem>>, vector<1x128x128xbf16>
      %650 = vector.shape_cast %649 : vector<1x128x128xbf16> to vector<128x128xbf16>
      %cst_351 = arith.constant dense<0.000000e+00> : vector<96x128xf32>
      %651 = tpu.matmul %648, %650, %cst_351 {dimension_numbers = #tpu.dot_dimension_numbers<[1], [0], [0], [1], [0, 0, 1, 1], [], []>} : vector<96x128xbf16>, vector<128x128xbf16>, vector<96x128xf32> -> vector<96x128xf32>
      %652 = arith.addf %643, %651 : vector<96x128xf32>
      %c384_i32_352 = arith.constant 384 : i32
      %653 = arith.addi %473, %c384_i32_352 : i32
      %654 = tpu.assume_multiple %653, 8 : i32
      %655 = arith.index_cast %654 : i32 to index
      %c0_353 = arith.constant 0 : index
      %656 = vector.load %arg15[%655, %c0_353] : memref<1184x128xf32, #tpu.memory_space<vmem>>, vector<96x128xf32>
      %657 = arith.truncf %656 : vector<96x128xf32> to vector<96x128xbf16>
      %c20_354 = arith.constant 20 : index
      %c0_355 = arith.constant 0 : index
      %c0_356 = arith.constant 0 : index
      %658 = vector.load %arg6[%c20_354, %c0_355, %c0_356] : memref<25x128x128xbf16, #tpu.memory_space<vmem>>, vector<1x128x128xbf16>
      %659 = vector.shape_cast %658 : vector<1x128x128xbf16> to vector<128x128xbf16>
      %cst_357 = arith.constant dense<0.000000e+00> : vector<96x128xf32>
      %660 = tpu.matmul %657, %659, %cst_357 {dimension_numbers = #tpu.dot_dimension_numbers<[1], [0], [0], [1], [0, 0, 1, 1], [], []>} : vector<96x128xbf16>, vector<128x128xbf16>, vector<96x128xf32> -> vector<96x128xf32>
      %661 = arith.addf %652, %660 : vector<96x128xf32>
      %c392_i32_358 = arith.constant 392 : i32
      %662 = arith.addi %473, %c392_i32_358 : i32
      %663 = tpu.assume_multiple %662, 8 : i32
      %664 = arith.index_cast %663 : i32 to index
      %c0_359 = arith.constant 0 : index
      %665 = vector.load %arg15[%664, %c0_359] : memref<1184x128xf32, #tpu.memory_space<vmem>>, vector<96x128xf32>
      %666 = arith.truncf %665 : vector<96x128xf32> to vector<96x128xbf16>
      %c21_360 = arith.constant 21 : index
      %c0_361 = arith.constant 0 : index
      %c0_362 = arith.constant 0 : index
      %667 = vector.load %arg6[%c21_360, %c0_361, %c0_362] : memref<25x128x128xbf16, #tpu.memory_space<vmem>>, vector<1x128x128xbf16>
      %668 = vector.shape_cast %667 : vector<1x128x128xbf16> to vector<128x128xbf16>
      %cst_363 = arith.constant dense<0.000000e+00> : vector<96x128xf32>
      %669 = tpu.matmul %666, %668, %cst_363 {dimension_numbers = #tpu.dot_dimension_numbers<[1], [0], [0], [1], [0, 0, 1, 1], [], []>} : vector<96x128xbf16>, vector<128x128xbf16>, vector<96x128xf32> -> vector<96x128xf32>
      %670 = arith.addf %661, %669 : vector<96x128xf32>
      %c400_i32_364 = arith.constant 400 : i32
      %671 = arith.addi %473, %c400_i32_364 : i32
      %672 = tpu.assume_multiple %671, 8 : i32
      %673 = arith.index_cast %672 : i32 to index
      %c0_365 = arith.constant 0 : index
      %674 = vector.load %arg15[%673, %c0_365] : memref<1184x128xf32, #tpu.memory_space<vmem>>, vector<96x128xf32>
      %675 = arith.truncf %674 : vector<96x128xf32> to vector<96x128xbf16>
      %c22_366 = arith.constant 22 : index
      %c0_367 = arith.constant 0 : index
      %c0_368 = arith.constant 0 : index
      %676 = vector.load %arg6[%c22_366, %c0_367, %c0_368] : memref<25x128x128xbf16, #tpu.memory_space<vmem>>, vector<1x128x128xbf16>
      %677 = vector.shape_cast %676 : vector<1x128x128xbf16> to vector<128x128xbf16>
      %cst_369 = arith.constant dense<0.000000e+00> : vector<96x128xf32>
      %678 = tpu.matmul %675, %677, %cst_369 {dimension_numbers = #tpu.dot_dimension_numbers<[1], [0], [0], [1], [0, 0, 1, 1], [], []>} : vector<96x128xbf16>, vector<128x128xbf16>, vector<96x128xf32> -> vector<96x128xf32>
      %679 = arith.addf %670, %678 : vector<96x128xf32>
      %c408_i32_370 = arith.constant 408 : i32
      %680 = arith.addi %473, %c408_i32_370 : i32
      %681 = tpu.assume_multiple %680, 8 : i32
      %682 = arith.index_cast %681 : i32 to index
      %c0_371 = arith.constant 0 : index
      %683 = vector.load %arg15[%682, %c0_371] : memref<1184x128xf32, #tpu.memory_space<vmem>>, vector<96x128xf32>
      %684 = arith.truncf %683 : vector<96x128xf32> to vector<96x128xbf16>
      %c23_372 = arith.constant 23 : index
      %c0_373 = arith.constant 0 : index
      %c0_374 = arith.constant 0 : index
      %685 = vector.load %arg6[%c23_372, %c0_373, %c0_374] : memref<25x128x128xbf16, #tpu.memory_space<vmem>>, vector<1x128x128xbf16>
      %686 = vector.shape_cast %685 : vector<1x128x128xbf16> to vector<128x128xbf16>
      %cst_375 = arith.constant dense<0.000000e+00> : vector<96x128xf32>
      %687 = tpu.matmul %684, %686, %cst_375 {dimension_numbers = #tpu.dot_dimension_numbers<[1], [0], [0], [1], [0, 0, 1, 1], [], []>} : vector<96x128xbf16>, vector<128x128xbf16>, vector<96x128xf32> -> vector<96x128xf32>
      %688 = arith.addf %679, %687 : vector<96x128xf32>
      %c416_i32_376 = arith.constant 416 : i32
      %689 = arith.addi %473, %c416_i32_376 : i32
      %690 = tpu.assume_multiple %689, 8 : i32
      %691 = arith.index_cast %690 : i32 to index
      %c0_377 = arith.constant 0 : index
      %692 = vector.load %arg15[%691, %c0_377] : memref<1184x128xf32, #tpu.memory_space<vmem>>, vector<96x128xf32>
      %693 = arith.truncf %692 : vector<96x128xf32> to vector<96x128xbf16>
      %c24_378 = arith.constant 24 : index
      %c0_379 = arith.constant 0 : index
      %c0_380 = arith.constant 0 : index
      %694 = vector.load %arg6[%c24_378, %c0_379, %c0_380] : memref<25x128x128xbf16, #tpu.memory_space<vmem>>, vector<1x128x128xbf16>
      %695 = vector.shape_cast %694 : vector<1x128x128xbf16> to vector<128x128xbf16>
      %cst_381 = arith.constant dense<0.000000e+00> : vector<96x128xf32>
      %696 = tpu.matmul %693, %695, %cst_381 {dimension_numbers = #tpu.dot_dimension_numbers<[1], [0], [0], [1], [0, 0, 1, 1], [], []>} : vector<96x128xbf16>, vector<128x128xbf16>, vector<96x128xf32> -> vector<96x128xf32>
      %697 = arith.addf %688, %696 : vector<96x128xf32>
      %698 = vector.extract_strided_slice %697 {offsets = [0, 0], sizes = [8, 128], strides = [1, 1]} : vector<96x128xf32> to vector<8x128xf32>
      %699 = vector.extract_strided_slice %697 {offsets = [8, 0], sizes = [8, 128], strides = [1, 1]} : vector<96x128xf32> to vector<8x128xf32>
      %700 = arith.maximumf %698, %699 : vector<8x128xf32>
      %701 = vector.extract_strided_slice %697 {offsets = [16, 0], sizes = [8, 128], strides = [1, 1]} : vector<96x128xf32> to vector<8x128xf32>
      %702 = vector.extract_strided_slice %697 {offsets = [24, 0], sizes = [8, 128], strides = [1, 1]} : vector<96x128xf32> to vector<8x128xf32>
      %703 = arith.maximumf %701, %702 : vector<8x128xf32>
      %704 = vector.extract_strided_slice %697 {offsets = [32, 0], sizes = [8, 128], strides = [1, 1]} : vector<96x128xf32> to vector<8x128xf32>
      %705 = vector.extract_strided_slice %697 {offsets = [40, 0], sizes = [8, 128], strides = [1, 1]} : vector<96x128xf32> to vector<8x128xf32>
      %706 = arith.maximumf %704, %705 : vector<8x128xf32>
      %707 = vector.extract_strided_slice %697 {offsets = [48, 0], sizes = [8, 128], strides = [1, 1]} : vector<96x128xf32> to vector<8x128xf32>
      %708 = vector.extract_strided_slice %697 {offsets = [56, 0], sizes = [8, 128], strides = [1, 1]} : vector<96x128xf32> to vector<8x128xf32>
      %709 = arith.maximumf %707, %708 : vector<8x128xf32>
      %710 = tpu.concatenate %700, %703, %706, %709 in 0 : vector<8x128xf32>, vector<8x128xf32>, vector<8x128xf32>, vector<8x128xf32> -> vector<32x128xf32>
      %711 = arith.maximumf %469, %710 : vector<32x128xf32>
      %c0_382 = arith.constant 0 : index
      %c0_383 = arith.constant 0 : index
      %712 = vector.load %arg7[%c0_382, %c0_383] : memref<1x128xf32, #tpu.memory_space<vmem>>, vector<1x128xf32>
      %713 = vector.broadcast %712 : vector<1x128xf32> to vector<32x128xf32>
      %714 = arith.addf %711, %713 : vector<32x128xf32>
      %cst_384 = arith.constant 0.000000e+00 : f32
      %715 = vector.broadcast %cst_384 : f32 to vector<32x128xf32>
      %716 = arith.maximumf %714, %715 : vector<32x128xf32>
      %717 = arith.mulf %716, %22 : vector<32x128xf32>
      %c4_i32_385 = arith.constant 4 : i32
      %718 = arith.muli %arg17, %c4_i32_385 : i32
      %c8_i32_386 = arith.constant 8 : i32
      %719 = arith.muli %718, %c8_i32_386 : i32
      %720 = tpu.assume_multiple %719, 8 : i32
      %721 = arith.index_cast %720 : i32 to index
      %c0_387 = arith.constant 0 : index
      %722 = vector.load %arg16[%721, %c0_387] : memref<128x128xf32, #tpu.memory_space<vmem>>, vector<32x128xf32>
      tpu.vector_store %arg16[%721, %c0_387], %717 {strides = array<i32>} : memref<128x128xf32, #tpu.memory_space<vmem>>, vector<32x128xf32>,
      %cst_388 = arith.constant dense<0.000000e+00> : vector<128xf32>
      %723 = vector.multi_reduction <add>, %717, %cst_388 [0] : vector<32x128xf32> to vector<128xf32>
      %724 = vector.shape_cast %723 : vector<128xf32> to vector<1x128xf32>
      %725 = arith.addf %arg18, %724 : vector<1x128xf32>
      %726 = arith.mulf %717, %717 : vector<32x128xf32>
      %cst_389 = arith.constant dense<0.000000e+00> : vector<128xf32>
      %727 = vector.multi_reduction <add>, %726, %cst_389 [0] : vector<32x128xf32> to vector<128xf32>
      %728 = vector.shape_cast %727 : vector<128xf32> to vector<1x128xf32>
      %729 = arith.addf %arg19, %728 : vector<1x128xf32>
      scf.yield %725, %729 : vector<1x128xf32>, vector<1x128xf32>
    }
    %c4_i32_18 = arith.constant 4 : i32
    %cst_19 = arith.constant 3.125000e-02 : f32
    %25 = vector.broadcast %cst_19 : f32 to vector<1x128xf32>
    %26 = arith.mulf %24#0, %25 : vector<1x128xf32>
    %cst_20 = arith.constant 3.125000e-02 : f32
    %27 = vector.broadcast %cst_20 : f32 to vector<1x128xf32>
    %28 = arith.mulf %24#1, %27 : vector<1x128xf32>
    %29 = arith.mulf %26, %26 : vector<1x128xf32>
    %30 = arith.subf %28, %29 : vector<1x128xf32>
    %cst_21 = arith.constant 0.000000e+00 : f32
    %31 = vector.broadcast %cst_21 : f32 to vector<1x128xf32>
    %32 = arith.maximumf %30, %31 : vector<1x128xf32>
    %cst_22 = arith.constant 9.99999974E-6 : f32
    %33 = vector.broadcast %cst_22 : f32 to vector<1x128xf32>
    %34 = arith.addf %32, %33 : vector<1x128xf32>
    %35 = math.rsqrt %34 : vector<1x128xf32>
    %c0_23 = arith.constant 0 : index
    %c0_24 = arith.constant 0 : index
    %36 = vector.load %arg8[%c0_23, %c0_24] : memref<1x128xf32, #tpu.memory_space<vmem>>, vector<1x128xf32>
    %37 = arith.mulf %35, %36 : vector<1x128xf32>
    %c0_25 = arith.constant 0 : index
    %c0_26 = arith.constant 0 : index
    %38 = vector.load %arg9[%c0_25, %c0_26] : memref<1x128xf32, #tpu.memory_space<vmem>>, vector<1x128xf32>
    %39 = arith.mulf %26, %37 : vector<1x128xf32>
    %40 = arith.subf %38, %39 : vector<1x128xf32>
    %cst_27 = arith.constant 0.000000e+00 : f32
    %41 = vector.broadcast %cst_27 : f32 to vector<8x128xf32>
    %c0_28 = arith.constant 0 : index
    %c0_29 = arith.constant 0 : index
    %42 = vector.load %arg16[%c0_28, %c0_29] : memref<128x128xf32, #tpu.memory_space<vmem>>, vector<8x128xf32>
    %43 = vector.broadcast %37 : vector<1x128xf32> to vector<8x128xf32>
    %44 = arith.mulf %42, %43 : vector<8x128xf32>
    %45 = vector.broadcast %40 : vector<1x128xf32> to vector<8x128xf32>
    %46 = arith.addf %44, %45 : vector<8x128xf32>
    %47 = arith.truncf %46 : vector<8x128xf32> to vector<8x128xbf16>
    %c0_30 = arith.constant 0 : index
    %c0_31 = arith.constant 0 : index
    %c0_32 = arith.constant 0 : index
    %48 = vector.load %arg10[%c0_30, %c0_31, %c0_32] : memref<16x128x128xbf16, #tpu.memory_space<vmem>>, vector<1x128x128xbf16>
    %49 = vector.shape_cast %48 : vector<1x128x128xbf16> to vector<128x128xbf16>
    %cst_33 = arith.constant dense<0.000000e+00> : vector<8x128xf32>
    %50 = tpu.matmul %47, %49, %cst_33 {dimension_numbers = #tpu.dot_dimension_numbers<[1], [0], [0], [1], [0, 0, 1, 1], [], []>} : vector<8x128xbf16>, vector<128x128xbf16>, vector<8x128xf32> -> vector<8x128xf32>
    %51 = arith.addf %41, %50 : vector<8x128xf32>
    %c8 = arith.constant 8 : index
    %c0_34 = arith.constant 0 : index
    %52 = vector.load %arg16[%c8, %c0_34] : memref<128x128xf32, #tpu.memory_space<vmem>>, vector<8x128xf32>
    %53 = vector.broadcast %37 : vector<1x128xf32> to vector<8x128xf32>
    %54 = arith.mulf %52, %53 : vector<8x128xf32>
    %55 = vector.broadcast %40 : vector<1x128xf32> to vector<8x128xf32>
    %56 = arith.addf %54, %55 : vector<8x128xf32>
    %57 = arith.truncf %56 : vector<8x128xf32> to vector<8x128xbf16>
    %c1 = arith.constant 1 : index
    %c0_35 = arith.constant 0 : index
    %c0_36 = arith.constant 0 : index
    %58 = vector.load %arg10[%c1, %c0_35, %c0_36] : memref<16x128x128xbf16, #tpu.memory_space<vmem>>, vector<1x128x128xbf16>
    %59 = vector.shape_cast %58 : vector<1x128x128xbf16> to vector<128x128xbf16>
    %cst_37 = arith.constant dense<0.000000e+00> : vector<8x128xf32>
    %60 = tpu.matmul %57, %59, %cst_37 {dimension_numbers = #tpu.dot_dimension_numbers<[1], [0], [0], [1], [0, 0, 1, 1], [], []>} : vector<8x128xbf16>, vector<128x128xbf16>, vector<8x128xf32> -> vector<8x128xf32>
    %61 = arith.addf %51, %60 : vector<8x128xf32>
    %c16 = arith.constant 16 : index
    %c0_38 = arith.constant 0 : index
    %62 = vector.load %arg16[%c16, %c0_38] : memref<128x128xf32, #tpu.memory_space<vmem>>, vector<8x128xf32>
    %63 = vector.broadcast %37 : vector<1x128xf32> to vector<8x128xf32>
    %64 = arith.mulf %62, %63 : vector<8x128xf32>
    %65 = vector.broadcast %40 : vector<1x128xf32> to vector<8x128xf32>
    %66 = arith.addf %64, %65 : vector<8x128xf32>
    %67 = arith.truncf %66 : vector<8x128xf32> to vector<8x128xbf16>
    %c2 = arith.constant 2 : index
    %c0_39 = arith.constant 0 : index
    %c0_40 = arith.constant 0 : index
    %68 = vector.load %arg10[%c2, %c0_39, %c0_40] : memref<16x128x128xbf16, #tpu.memory_space<vmem>>, vector<1x128x128xbf16>
    %69 = vector.shape_cast %68 : vector<1x128x128xbf16> to vector<128x128xbf16>
    %cst_41 = arith.constant dense<0.000000e+00> : vector<8x128xf32>
    %70 = tpu.matmul %67, %69, %cst_41 {dimension_numbers = #tpu.dot_dimension_numbers<[1], [0], [0], [1], [0, 0, 1, 1], [], []>} : vector<8x128xbf16>, vector<128x128xbf16>, vector<8x128xf32> -> vector<8x128xf32>
    %71 = arith.addf %61, %70 : vector<8x128xf32>
    %c24 = arith.constant 24 : index
    %c0_42 = arith.constant 0 : index
    %72 = vector.load %arg16[%c24, %c0_42] : memref<128x128xf32, #tpu.memory_space<vmem>>, vector<8x128xf32>
    %73 = vector.broadcast %37 : vector<1x128xf32> to vector<8x128xf32>
    %74 = arith.mulf %72, %73 : vector<8x128xf32>
    %75 = vector.broadcast %40 : vector<1x128xf32> to vector<8x128xf32>
    %76 = arith.addf %74, %75 : vector<8x128xf32>
    %77 = arith.truncf %76 : vector<8x128xf32> to vector<8x128xbf16>
    %c3 = arith.constant 3 : index
    %c0_43 = arith.constant 0 : index
    %c0_44 = arith.constant 0 : index
    %78 = vector.load %arg10[%c3, %c0_43, %c0_44] : memref<16x128x128xbf16, #tpu.memory_space<vmem>>, vector<1x128x128xbf16>
    %79 = vector.shape_cast %78 : vector<1x128x128xbf16> to vector<128x128xbf16>
    %cst_45 = arith.constant dense<0.000000e+00> : vector<8x128xf32>
    %80 = tpu.matmul %77, %79, %cst_45 {dimension_numbers = #tpu.dot_dimension_numbers<[1], [0], [0], [1], [0, 0, 1, 1], [], []>} : vector<8x128xbf16>, vector<128x128xbf16>, vector<8x128xf32> -> vector<8x128xf32>
    %81 = arith.addf %71, %80 : vector<8x128xf32>
    %c32 = arith.constant 32 : index
    %c0_46 = arith.constant 0 : index
    %82 = vector.load %arg16[%c32, %c0_46] : memref<128x128xf32, #tpu.memory_space<vmem>>, vector<8x128xf32>
    %83 = vector.broadcast %37 : vector<1x128xf32> to vector<8x128xf32>
    %84 = arith.mulf %82, %83 : vector<8x128xf32>
    %85 = vector.broadcast %40 : vector<1x128xf32> to vector<8x128xf32>
    %86 = arith.addf %84, %85 : vector<8x128xf32>
    %87 = arith.truncf %86 : vector<8x128xf32> to vector<8x128xbf16>
    %c4 = arith.constant 4 : index
    %c0_47 = arith.constant 0 : index
    %c0_48 = arith.constant 0 : index
    %88 = vector.load %arg10[%c4, %c0_47, %c0_48] : memref<16x128x128xbf16, #tpu.memory_space<vmem>>, vector<1x128x128xbf16>
    %89 = vector.shape_cast %88 : vector<1x128x128xbf16> to vector<128x128xbf16>
    %cst_49 = arith.constant dense<0.000000e+00> : vector<8x128xf32>
    %90 = tpu.matmul %87, %89, %cst_49 {dimension_numbers = #tpu.dot_dimension_numbers<[1], [0], [0], [1], [0, 0, 1, 1], [], []>} : vector<8x128xbf16>, vector<128x128xbf16>, vector<8x128xf32> -> vector<8x128xf32>
    %91 = arith.addf %81, %90 : vector<8x128xf32>
    %c40 = arith.constant 40 : index
    %c0_50 = arith.constant 0 : index
    %92 = vector.load %arg16[%c40, %c0_50] : memref<128x128xf32, #tpu.memory_space<vmem>>, vector<8x128xf32>
    %93 = vector.broadcast %37 : vector<1x128xf32> to vector<8x128xf32>
    %94 = arith.mulf %92, %93 : vector<8x128xf32>
    %95 = vector.broadcast %40 : vector<1x128xf32> to vector<8x128xf32>
    %96 = arith.addf %94, %95 : vector<8x128xf32>
    %97 = arith.truncf %96 : vector<8x128xf32> to vector<8x128xbf16>
    %c5 = arith.constant 5 : index
    %c0_51 = arith.constant 0 : index
    %c0_52 = arith.constant 0 : index
    %98 = vector.load %arg10[%c5, %c0_51, %c0_52] : memref<16x128x128xbf16, #tpu.memory_space<vmem>>, vector<1x128x128xbf16>
    %99 = vector.shape_cast %98 : vector<1x128x128xbf16> to vector<128x128xbf16>
    %cst_53 = arith.constant dense<0.000000e+00> : vector<8x128xf32>
    %100 = tpu.matmul %97, %99, %cst_53 {dimension_numbers = #tpu.dot_dimension_numbers<[1], [0], [0], [1], [0, 0, 1, 1], [], []>} : vector<8x128xbf16>, vector<128x128xbf16>, vector<8x128xf32> -> vector<8x128xf32>
    %101 = arith.addf %91, %100 : vector<8x128xf32>
    %c48 = arith.constant 48 : index
    %c0_54 = arith.constant 0 : index
    %102 = vector.load %arg16[%c48, %c0_54] : memref<128x128xf32, #tpu.memory_space<vmem>>, vector<8x128xf32>
    %103 = vector.broadcast %37 : vector<1x128xf32> to vector<8x128xf32>
    %104 = arith.mulf %102, %103 : vector<8x128xf32>
    %105 = vector.broadcast %40 : vector<1x128xf32> to vector<8x128xf32>
    %106 = arith.addf %104, %105 : vector<8x128xf32>
    %107 = arith.truncf %106 : vector<8x128xf32> to vector<8x128xbf16>
    %c6 = arith.constant 6 : index
    %c0_55 = arith.constant 0 : index
    %c0_56 = arith.constant 0 : index
    %108 = vector.load %arg10[%c6, %c0_55, %c0_56] : memref<16x128x128xbf16, #tpu.memory_space<vmem>>, vector<1x128x128xbf16>
    %109 = vector.shape_cast %108 : vector<1x128x128xbf16> to vector<128x128xbf16>
    %cst_57 = arith.constant dense<0.000000e+00> : vector<8x128xf32>
    %110 = tpu.matmul %107, %109, %cst_57 {dimension_numbers = #tpu.dot_dimension_numbers<[1], [0], [0], [1], [0, 0, 1, 1], [], []>} : vector<8x128xbf16>, vector<128x128xbf16>, vector<8x128xf32> -> vector<8x128xf32>
    %111 = arith.addf %101, %110 : vector<8x128xf32>
    %c56 = arith.constant 56 : index
    %c0_58 = arith.constant 0 : index
    %112 = vector.load %arg16[%c56, %c0_58] : memref<128x128xf32, #tpu.memory_space<vmem>>, vector<8x128xf32>
    %113 = vector.broadcast %37 : vector<1x128xf32> to vector<8x128xf32>
    %114 = arith.mulf %112, %113 : vector<8x128xf32>
    %115 = vector.broadcast %40 : vector<1x128xf32> to vector<8x128xf32>
    %116 = arith.addf %114, %115 : vector<8x128xf32>
    %117 = arith.truncf %116 : vector<8x128xf32> to vector<8x128xbf16>
    %c7 = arith.constant 7 : index
    %c0_59 = arith.constant 0 : index
    %c0_60 = arith.constant 0 : index
    %118 = vector.load %arg10[%c7, %c0_59, %c0_60] : memref<16x128x128xbf16, #tpu.memory_space<vmem>>, vector<1x128x128xbf16>
    %119 = vector.shape_cast %118 : vector<1x128x128xbf16> to vector<128x128xbf16>
    %cst_61 = arith.constant dense<0.000000e+00> : vector<8x128xf32>
    %120 = tpu.matmul %117, %119, %cst_61 {dimension_numbers = #tpu.dot_dimension_numbers<[1], [0], [0], [1], [0, 0, 1, 1], [], []>} : vector<8x128xbf16>, vector<128x128xbf16>, vector<8x128xf32> -> vector<8x128xf32>
    %121 = arith.addf %111, %120 : vector<8x128xf32>
    %c64 = arith.constant 64 : index
    %c0_62 = arith.constant 0 : index
    %122 = vector.load %arg16[%c64, %c0_62] : memref<128x128xf32, #tpu.memory_space<vmem>>, vector<8x128xf32>
    %123 = vector.broadcast %37 : vector<1x128xf32> to vector<8x128xf32>
    %124 = arith.mulf %122, %123 : vector<8x128xf32>
    %125 = vector.broadcast %40 : vector<1x128xf32> to vector<8x128xf32>
    %126 = arith.addf %124, %125 : vector<8x128xf32>
    %127 = arith.truncf %126 : vector<8x128xf32> to vector<8x128xbf16>
    %c8_63 = arith.constant 8 : index
    %c0_64 = arith.constant 0 : index
    %c0_65 = arith.constant 0 : index
    %128 = vector.load %arg10[%c8_63, %c0_64, %c0_65] : memref<16x128x128xbf16, #tpu.memory_space<vmem>>, vector<1x128x128xbf16>
    %129 = vector.shape_cast %128 : vector<1x128x128xbf16> to vector<128x128xbf16>
    %cst_66 = arith.constant dense<0.000000e+00> : vector<8x128xf32>
    %130 = tpu.matmul %127, %129, %cst_66 {dimension_numbers = #tpu.dot_dimension_numbers<[1], [0], [0], [1], [0, 0, 1, 1], [], []>} : vector<8x128xbf16>, vector<128x128xbf16>, vector<8x128xf32> -> vector<8x128xf32>
    %131 = arith.addf %121, %130 : vector<8x128xf32>
    %c72 = arith.constant 72 : index
    %c0_67 = arith.constant 0 : index
    %132 = vector.load %arg16[%c72, %c0_67] : memref<128x128xf32, #tpu.memory_space<vmem>>, vector<8x128xf32>
    %133 = vector.broadcast %37 : vector<1x128xf32> to vector<8x128xf32>
    %134 = arith.mulf %132, %133 : vector<8x128xf32>
    %135 = vector.broadcast %40 : vector<1x128xf32> to vector<8x128xf32>
    %136 = arith.addf %134, %135 : vector<8x128xf32>
    %137 = arith.truncf %136 : vector<8x128xf32> to vector<8x128xbf16>
    %c9 = arith.constant 9 : index
    %c0_68 = arith.constant 0 : index
    %c0_69 = arith.constant 0 : index
    %138 = vector.load %arg10[%c9, %c0_68, %c0_69] : memref<16x128x128xbf16, #tpu.memory_space<vmem>>, vector<1x128x128xbf16>
    %139 = vector.shape_cast %138 : vector<1x128x128xbf16> to vector<128x128xbf16>
    %cst_70 = arith.constant dense<0.000000e+00> : vector<8x128xf32>
    %140 = tpu.matmul %137, %139, %cst_70 {dimension_numbers = #tpu.dot_dimension_numbers<[1], [0], [0], [1], [0, 0, 1, 1], [], []>} : vector<8x128xbf16>, vector<128x128xbf16>, vector<8x128xf32> -> vector<8x128xf32>
    %141 = arith.addf %131, %140 : vector<8x128xf32>
    %c80 = arith.constant 80 : index
    %c0_71 = arith.constant 0 : index
    %142 = vector.load %arg16[%c80, %c0_71] : memref<128x128xf32, #tpu.memory_space<vmem>>, vector<8x128xf32>
    %143 = vector.broadcast %37 : vector<1x128xf32> to vector<8x128xf32>
    %144 = arith.mulf %142, %143 : vector<8x128xf32>
    %145 = vector.broadcast %40 : vector<1x128xf32> to vector<8x128xf32>
    %146 = arith.addf %144, %145 : vector<8x128xf32>
    %147 = arith.truncf %146 : vector<8x128xf32> to vector<8x128xbf16>
    %c10 = arith.constant 10 : index
    %c0_72 = arith.constant 0 : index
    %c0_73 = arith.constant 0 : index
    %148 = vector.load %arg10[%c10, %c0_72, %c0_73] : memref<16x128x128xbf16, #tpu.memory_space<vmem>>, vector<1x128x128xbf16>
    %149 = vector.shape_cast %148 : vector<1x128x128xbf16> to vector<128x128xbf16>
    %cst_74 = arith.constant dense<0.000000e+00> : vector<8x128xf32>
    %150 = tpu.matmul %147, %149, %cst_74 {dimension_numbers = #tpu.dot_dimension_numbers<[1], [0], [0], [1], [0, 0, 1, 1], [], []>} : vector<8x128xbf16>, vector<128x128xbf16>, vector<8x128xf32> -> vector<8x128xf32>
    %151 = arith.addf %141, %150 : vector<8x128xf32>
    %c88 = arith.constant 88 : index
    %c0_75 = arith.constant 0 : index
    %152 = vector.load %arg16[%c88, %c0_75] : memref<128x128xf32, #tpu.memory_space<vmem>>, vector<8x128xf32>
    %153 = vector.broadcast %37 : vector<1x128xf32> to vector<8x128xf32>
    %154 = arith.mulf %152, %153 : vector<8x128xf32>
    %155 = vector.broadcast %40 : vector<1x128xf32> to vector<8x128xf32>
    %156 = arith.addf %154, %155 : vector<8x128xf32>
    %157 = arith.truncf %156 : vector<8x128xf32> to vector<8x128xbf16>
    %c11 = arith.constant 11 : index
    %c0_76 = arith.constant 0 : index
    %c0_77 = arith.constant 0 : index
    %158 = vector.load %arg10[%c11, %c0_76, %c0_77] : memref<16x128x128xbf16, #tpu.memory_space<vmem>>, vector<1x128x128xbf16>
    %159 = vector.shape_cast %158 : vector<1x128x128xbf16> to vector<128x128xbf16>
    %cst_78 = arith.constant dense<0.000000e+00> : vector<8x128xf32>
    %160 = tpu.matmul %157, %159, %cst_78 {dimension_numbers = #tpu.dot_dimension_numbers<[1], [0], [0], [1], [0, 0, 1, 1], [], []>} : vector<8x128xbf16>, vector<128x128xbf16>, vector<8x128xf32> -> vector<8x128xf32>
    %161 = arith.addf %151, %160 : vector<8x128xf32>
    %c96 = arith.constant 96 : index
    %c0_79 = arith.constant 0 : index
    %162 = vector.load %arg16[%c96, %c0_79] : memref<128x128xf32, #tpu.memory_space<vmem>>, vector<8x128xf32>
    %163 = vector.broadcast %37 : vector<1x128xf32> to vector<8x128xf32>
    %164 = arith.mulf %162, %163 : vector<8x128xf32>
    %165 = vector.broadcast %40 : vector<1x128xf32> to vector<8x128xf32>
    %166 = arith.addf %164, %165 : vector<8x128xf32>
    %167 = arith.truncf %166 : vector<8x128xf32> to vector<8x128xbf16>
    %c12 = arith.constant 12 : index
    %c0_80 = arith.constant 0 : index
    %c0_81 = arith.constant 0 : index
    %168 = vector.load %arg10[%c12, %c0_80, %c0_81] : memref<16x128x128xbf16, #tpu.memory_space<vmem>>, vector<1x128x128xbf16>
    %169 = vector.shape_cast %168 : vector<1x128x128xbf16> to vector<128x128xbf16>
    %cst_82 = arith.constant dense<0.000000e+00> : vector<8x128xf32>
    %170 = tpu.matmul %167, %169, %cst_82 {dimension_numbers = #tpu.dot_dimension_numbers<[1], [0], [0], [1], [0, 0, 1, 1], [], []>} : vector<8x128xbf16>, vector<128x128xbf16>, vector<8x128xf32> -> vector<8x128xf32>
    %171 = arith.addf %161, %170 : vector<8x128xf32>
    %c104 = arith.constant 104 : index
    %c0_83 = arith.constant 0 : index
    %172 = vector.load %arg16[%c104, %c0_83] : memref<128x128xf32, #tpu.memory_space<vmem>>, vector<8x128xf32>
    %173 = vector.broadcast %37 : vector<1x128xf32> to vector<8x128xf32>
    %174 = arith.mulf %172, %173 : vector<8x128xf32>
    %175 = vector.broadcast %40 : vector<1x128xf32> to vector<8x128xf32>
    %176 = arith.addf %174, %175 : vector<8x128xf32>
    %177 = arith.truncf %176 : vector<8x128xf32> to vector<8x128xbf16>
    %c13 = arith.constant 13 : index
    %c0_84 = arith.constant 0 : index
    %c0_85 = arith.constant 0 : index
    %178 = vector.load %arg10[%c13, %c0_84, %c0_85] : memref<16x128x128xbf16, #tpu.memory_space<vmem>>, vector<1x128x128xbf16>
    %179 = vector.shape_cast %178 : vector<1x128x128xbf16> to vector<128x128xbf16>
    %cst_86 = arith.constant dense<0.000000e+00> : vector<8x128xf32>
    %180 = tpu.matmul %177, %179, %cst_86 {dimension_numbers = #tpu.dot_dimension_numbers<[1], [0], [0], [1], [0, 0, 1, 1], [], []>} : vector<8x128xbf16>, vector<128x128xbf16>, vector<8x128xf32> -> vector<8x128xf32>
    %181 = arith.addf %171, %180 : vector<8x128xf32>
    %c112 = arith.constant 112 : index
    %c0_87 = arith.constant 0 : index
    %182 = vector.load %arg16[%c112, %c0_87] : memref<128x128xf32, #tpu.memory_space<vmem>>, vector<8x128xf32>
    %183 = vector.broadcast %37 : vector<1x128xf32> to vector<8x128xf32>
    %184 = arith.mulf %182, %183 : vector<8x128xf32>
    %185 = vector.broadcast %40 : vector<1x128xf32> to vector<8x128xf32>
    %186 = arith.addf %184, %185 : vector<8x128xf32>
    %187 = arith.truncf %186 : vector<8x128xf32> to vector<8x128xbf16>
    %c14 = arith.constant 14 : index
    %c0_88 = arith.constant 0 : index
    %c0_89 = arith.constant 0 : index
    %188 = vector.load %arg10[%c14, %c0_88, %c0_89] : memref<16x128x128xbf16, #tpu.memory_space<vmem>>, vector<1x128x128xbf16>
    %189 = vector.shape_cast %188 : vector<1x128x128xbf16> to vector<128x128xbf16>
    %cst_90 = arith.constant dense<0.000000e+00> : vector<8x128xf32>
    %190 = tpu.matmul %187, %189, %cst_90 {dimension_numbers = #tpu.dot_dimension_numbers<[1], [0], [0], [1], [0, 0, 1, 1], [], []>} : vector<8x128xbf16>, vector<128x128xbf16>, vector<8x128xf32> -> vector<8x128xf32>
    %191 = arith.addf %181, %190 : vector<8x128xf32>
    %c120 = arith.constant 120 : index
    %c0_91 = arith.constant 0 : index
    %192 = vector.load %arg16[%c120, %c0_91] : memref<128x128xf32, #tpu.memory_space<vmem>>, vector<8x128xf32>
    %193 = vector.broadcast %37 : vector<1x128xf32> to vector<8x128xf32>
    %194 = arith.mulf %192, %193 : vector<8x128xf32>
    %195 = vector.broadcast %40 : vector<1x128xf32> to vector<8x128xf32>
    %196 = arith.addf %194, %195 : vector<8x128xf32>
    %197 = arith.truncf %196 : vector<8x128xf32> to vector<8x128xbf16>
    %c15 = arith.constant 15 : index
    %c0_92 = arith.constant 0 : index
    %c0_93 = arith.constant 0 : index
    %198 = vector.load %arg10[%c15, %c0_92, %c0_93] : memref<16x128x128xbf16, #tpu.memory_space<vmem>>, vector<1x128x128xbf16>
    %199 = vector.shape_cast %198 : vector<1x128x128xbf16> to vector<128x128xbf16>
    %cst_94 = arith.constant dense<0.000000e+00> : vector<8x128xf32>
    %200 = tpu.matmul %197, %199, %cst_94 {dimension_numbers = #tpu.dot_dimension_numbers<[1], [0], [0], [1], [0, 0, 1, 1], [], []>} : vector<8x128xbf16>, vector<128x128xbf16>, vector<8x128xf32> -> vector<8x128xf32>
    %201 = arith.addf %191, %200 : vector<8x128xf32>
    %c0_95 = arith.constant 0 : index
    %c0_96 = arith.constant 0 : index
    %202 = vector.load %arg11[%c0_95, %c0_96] : memref<1x128xf32, #tpu.memory_space<vmem>>, vector<1x128xf32>
    %203 = vector.broadcast %202 : vector<1x128xf32> to vector<8x128xf32>
    %204 = arith.addf %201, %203 : vector<8x128xf32>
    %cst_97 = arith.constant 0.000000e+00 : f32
    %205 = vector.broadcast %cst_97 : f32 to vector<8x128xf32>
    %206 = arith.maximumf %204, %205 : vector<8x128xf32>
    %207 = arith.truncf %206 : vector<8x128xf32> to vector<8x128xbf16>
    %c0_98 = arith.constant 0 : index
    %c0_99 = arith.constant 0 : index
    %208 = vector.load %arg12[%c0_98, %c0_99] : memref<128x128xbf16, #tpu.memory_space<vmem>>, vector<128x128xbf16>
    %cst_100 = arith.constant dense<0.000000e+00> : vector<8x128xf32>
    %209 = tpu.matmul %207, %208, %cst_100 {dimension_numbers = #tpu.dot_dimension_numbers<[1], [0], [0], [1], [0, 0, 1, 1], [], []>} : vector<8x128xbf16>, vector<128x128xbf16>, vector<8x128xf32> -> vector<8x128xf32>
    %c0_101 = arith.constant 0 : index
    %c0_102 = arith.constant 0 : index
    %210 = vector.load %arg13[%c0_101, %c0_102] : memref<1x128xf32, #tpu.memory_space<vmem>>, vector<1x128xf32>
    %211 = vector.broadcast %210 : vector<1x128xf32> to vector<8x128xf32>
    %212 = arith.addf %209, %211 : vector<8x128xf32>
    %213 = tpu.iota {dimensions = array<i32: 1>} : vector<8x128xi32>
    %c10_i32 = arith.constant 10 : i32
    %214 = vector.broadcast %c10_i32 : i32 to vector<8x128xi32>
    %215 = arith.cmpi slt, %213, %214 : vector<8x128xi32>
    %cst_103 = arith.constant -1.000000e+30 : f32
    %216 = vector.broadcast %cst_103 : f32 to vector<8x128xf32>
    %217 = arith.select %215, %212, %216 : vector<8x128xi1>, vector<8x128xf32>
    %cst_104 = arith.constant dense<0xFF800000> : vector<8xf32>
    %218 = vector.multi_reduction <maximumf>, %217, %cst_104 [1] : vector<8x128xf32> to vector<8xf32>
    %219 = vector.shape_cast %218 : vector<8xf32> to vector<8x1xf32>
    %220 = vector.broadcast %219 : vector<8x1xf32> to vector<8x128xf32>
    %221 = arith.subf %217, %220 : vector<8x128xf32>
    %222 = math.exp %221 : vector<8x128xf32>
    %cst_105 = arith.constant dense<0.000000e+00> : vector<8xf32>
    %223 = vector.multi_reduction <add>, %222, %cst_105 [1] : vector<8x128xf32> to vector<8xf32>
    %224 = vector.shape_cast %223 : vector<8xf32> to vector<8x1xf32>
    %225 = math.log %224 : vector<8x1xf32>
    %226 = vector.broadcast %225 : vector<8x1xf32> to vector<8x128xf32>
    %227 = arith.subf %221, %226 : vector<8x128xf32>
    %c0_106 = arith.constant 0 : index
    %c0_107 = arith.constant 0 : index
    %228 = vector.load %arg14[%c0_106, %c0_107] : memref<8x128xf32, #tpu.memory_space<vmem>>, vector<8x128xf32>
    tpu.vector_store %arg14[%c0_106, %c0_107], %227 {strides = array<i32>} : memref<8x128xf32, #tpu.memory_space<vmem>>, vector<8x128xf32>,
    return
  }
}

</mosaic_0001>

<llo_original>
// kernel: mnist_forward.1
$region0: #{mnist_forward.1}
  #allocation0 [shape = 'u32[]', space=smem, size = 0x4, offset = 0x4, fixed_abs, tag = 'smem constant byte address 0x4 - core index']
  #allocation1 [shape = 'u32[72,128]{1,0:T(1,128)}', space=vmem, size = 0x9000, scoped, tag = 'internal scratch']
  #allocation2 [shape = 'f32[1184,128]{1,0:T(8,128)}', space=vmem, size = 0x94000, scoped, tag = 'scratch operand']
  #allocation3 [shape = 'f32[128,128]{1,0:T(8,128)}', space=vmem, size = 0x10000, scoped, tag = 'scratch operand']
  %s0 = inlined_call_operand.vmem [shape: f32[64,128], index: 0, kind: input, shape index: {}]
  %s1 = inlined_call_operand.vmem [shape: bf16[4608,128], index: 1, kind: input, shape index: {}]
  %s2 = inlined_call_operand.vmem [shape: bf16[128,128], index: 2, kind: input, shape index: {}]
  %s3 = inlined_call_operand.vmem [shape: f32[1,128], index: 3, kind: input, shape index: {}]
  %s4 = inlined_call_operand.vmem [shape: f32[1,128], index: 4, kind: input, shape index: {}]
  %s5 = inlined_call_operand.vmem [shape: f32[1,128], index: 5, kind: input, shape index: {}]
  %s6 = inlined_call_operand.vmem [shape: bf16[25,128,128], index: 6, kind: input, shape index: {}]
  %s7 = inlined_call_operand.vmem [shape: f32[1,128], index: 7, kind: input, shape index: {}]
  %s8 = inlined_call_operand.vmem [shape: f32[1,128], index: 8, kind: input, shape index: {}]
  %s9 = inlined_call_operand.vmem [shape: f32[1,128], index: 9, kind: input, shape index: {}]
  %s10 = inlined_call_operand.vmem [shape: bf16[16,128,128], index: 10, kind: input, shape index: {}]
  %s11 = inlined_call_operand.vmem [shape: f32[1,128], index: 11, kind: input, shape index: {}]
  %s12 = inlined_call_operand.vmem [shape: bf16[128,128], index: 12, kind: input, shape index: {}]
  %s13 = inlined_call_operand.vmem [shape: f32[1,128], index: 13, kind: input, shape index: {}]
  %s14 = inlined_call_operand.vmem [shape: f32[8,128], index: 14, kind: output, shape index: {}]
  %s15 = sld [smem:[#allocation0]]
  $region87: #{mnist_forward.1} parent=0
    _
  %s17 = ssub.s32 1, %s15
  %s18 = scalar_select 0, %s17, %s15
  // Predicated region
  $region2: #{mnist_forward.1} parent=0 // pred_check
    _
  $region3: #{mnist_forward.1} parent=0 // pred_check_branch
    %20 = sbr.rel (0) target = $region5
  $region4: #{mnist_forward.1} parent=0 // pred_region
    _
  $region5: #{mnist_forward.1} parent=0 // pred_fallthru
    _
  // Predicated region
  $region6: #{mnist_forward.1} parent=0 // pred_check
    _
  $region7: #{mnist_forward.1} parent=0 // pred_check_branch
    %22 = sbr.rel (0) target = $region9
  $region8: #{mnist_forward.1} parent=0 // pred_region
    _
  $region9: #{mnist_forward.1} parent=0 // pred_fallthru
    _
  // Predicated region
  $region10: #{mnist_forward.1} parent=0 // pred_check
    _
  $region11: #{mnist_forward.1} parent=0 // pred_check_branch
    %24 = sbr.rel (0) target = $region13
  $region12: #{mnist_forward.1} parent=0 // pred_region
    _
  $region13: #{mnist_forward.1} parent=0 // pred_fallthru
    _
  // Predicated region
  $region14: #{mnist_forward.1} parent=0 // pred_check
    _
  $region15: #{mnist_forward.1} parent=0 // pred_check_branch
    %26 = sbr.rel (0) target = $region17
  $region16: #{mnist_forward.1} parent=0 // pred_region
    _
  $region17: #{mnist_forward.1} parent=0 // pred_fallthru
    _
  // Predicated region
  $region18: #{mnist_forward.1} parent=0 // pred_check
    _
  $region19: #{mnist_forward.1} parent=0 // pred_check_branch
    %28 = sbr.rel (0) target = $region21
  $region20: #{mnist_forward.1} parent=0 // pred_region
    _
  $region21: #{mnist_forward.1} parent=0 // pred_fallthru
    _
  // Predicated region
  $region22: #{mnist_forward.1} parent=0 // pred_check
    _
  $region23: #{mnist_forward.1} parent=0 // pred_check_branch
    %30 = sbr.rel (0) target = $region25
  $region24: #{mnist_forward.1} parent=0 // pred_region
    _
  $region25: #{mnist_forward.1} parent=0 // pred_fallthru
    _
  // Predicated region
  $region26: #{mnist_forward.1} parent=0 // pred_check
    _
  $region27: #{mnist_forward.1} parent=0 // pred_check_branch
    %32 = sbr.rel (0) target = $region29
  $region28: #{mnist_forward.1} parent=0 // pred_region
    _
  $region29: #{mnist_forward.1} parent=0 // pred_fallthru
    _
  // Predicated region
  $region30: #{mnist_forward.1} parent=0 // pred_check
    _
  $region31: #{mnist_forward.1} parent=0 // pred_check_branch
    %34 = sbr.rel (0) target = $region33
  $region32: #{mnist_forward.1} parent=0 // pred_region
    _
  $region33: #{mnist_forward.1} parent=0 // pred_fallthru
    _
  // Predicated region
  $region34: #{mnist_forward.1} parent=0 // pred_check
    _
  $region35: #{mnist_forward.1} parent=0 // pred_check_branch
    %36 = sbr.rel (0) target = $region37
  $region36: #{mnist_forward.1} parent=0 // pred_region
    _
  $region37: #{mnist_forward.1} parent=0 // pred_fallthru
    _
  // Predicated region
  $region38: #{mnist_forward.1} parent=0 // pred_check
    _
  $region39: #{mnist_forward.1} parent=0 // pred_check_branch
    %38 = sbr.rel (0) target = $region41
  $region40: #{mnist_forward.1} parent=0 // pred_region
    _
  $region41: #{mnist_forward.1} parent=0 // pred_fallthru
    _
  // Predicated region
  $region42: #{mnist_forward.1} parent=0 // pred_check
    _
  $region43: #{mnist_forward.1} parent=0 // pred_check_branch
    %40 = sbr.rel (0) target = $region45
  $region44: #{mnist_forward.1} parent=0 // pred_region
    _
  $region45: #{mnist_forward.1} parent=0 // pred_fallthru
    _
  // Predicated region
  $region46: #{mnist_forward.1} parent=0 // pred_check
    _
  $region47: #{mnist_forward.1} parent=0 // pred_check_branch
    %42 = sbr.rel (0) target = $region49
  $region48: #{mnist_forward.1} parent=0 // pred_region
    _
  $region49: #{mnist_forward.1} parent=0 // pred_fallthru
    _
  // Predicated region
  $region50: #{mnist_forward.1} parent=0 // pred_check
    _
  $region51: #{mnist_forward.1} parent=0 // pred_check_branch
    %44 = sbr.rel (0) target = $region53
  $region52: #{mnist_forward.1} parent=0 // pred_region
    _
  $region53: #{mnist_forward.1} parent=0 // pred_fallthru
    _
  // Predicated region
  $region54: #{mnist_forward.1} parent=0 // pred_check
    _
  $region55: #{mnist_forward.1} parent=0 // pred_check_branch
    %46 = sbr.rel (0) target = $region57
  $region56: #{mnist_forward.1} parent=0 // pred_region
    _
  $region57: #{mnist_forward.1} parent=0 // pred_fallthru
    _
  loop: start=0, step=1, limit=18
  $region58: #{mnist_forward.1} parent=0 // loop_pre_header
    _
  $region59: #{mnist_forward.1} parent=0 // loop_header
    %s48 = sphi 0, %s52
    %p49 = scmp.ge.s32.totalorder %s48, 18
    %v53 = vphi 0.0, %v465
    %v54 = vphi 0.0, %v487
  $region60: #{mnist_forward.1} parent=0 // loop_header_branch
    %51 = sbr.rel (%p49) target = $region64
  $region61: #{mnist_forward.1} parent=0 // loop_body
    %s55 = smul.u32 %s48, 64
    %s56 = sshra.s32 %s55, 3
    %s57 = sand.u32 %s55, 7
    %s58 = smul.addr %s56, 4
    %s59 = scalar_lea.vmem %s1, %s58
    %v60 = vld [vmem:[%s59] sm:$0xf]
    %v61 = vld [vmem:[%s59 + $0x4] sm:$0xf]
    %v62 = vld [vmem:[%s59 + $0x8] sm:$0xf]
    %v63 = vld [vmem:[%s59 + $0xc] sm:$0xf]
    %v64 = vld [vmem:[%s59 + $0x10] sm:$0xf]
    %v65 = vld [vmem:[%s59 + $0x14] sm:$0xf]
    %v66 = vld [vmem:[%s59 + $0x18] sm:$0xf]
    %v67 = vld [vmem:[%s59 + $0x1c] sm:$0xf]
    %v68 = vld [vmem:[%s2] sm:$0xf]
    %v69 = vld [vmem:[%s2 + $0x4] sm:$0xf]
    %v70 = vld [vmem:[%s2 + $0x8] sm:$0xf]
    %v71 = vld [vmem:[%s2 + $0xc] sm:$0xf]
    %v72 = vld [vmem:[%s2 + $0x10] sm:$0xf]
    %v73 = vld [vmem:[%s2 + $0x14] sm:$0xf]
    %v74 = vld [vmem:[%s2 + $0x18] sm:$0xf]
    %v75 = vld [vmem:[%s2 + $0x1c] sm:$0xf]
    %v76 = vld [vmem:[%s2 + $0x20] sm:$0xf]
    %v77 = vld [vmem:[%s2 + $0x24] sm:$0xf]
    %v78 = vld [vmem:[%s2 + $0x28] sm:$0xf]
    %v79 = vld [vmem:[%s2 + $0x2c] sm:$0xf]
    %v80 = vld [vmem:[%s2 + $0x30] sm:$0xf]
    %v81 = vld [vmem:[%s2 + $0x34] sm:$0xf]
    %v82 = vld [vmem:[%s2 + $0x38] sm:$0xf]
    %v83 = vld [vmem:[%s2 + $0x3c] sm:$0xf]
    %v92 = vunpack.c.l.b16 %v60
    %v93 = vunpack.c.l.b16 %v61
    %v94 = vunpack.c.l.b16 %v62
    %v95 = vunpack.c.l.b16 %v63
    %v96 = vunpack.c.l.b16 %v64
    %v97 = vunpack.c.l.b16 %v65
    %v98 = vunpack.c.l.b16 %v66
    %v99 = vunpack.c.l.b16 %v67
    %v100 = vpack.c.b16 %v93, %v92
    %v101 = vpack.c.b16 %v95, %v94
    %v102 = vpack.c.b16 %v97, %v96
    %v103 = vpack.c.b16 %v99, %v98
    %v124 = vunpack.c.l.b16 %v68
    %v125 = vunpack.c.l.b16 %v69
    %v126 = vunpack.c.l.b16 %v70
    %v127 = vunpack.c.l.b16 %v71
    %v128 = vunpack.c.l.b16 %v72
    %v129 = vunpack.c.l.b16 %v73
    %v130 = vunpack.c.l.b16 %v74
    %v131 = vunpack.c.l.b16 %v75
    %v132 = vunpack.c.l.b16 %v76
    %v133 = vunpack.c.l.b16 %v77
    %v134 = vunpack.c.l.b16 %v78
    %v135 = vunpack.c.l.b16 %v79
    %v136 = vunpack.c.l.b16 %v80
    %v137 = vunpack.c.l.b16 %v81
    %v138 = vunpack.c.l.b16 %v82
    %v139 = vunpack.c.l.b16 %v83
    %v140 = vpack.c.b16 %v125, %v124
    %v141 = vpack.c.b16 %v127, %v126
    %v142 = vpack.c.b16 %v129, %v128
    %v143 = vpack.c.b16 %v131, %v130
    %v144 = vpack.c.b16 %v133, %v132
    %v145 = vpack.c.b16 %v135, %v134
    %v146 = vpack.c.b16 %v137, %v136
    %v147 = vpack.c.b16 %v139, %v138
    %156 = vmatpush.bf16.msra.mxu0 %v147
    %157 = vmatpush.bf16.msra.mxu0 %v146
    %158 = vmatpush.bf16.msra.mxu0 %v145
    %159 = vmatpush.bf16.msra.mxu0 %v144
    %160 = vmatpush.bf16.msra.mxu0 %v143
    %161 = vmatpush.bf16.msra.mxu0 %v142
    %162 = vmatpush.bf16.msra.mxu0 %v141
    %163 = vmatpush.bf16.msra.mxu0 %v140
    %164 = vmatmul.bf16.gmra.mxu0 %v100
    %v165 = vpop.f32.mrf.mxu0
    %v166 = vadd.f32 0.0, %v165
    %v167 = vpop.f32.mrf.mxu0
    %v168 = vadd.f32 0.0, %v167
    %169 = vmatmul.bf16.gmra.mxu0 %v101
    %v170 = vpop.f32.mrf.mxu0
    %v171 = vadd.f32 0.0, %v170
    %v172 = vpop.f32.mrf.mxu0
    %v173 = vadd.f32 0.0, %v172
    %174 = vmatmul.bf16.gmra.mxu0 %v102
    %v175 = vpop.f32.mrf.mxu0
    %v176 = vadd.f32 0.0, %v175
    %v177 = vpop.f32.mrf.mxu0
    %v178 = vadd.f32 0.0, %v177
    %179 = vmatmul.bf16.gmra.mxu0 %v103
    %v180 = vpop.f32.mrf.mxu0
    %v181 = vadd.f32 0.0, %v180
    %v182 = vpop.f32.mrf.mxu0
    %v183 = vadd.f32 0.0, %v182
    %184 = vdwg.mxu0
    %s185 = sadd.s32 %s55, 1152
    %s186 = sshra.s32 %s185, 3
    %s187 = sand.u32 %s185, 7
    %s188 = smul.addr %s186, 4
    %s189 = scalar_lea.vmem %s1, %s188
    %v190 = vld [vmem:[%s189] sm:$0xf]
    %v191 = vld [vmem:[%s189 + $0x4] sm:$0xf]
    %v192 = vld [vmem:[%s189 + $0x8] sm:$0xf]
    %v193 = vld [vmem:[%s189 + $0xc] sm:$0xf]
    %v194 = vld [vmem:[%s189 + $0x10] sm:$0xf]
    %v195 = vld [vmem:[%s189 + $0x14] sm:$0xf]
    %v196 = vld [vmem:[%s189 + $0x18] sm:$0xf]
    %v197 = vld [vmem:[%s189 + $0x1c] sm:$0xf]
    %v206 = vunpack.c.l.b16 %v190
    %v207 = vunpack.c.l.b16 %v191
    %v208 = vunpack.c.l.b16 %v192
    %v209 = vunpack.c.l.b16 %v193
    %v210 = vunpack.c.l.b16 %v194
    %v211 = vunpack.c.l.b16 %v195
    %v212 = vunpack.c.l.b16 %v196
    %v213 = vunpack.c.l.b16 %v197
    %v214 = vpack.c.b16 %v207, %v206
    %v215 = vpack.c.b16 %v209, %v208
    %v216 = vpack.c.b16 %v211, %v210
    %v217 = vpack.c.b16 %v213, %v212
    %222 = vmatpush.bf16.msra.mxu0 %v147
    %223 = vmatpush.bf16.msra.mxu0 %v146
    %224 = vmatpush.bf16.msra.mxu0 %v145
    %225 = vmatpush.bf16.msra.mxu0 %v144
    %226 = vmatpush.bf16.msra.mxu0 %v143
    %227 = vmatpush.bf16.msra.mxu0 %v142
    %228 = vmatpush.bf16.msra.mxu0 %v141
    %229 = vmatpush.bf16.msra.mxu0 %v140
    %230 = vmatmul.bf16.gmra.mxu0 %v214
    %v231 = vpop.f32.mrf.mxu0
    %v232 = vadd.f32 0.0, %v231
    %v233 = vpop.f32.mrf.mxu0
    %v234 = vadd.f32 0.0, %v233
    %235 = vmatmul.bf16.gmra.mxu0 %v215
    %v236 = vpop.f32.mrf.mxu0
    %v237 = vadd.f32 0.0, %v236
    %v238 = vpop.f32.mrf.mxu0
    %v239 = vadd.f32 0.0, %v238
    %240 = vmatmul.bf16.gmra.mxu0 %v216
    %v241 = vpop.f32.mrf.mxu0
    %v242 = vadd.f32 0.0, %v241
    %v243 = vpop.f32.mrf.mxu0
    %v244 = vadd.f32 0.0, %v243
    %245 = vmatmul.bf16.gmra.mxu0 %v217
    %v246 = vpop.f32.mrf.mxu0
    %v247 = vadd.f32 0.0, %v246
    %v248 = vpop.f32.mrf.mxu0
    %v249 = vadd.f32 0.0, %v248
    %250 = vdwg.mxu0
    %v251 = vmax.f32 %v166, %v232
    %v252 = vmax.f32 %v168, %v234
    %v253 = vmax.f32 %v171, %v237
    %v254 = vmax.f32 %v173, %v239
    %v255 = vmax.f32 %v176, %v242
    %v256 = vmax.f32 %v178, %v244
    %v257 = vmax.f32 %v181, %v247
    %v258 = vmax.f32 %v183, %v249
    %s259 = sadd.s32 %s55, 2304
    %s260 = sshra.s32 %s259, 3
    %s261 = sand.u32 %s259, 7
    %s262 = smul.addr %s260, 4
    %s263 = scalar_lea.vmem %s1, %s262
    %v264 = vld [vmem:[%s263] sm:$0xf]
    %v265 = vld [vmem:[%s263 + $0x4] sm:$0xf]
    %v266 = vld [vmem:[%s263 + $0x8] sm:$0xf]
    %v267 = vld [vmem:[%s263 + $0xc] sm:$0xf]
    %v268 = vld [vmem:[%s263 + $0x10] sm:$0xf]
    %v269 = vld [vmem:[%s263 + $0x14] sm:$0xf]
    %v270 = vld [vmem:[%s263 + $0x18] sm:$0xf]
    %v271 = vld [vmem:[%s263 + $0x1c] sm:$0xf]
    %v280 = vunpack.c.l.b16 %v264
    %v281 = vunpack.c.l.b16 %v265
    %v282 = vunpack.c.l.b16 %v266
    %v283 = vunpack.c.l.b16 %v267
    %v284 = vunpack.c.l.b16 %v268
    %v285 = vunpack.c.l.b16 %v269
    %v286 = vunpack.c.l.b16 %v270
    %v287 = vunpack.c.l.b16 %v271
    %v288 = vpack.c.b16 %v281, %v280
    %v289 = vpack.c.b16 %v283, %v282
    %v290 = vpack.c.b16 %v285, %v284
    %v291 = vpack.c.b16 %v287, %v286
    %296 = vmatpush.bf16.msra.mxu0 %v147
    %297 = vmatpush.bf16.msra.mxu0 %v146
    %298 = vmatpush.bf16.msra.mxu0 %v145
    %299 = vmatpush.bf16.msra.mxu0 %v144
    %300 = vmatpush.bf16.msra.mxu0 %v143
    %301 = vmatpush.bf16.msra.mxu0 %v142
    %302 = vmatpush.bf16.msra.mxu0 %v141
    %303 = vmatpush.bf16.msra.mxu0 %v140
    %304 = vmatmul.bf16.gmra.mxu0 %v288
    %v305 = vpop.f32.mrf.mxu0
    %v306 = vadd.f32 0.0, %v305
    %v307 = vpop.f32.mrf.mxu0
    %v308 = vadd.f32 0.0, %v307
    %309 = vmatmul.bf16.gmra.mxu0 %v289
    %v310 = vpop.f32.mrf.mxu0
    %v311 = vadd.f32 0.0, %v310
    %v312 = vpop.f32.mrf.mxu0
    %v313 = vadd.f32 0.0, %v312
    %314 = vmatmul.bf16.gmra.mxu0 %v290
    %v315 = vpop.f32.mrf.mxu0
    %v316 = vadd.f32 0.0, %v315
    %v317 = vpop.f32.mrf.mxu0
    %v318 = vadd.f32 0.0, %v317
    %319 = vmatmul.bf16.gmra.mxu0 %v291
    %v320 = vpop.f32.mrf.mxu0
    %v321 = vadd.f32 0.0, %v320
    %v322 = vpop.f32.mrf.mxu0
    %v323 = vadd.f32 0.0, %v322
    %324 = vdwg.mxu0
    %v325 = vmax.f32 %v251, %v306
    %v326 = vmax.f32 %v252, %v308
    %v327 = vmax.f32 %v253, %v311
    %v328 = vmax.f32 %v254, %v313
    %v329 = vmax.f32 %v255, %v316
    %v330 = vmax.f32 %v256, %v318
    %v331 = vmax.f32 %v257, %v321
    %v332 = vmax.f32 %v258, %v323
    %s333 = sadd.s32 %s55, 3456
    %s334 = sshra.s32 %s333, 3
    %s335 = sand.u32 %s333, 7
    %s336 = smul.addr %s334, 4
    %s337 = scalar_lea.vmem %s1, %s336
    %v338 = vld [vmem:[%s337] sm:$0xf]
    %v339 = vld [vmem:[%s337 + $0x4] sm:$0xf]
    %v340 = vld [vmem:[%s337 + $0x8] sm:$0xf]
    %v341 = vld [vmem:[%s337 + $0xc] sm:$0xf]
    %v342 = vld [vmem:[%s337 + $0x10] sm:$0xf]
    %v343 = vld [vmem:[%s337 + $0x14] sm:$0xf]
    %v344 = vld [vmem:[%s337 + $0x18] sm:$0xf]
    %v345 = vld [vmem:[%s337 + $0x1c] sm:$0xf]
    %v354 = vunpack.c.l.b16 %v338
    %v355 = vunpack.c.l.b16 %v339
    %v356 = vunpack.c.l.b16 %v340
    %v357 = vunpack.c.l.b16 %v341
    %v358 = vunpack.c.l.b16 %v342
    %v359 = vunpack.c.l.b16 %v343
    %v360 = vunpack.c.l.b16 %v344
    %v361 = vunpack.c.l.b16 %v345
    %v362 = vpack.c.b16 %v355, %v354
    %v363 = vpack.c.b16 %v357, %v356
    %v364 = vpack.c.b16 %v359, %v358
    %v365 = vpack.c.b16 %v361, %v360
    %370 = vmatpush.bf16.msra.mxu0 %v147
    %371 = vmatpush.bf16.msra.mxu0 %v146
    %372 = vmatpush.bf16.msra.mxu0 %v145
    %373 = vmatpush.bf16.msra.mxu0 %v144
    %374 = vmatpush.bf16.msra.mxu0 %v143
    %375 = vmatpush.bf16.msra.mxu0 %v142
    %376 = vmatpush.bf16.msra.mxu0 %v141
    %377 = vmatpush.bf16.msra.mxu0 %v140
    %378 = vmatmul.bf16.gmra.mxu0 %v362
    %v379 = vpop.f32.mrf.mxu0
    %v380 = vadd.f32 0.0, %v379
    %v381 = vpop.f32.mrf.mxu0
    %v382 = vadd.f32 0.0, %v381
    %383 = vmatmul.bf16.gmra.mxu0 %v363
    %v384 = vpop.f32.mrf.mxu0
    %v385 = vadd.f32 0.0, %v384
    %v386 = vpop.f32.mrf.mxu0
    %v387 = vadd.f32 0.0, %v386
    %388 = vmatmul.bf16.gmra.mxu0 %v364
    %v389 = vpop.f32.mrf.mxu0
    %v390 = vadd.f32 0.0, %v389
    %v391 = vpop.f32.mrf.mxu0
    %v392 = vadd.f32 0.0, %v391
    %393 = vmatmul.bf16.gmra.mxu0 %v365
    %v394 = vpop.f32.mrf.mxu0
    %v395 = vadd.f32 0.0, %v394
    %v396 = vpop.f32.mrf.mxu0
    %v397 = vadd.f32 0.0, %v396
    %398 = vdwg.mxu0
    %v399 = vmax.f32 %v325, %v380
    %v400 = vmax.f32 %v326, %v382
    %v401 = vmax.f32 %v327, %v385
    %v402 = vmax.f32 %v328, %v387
    %v403 = vmax.f32 %v329, %v390
    %v404 = vmax.f32 %v330, %v392
    %v405 = vmax.f32 %v331, %v395
    %v406 = vmax.f32 %v332, %v397
    %v407 = vld [vmem:[%s3] sm:$0x1]
    %v409 = vperm.slane %v407, 0
    %v411 = vadd.f32 %v399, %v409
    %v412 = vadd.f32 %v400, %v409
    %v413 = vadd.f32 %v401, %v409
    %v414 = vadd.f32 %v402, %v409
    %v415 = vadd.f32 %v403, %v409
    %v416 = vadd.f32 %v404, %v409
    %v417 = vadd.f32 %v405, %v409
    %v418 = vadd.f32 %v406, %v409
    %v419 = vmax.f32 %v411, 0.0
    %v420 = vmax.f32 %v412, 0.0
    %v421 = vmax.f32 %v413, 0.0
    %v422 = vmax.f32 %v414, 0.0
    %v423 = vmax.f32 %v415, 0.0
    %v424 = vmax.f32 %v416, 0.0
    %v425 = vmax.f32 %v417, 0.0
    %v426 = vmax.f32 %v418, 0.0
    %v427 = vld [vmem:[%s0] sm:$0xff]
    %v428 = vld [vmem:[%s0 + $0x8] sm:$0xff]
    %v429 = vld [vmem:[%s0 + $0x10] sm:$0xff]
    %v430 = vld [vmem:[%s0 + $0x18] sm:$0xff]
    %v431 = vld [vmem:[%s0 + $0x20] sm:$0xff]
    %v432 = vld [vmem:[%s0 + $0x28] sm:$0xff]
    %v433 = vld [vmem:[%s0 + $0x30] sm:$0xff]
    %v434 = vld [vmem:[%s0 + $0x38] sm:$0xff]
    %v435 = vmul.f32 %v419, %v427
    %v436 = vmul.f32 %v420, %v428
    %v437 = vmul.f32 %v421, %v429
    %v438 = vmul.f32 %v422, %v430
    %v439 = vmul.f32 %v423, %v431
    %v440 = vmul.f32 %v424, %v432
    %v441 = vmul.f32 %v425, %v433
    %v442 = vmul.f32 %v426, %v434
    %s443 = scalar_lea.vmem [#allocation2], %s55
    %444 = vst [vmem:[%s443] sm:$0xff] %v435
    %445 = vst [vmem:[%s443 + $0x8] sm:$0xff] %v436
    %446 = vst [vmem:[%s443 + $0x10] sm:$0xff] %v437
    %447 = vst [vmem:[%s443 + $0x18] sm:$0xff] %v438
    %448 = vst [vmem:[%s443 + $0x20] sm:$0xff] %v439
    %449 = vst [vmem:[%s443 + $0x28] sm:$0xff] %v440
    %450 = vst [vmem:[%s443 + $0x30] sm:$0xff] %v441
    %451 = vst [vmem:[%s443 + $0x38] sm:$0xff] %v442
    %v452 = vadd.f32 %v435, %v436
    %v453 = vadd.f32 %v452, %v437
    %v454 = vadd.f32 %v453, %v438
    %v455 = vadd.f32 %v454, %v439
    %v456 = vadd.f32 %v455, %v440
    %v457 = vadd.f32 %v456, %v441
    %v458 = vadd.f32 %v457, %v442
    %v459 = vrot.slane %v458, 4
    %v460 = vadd.f32 %v458, %v459
    %v461 = vrot.slane %v460, 2
    %v462 = vadd.f32 %v460, %v461
    %v463 = vrot.slane %v462, 1
    %v464 = vadd.f32 %v462, %v463
    %v465 = vadd.f32 %v53, %v464
    %v466 = vmul.f32 %v435, %v435
    %v467 = vmul.f32 %v436, %v436
    %v468 = vmul.f32 %v437, %v437
    %v469 = vmul.f32 %v438, %v438
    %v470 = vmul.f32 %v439, %v439
    %v471 = vmul.f32 %v440, %v440
    %v472 = vmul.f32 %v441, %v441
    %v473 = vmul.f32 %v442, %v442
    %v474 = vadd.f32 %v466, %v467
    %v475 = vadd.f32 %v474, %v468
    %v476 = vadd.f32 %v475, %v469
    %v477 = vadd.f32 %v476, %v470
    %v478 = vadd.f32 %v477, %v471
    %v479 = vadd.f32 %v478, %v472
    %v480 = vadd.f32 %v479, %v473
    %v481 = vrot.slane %v480, 4
    %v482 = vadd.f32 %v480, %v481
    %v483 = vrot.slane %v482, 2
    %v484 = vadd.f32 %v482, %v483
    %v485 = vrot.slane %v484, 1
    %v486 = vadd.f32 %v484, %v485
    %v487 = vadd.f32 %v54, %v486
  $region62: #{mnist_forward.1} parent=0 // loop_footer
    %s52 = sadd.s32 1, %s48
  $region63: #{mnist_forward.1} parent=0 // loop_footer_branch
    %47 = sbr.rel target = $region59
  $region64: #{mnist_forward.1} parent=0 // loop_exit
    _
  %v488 = vmul.f32 %v53, 0.0034722222
  %v489 = vmul.f32 %v54, 0.0034722222
  %v490 = vmul.f32 %v488, %v488
  %v491 = vsub.f32 %v489, %v490
  %v492 = vmax.f32 %v491, 0.0
  %v493 = vadd.f32 %v492, 1e-05
  %v494 = vrsqrt.pop %v493
  %v495 = vmul.f32 %v494, %v493
  %v496 = vmul.f32 %v495, %v494
  %v497 = vmul.f32 0.5, %v496
  %v498 = vsub.f32 1.5, %v497
  %v499 = vmul.f32 %v494, %v498
  %vm500 = vweird.f32 %v493
  %vm501 = vweird.f32 %v494
  %vm502 = vmor %vm500, %vm501
  %v503 = vsel %vm502, %v494, %v499
  %v504 = vld [vmem:[%s4] sm:$0x1]
  %v505 = vmul.f32 %v503, %v504
  %v506 = vld [vmem:[%s5] sm:$0x1]
  %v507 = vmul.f32 %v488, %v505
  %v508 = vsub.f32 %v506, %v507
  loop: start=0, step=1, limit=18
  $region65: #{mnist_forward.1} parent=0 // loop_pre_header
    _
  $region66: #{mnist_forward.1} parent=0 // loop_header
    %s510 = sphi 0, %s514
    %p511 = scmp.ge.s32.totalorder %s510, 18
  $region67: #{mnist_forward.1} parent=0 // loop_header_branch
    %513 = sbr.rel (%p511) target = $region71
  $region68: #{mnist_forward.1} parent=0 // loop_body
    %s515 = smul.u32 %s510, 64
    %s516 = scalar_lea.vmem [#allocation2], %s515
    %v517 = vld [vmem:[%s516] sm:$0xff]
    %v518 = vld [vmem:[%s516 + $0x8] sm:$0xff]
    %v519 = vld [vmem:[%s516 + $0x10] sm:$0xff]
    %v520 = vld [vmem:[%s516 + $0x18] sm:$0xff]
    %v521 = vld [vmem:[%s516 + $0x20] sm:$0xff]
    %v522 = vld [vmem:[%s516 + $0x28] sm:$0xff]
    %v523 = vld [vmem:[%s516 + $0x30] sm:$0xff]
    %v524 = vld [vmem:[%s516 + $0x38] sm:$0xff]
    %v525 = vperm.slane %v505, 0
    %v526 = vmul.f32 %v517, %v525
    %v527 = vmul.f32 %v518, %v525
    %v528 = vmul.f32 %v519, %v525
    %v529 = vmul.f32 %v520, %v525
    %v530 = vmul.f32 %v521, %v525
    %v531 = vmul.f32 %v522, %v525
    %v532 = vmul.f32 %v523, %v525
    %v533 = vmul.f32 %v524, %v525
    %v535 = vperm.slane %v508, 0
    %v537 = vadd.f32 %v526, %v535
    %v538 = vadd.f32 %v527, %v535
    %v539 = vadd.f32 %v528, %v535
    %v540 = vadd.f32 %v529, %v535
    %v541 = vadd.f32 %v530, %v535
    %v542 = vadd.f32 %v531, %v535
    %v543 = vadd.f32 %v532, %v535
    %v544 = vadd.f32 %v533, %v535
    %545 = vst [vmem:[%s516] sm:$0xff] %v537
    %546 = vst [vmem:[%s516 + $0x8] sm:$0xff] %v538
    %547 = vst [vmem:[%s516 + $0x10] sm:$0xff] %v539
    %548 = vst [vmem:[%s516 + $0x18] sm:$0xff] %v540
    %549 = vst [vmem:[%s516 + $0x20] sm:$0xff] %v541
    %550 = vst [vmem:[%s516 + $0x28] sm:$0xff] %v542
    %551 = vst [vmem:[%s516 + $0x30] sm:$0xff] %v543
    %552 = vst [vmem:[%s516 + $0x38] sm:$0xff] %v544
  $region69: #{mnist_forward.1} parent=0 // loop_footer
    %s514 = sadd.s32 1, %s510
  $region70: #{mnist_forward.1} parent=0 // loop_footer_branch
    %509 = sbr.rel target = $region66
  $region71: #{mnist_forward.1} parent=0 // loop_exit
    _
  %553 = vst [vmem:[#allocation2 + $0x480] sm:$0xff] 0.0
  %554 = vst [vmem:[#allocation2 + $0x488] sm:$0xff] 0.0
  %555 = vst [vmem:[#allocation2 + $0x490] sm:$0xff] 0.0
  %556 = vst [vmem:[#allocation2 + $0x498] sm:$0xff] 0.0
  %v557 = vld [vmem:[%s0] sm:$0xff]
  %v558 = vld [vmem:[%s0 + $0x8] sm:$0xff]
  %v559 = vld [vmem:[%s0 + $0x10] sm:$0xff]
  %v560 = vld [vmem:[%s0 + $0x18] sm:$0xff]
  loop: start=0, step=1, limit=4
  $region72: #{mnist_forward.1} parent=0 // loop_pre_header
    _
  $region73: #{mnist_forward.1} parent=0 // loop_header
    %s562 = sphi 0, %s566
    %p563 = scmp.ge.s32.totalorder %s562, 4
    %v567 = vphi 0.0, %v5356
    %v568 = vphi 0.0, %v5370
  $region74: #{mnist_forward.1} parent=0 // loop_header_branch
    %565 = sbr.rel (%p563) target = $region78
  $region75: #{mnist_forward.1} parent=0 // loop_body
    %s569 = smul.u32 %s562, 192
    %s570 = scalar_lea.vmem [#allocation2], %s569
    %v571 = vld [vmem:[%s570] sm:$0xff]
    %v572 = vld [vmem:[%s570 + $0x8] sm:$0xff]
    %v573 = vld [vmem:[%s570 + $0x10] sm:$0xff]
    %v574 = vld [vmem:[%s570 + $0x18] sm:$0xff]
    %v575 = vld [vmem:[%s570 + $0x20] sm:$0xff]
    %v576 = vld [vmem:[%s570 + $0x28] sm:$0xff]
    %v577 = vld [vmem:[%s570 + $0x30] sm:$0xff]
    %v578 = vld [vmem:[%s570 + $0x38] sm:$0xff]
    %v579 = vld [vmem:[%s570 + $0x40] sm:$0xff]
    %v580 = vld [vmem:[%s570 + $0x48] sm:$0xff]
    %v581 = vld [vmem:[%s570 + $0x50] sm:$0xff]
    %v582 = vld [vmem:[%s570 + $0x58] sm:$0xff]
    %v583 = vpack.c.bf16 %v572, %v571
    %v584 = vpack.c.bf16 %v574, %v573
    %v585 = vpack.c.bf16 %v576, %v575
    %v586 = vpack.c.bf16 %v578, %v577
    %v587 = vpack.c.bf16 %v580, %v579
    %v588 = vpack.c.bf16 %v582, %v581
    %v589 = vld [vmem:[%s6] sm:$0xf]
    %v590 = vld [vmem:[%s6 + $0x4] sm:$0xf]
    %v591 = vld [vmem:[%s6 + $0x8] sm:$0xf]
    %v592 = vld [vmem:[%s6 + $0xc] sm:$0xf]
    %v593 = vld [vmem:[%s6 + $0x10] sm:$0xf]
    %v594 = vld [vmem:[%s6 + $0x14] sm:$0xf]
    %v595 = vld [vmem:[%s6 + $0x18] sm:$0xf]
    %v596 = vld [vmem:[%s6 + $0x1c] sm:$0xf]
    %v597 = vld [vmem:[%s6 + $0x20] sm:$0xf]
    %v598 = vld [vmem:[%s6 + $0x24] sm:$0xf]
    %v599 = vld [vmem:[%s6 + $0x28] sm:$0xf]
    %v600 = vld [vmem:[%s6 + $0x2c] sm:$0xf]
    %v601 = vld [vmem:[%s6 + $0x30] sm:$0xf]
    %v602 = vld [vmem:[%s6 + $0x34] sm:$0xf]
    %v603 = vld [vmem:[%s6 + $0x38] sm:$0xf]
    %v604 = vld [vmem:[%s6 + $0x3c] sm:$0xf]
    %s605 = sadd.s32 %s569, 8
    %s606 = scalar_lea.vmem [#allocation2], %s605
    %v607 = vld [vmem:[%s606] sm:$0xff]
    %v608 = vld [vmem:[%s606 + $0x8] sm:$0xff]
    %v609 = vld [vmem:[%s606 + $0x10] sm:$0xff]
    %v610 = vld [vmem:[%s606 + $0x18] sm:$0xff]
    %v611 = vld [vmem:[%s606 + $0x20] sm:$0xff]
    %v612 = vld [vmem:[%s606 + $0x28] sm:$0xff]
    %v613 = vld [vmem:[%s606 + $0x30] sm:$0xff]
    %v614 = vld [vmem:[%s606 + $0x38] sm:$0xff]
    %v615 = vld [vmem:[%s606 + $0x40] sm:$0xff]
    %v616 = vld [vmem:[%s606 + $0x48] sm:$0xff]
    %v617 = vld [vmem:[%s606 + $0x50] sm:$0xff]
    %v618 = vld [vmem:[%s606 + $0x58] sm:$0xff]
    %v619 = vpack.c.bf16 %v608, %v607
    %v620 = vpack.c.bf16 %v610, %v609
    %v621 = vpack.c.bf16 %v612, %v611
    %v622 = vpack.c.bf16 %v614, %v613
    %v623 = vpack.c.bf16 %v616, %v615
    %v624 = vpack.c.bf16 %v618, %v617
    %s625 = scalar_lea.vmem %s6, 64
    %v626 = vld [vmem:[%s625] sm:$0xf]
    %v627 = vld [vmem:[%s625 + $0x4] sm:$0xf]
    %v628 = vld [vmem:[%s625 + $0x8] sm:$0xf]
    %v629 = vld [vmem:[%s625 + $0xc] sm:$0xf]
    %v630 = vld [vmem:[%s625 + $0x10] sm:$0xf]
    %v631 = vld [vmem:[%s625 + $0x14] sm:$0xf]
    %v632 = vld [vmem:[%s625 + $0x18] sm:$0xf]
    %v633 = vld [vmem:[%s625 + $0x1c] sm:$0xf]
    %v634 = vld [vmem:[%s625 + $0x20] sm:$0xf]
    %v635 = vld [vmem:[%s625 + $0x24] sm:$0xf]
    %v636 = vld [vmem:[%s625 + $0x28] sm:$0xf]
    %v637 = vld [vmem:[%s625 + $0x2c] sm:$0xf]
    %v638 = vld [vmem:[%s625 + $0x30] sm:$0xf]
    %v639 = vld [vmem:[%s625 + $0x34] sm:$0xf]
    %v640 = vld [vmem:[%s625 + $0x38] sm:$0xf]
    %v641 = vld [vmem:[%s625 + $0x3c] sm:$0xf]
    %v658 = vunpack.c.l.b16 %v626
    %v659 = vunpack.c.l.b16 %v627
    %v660 = vunpack.c.l.b16 %v628
    %v661 = vunpack.c.l.b16 %v629
    %v662 = vunpack.c.l.b16 %v630
    %v663 = vunpack.c.l.b16 %v631
    %v664 = vunpack.c.l.b16 %v632
    %v665 = vunpack.c.l.b16 %v633
    %v666 = vunpack.c.l.b16 %v634
    %v667 = vunpack.c.l.b16 %v635
    %v668 = vunpack.c.l.b16 %v636
    %v669 = vunpack.c.l.b16 %v637
    %v670 = vunpack.c.l.b16 %v638
    %v671 = vunpack.c.l.b16 %v639
    %v672 = vunpack.c.l.b16 %v640
    %v673 = vunpack.c.l.b16 %v641
    %v674 = vpack.c.b16 %v659, %v658
    %v675 = vpack.c.b16 %v661, %v660
    %v676 = vpack.c.b16 %v663, %v662
    %v677 = vpack.c.b16 %v665, %v664
    %v678 = vpack.c.b16 %v667, %v666
    %v679 = vpack.c.b16 %v669, %v668
    %v680 = vpack.c.b16 %v671, %v670
    %v681 = vpack.c.b16 %v673, %v672
    %690 = vmatpush.bf16.msra.mxu0 %v681
    %691 = vmatpush.bf16.msra.mxu0 %v680
    %692 = vmatpush.bf16.msra.mxu0 %v679
    %693 = vmatpush.bf16.msra.mxu0 %v678
    %694 = vmatpush.bf16.msra.mxu0 %v677
    %695 = vmatpush.bf16.msra.mxu0 %v676
    %696 = vmatpush.bf16.msra.mxu0 %v675
    %697 = vmatpush.bf16.msra.mxu0 %v674
    %698 = vmatmul.bf16.gmra.mxu0 %v619
    %v699 = vpop.f32.mrf.mxu0
    %v700 = vadd.f32 0.0, %v699
    %v701 = vpop.f32.mrf.mxu0
    %v702 = vadd.f32 0.0, %v701
    %703 = vmatmul.bf16.gmra.mxu0 %v620
    %v704 = vpop.f32.mrf.mxu0
    %v705 = vadd.f32 0.0, %v704
    %v706 = vpop.f32.mrf.mxu0
    %v707 = vadd.f32 0.0, %v706
    %708 = vmatmul.bf16.gmra.mxu0 %v621
    %v709 = vpop.f32.mrf.mxu0
    %v710 = vadd.f32 0.0, %v709
    %v711 = vpop.f32.mrf.mxu0
    %v712 = vadd.f32 0.0, %v711
    %713 = vmatmul.bf16.gmra.mxu0 %v622
    %v714 = vpop.f32.mrf.mxu0
    %v715 = vadd.f32 0.0, %v714
    %v716 = vpop.f32.mrf.mxu0
    %v717 = vadd.f32 0.0, %v716
    %718 = vmatmul.bf16.gmra.mxu0 %v623
    %v719 = vpop.f32.mrf.mxu0
    %v720 = vpop.f32.mrf.mxu0
    %721 = vmatmul.bf16.gmra.mxu0 %v624
    %v722 = vpop.f32.mrf.mxu0
    %v723 = vpop.f32.mrf.mxu0
    %724 = vdwg.mxu0
    %v741 = vunpack.c.l.b16 %v589
    %v742 = vunpack.c.l.b16 %v590
    %v743 = vunpack.c.l.b16 %v591
    %v744 = vunpack.c.l.b16 %v592
    %v745 = vunpack.c.l.b16 %v593
    %v746 = vunpack.c.l.b16 %v594
    %v747 = vunpack.c.l.b16 %v595
    %v748 = vunpack.c.l.b16 %v596
    %v749 = vunpack.c.l.b16 %v597
    %v750 = vunpack.c.l.b16 %v598
    %v751 = vunpack.c.l.b16 %v599
    %v752 = vunpack.c.l.b16 %v600
    %v753 = vunpack.c.l.b16 %v601
    %v754 = vunpack.c.l.b16 %v602
    %v755 = vunpack.c.l.b16 %v603
    %v756 = vunpack.c.l.b16 %v604
    %v757 = vpack.c.b16 %v742, %v741
    %v758 = vpack.c.b16 %v744, %v743
    %v759 = vpack.c.b16 %v746, %v745
    %v760 = vpack.c.b16 %v748, %v747
    %v761 = vpack.c.b16 %v750, %v749
    %v762 = vpack.c.b16 %v752, %v751
    %v763 = vpack.c.b16 %v754, %v753
    %v764 = vpack.c.b16 %v756, %v755
    %773 = vmatpush.bf16.msra.mxu0 %v764
    %774 = vmatpush.bf16.msra.mxu0 %v763
    %775 = vmatpush.bf16.msra.mxu0 %v762
    %776 = vmatpush.bf16.msra.mxu0 %v761
    %777 = vmatpush.bf16.msra.mxu0 %v760
    %778 = vmatpush.bf16.msra.mxu0 %v759
    %779 = vmatpush.bf16.msra.mxu0 %v758
    %780 = vmatpush.bf16.msra.mxu0 %v757
    %781 = vmatmul.bf16.gmra.mxu0 %v583
    %v782 = vpop.f32.mrf.mxu0
    %v783 = vadd.f32 %v700, %v782
    %v784 = vpop.f32.mrf.mxu0
    %v785 = vadd.f32 %v702, %v784
    %786 = vmatmul.bf16.gmra.mxu0 %v584
    %v787 = vpop.f32.mrf.mxu0
    %v788 = vadd.f32 %v705, %v787
    %v789 = vpop.f32.mrf.mxu0
    %v790 = vadd.f32 %v707, %v789
    %791 = vmatmul.bf16.gmra.mxu0 %v585
    %v792 = vpop.f32.mrf.mxu0
    %v793 = vadd.f32 %v710, %v792
    %v794 = vpop.f32.mrf.mxu0
    %v795 = vadd.f32 %v712, %v794
    %796 = vmatmul.bf16.gmra.mxu0 %v586
    %v797 = vpop.f32.mrf.mxu0
    %v798 = vadd.f32 %v715, %v797
    %v799 = vpop.f32.mrf.mxu0
    %v800 = vadd.f32 %v717, %v799
    %801 = vmatmul.bf16.gmra.mxu0 %v587
    %v802 = vpop.f32.mrf.mxu0
    %v803 = vpop.f32.mrf.mxu0
    %804 = vmatmul.bf16.gmra.mxu0 %v588
    %v805 = vpop.f32.mrf.mxu0
    %v806 = vpop.f32.mrf.mxu0
    %807 = vdwg.mxu0
    %s808 = sadd.s32 %s569, 16
    %s809 = scalar_lea.vmem [#allocation2], %s808
    %v810 = vld [vmem:[%s809] sm:$0xff]
    %v811 = vld [vmem:[%s809 + $0x8] sm:$0xff]
    %v812 = vld [vmem:[%s809 + $0x10] sm:$0xff]
    %v813 = vld [vmem:[%s809 + $0x18] sm:$0xff]
    %v814 = vld [vmem:[%s809 + $0x20] sm:$0xff]
    %v815 = vld [vmem:[%s809 + $0x28] sm:$0xff]
    %v816 = vld [vmem:[%s809 + $0x30] sm:$0xff]
    %v817 = vld [vmem:[%s809 + $0x38] sm:$0xff]
    %v818 = vld [vmem:[%s809 + $0x40] sm:$0xff]
    %v819 = vld [vmem:[%s809 + $0x48] sm:$0xff]
    %v820 = vld [vmem:[%s809 + $0x50] sm:$0xff]
    %v821 = vld [vmem:[%s809 + $0x58] sm:$0xff]
    %v822 = vpack.c.bf16 %v811, %v810
    %v823 = vpack.c.bf16 %v813, %v812
    %v824 = vpack.c.bf16 %v815, %v814
    %v825 = vpack.c.bf16 %v817, %v816
    %v826 = vpack.c.bf16 %v819, %v818
    %v827 = vpack.c.bf16 %v821, %v820
    %s828 = scalar_lea.vmem %s6, 128
    %v829 = vld [vmem:[%s828] sm:$0xf]
    %v830 = vld [vmem:[%s828 + $0x4] sm:$0xf]
    %v831 = vld [vmem:[%s828 + $0x8] sm:$0xf]
    %v832 = vld [vmem:[%s828 + $0xc] sm:$0xf]
    %v833 = vld [vmem:[%s828 + $0x10] sm:$0xf]
    %v834 = vld [vmem:[%s828 + $0x14] sm:$0xf]
    %v835 = vld [vmem:[%s828 + $0x18] sm:$0xf]
    %v836 = vld [vmem:[%s828 + $0x1c] sm:$0xf]
    %v837 = vld [vmem:[%s828 + $0x20] sm:$0xf]
    %v838 = vld [vmem:[%s828 + $0x24] sm:$0xf]
    %v839 = vld [vmem:[%s828 + $0x28] sm:$0xf]
    %v840 = vld [vmem:[%s828 + $0x2c] sm:$0xf]
    %v841 = vld [vmem:[%s828 + $0x30] sm:$0xf]
    %v842 = vld [vmem:[%s828 + $0x34] sm:$0xf]
    %v843 = vld [vmem:[%s828 + $0x38] sm:$0xf]
    %v844 = vld [vmem:[%s828 + $0x3c] sm:$0xf]
    %v861 = vunpack.c.l.b16 %v829
    %v862 = vunpack.c.l.b16 %v830
    %v863 = vunpack.c.l.b16 %v831
    %v864 = vunpack.c.l.b16 %v832
    %v865 = vunpack.c.l.b16 %v833
    %v866 = vunpack.c.l.b16 %v834
    %v867 = vunpack.c.l.b16 %v835
    %v868 = vunpack.c.l.b16 %v836
    %v869 = vunpack.c.l.b16 %v837
    %v870 = vunpack.c.l.b16 %v838
    %v871 = vunpack.c.l.b16 %v839
    %v872 = vunpack.c.l.b16 %v840
    %v873 = vunpack.c.l.b16 %v841
    %v874 = vunpack.c.l.b16 %v842
    %v875 = vunpack.c.l.b16 %v843
    %v876 = vunpack.c.l.b16 %v844
    %v877 = vpack.c.b16 %v862, %v861
    %v878 = vpack.c.b16 %v864, %v863
    %v879 = vpack.c.b16 %v866, %v865
    %v880 = vpack.c.b16 %v868, %v867
    %v881 = vpack.c.b16 %v870, %v869
    %v882 = vpack.c.b16 %v872, %v871
    %v883 = vpack.c.b16 %v874, %v873
    %v884 = vpack.c.b16 %v876, %v875
    %893 = vmatpush.bf16.msra.mxu0 %v884
    %894 = vmatpush.bf16.msra.mxu0 %v883
    %895 = vmatpush.bf16.msra.mxu0 %v882
    %896 = vmatpush.bf16.msra.mxu0 %v881
    %897 = vmatpush.bf16.msra.mxu0 %v880
    %898 = vmatpush.bf16.msra.mxu0 %v879
    %899 = vmatpush.bf16.msra.mxu0 %v878
    %900 = vmatpush.bf16.msra.mxu0 %v877
    %901 = vmatmul.bf16.gmra.mxu0 %v822
    %v902 = vpop.f32.mrf.mxu0
    %v903 = vadd.f32 0.0, %v902
    %v904 = vpop.f32.mrf.mxu0
    %v905 = vadd.f32 0.0, %v904
    %906 = vmatmul.bf16.gmra.mxu0 %v823
    %v907 = vpop.f32.mrf.mxu0
    %v908 = vadd.f32 0.0, %v907
    %v909 = vpop.f32.mrf.mxu0
    %v910 = vadd.f32 0.0, %v909
    %911 = vmatmul.bf16.gmra.mxu0 %v824
    %v912 = vpop.f32.mrf.mxu0
    %v913 = vadd.f32 0.0, %v912
    %v914 = vpop.f32.mrf.mxu0
    %v915 = vadd.f32 0.0, %v914
    %916 = vmatmul.bf16.gmra.mxu0 %v825
    %v917 = vpop.f32.mrf.mxu0
    %v918 = vadd.f32 0.0, %v917
    %v919 = vpop.f32.mrf.mxu0
    %v920 = vadd.f32 0.0, %v919
    %921 = vmatmul.bf16.gmra.mxu0 %v826
    %v922 = vpop.f32.mrf.mxu0
    %v923 = vpop.f32.mrf.mxu0
    %924 = vmatmul.bf16.gmra.mxu0 %v827
    %v925 = vpop.f32.mrf.mxu0
    %v926 = vpop.f32.mrf.mxu0
    %927 = vdwg.mxu0
    %v928 = vadd.f32 %v783, %v903
    %v929 = vadd.f32 %v785, %v905
    %v930 = vadd.f32 %v788, %v908
    %v931 = vadd.f32 %v790, %v910
    %v932 = vadd.f32 %v793, %v913
    %v933 = vadd.f32 %v795, %v915
    %v934 = vadd.f32 %v798, %v918
    %v935 = vadd.f32 %v800, %v920
    %s936 = sadd.s32 %s569, 24
    %s937 = scalar_lea.vmem [#allocation2], %s936
    %v938 = vld [vmem:[%s937] sm:$0xff]
    %v939 = vld [vmem:[%s937 + $0x8] sm:$0xff]
    %v940 = vld [vmem:[%s937 + $0x10] sm:$0xff]
    %v941 = vld [vmem:[%s937 + $0x18] sm:$0xff]
    %v942 = vld [vmem:[%s937 + $0x20] sm:$0xff]
    %v943 = vld [vmem:[%s937 + $0x28] sm:$0xff]
    %v944 = vld [vmem:[%s937 + $0x30] sm:$0xff]
    %v945 = vld [vmem:[%s937 + $0x38] sm:$0xff]
    %v946 = vld [vmem:[%s937 + $0x40] sm:$0xff]
    %v947 = vld [vmem:[%s937 + $0x48] sm:$0xff]
    %v948 = vld [vmem:[%s937 + $0x50] sm:$0xff]
    %v949 = vld [vmem:[%s937 + $0x58] sm:$0xff]
    %v950 = vpack.c.bf16 %v939, %v938
    %v951 = vpack.c.bf16 %v941, %v940
    %v952 = vpack.c.bf16 %v943, %v942
    %v953 = vpack.c.bf16 %v945, %v944
    %v954 = vpack.c.bf16 %v947, %v946
    %v955 = vpack.c.bf16 %v949, %v948
    %s956 = scalar_lea.vmem %s6, 192
    %v957 = vld [vmem:[%s956] sm:$0xf]
    %v958 = vld [vmem:[%s956 + $0x4] sm:$0xf]
    %v959 = vld [vmem:[%s956 + $0x8] sm:$0xf]
    %v960 = vld [vmem:[%s956 + $0xc] sm:$0xf]
    %v961 = vld [vmem:[%s956 + $0x10] sm:$0xf]
    %v962 = vld [vmem:[%s956 + $0x14] sm:$0xf]
    %v963 = vld [vmem:[%s956 + $0x18] sm:$0xf]
    %v964 = vld [vmem:[%s956 + $0x1c] sm:$0xf]
    %v965 = vld [vmem:[%s956 + $0x20] sm:$0xf]
    %v966 = vld [vmem:[%s956 + $0x24] sm:$0xf]
    %v967 = vld [vmem:[%s956 + $0x28] sm:$0xf]
    %v968 = vld [vmem:[%s956 + $0x2c] sm:$0xf]
    %v969 = vld [vmem:[%s956 + $0x30] sm:$0xf]
    %v970 = vld [vmem:[%s956 + $0x34] sm:$0xf]
    %v971 = vld [vmem:[%s956 + $0x38] sm:$0xf]
    %v972 = vld [vmem:[%s956 + $0x3c] sm:$0xf]
    %v989 = vunpack.c.l.b16 %v957
    %v990 = vunpack.c.l.b16 %v958
    %v991 = vunpack.c.l.b16 %v959
    %v992 = vunpack.c.l.b16 %v960
    %v993 = vunpack.c.l.b16 %v961
    %v994 = vunpack.c.l.b16 %v962
    %v995 = vunpack.c.l.b16 %v963
    %v996 = vunpack.c.l.b16 %v964
    %v997 = vunpack.c.l.b16 %v965
    %v998 = vunpack.c.l.b16 %v966
    %v999 = vunpack.c.l.b16 %v967
    %v1000 = vunpack.c.l.b16 %v968
    %v1001 = vunpack.c.l.b16 %v969
    %v1002 = vunpack.c.l.b16 %v970
    %v1003 = vunpack.c.l.b16 %v971
    %v1004 = vunpack.c.l.b16 %v972
    %v1005 = vpack.c.b16 %v990, %v989
    %v1006 = vpack.c.b16 %v992, %v991
    %v1007 = vpack.c.b16 %v994, %v993
    %v1008 = vpack.c.b16 %v996, %v995
    %v1009 = vpack.c.b16 %v998, %v997
    %v1010 = vpack.c.b16 %v1000, %v999
    %v1011 = vpack.c.b16 %v1002, %v1001
    %v1012 = vpack.c.b16 %v1004, %v1003
    %1021 = vmatpush.bf16.msra.mxu0 %v1012
    %1022 = vmatpush.bf16.msra.mxu0 %v1011
    %1023 = vmatpush.bf16.msra.mxu0 %v1010
    %1024 = vmatpush.bf16.msra.mxu0 %v1009
    %1025 = vmatpush.bf16.msra.mxu0 %v1008
    %1026 = vmatpush.bf16.msra.mxu0 %v1007
    %1027 = vmatpush.bf16.msra.mxu0 %v1006
    %1028 = vmatpush.bf16.msra.mxu0 %v1005
    %1029 = vmatmul.bf16.gmra.mxu0 %v950
    %v1030 = vpop.f32.mrf.mxu0
    %v1031 = vadd.f32 0.0, %v1030
    %v1032 = vpop.f32.mrf.mxu0
    %v1033 = vadd.f32 0.0, %v1032
    %1034 = vmatmul.bf16.gmra.mxu0 %v951
    %v1035 = vpop.f32.mrf.mxu0
    %v1036 = vadd.f32 0.0, %v1035
    %v1037 = vpop.f32.mrf.mxu0
    %v1038 = vadd.f32 0.0, %v1037
    %1039 = vmatmul.bf16.gmra.mxu0 %v952
    %v1040 = vpop.f32.mrf.mxu0
    %v1041 = vadd.f32 0.0, %v1040
    %v1042 = vpop.f32.mrf.mxu0
    %v1043 = vadd.f32 0.0, %v1042
    %1044 = vmatmul.bf16.gmra.mxu0 %v953
    %v1045 = vpop.f32.mrf.mxu0
    %v1046 = vadd.f32 0.0, %v1045
    %v1047 = vpop.f32.mrf.mxu0
    %v1048 = vadd.f32 0.0, %v1047
    %1049 = vmatmul.bf16.gmra.mxu0 %v954
    %v1050 = vpop.f32.mrf.mxu0
    %v1051 = vpop.f32.mrf.mxu0
    %1052 = vmatmul.bf16.gmra.mxu0 %v955
    %v1053 = vpop.f32.mrf.mxu0
    %v1054 = vpop.f32.mrf.mxu0
    %1055 = vdwg.mxu0
    %v1056 = vadd.f32 %v928, %v1031
    %v1057 = vadd.f32 %v929, %v1033
    %v1058 = vadd.f32 %v930, %v1036
    %v1059 = vadd.f32 %v931, %v1038
    %v1060 = vadd.f32 %v932, %v1041
    %v1061 = vadd.f32 %v933, %v1043
    %v1062 = vadd.f32 %v934, %v1046
    %v1063 = vadd.f32 %v935, %v1048
    %s1064 = sadd.s32 %s569, 32
    %s1065 = scalar_lea.vmem [#allocation2], %s1064
    %v1066 = vld [vmem:[%s1065] sm:$0xff]
    %v1067 = vld [vmem:[%s1065 + $0x8] sm:$0xff]
    %v1068 = vld [vmem:[%s1065 + $0x10] sm:$0xff]
    %v1069 = vld [vmem:[%s1065 + $0x18] sm:$0xff]
    %v1070 = vld [vmem:[%s1065 + $0x20] sm:$0xff]
    %v1071 = vld [vmem:[%s1065 + $0x28] sm:$0xff]
    %v1072 = vld [vmem:[%s1065 + $0x30] sm:$0xff]
    %v1073 = vld [vmem:[%s1065 + $0x38] sm:$0xff]
    %v1074 = vld [vmem:[%s1065 + $0x40] sm:$0xff]
    %v1075 = vld [vmem:[%s1065 + $0x48] sm:$0xff]
    %v1076 = vld [vmem:[%s1065 + $0x50] sm:$0xff]
    %v1077 = vld [vmem:[%s1065 + $0x58] sm:$0xff]
    %v1078 = vpack.c.bf16 %v1067, %v1066
    %v1079 = vpack.c.bf16 %v1069, %v1068
    %v1080 = vpack.c.bf16 %v1071, %v1070
    %v1081 = vpack.c.bf16 %v1073, %v1072
    %v1082 = vpack.c.bf16 %v1075, %v1074
    %v1083 = vpack.c.bf16 %v1077, %v1076
    %s1084 = scalar_lea.vmem %s6, 256
    %v1085 = vld [vmem:[%s1084] sm:$0xf]
    %v1086 = vld [vmem:[%s1084 + $0x4] sm:$0xf]
    %v1087 = vld [vmem:[%s1084 + $0x8] sm:$0xf]
    %v1088 = vld [vmem:[%s1084 + $0xc] sm:$0xf]
    %v1089 = vld [vmem:[%s1084 + $0x10] sm:$0xf]
    %v1090 = vld [vmem:[%s1084 + $0x14] sm:$0xf]
    %v1091 = vld [vmem:[%s1084 + $0x18] sm:$0xf]
    %v1092 = vld [vmem:[%s1084 + $0x1c] sm:$0xf]
    %v1093 = vld [vmem:[%s1084 + $0x20] sm:$0xf]
    %v1094 = vld [vmem:[%s1084 + $0x24] sm:$0xf]
    %v1095 = vld [vmem:[%s1084 + $0x28] sm:$0xf]
    %v1096 = vld [vmem:[%s1084 + $0x2c] sm:$0xf]
    %v1097 = vld [vmem:[%s1084 + $0x30] sm:$0xf]
    %v1098 = vld [vmem:[%s1084 + $0x34] sm:$0xf]
    %v1099 = vld [vmem:[%s1084 + $0x38] sm:$0xf]
    %v1100 = vld [vmem:[%s1084 + $0x3c] sm:$0xf]
    %v1117 = vunpack.c.l.b16 %v1085
    %v1118 = vunpack.c.l.b16 %v1086
    %v1119 = vunpack.c.l.b16 %v1087
    %v1120 = vunpack.c.l.b16 %v1088
    %v1121 = vunpack.c.l.b16 %v1089
    %v1122 = vunpack.c.l.b16 %v1090
    %v1123 = vunpack.c.l.b16 %v1091
    %v1124 = vunpack.c.l.b16 %v1092
    %v1125 = vunpack.c.l.b16 %v1093
    %v1126 = vunpack.c.l.b16 %v1094
    %v1127 = vunpack.c.l.b16 %v1095
    %v1128 = vunpack.c.l.b16 %v1096
    %v1129 = vunpack.c.l.b16 %v1097
    %v1130 = vunpack.c.l.b16 %v1098
    %v1131 = vunpack.c.l.b16 %v1099
    %v1132 = vunpack.c.l.b16 %v1100
    %v1133 = vpack.c.b16 %v1118, %v1117
    %v1134 = vpack.c.b16 %v1120, %v1119
    %v1135 = vpack.c.b16 %v1122, %v1121
    %v1136 = vpack.c.b16 %v1124, %v1123
    %v1137 = vpack.c.b16 %v1126, %v1125
    %v1138 = vpack.c.b16 %v1128, %v1127
    %v1139 = vpack.c.b16 %v1130, %v1129
    %v1140 = vpack.c.b16 %v1132, %v1131
    %1149 = vmatpush.bf16.msra.mxu0 %v1140
    %1150 = vmatpush.bf16.msra.mxu0 %v1139
    %1151 = vmatpush.bf16.msra.mxu0 %v1138
    %1152 = vmatpush.bf16.msra.mxu0 %v1137
    %1153 = vmatpush.bf16.msra.mxu0 %v1136
    %1154 = vmatpush.bf16.msra.mxu0 %v1135
    %1155 = vmatpush.bf16.msra.mxu0 %v1134
    %1156 = vmatpush.bf16.msra.mxu0 %v1133
    %1157 = vmatmul.bf16.gmra.mxu0 %v1078
    %v1158 = vpop.f32.mrf.mxu0
    %v1159 = vadd.f32 0.0, %v1158
    %v1160 = vpop.f32.mrf.mxu0
    %v1161 = vadd.f32 0.0, %v1160
    %1162 = vmatmul.bf16.gmra.mxu0 %v1079
    %v1163 = vpop.f32.mrf.mxu0
    %v1164 = vadd.f32 0.0, %v1163
    %v1165 = vpop.f32.mrf.mxu0
    %v1166 = vadd.f32 0.0, %v1165
    %1167 = vmatmul.bf16.gmra.mxu0 %v1080
    %v1168 = vpop.f32.mrf.mxu0
    %v1169 = vadd.f32 0.0, %v1168
    %v1170 = vpop.f32.mrf.mxu0
    %v1171 = vadd.f32 0.0, %v1170
    %1172 = vmatmul.bf16.gmra.mxu0 %v1081
    %v1173 = vpop.f32.mrf.mxu0
    %v1174 = vadd.f32 0.0, %v1173
    %v1175 = vpop.f32.mrf.mxu0
    %v1176 = vadd.f32 0.0, %v1175
    %1177 = vmatmul.bf16.gmra.mxu0 %v1082
    %v1178 = vpop.f32.mrf.mxu0
    %v1179 = vpop.f32.mrf.mxu0
    %1180 = vmatmul.bf16.gmra.mxu0 %v1083
    %v1181 = vpop.f32.mrf.mxu0
    %v1182 = vpop.f32.mrf.mxu0
    %1183 = vdwg.mxu0
    %v1184 = vadd.f32 %v1056, %v1159
    %v1185 = vadd.f32 %v1057, %v1161
    %v1186 = vadd.f32 %v1058, %v1164
    %v1187 = vadd.f32 %v1059, %v1166
    %v1188 = vadd.f32 %v1060, %v1169
    %v1189 = vadd.f32 %v1061, %v1171
    %v1190 = vadd.f32 %v1062, %v1174
    %v1191 = vadd.f32 %v1063, %v1176
    %s1192 = sadd.s32 %s569, 96
    %s1193 = scalar_lea.vmem [#allocation2], %s1192
    %v1194 = vld [vmem:[%s1193] sm:$0xff]
    %v1195 = vld [vmem:[%s1193 + $0x8] sm:$0xff]
    %v1196 = vld [vmem:[%s1193 + $0x10] sm:$0xff]
    %v1197 = vld [vmem:[%s1193 + $0x18] sm:$0xff]
    %v1198 = vld [vmem:[%s1193 + $0x20] sm:$0xff]
    %v1199 = vld [vmem:[%s1193 + $0x28] sm:$0xff]
    %v1200 = vld [vmem:[%s1193 + $0x30] sm:$0xff]
    %v1201 = vld [vmem:[%s1193 + $0x38] sm:$0xff]
    %v1202 = vld [vmem:[%s1193 + $0x40] sm:$0xff]
    %v1203 = vld [vmem:[%s1193 + $0x48] sm:$0xff]
    %v1204 = vld [vmem:[%s1193 + $0x50] sm:$0xff]
    %v1205 = vld [vmem:[%s1193 + $0x58] sm:$0xff]
    %v1206 = vpack.c.bf16 %v1195, %v1194
    %v1207 = vpack.c.bf16 %v1197, %v1196
    %v1208 = vpack.c.bf16 %v1199, %v1198
    %v1209 = vpack.c.bf16 %v1201, %v1200
    %v1210 = vpack.c.bf16 %v1203, %v1202
    %v1211 = vpack.c.bf16 %v1205, %v1204
    %s1212 = scalar_lea.vmem %s6, 320
    %v1213 = vld [vmem:[%s1212] sm:$0xf]
    %v1214 = vld [vmem:[%s1212 + $0x4] sm:$0xf]
    %v1215 = vld [vmem:[%s1212 + $0x8] sm:$0xf]
    %v1216 = vld [vmem:[%s1212 + $0xc] sm:$0xf]
    %v1217 = vld [vmem:[%s1212 + $0x10] sm:$0xf]
    %v1218 = vld [vmem:[%s1212 + $0x14] sm:$0xf]
    %v1219 = vld [vmem:[%s1212 + $0x18] sm:$0xf]
    %v1220 = vld [vmem:[%s1212 + $0x1c] sm:$0xf]
    %v1221 = vld [vmem:[%s1212 + $0x20] sm:$0xf]
    %v1222 = vld [vmem:[%s1212 + $0x24] sm:$0xf]
    %v1223 = vld [vmem:[%s1212 + $0x28] sm:$0xf]
    %v1224 = vld [vmem:[%s1212 + $0x2c] sm:$0xf]
    %v1225 = vld [vmem:[%s1212 + $0x30] sm:$0xf]
    %v1226 = vld [vmem:[%s1212 + $0x34] sm:$0xf]
    %v1227 = vld [vmem:[%s1212 + $0x38] sm:$0xf]
    %v1228 = vld [vmem:[%s1212 + $0x3c] sm:$0xf]
    %v1245 = vunpack.c.l.b16 %v1213
    %v1246 = vunpack.c.l.b16 %v1214
    %v1247 = vunpack.c.l.b16 %v1215
    %v1248 = vunpack.c.l.b16 %v1216
    %v1249 = vunpack.c.l.b16 %v1217
    %v1250 = vunpack.c.l.b16 %v1218
    %v1251 = vunpack.c.l.b16 %v1219
    %v1252 = vunpack.c.l.b16 %v1220
    %v1253 = vunpack.c.l.b16 %v1221
    %v1254 = vunpack.c.l.b16 %v1222
    %v1255 = vunpack.c.l.b16 %v1223
    %v1256 = vunpack.c.l.b16 %v1224
    %v1257 = vunpack.c.l.b16 %v1225
    %v1258 = vunpack.c.l.b16 %v1226
    %v1259 = vunpack.c.l.b16 %v1227
    %v1260 = vunpack.c.l.b16 %v1228
    %v1261 = vpack.c.b16 %v1246, %v1245
    %v1262 = vpack.c.b16 %v1248, %v1247
    %v1263 = vpack.c.b16 %v1250, %v1249
    %v1264 = vpack.c.b16 %v1252, %v1251
    %v1265 = vpack.c.b16 %v1254, %v1253
    %v1266 = vpack.c.b16 %v1256, %v1255
    %v1267 = vpack.c.b16 %v1258, %v1257
    %v1268 = vpack.c.b16 %v1260, %v1259
    %1277 = vmatpush.bf16.msra.mxu0 %v1268
    %1278 = vmatpush.bf16.msra.mxu0 %v1267
    %1279 = vmatpush.bf16.msra.mxu0 %v1266
    %1280 = vmatpush.bf16.msra.mxu0 %v1265
    %1281 = vmatpush.bf16.msra.mxu0 %v1264
    %1282 = vmatpush.bf16.msra.mxu0 %v1263
    %1283 = vmatpush.bf16.msra.mxu0 %v1262
    %1284 = vmatpush.bf16.msra.mxu0 %v1261
    %1285 = vmatmul.bf16.gmra.mxu0 %v1206
    %v1286 = vpop.f32.mrf.mxu0
    %v1287 = vadd.f32 0.0, %v1286
    %v1288 = vpop.f32.mrf.mxu0
    %v1289 = vadd.f32 0.0, %v1288
    %1290 = vmatmul.bf16.gmra.mxu0 %v1207
    %v1291 = vpop.f32.mrf.mxu0
    %v1292 = vadd.f32 0.0, %v1291
    %v1293 = vpop.f32.mrf.mxu0
    %v1294 = vadd.f32 0.0, %v1293
    %1295 = vmatmul.bf16.gmra.mxu0 %v1208
    %v1296 = vpop.f32.mrf.mxu0
    %v1297 = vadd.f32 0.0, %v1296
    %v1298 = vpop.f32.mrf.mxu0
    %v1299 = vadd.f32 0.0, %v1298
    %1300 = vmatmul.bf16.gmra.mxu0 %v1209
    %v1301 = vpop.f32.mrf.mxu0
    %v1302 = vadd.f32 0.0, %v1301
    %v1303 = vpop.f32.mrf.mxu0
    %v1304 = vadd.f32 0.0, %v1303
    %1305 = vmatmul.bf16.gmra.mxu0 %v1210
    %v1306 = vpop.f32.mrf.mxu0
    %v1307 = vpop.f32.mrf.mxu0
    %1308 = vmatmul.bf16.gmra.mxu0 %v1211
    %v1309 = vpop.f32.mrf.mxu0
    %v1310 = vpop.f32.mrf.mxu0
    %1311 = vdwg.mxu0
    %v1312 = vadd.f32 %v1184, %v1287
    %v1313 = vadd.f32 %v1185, %v1289
    %v1314 = vadd.f32 %v1186, %v1292
    %v1315 = vadd.f32 %v1187, %v1294
    %v1316 = vadd.f32 %v1188, %v1297
    %v1317 = vadd.f32 %v1189, %v1299
    %v1318 = vadd.f32 %v1190, %v1302
    %v1319 = vadd.f32 %v1191, %v1304
    %s1320 = sadd.s32 %s569, 104
    %s1321 = scalar_lea.vmem [#allocation2], %s1320
    %v1322 = vld [vmem:[%s1321] sm:$0xff]
    %v1323 = vld [vmem:[%s1321 + $0x8] sm:$0xff]
    %v1324 = vld [vmem:[%s1321 + $0x10] sm:$0xff]
    %v1325 = vld [vmem:[%s1321 + $0x18] sm:$0xff]
    %v1326 = vld [vmem:[%s1321 + $0x20] sm:$0xff]
    %v1327 = vld [vmem:[%s1321 + $0x28] sm:$0xff]
    %v1328 = vld [vmem:[%s1321 + $0x30] sm:$0xff]
    %v1329 = vld [vmem:[%s1321 + $0x38] sm:$0xff]
    %v1330 = vld [vmem:[%s1321 + $0x40] sm:$0xff]
    %v1331 = vld [vmem:[%s1321 + $0x48] sm:$0xff]
    %v1332 = vld [vmem:[%s1321 + $0x50] sm:$0xff]
    %v1333 = vld [vmem:[%s1321 + $0x58] sm:$0xff]
    %v1334 = vpack.c.bf16 %v1323, %v1322
    %v1335 = vpack.c.bf16 %v1325, %v1324
    %v1336 = vpack.c.bf16 %v1327, %v1326
    %v1337 = vpack.c.bf16 %v1329, %v1328
    %v1338 = vpack.c.bf16 %v1331, %v1330
    %v1339 = vpack.c.bf16 %v1333, %v1332
    %s1340 = scalar_lea.vmem %s6, 384
    %v1341 = vld [vmem:[%s1340] sm:$0xf]
    %v1342 = vld [vmem:[%s1340 + $0x4] sm:$0xf]
    %v1343 = vld [vmem:[%s1340 + $0x8] sm:$0xf]
    %v1344 = vld [vmem:[%s1340 + $0xc] sm:$0xf]
    %v1345 = vld [vmem:[%s1340 + $0x10] sm:$0xf]
    %v1346 = vld [vmem:[%s1340 + $0x14] sm:$0xf]
    %v1347 = vld [vmem:[%s1340 + $0x18] sm:$0xf]
    %v1348 = vld [vmem:[%s1340 + $0x1c] sm:$0xf]
    %v1349 = vld [vmem:[%s1340 + $0x20] sm:$0xf]
    %v1350 = vld [vmem:[%s1340 + $0x24] sm:$0xf]
    %v1351 = vld [vmem:[%s1340 + $0x28] sm:$0xf]
    %v1352 = vld [vmem:[%s1340 + $0x2c] sm:$0xf]
    %v1353 = vld [vmem:[%s1340 + $0x30] sm:$0xf]
    %v1354 = vld [vmem:[%s1340 + $0x34] sm:$0xf]
    %v1355 = vld [vmem:[%s1340 + $0x38] sm:$0xf]
    %v1356 = vld [vmem:[%s1340 + $0x3c] sm:$0xf]
    %v1373 = vunpack.c.l.b16 %v1341
    %v1374 = vunpack.c.l.b16 %v1342
    %v1375 = vunpack.c.l.b16 %v1343
    %v1376 = vunpack.c.l.b16 %v1344
    %v1377 = vunpack.c.l.b16 %v1345
    %v1378 = vunpack.c.l.b16 %v1346
    %v1379 = vunpack.c.l.b16 %v1347
    %v1380 = vunpack.c.l.b16 %v1348
    %v1381 = vunpack.c.l.b16 %v1349
    %v1382 = vunpack.c.l.b16 %v1350
    %v1383 = vunpack.c.l.b16 %v1351
    %v1384 = vunpack.c.l.b16 %v1352
    %v1385 = vunpack.c.l.b16 %v1353
    %v1386 = vunpack.c.l.b16 %v1354
    %v1387 = vunpack.c.l.b16 %v1355
    %v1388 = vunpack.c.l.b16 %v1356
    %v1389 = vpack.c.b16 %v1374, %v1373
    %v1390 = vpack.c.b16 %v1376, %v1375
    %v1391 = vpack.c.b16 %v1378, %v1377
    %v1392 = vpack.c.b16 %v1380, %v1379
    %v1393 = vpack.c.b16 %v1382, %v1381
    %v1394 = vpack.c.b16 %v1384, %v1383
    %v1395 = vpack.c.b16 %v1386, %v1385
    %v1396 = vpack.c.b16 %v1388, %v1387
    %1405 = vmatpush.bf16.msra.mxu0 %v1396
    %1406 = vmatpush.bf16.msra.mxu0 %v1395
    %1407 = vmatpush.bf16.msra.mxu0 %v1394
    %1408 = vmatpush.bf16.msra.mxu0 %v1393
    %1409 = vmatpush.bf16.msra.mxu0 %v1392
    %1410 = vmatpush.bf16.msra.mxu0 %v1391
    %1411 = vmatpush.bf16.msra.mxu0 %v1390
    %1412 = vmatpush.bf16.msra.mxu0 %v1389
    %1413 = vmatmul.bf16.gmra.mxu0 %v1334
    %v1414 = vpop.f32.mrf.mxu0
    %v1415 = vadd.f32 0.0, %v1414
    %v1416 = vpop.f32.mrf.mxu0
    %v1417 = vadd.f32 0.0, %v1416
    %1418 = vmatmul.bf16.gmra.mxu0 %v1335
    %v1419 = vpop.f32.mrf.mxu0
    %v1420 = vadd.f32 0.0, %v1419
    %v1421 = vpop.f32.mrf.mxu0
    %v1422 = vadd.f32 0.0, %v1421
    %1423 = vmatmul.bf16.gmra.mxu0 %v1336
    %v1424 = vpop.f32.mrf.mxu0
    %v1425 = vadd.f32 0.0, %v1424
    %v1426 = vpop.f32.mrf.mxu0
    %v1427 = vadd.f32 0.0, %v1426
    %1428 = vmatmul.bf16.gmra.mxu0 %v1337
    %v1429 = vpop.f32.mrf.mxu0
    %v1430 = vadd.f32 0.0, %v1429
    %v1431 = vpop.f32.mrf.mxu0
    %v1432 = vadd.f32 0.0, %v1431
    %1433 = vmatmul.bf16.gmra.mxu0 %v1338
    %v1434 = vpop.f32.mrf.mxu0
    %v1435 = vpop.f32.mrf.mxu0
    %1436 = vmatmul.bf16.gmra.mxu0 %v1339
    %v1437 = vpop.f32.mrf.mxu0
    %v1438 = vpop.f32.mrf.mxu0
    %1439 = vdwg.mxu0
    %v1440 = vadd.f32 %v1312, %v1415
    %v1441 = vadd.f32 %v1313, %v1417
    %v1442 = vadd.f32 %v1314, %v1420
    %v1443 = vadd.f32 %v1315, %v1422
    %v1444 = vadd.f32 %v1316, %v1425
    %v1445 = vadd.f32 %v1317, %v1427
    %v1446 = vadd.f32 %v1318, %v1430
    %v1447 = vadd.f32 %v1319, %v1432
    %s1448 = sadd.s32 %s569, 112
    %s1449 = scalar_lea.vmem [#allocation2], %s1448
    %v1450 = vld [vmem:[%s1449] sm:$0xff]
    %v1451 = vld [vmem:[%s1449 + $0x8] sm:$0xff]
    %v1452 = vld [vmem:[%s1449 + $0x10] sm:$0xff]
    %v1453 = vld [vmem:[%s1449 + $0x18] sm:$0xff]
    %v1454 = vld [vmem:[%s1449 + $0x20] sm:$0xff]
    %v1455 = vld [vmem:[%s1449 + $0x28] sm:$0xff]
    %v1456 = vld [vmem:[%s1449 + $0x30] sm:$0xff]
    %v1457 = vld [vmem:[%s1449 + $0x38] sm:$0xff]
    %v1458 = vld [vmem:[%s1449 + $0x40] sm:$0xff]
    %v1459 = vld [vmem:[%s1449 + $0x48] sm:$0xff]
    %v1460 = vld [vmem:[%s1449 + $0x50] sm:$0xff]
    %v1461 = vld [vmem:[%s1449 + $0x58] sm:$0xff]
    %v1462 = vpack.c.bf16 %v1451, %v1450
    %v1463 = vpack.c.bf16 %v1453, %v1452
    %v1464 = vpack.c.bf16 %v1455, %v1454
    %v1465 = vpack.c.bf16 %v1457, %v1456
    %v1466 = vpack.c.bf16 %v1459, %v1458
    %v1467 = vpack.c.bf16 %v1461, %v1460
    %s1468 = scalar_lea.vmem %s6, 448
    %v1469 = vld [vmem:[%s1468] sm:$0xf]
    %v1470 = vld [vmem:[%s1468 + $0x4] sm:$0xf]
    %v1471 = vld [vmem:[%s1468 + $0x8] sm:$0xf]
    %v1472 = vld [vmem:[%s1468 + $0xc] sm:$0xf]
    %v1473 = vld [vmem:[%s1468 + $0x10] sm:$0xf]
    %v1474 = vld [vmem:[%s1468 + $0x14] sm:$0xf]
    %v1475 = vld [vmem:[%s1468 + $0x18] sm:$0xf]
    %v1476 = vld [vmem:[%s1468 + $0x1c] sm:$0xf]
    %v1477 = vld [vmem:[%s1468 + $0x20] sm:$0xf]
    %v1478 = vld [vmem:[%s1468 + $0x24] sm:$0xf]
    %v1479 = vld [vmem:[%s1468 + $0x28] sm:$0xf]
    %v1480 = vld [vmem:[%s1468 + $0x2c] sm:$0xf]
    %v1481 = vld [vmem:[%s1468 + $0x30] sm:$0xf]
    %v1482 = vld [vmem:[%s1468 + $0x34] sm:$0xf]
    %v1483 = vld [vmem:[%s1468 + $0x38] sm:$0xf]
    %v1484 = vld [vmem:[%s1468 + $0x3c] sm:$0xf]
    %v1501 = vunpack.c.l.b16 %v1469
    %v1502 = vunpack.c.l.b16 %v1470
    %v1503 = vunpack.c.l.b16 %v1471
    %v1504 = vunpack.c.l.b16 %v1472
    %v1505 = vunpack.c.l.b16 %v1473
    %v1506 = vunpack.c.l.b16 %v1474
    %v1507 = vunpack.c.l.b16 %v1475
    %v1508 = vunpack.c.l.b16 %v1476
    %v1509 = vunpack.c.l.b16 %v1477
    %v1510 = vunpack.c.l.b16 %v1478
    %v1511 = vunpack.c.l.b16 %v1479
    %v1512 = vunpack.c.l.b16 %v1480
    %v1513 = vunpack.c.l.b16 %v1481
    %v1514 = vunpack.c.l.b16 %v1482
    %v1515 = vunpack.c.l.b16 %v1483
    %v1516 = vunpack.c.l.b16 %v1484
    %v1517 = vpack.c.b16 %v1502, %v1501
    %v1518 = vpack.c.b16 %v1504, %v1503
    %v1519 = vpack.c.b16 %v1506, %v1505
    %v1520 = vpack.c.b16 %v1508, %v1507
    %v1521 = vpack.c.b16 %v1510, %v1509
    %v1522 = vpack.c.b16 %v1512, %v1511
    %v1523 = vpack.c.b16 %v1514, %v1513
    %v1524 = vpack.c.b16 %v1516, %v1515
    %1533 = vmatpush.bf16.msra.mxu0 %v1524
    %1534 = vmatpush.bf16.msra.mxu0 %v1523
    %1535 = vmatpush.bf16.msra.mxu0 %v1522
    %1536 = vmatpush.bf16.msra.mxu0 %v1521
    %1537 = vmatpush.bf16.msra.mxu0 %v1520
    %1538 = vmatpush.bf16.msra.mxu0 %v1519
    %1539 = vmatpush.bf16.msra.mxu0 %v1518
    %1540 = vmatpush.bf16.msra.mxu0 %v1517
    %1541 = vmatmul.bf16.gmra.mxu0 %v1462
    %v1542 = vpop.f32.mrf.mxu0
    %v1543 = vadd.f32 0.0, %v1542
    %v1544 = vpop.f32.mrf.mxu0
    %v1545 = vadd.f32 0.0, %v1544
    %1546 = vmatmul.bf16.gmra.mxu0 %v1463
    %v1547 = vpop.f32.mrf.mxu0
    %v1548 = vadd.f32 0.0, %v1547
    %v1549 = vpop.f32.mrf.mxu0
    %v1550 = vadd.f32 0.0, %v1549
    %1551 = vmatmul.bf16.gmra.mxu0 %v1464
    %v1552 = vpop.f32.mrf.mxu0
    %v1553 = vadd.f32 0.0, %v1552
    %v1554 = vpop.f32.mrf.mxu0
    %v1555 = vadd.f32 0.0, %v1554
    %1556 = vmatmul.bf16.gmra.mxu0 %v1465
    %v1557 = vpop.f32.mrf.mxu0
    %v1558 = vadd.f32 0.0, %v1557
    %v1559 = vpop.f32.mrf.mxu0
    %v1560 = vadd.f32 0.0, %v1559
    %1561 = vmatmul.bf16.gmra.mxu0 %v1466
    %v1562 = vpop.f32.mrf.mxu0
    %v1563 = vpop.f32.mrf.mxu0
    %1564 = vmatmul.bf16.gmra.mxu0 %v1467
    %v1565 = vpop.f32.mrf.mxu0
    %v1566 = vpop.f32.mrf.mxu0
    %1567 = vdwg.mxu0
    %v1568 = vadd.f32 %v1440, %v1543
    %v1569 = vadd.f32 %v1441, %v1545
    %v1570 = vadd.f32 %v1442, %v1548
    %v1571 = vadd.f32 %v1443, %v1550
    %v1572 = vadd.f32 %v1444, %v1553
    %v1573 = vadd.f32 %v1445, %v1555
    %v1574 = vadd.f32 %v1446, %v1558
    %v1575 = vadd.f32 %v1447, %v1560
    %s1576 = sadd.s32 %s569, 120
    %s1577 = scalar_lea.vmem [#allocation2], %s1576
    %v1578 = vld [vmem:[%s1577] sm:$0xff]
    %v1579 = vld [vmem:[%s1577 + $0x8] sm:$0xff]
    %v1580 = vld [vmem:[%s1577 + $0x10] sm:$0xff]
    %v1581 = vld [vmem:[%s1577 + $0x18] sm:$0xff]
    %v1582 = vld [vmem:[%s1577 + $0x20] sm:$0xff]
    %v1583 = vld [vmem:[%s1577 + $0x28] sm:$0xff]
    %v1584 = vld [vmem:[%s1577 + $0x30] sm:$0xff]
    %v1585 = vld [vmem:[%s1577 + $0x38] sm:$0xff]
    %v1586 = vld [vmem:[%s1577 + $0x40] sm:$0xff]
    %v1587 = vld [vmem:[%s1577 + $0x48] sm:$0xff]
    %v1588 = vld [vmem:[%s1577 + $0x50] sm:$0xff]
    %v1589 = vld [vmem:[%s1577 + $0x58] sm:$0xff]
    %v1590 = vpack.c.bf16 %v1579, %v1578
    %v1591 = vpack.c.bf16 %v1581, %v1580
    %v1592 = vpack.c.bf16 %v1583, %v1582
    %v1593 = vpack.c.bf16 %v1585, %v1584
    %v1594 = vpack.c.bf16 %v1587, %v1586
    %v1595 = vpack.c.bf16 %v1589, %v1588
    %s1596 = scalar_lea.vmem %s6, 512
    %v1597 = vld [vmem:[%s1596] sm:$0xf]
    %v1598 = vld [vmem:[%s1596 + $0x4] sm:$0xf]
    %v1599 = vld [vmem:[%s1596 + $0x8] sm:$0xf]
    %v1600 = vld [vmem:[%s1596 + $0xc] sm:$0xf]
    %v1601 = vld [vmem:[%s1596 + $0x10] sm:$0xf]
    %v1602 = vld [vmem:[%s1596 + $0x14] sm:$0xf]
    %v1603 = vld [vmem:[%s1596 + $0x18] sm:$0xf]
    %v1604 = vld [vmem:[%s1596 + $0x1c] sm:$0xf]
    %v1605 = vld [vmem:[%s1596 + $0x20] sm:$0xf]
    %v1606 = vld [vmem:[%s1596 + $0x24] sm:$0xf]
    %v1607 = vld [vmem:[%s1596 + $0x28] sm:$0xf]
    %v1608 = vld [vmem:[%s1596 + $0x2c] sm:$0xf]
    %v1609 = vld [vmem:[%s1596 + $0x30] sm:$0xf]
    %v1610 = vld [vmem:[%s1596 + $0x34] sm:$0xf]
    %v1611 = vld [vmem:[%s1596 + $0x38] sm:$0xf]
    %v1612 = vld [vmem:[%s1596 + $0x3c] sm:$0xf]
    %v1629 = vunpack.c.l.b16 %v1597
    %v1630 = vunpack.c.l.b16 %v1598
    %v1631 = vunpack.c.l.b16 %v1599
    %v1632 = vunpack.c.l.b16 %v1600
    %v1633 = vunpack.c.l.b16 %v1601
    %v1634 = vunpack.c.l.b16 %v1602
    %v1635 = vunpack.c.l.b16 %v1603
    %v1636 = vunpack.c.l.b16 %v1604
    %v1637 = vunpack.c.l.b16 %v1605
    %v1638 = vunpack.c.l.b16 %v1606
    %v1639 = vunpack.c.l.b16 %v1607
    %v1640 = vunpack.c.l.b16 %v1608
    %v1641 = vunpack.c.l.b16 %v1609
    %v1642 = vunpack.c.l.b16 %v1610
    %v1643 = vunpack.c.l.b16 %v1611
    %v1644 = vunpack.c.l.b16 %v1612
    %v1645 = vpack.c.b16 %v1630, %v1629
    %v1646 = vpack.c.b16 %v1632, %v1631
    %v1647 = vpack.c.b16 %v1634, %v1633
    %v1648 = vpack.c.b16 %v1636, %v1635
    %v1649 = vpack.c.b16 %v1638, %v1637
    %v1650 = vpack.c.b16 %v1640, %v1639
    %v1651 = vpack.c.b16 %v1642, %v1641
    %v1652 = vpack.c.b16 %v1644, %v1643
    %1661 = vmatpush.bf16.msra.mxu0 %v1652
    %1662 = vmatpush.bf16.msra.mxu0 %v1651
    %1663 = vmatpush.bf16.msra.mxu0 %v1650
    %1664 = vmatpush.bf16.msra.mxu0 %v1649
    %1665 = vmatpush.bf16.msra.mxu0 %v1648
    %1666 = vmatpush.bf16.msra.mxu0 %v1647
    %1667 = vmatpush.bf16.msra.mxu0 %v1646
    %1668 = vmatpush.bf16.msra.mxu0 %v1645
    %1669 = vmatmul.bf16.gmra.mxu0 %v1590
    %v1670 = vpop.f32.mrf.mxu0
    %v1671 = vadd.f32 0.0, %v1670
    %v1672 = vpop.f32.mrf.mxu0
    %v1673 = vadd.f32 0.0, %v1672
    %1674 = vmatmul.bf16.gmra.mxu0 %v1591
    %v1675 = vpop.f32.mrf.mxu0
    %v1676 = vadd.f32 0.0, %v1675
    %v1677 = vpop.f32.mrf.mxu0
    %v1678 = vadd.f32 0.0, %v1677
    %1679 = vmatmul.bf16.gmra.mxu0 %v1592
    %v1680 = vpop.f32.mrf.mxu0
    %v1681 = vadd.f32 0.0, %v1680
    %v1682 = vpop.f32.mrf.mxu0
    %v1683 = vadd.f32 0.0, %v1682
    %1684 = vmatmul.bf16.gmra.mxu0 %v1593
    %v1685 = vpop.f32.mrf.mxu0
    %v1686 = vadd.f32 0.0, %v1685
    %v1687 = vpop.f32.mrf.mxu0
    %v1688 = vadd.f32 0.0, %v1687
    %1689 = vmatmul.bf16.gmra.mxu0 %v1594
    %v1690 = vpop.f32.mrf.mxu0
    %v1691 = vpop.f32.mrf.mxu0
    %1692 = vmatmul.bf16.gmra.mxu0 %v1595
    %v1693 = vpop.f32.mrf.mxu0
    %v1694 = vpop.f32.mrf.mxu0
    %1695 = vdwg.mxu0
    %v1696 = vadd.f32 %v1568, %v1671
    %v1697 = vadd.f32 %v1569, %v1673
    %v1698 = vadd.f32 %v1570, %v1676
    %v1699 = vadd.f32 %v1571, %v1678
    %v1700 = vadd.f32 %v1572, %v1681
    %v1701 = vadd.f32 %v1573, %v1683
    %v1702 = vadd.f32 %v1574, %v1686
    %v1703 = vadd.f32 %v1575, %v1688
    %s1704 = sadd.s32 %s569, 128
    %s1705 = scalar_lea.vmem [#allocation2], %s1704
    %v1706 = vld [vmem:[%s1705] sm:$0xff]
    %v1707 = vld [vmem:[%s1705 + $0x8] sm:$0xff]
    %v1708 = vld [vmem:[%s1705 + $0x10] sm:$0xff]
    %v1709 = vld [vmem:[%s1705 + $0x18] sm:$0xff]
    %v1710 = vld [vmem:[%s1705 + $0x20] sm:$0xff]
    %v1711 = vld [vmem:[%s1705 + $0x28] sm:$0xff]
    %v1712 = vld [vmem:[%s1705 + $0x30] sm:$0xff]
    %v1713 = vld [vmem:[%s1705 + $0x38] sm:$0xff]
    %v1714 = vld [vmem:[%s1705 + $0x40] sm:$0xff]
    %v1715 = vld [vmem:[%s1705 + $0x48] sm:$0xff]
    %v1716 = vld [vmem:[%s1705 + $0x50] sm:$0xff]
    %v1717 = vld [vmem:[%s1705 + $0x58] sm:$0xff]
    %v1718 = vpack.c.bf16 %v1707, %v1706
    %v1719 = vpack.c.bf16 %v1709, %v1708
    %v1720 = vpack.c.bf16 %v1711, %v1710
    %v1721 = vpack.c.bf16 %v1713, %v1712
    %v1722 = vpack.c.bf16 %v1715, %v1714
    %v1723 = vpack.c.bf16 %v1717, %v1716
    %s1724 = scalar_lea.vmem %s6, 576
    %v1725 = vld [vmem:[%s1724] sm:$0xf]
    %v1726 = vld [vmem:[%s1724 + $0x4] sm:$0xf]
    %v1727 = vld [vmem:[%s1724 + $0x8] sm:$0xf]
    %v1728 = vld [vmem:[%s1724 + $0xc] sm:$0xf]
    %v1729 = vld [vmem:[%s1724 + $0x10] sm:$0xf]
    %v1730 = vld [vmem:[%s1724 + $0x14] sm:$0xf]
    %v1731 = vld [vmem:[%s1724 + $0x18] sm:$0xf]
    %v1732 = vld [vmem:[%s1724 + $0x1c] sm:$0xf]
    %v1733 = vld [vmem:[%s1724 + $0x20] sm:$0xf]
    %v1734 = vld [vmem:[%s1724 + $0x24] sm:$0xf]
    %v1735 = vld [vmem:[%s1724 + $0x28] sm:$0xf]
    %v1736 = vld [vmem:[%s1724 + $0x2c] sm:$0xf]
    %v1737 = vld [vmem:[%s1724 + $0x30] sm:$0xf]
    %v1738 = vld [vmem:[%s1724 + $0x34] sm:$0xf]
    %v1739 = vld [vmem:[%s1724 + $0x38] sm:$0xf]
    %v1740 = vld [vmem:[%s1724 + $0x3c] sm:$0xf]
    %v1757 = vunpack.c.l.b16 %v1725
    %v1758 = vunpack.c.l.b16 %v1726
    %v1759 = vunpack.c.l.b16 %v1727
    %v1760 = vunpack.c.l.b16 %v1728
    %v1761 = vunpack.c.l.b16 %v1729
    %v1762 = vunpack.c.l.b16 %v1730
    %v1763 = vunpack.c.l.b16 %v1731
    %v1764 = vunpack.c.l.b16 %v1732
    %v1765 = vunpack.c.l.b16 %v1733
    %v1766 = vunpack.c.l.b16 %v1734
    %v1767 = vunpack.c.l.b16 %v1735
    %v1768 = vunpack.c.l.b16 %v1736
    %v1769 = vunpack.c.l.b16 %v1737
    %v1770 = vunpack.c.l.b16 %v1738
    %v1771 = vunpack.c.l.b16 %v1739
    %v1772 = vunpack.c.l.b16 %v1740
    %v1773 = vpack.c.b16 %v1758, %v1757
    %v1774 = vpack.c.b16 %v1760, %v1759
    %v1775 = vpack.c.b16 %v1762, %v1761
    %v1776 = vpack.c.b16 %v1764, %v1763
    %v1777 = vpack.c.b16 %v1766, %v1765
    %v1778 = vpack.c.b16 %v1768, %v1767
    %v1779 = vpack.c.b16 %v1770, %v1769
    %v1780 = vpack.c.b16 %v1772, %v1771
    %1789 = vmatpush.bf16.msra.mxu0 %v1780
    %1790 = vmatpush.bf16.msra.mxu0 %v1779
    %1791 = vmatpush.bf16.msra.mxu0 %v1778
    %1792 = vmatpush.bf16.msra.mxu0 %v1777
    %1793 = vmatpush.bf16.msra.mxu0 %v1776
    %1794 = vmatpush.bf16.msra.mxu0 %v1775
    %1795 = vmatpush.bf16.msra.mxu0 %v1774
    %1796 = vmatpush.bf16.msra.mxu0 %v1773
    %1797 = vmatmul.bf16.gmra.mxu0 %v1718
    %v1798 = vpop.f32.mrf.mxu0
    %v1799 = vadd.f32 0.0, %v1798
    %v1800 = vpop.f32.mrf.mxu0
    %v1801 = vadd.f32 0.0, %v1800
    %1802 = vmatmul.bf16.gmra.mxu0 %v1719
    %v1803 = vpop.f32.mrf.mxu0
    %v1804 = vadd.f32 0.0, %v1803
    %v1805 = vpop.f32.mrf.mxu0
    %v1806 = vadd.f32 0.0, %v1805
    %1807 = vmatmul.bf16.gmra.mxu0 %v1720
    %v1808 = vpop.f32.mrf.mxu0
    %v1809 = vadd.f32 0.0, %v1808
    %v1810 = vpop.f32.mrf.mxu0
    %v1811 = vadd.f32 0.0, %v1810
    %1812 = vmatmul.bf16.gmra.mxu0 %v1721
    %v1813 = vpop.f32.mrf.mxu0
    %v1814 = vadd.f32 0.0, %v1813
    %v1815 = vpop.f32.mrf.mxu0
    %v1816 = vadd.f32 0.0, %v1815
    %1817 = vmatmul.bf16.gmra.mxu0 %v1722
    %v1818 = vpop.f32.mrf.mxu0
    %v1819 = vpop.f32.mrf.mxu0
    %1820 = vmatmul.bf16.gmra.mxu0 %v1723
    %v1821 = vpop.f32.mrf.mxu0
    %v1822 = vpop.f32.mrf.mxu0
    %1823 = vdwg.mxu0
    %v1824 = vadd.f32 %v1696, %v1799
    %v1825 = vadd.f32 %v1697, %v1801
    %v1826 = vadd.f32 %v1698, %v1804
    %v1827 = vadd.f32 %v1699, %v1806
    %v1828 = vadd.f32 %v1700, %v1809
    %v1829 = vadd.f32 %v1701, %v1811
    %v1830 = vadd.f32 %v1702, %v1814
    %v1831 = vadd.f32 %v1703, %v1816
    %s1832 = sadd.s32 %s569, 192
    %s1833 = scalar_lea.vmem [#allocation2], %s1832
    %v1834 = vld [vmem:[%s1833] sm:$0xff]
    %v1835 = vld [vmem:[%s1833 + $0x8] sm:$0xff]
    %v1836 = vld [vmem:[%s1833 + $0x10] sm:$0xff]
    %v1837 = vld [vmem:[%s1833 + $0x18] sm:$0xff]
    %v1838 = vld [vmem:[%s1833 + $0x20] sm:$0xff]
    %v1839 = vld [vmem:[%s1833 + $0x28] sm:$0xff]
    %v1840 = vld [vmem:[%s1833 + $0x30] sm:$0xff]
    %v1841 = vld [vmem:[%s1833 + $0x38] sm:$0xff]
    %v1842 = vld [vmem:[%s1833 + $0x40] sm:$0xff]
    %v1843 = vld [vmem:[%s1833 + $0x48] sm:$0xff]
    %v1844 = vld [vmem:[%s1833 + $0x50] sm:$0xff]
    %v1845 = vld [vmem:[%s1833 + $0x58] sm:$0xff]
    %v1846 = vpack.c.bf16 %v1835, %v1834
    %v1847 = vpack.c.bf16 %v1837, %v1836
    %v1848 = vpack.c.bf16 %v1839, %v1838
    %v1849 = vpack.c.bf16 %v1841, %v1840
    %v1850 = vpack.c.bf16 %v1843, %v1842
    %v1851 = vpack.c.bf16 %v1845, %v1844
    %s1852 = scalar_lea.vmem %s6, 640
    %v1853 = vld [vmem:[%s1852] sm:$0xf]
    %v1854 = vld [vmem:[%s1852 + $0x4] sm:$0xf]
    %v1855 = vld [vmem:[%s1852 + $0x8] sm:$0xf]
    %v1856 = vld [vmem:[%s1852 + $0xc] sm:$0xf]
    %v1857 = vld [vmem:[%s1852 + $0x10] sm:$0xf]
    %v1858 = vld [vmem:[%s1852 + $0x14] sm:$0xf]
    %v1859 = vld [vmem:[%s1852 + $0x18] sm:$0xf]
    %v1860 = vld [vmem:[%s1852 + $0x1c] sm:$0xf]
    %v1861 = vld [vmem:[%s1852 + $0x20] sm:$0xf]
    %v1862 = vld [vmem:[%s1852 + $0x24] sm:$0xf]
    %v1863 = vld [vmem:[%s1852 + $0x28] sm:$0xf]
    %v1864 = vld [vmem:[%s1852 + $0x2c] sm:$0xf]
    %v1865 = vld [vmem:[%s1852 + $0x30] sm:$0xf]
    %v1866 = vld [vmem:[%s1852 + $0x34] sm:$0xf]
    %v1867 = vld [vmem:[%s1852 + $0x38] sm:$0xf]
    %v1868 = vld [vmem:[%s1852 + $0x3c] sm:$0xf]
    %v1885 = vunpack.c.l.b16 %v1853
    %v1886 = vunpack.c.l.b16 %v1854
    %v1887 = vunpack.c.l.b16 %v1855
    %v1888 = vunpack.c.l.b16 %v1856
    %v1889 = vunpack.c.l.b16 %v1857
    %v1890 = vunpack.c.l.b16 %v1858
    %v1891 = vunpack.c.l.b16 %v1859
    %v1892 = vunpack.c.l.b16 %v1860
    %v1893 = vunpack.c.l.b16 %v1861
    %v1894 = vunpack.c.l.b16 %v1862
    %v1895 = vunpack.c.l.b16 %v1863
    %v1896 = vunpack.c.l.b16 %v1864
    %v1897 = vunpack.c.l.b16 %v1865
    %v1898 = vunpack.c.l.b16 %v1866
    %v1899 = vunpack.c.l.b16 %v1867
    %v1900 = vunpack.c.l.b16 %v1868
    %v1901 = vpack.c.b16 %v1886, %v1885
    %v1902 = vpack.c.b16 %v1888, %v1887
    %v1903 = vpack.c.b16 %v1890, %v1889
    %v1904 = vpack.c.b16 %v1892, %v1891
    %v1905 = vpack.c.b16 %v1894, %v1893
    %v1906 = vpack.c.b16 %v1896, %v1895
    %v1907 = vpack.c.b16 %v1898, %v1897
    %v1908 = vpack.c.b16 %v1900, %v1899
    %1917 = vmatpush.bf16.msra.mxu0 %v1908
    %1918 = vmatpush.bf16.msra.mxu0 %v1907
    %1919 = vmatpush.bf16.msra.mxu0 %v1906
    %1920 = vmatpush.bf16.msra.mxu0 %v1905
    %1921 = vmatpush.bf16.msra.mxu0 %v1904
    %1922 = vmatpush.bf16.msra.mxu0 %v1903
    %1923 = vmatpush.bf16.msra.mxu0 %v1902
    %1924 = vmatpush.bf16.msra.mxu0 %v1901
    %1925 = vmatmul.bf16.gmra.mxu0 %v1846
    %v1926 = vpop.f32.mrf.mxu0
    %v1927 = vadd.f32 0.0, %v1926
    %v1928 = vpop.f32.mrf.mxu0
    %v1929 = vadd.f32 0.0, %v1928
    %1930 = vmatmul.bf16.gmra.mxu0 %v1847
    %v1931 = vpop.f32.mrf.mxu0
    %v1932 = vadd.f32 0.0, %v1931
    %v1933 = vpop.f32.mrf.mxu0
    %v1934 = vadd.f32 0.0, %v1933
    %1935 = vmatmul.bf16.gmra.mxu0 %v1848
    %v1936 = vpop.f32.mrf.mxu0
    %v1937 = vadd.f32 0.0, %v1936
    %v1938 = vpop.f32.mrf.mxu0
    %v1939 = vadd.f32 0.0, %v1938
    %1940 = vmatmul.bf16.gmra.mxu0 %v1849
    %v1941 = vpop.f32.mrf.mxu0
    %v1942 = vadd.f32 0.0, %v1941
    %v1943 = vpop.f32.mrf.mxu0
    %v1944 = vadd.f32 0.0, %v1943
    %1945 = vmatmul.bf16.gmra.mxu0 %v1850
    %v1946 = vpop.f32.mrf.mxu0
    %v1947 = vpop.f32.mrf.mxu0
    %1948 = vmatmul.bf16.gmra.mxu0 %v1851
    %v1949 = vpop.f32.mrf.mxu0
    %v1950 = vpop.f32.mrf.mxu0
    %1951 = vdwg.mxu0
    %v1952 = vadd.f32 %v1824, %v1927
    %v1953 = vadd.f32 %v1825, %v1929
    %v1954 = vadd.f32 %v1826, %v1932
    %v1955 = vadd.f32 %v1827, %v1934
    %v1956 = vadd.f32 %v1828, %v1937
    %v1957 = vadd.f32 %v1829, %v1939
    %v1958 = vadd.f32 %v1830, %v1942
    %v1959 = vadd.f32 %v1831, %v1944
    %s1960 = sadd.s32 %s569, 200
    %s1961 = scalar_lea.vmem [#allocation2], %s1960
    %v1962 = vld [vmem:[%s1961] sm:$0xff]
    %v1963 = vld [vmem:[%s1961 + $0x8] sm:$0xff]
    %v1964 = vld [vmem:[%s1961 + $0x10] sm:$0xff]
    %v1965 = vld [vmem:[%s1961 + $0x18] sm:$0xff]
    %v1966 = vld [vmem:[%s1961 + $0x20] sm:$0xff]
    %v1967 = vld [vmem:[%s1961 + $0x28] sm:$0xff]
    %v1968 = vld [vmem:[%s1961 + $0x30] sm:$0xff]
    %v1969 = vld [vmem:[%s1961 + $0x38] sm:$0xff]
    %v1970 = vld [vmem:[%s1961 + $0x40] sm:$0xff]
    %v1971 = vld [vmem:[%s1961 + $0x48] sm:$0xff]
    %v1972 = vld [vmem:[%s1961 + $0x50] sm:$0xff]
    %v1973 = vld [vmem:[%s1961 + $0x58] sm:$0xff]
    %v1974 = vpack.c.bf16 %v1963, %v1962
    %v1975 = vpack.c.bf16 %v1965, %v1964
    %v1976 = vpack.c.bf16 %v1967, %v1966
    %v1977 = vpack.c.bf16 %v1969, %v1968
    %v1978 = vpack.c.bf16 %v1971, %v1970
    %v1979 = vpack.c.bf16 %v1973, %v1972
    %s1980 = scalar_lea.vmem %s6, 704
    %v1981 = vld [vmem:[%s1980] sm:$0xf]
    %v1982 = vld [vmem:[%s1980 + $0x4] sm:$0xf]
    %v1983 = vld [vmem:[%s1980 + $0x8] sm:$0xf]
    %v1984 = vld [vmem:[%s1980 + $0xc] sm:$0xf]
    %v1985 = vld [vmem:[%s1980 + $0x10] sm:$0xf]
    %v1986 = vld [vmem:[%s1980 + $0x14] sm:$0xf]
    %v1987 = vld [vmem:[%s1980 + $0x18] sm:$0xf]
    %v1988 = vld [vmem:[%s1980 + $0x1c] sm:$0xf]
    %v1989 = vld [vmem:[%s1980 + $0x20] sm:$0xf]
    %v1990 = vld [vmem:[%s1980 + $0x24] sm:$0xf]
    %v1991 = vld [vmem:[%s1980 + $0x28] sm:$0xf]
    %v1992 = vld [vmem:[%s1980 + $0x2c] sm:$0xf]
    %v1993 = vld [vmem:[%s1980 + $0x30] sm:$0xf]
    %v1994 = vld [vmem:[%s1980 + $0x34] sm:$0xf]
    %v1995 = vld [vmem:[%s1980 + $0x38] sm:$0xf]
    %v1996 = vld [vmem:[%s1980 + $0x3c] sm:$0xf]
    %v2013 = vunpack.c.l.b16 %v1981
    %v2014 = vunpack.c.l.b16 %v1982
    %v2015 = vunpack.c.l.b16 %v1983
    %v2016 = vunpack.c.l.b16 %v1984
    %v2017 = vunpack.c.l.b16 %v1985
    %v2018 = vunpack.c.l.b16 %v1986
    %v2019 = vunpack.c.l.b16 %v1987
    %v2020 = vunpack.c.l.b16 %v1988
    %v2021 = vunpack.c.l.b16 %v1989
    %v2022 = vunpack.c.l.b16 %v1990
    %v2023 = vunpack.c.l.b16 %v1991
    %v2024 = vunpack.c.l.b16 %v1992
    %v2025 = vunpack.c.l.b16 %v1993
    %v2026 = vunpack.c.l.b16 %v1994
    %v2027 = vunpack.c.l.b16 %v1995
    %v2028 = vunpack.c.l.b16 %v1996
    %v2029 = vpack.c.b16 %v2014, %v2013
    %v2030 = vpack.c.b16 %v2016, %v2015
    %v2031 = vpack.c.b16 %v2018, %v2017
    %v2032 = vpack.c.b16 %v2020, %v2019
    %v2033 = vpack.c.b16 %v2022, %v2021
    %v2034 = vpack.c.b16 %v2024, %v2023
    %v2035 = vpack.c.b16 %v2026, %v2025
    %v2036 = vpack.c.b16 %v2028, %v2027
    %2045 = vmatpush.bf16.msra.mxu0 %v2036
    %2046 = vmatpush.bf16.msra.mxu0 %v2035
    %2047 = vmatpush.bf16.msra.mxu0 %v2034
    %2048 = vmatpush.bf16.msra.mxu0 %v2033
    %2049 = vmatpush.bf16.msra.mxu0 %v2032
    %2050 = vmatpush.bf16.msra.mxu0 %v2031
    %2051 = vmatpush.bf16.msra.mxu0 %v2030
    %2052 = vmatpush.bf16.msra.mxu0 %v2029
    %2053 = vmatmul.bf16.gmra.mxu0 %v1974
    %v2054 = vpop.f32.mrf.mxu0
    %v2055 = vadd.f32 0.0, %v2054
    %v2056 = vpop.f32.mrf.mxu0
    %v2057 = vadd.f32 0.0, %v2056
    %2058 = vmatmul.bf16.gmra.mxu0 %v1975
    %v2059 = vpop.f32.mrf.mxu0
    %v2060 = vadd.f32 0.0, %v2059
    %v2061 = vpop.f32.mrf.mxu0
    %v2062 = vadd.f32 0.0, %v2061
    %2063 = vmatmul.bf16.gmra.mxu0 %v1976
    %v2064 = vpop.f32.mrf.mxu0
    %v2065 = vadd.f32 0.0, %v2064
    %v2066 = vpop.f32.mrf.mxu0
    %v2067 = vadd.f32 0.0, %v2066
    %2068 = vmatmul.bf16.gmra.mxu0 %v1977
    %v2069 = vpop.f32.mrf.mxu0
    %v2070 = vadd.f32 0.0, %v2069
    %v2071 = vpop.f32.mrf.mxu0
    %v2072 = vadd.f32 0.0, %v2071
    %2073 = vmatmul.bf16.gmra.mxu0 %v1978
    %v2074 = vpop.f32.mrf.mxu0
    %v2075 = vpop.f32.mrf.mxu0
    %2076 = vmatmul.bf16.gmra.mxu0 %v1979
    %v2077 = vpop.f32.mrf.mxu0
    %v2078 = vpop.f32.mrf.mxu0
    %2079 = vdwg.mxu0
    %v2080 = vadd.f32 %v1952, %v2055
    %v2081 = vadd.f32 %v1953, %v2057
    %v2082 = vadd.f32 %v1954, %v2060
    %v2083 = vadd.f32 %v1955, %v2062
    %v2084 = vadd.f32 %v1956, %v2065
    %v2085 = vadd.f32 %v1957, %v2067
    %v2086 = vadd.f32 %v1958, %v2070
    %v2087 = vadd.f32 %v1959, %v2072
    %s2088 = sadd.s32 %s569, 208
    %s2089 = scalar_lea.vmem [#allocation2], %s2088
    %v2090 = vld [vmem:[%s2089] sm:$0xff]
    %v2091 = vld [vmem:[%s2089 + $0x8] sm:$0xff]
    %v2092 = vld [vmem:[%s2089 + $0x10] sm:$0xff]
    %v2093 = vld [vmem:[%s2089 + $0x18] sm:$0xff]
    %v2094 = vld [vmem:[%s2089 + $0x20] sm:$0xff]
    %v2095 = vld [vmem:[%s2089 + $0x28] sm:$0xff]
    %v2096 = vld [vmem:[%s2089 + $0x30] sm:$0xff]
    %v2097 = vld [vmem:[%s2089 + $0x38] sm:$0xff]
    %v2098 = vld [vmem:[%s2089 + $0x40] sm:$0xff]
    %v2099 = vld [vmem:[%s2089 + $0x48] sm:$0xff]
    %v2100 = vld [vmem:[%s2089 + $0x50] sm:$0xff]
    %v2101 = vld [vmem:[%s2089 + $0x58] sm:$0xff]
    %v2102 = vpack.c.bf16 %v2091, %v2090
    %v2103 = vpack.c.bf16 %v2093, %v2092
    %v2104 = vpack.c.bf16 %v2095, %v2094
    %v2105 = vpack.c.bf16 %v2097, %v2096
    %v2106 = vpack.c.bf16 %v2099, %v2098
    %v2107 = vpack.c.bf16 %v2101, %v2100
    %s2108 = scalar_lea.vmem %s6, 768
    %v2109 = vld [vmem:[%s2108] sm:$0xf]
    %v2110 = vld [vmem:[%s2108 + $0x4] sm:$0xf]
    %v2111 = vld [vmem:[%s2108 + $0x8] sm:$0xf]
    %v2112 = vld [vmem:[%s2108 + $0xc] sm:$0xf]
    %v2113 = vld [vmem:[%s2108 + $0x10] sm:$0xf]
    %v2114 = vld [vmem:[%s2108 + $0x14] sm:$0xf]
    %v2115 = vld [vmem:[%s2108 + $0x18] sm:$0xf]
    %v2116 = vld [vmem:[%s2108 + $0x1c] sm:$0xf]
    %v2117 = vld [vmem:[%s2108 + $0x20] sm:$0xf]
    %v2118 = vld [vmem:[%s2108 + $0x24] sm:$0xf]
    %v2119 = vld [vmem:[%s2108 + $0x28] sm:$0xf]
    %v2120 = vld [vmem:[%s2108 + $0x2c] sm:$0xf]
    %v2121 = vld [vmem:[%s2108 + $0x30] sm:$0xf]
    %v2122 = vld [vmem:[%s2108 + $0x34] sm:$0xf]
    %v2123 = vld [vmem:[%s2108 + $0x38] sm:$0xf]
    %v2124 = vld [vmem:[%s2108 + $0x3c] sm:$0xf]
    %v2141 = vunpack.c.l.b16 %v2109
    %v2142 = vunpack.c.l.b16 %v2110
    %v2143 = vunpack.c.l.b16 %v2111
    %v2144 = vunpack.c.l.b16 %v2112
    %v2145 = vunpack.c.l.b16 %v2113
    %v2146 = vunpack.c.l.b16 %v2114
    %v2147 = vunpack.c.l.b16 %v2115
    %v2148 = vunpack.c.l.b16 %v2116
    %v2149 = vunpack.c.l.b16 %v2117
    %v2150 = vunpack.c.l.b16 %v2118
    %v2151 = vunpack.c.l.b16 %v2119
    %v2152 = vunpack.c.l.b16 %v2120
    %v2153 = vunpack.c.l.b16 %v2121
    %v2154 = vunpack.c.l.b16 %v2122
    %v2155 = vunpack.c.l.b16 %v2123
    %v2156 = vunpack.c.l.b16 %v2124
    %v2157 = vpack.c.b16 %v2142, %v2141
    %v2158 = vpack.c.b16 %v2144, %v2143
    %v2159 = vpack.c.b16 %v2146, %v2145
    %v2160 = vpack.c.b16 %v2148, %v2147
    %v2161 = vpack.c.b16 %v2150, %v2149
    %v2162 = vpack.c.b16 %v2152, %v2151
    %v2163 = vpack.c.b16 %v2154, %v2153
    %v2164 = vpack.c.b16 %v2156, %v2155
    %2173 = vmatpush.bf16.msra.mxu0 %v2164
    %2174 = vmatpush.bf16.msra.mxu0 %v2163
    %2175 = vmatpush.bf16.msra.mxu0 %v2162
    %2176 = vmatpush.bf16.msra.mxu0 %v2161
    %2177 = vmatpush.bf16.msra.mxu0 %v2160
    %2178 = vmatpush.bf16.msra.mxu0 %v2159
    %2179 = vmatpush.bf16.msra.mxu0 %v2158
    %2180 = vmatpush.bf16.msra.mxu0 %v2157
    %2181 = vmatmul.bf16.gmra.mxu0 %v2102
    %v2182 = vpop.f32.mrf.mxu0
    %v2183 = vadd.f32 0.0, %v2182
    %v2184 = vpop.f32.mrf.mxu0
    %v2185 = vadd.f32 0.0, %v2184
    %2186 = vmatmul.bf16.gmra.mxu0 %v2103
    %v2187 = vpop.f32.mrf.mxu0
    %v2188 = vadd.f32 0.0, %v2187
    %v2189 = vpop.f32.mrf.mxu0
    %v2190 = vadd.f32 0.0, %v2189
    %2191 = vmatmul.bf16.gmra.mxu0 %v2104
    %v2192 = vpop.f32.mrf.mxu0
    %v2193 = vadd.f32 0.0, %v2192
    %v2194 = vpop.f32.mrf.mxu0
    %v2195 = vadd.f32 0.0, %v2194
    %2196 = vmatmul.bf16.gmra.mxu0 %v2105
    %v2197 = vpop.f32.mrf.mxu0
    %v2198 = vadd.f32 0.0, %v2197
    %v2199 = vpop.f32.mrf.mxu0
    %v2200 = vadd.f32 0.0, %v2199
    %2201 = vmatmul.bf16.gmra.mxu0 %v2106
    %v2202 = vpop.f32.mrf.mxu0
    %v2203 = vpop.f32.mrf.mxu0
    %2204 = vmatmul.bf16.gmra.mxu0 %v2107
    %v2205 = vpop.f32.mrf.mxu0
    %v2206 = vpop.f32.mrf.mxu0
    %2207 = vdwg.mxu0
    %v2208 = vadd.f32 %v2080, %v2183
    %v2209 = vadd.f32 %v2081, %v2185
    %v2210 = vadd.f32 %v2082, %v2188
    %v2211 = vadd.f32 %v2083, %v2190
    %v2212 = vadd.f32 %v2084, %v2193
    %v2213 = vadd.f32 %v2085, %v2195
    %v2214 = vadd.f32 %v2086, %v2198
    %v2215 = vadd.f32 %v2087, %v2200
    %s2216 = sadd.s32 %s569, 216
    %s2217 = scalar_lea.vmem [#allocation2], %s2216
    %v2218 = vld [vmem:[%s2217] sm:$0xff]
    %v2219 = vld [vmem:[%s2217 + $0x8] sm:$0xff]
    %v2220 = vld [vmem:[%s2217 + $0x10] sm:$0xff]
    %v2221 = vld [vmem:[%s2217 + $0x18] sm:$0xff]
    %v2222 = vld [vmem:[%s2217 + $0x20] sm:$0xff]
    %v2223 = vld [vmem:[%s2217 + $0x28] sm:$0xff]
    %v2224 = vld [vmem:[%s2217 + $0x30] sm:$0xff]
    %v2225 = vld [vmem:[%s2217 + $0x38] sm:$0xff]
    %v2226 = vld [vmem:[%s2217 + $0x40] sm:$0xff]
    %v2227 = vld [vmem:[%s2217 + $0x48] sm:$0xff]
    %v2228 = vld [vmem:[%s2217 + $0x50] sm:$0xff]
    %v2229 = vld [vmem:[%s2217 + $0x58] sm:$0xff]
    %v2230 = vpack.c.bf16 %v2219, %v2218
    %v2231 = vpack.c.bf16 %v2221, %v2220
    %v2232 = vpack.c.bf16 %v2223, %v2222
    %v2233 = vpack.c.bf16 %v2225, %v2224
    %v2234 = vpack.c.bf16 %v2227, %v2226
    %v2235 = vpack.c.bf16 %v2229, %v2228
    %s2236 = scalar_lea.vmem %s6, 832
    %v2237 = vld [vmem:[%s2236] sm:$0xf]
    %v2238 = vld [vmem:[%s2236 + $0x4] sm:$0xf]
    %v2239 = vld [vmem:[%s2236 + $0x8] sm:$0xf]
    %v2240 = vld [vmem:[%s2236 + $0xc] sm:$0xf]
    %v2241 = vld [vmem:[%s2236 + $0x10] sm:$0xf]
    %v2242 = vld [vmem:[%s2236 + $0x14] sm:$0xf]
    %v2243 = vld [vmem:[%s2236 + $0x18] sm:$0xf]
    %v2244 = vld [vmem:[%s2236 + $0x1c] sm:$0xf]
    %v2245 = vld [vmem:[%s2236 + $0x20] sm:$0xf]
    %v2246 = vld [vmem:[%s2236 + $0x24] sm:$0xf]
    %v2247 = vld [vmem:[%s2236 + $0x28] sm:$0xf]
    %v2248 = vld [vmem:[%s2236 + $0x2c] sm:$0xf]
    %v2249 = vld [vmem:[%s2236 + $0x30] sm:$0xf]
    %v2250 = vld [vmem:[%s2236 + $0x34] sm:$0xf]
    %v2251 = vld [vmem:[%s2236 + $0x38] sm:$0xf]
    %v2252 = vld [vmem:[%s2236 + $0x3c] sm:$0xf]
    %v2269 = vunpack.c.l.b16 %v2237
    %v2270 = vunpack.c.l.b16 %v2238
    %v2271 = vunpack.c.l.b16 %v2239
    %v2272 = vunpack.c.l.b16 %v2240
    %v2273 = vunpack.c.l.b16 %v2241
    %v2274 = vunpack.c.l.b16 %v2242
    %v2275 = vunpack.c.l.b16 %v2243
    %v2276 = vunpack.c.l.b16 %v2244
    %v2277 = vunpack.c.l.b16 %v2245
    %v2278 = vunpack.c.l.b16 %v2246
    %v2279 = vunpack.c.l.b16 %v2247
    %v2280 = vunpack.c.l.b16 %v2248
    %v2281 = vunpack.c.l.b16 %v2249
    %v2282 = vunpack.c.l.b16 %v2250
    %v2283 = vunpack.c.l.b16 %v2251
    %v2284 = vunpack.c.l.b16 %v2252
    %v2285 = vpack.c.b16 %v2270, %v2269
    %v2286 = vpack.c.b16 %v2272, %v2271
    %v2287 = vpack.c.b16 %v2274, %v2273
    %v2288 = vpack.c.b16 %v2276, %v2275
    %v2289 = vpack.c.b16 %v2278, %v2277
    %v2290 = vpack.c.b16 %v2280, %v2279
    %v2291 = vpack.c.b16 %v2282, %v2281
    %v2292 = vpack.c.b16 %v2284, %v2283
    %2301 = vmatpush.bf16.msra.mxu0 %v2292
    %2302 = vmatpush.bf16.msra.mxu0 %v2291
    %2303 = vmatpush.bf16.msra.mxu0 %v2290
    %2304 = vmatpush.bf16.msra.mxu0 %v2289
    %2305 = vmatpush.bf16.msra.mxu0 %v2288
    %2306 = vmatpush.bf16.msra.mxu0 %v2287
    %2307 = vmatpush.bf16.msra.mxu0 %v2286
    %2308 = vmatpush.bf16.msra.mxu0 %v2285
    %2309 = vmatmul.bf16.gmra.mxu0 %v2230
    %v2310 = vpop.f32.mrf.mxu0
    %v2311 = vadd.f32 0.0, %v2310
    %v2312 = vpop.f32.mrf.mxu0
    %v2313 = vadd.f32 0.0, %v2312
    %2314 = vmatmul.bf16.gmra.mxu0 %v2231
    %v2315 = vpop.f32.mrf.mxu0
    %v2316 = vadd.f32 0.0, %v2315
    %v2317 = vpop.f32.mrf.mxu0
    %v2318 = vadd.f32 0.0, %v2317
    %2319 = vmatmul.bf16.gmra.mxu0 %v2232
    %v2320 = vpop.f32.mrf.mxu0
    %v2321 = vadd.f32 0.0, %v2320
    %v2322 = vpop.f32.mrf.mxu0
    %v2323 = vadd.f32 0.0, %v2322
    %2324 = vmatmul.bf16.gmra.mxu0 %v2233
    %v2325 = vpop.f32.mrf.mxu0
    %v2326 = vadd.f32 0.0, %v2325
    %v2327 = vpop.f32.mrf.mxu0
    %v2328 = vadd.f32 0.0, %v2327
    %2329 = vmatmul.bf16.gmra.mxu0 %v2234
    %v2330 = vpop.f32.mrf.mxu0
    %v2331 = vpop.f32.mrf.mxu0
    %2332 = vmatmul.bf16.gmra.mxu0 %v2235
    %v2333 = vpop.f32.mrf.mxu0
    %v2334 = vpop.f32.mrf.mxu0
    %2335 = vdwg.mxu0
    %v2336 = vadd.f32 %v2208, %v2311
    %v2337 = vadd.f32 %v2209, %v2313
    %v2338 = vadd.f32 %v2210, %v2316
    %v2339 = vadd.f32 %v2211, %v2318
    %v2340 = vadd.f32 %v2212, %v2321
    %v2341 = vadd.f32 %v2213, %v2323
    %v2342 = vadd.f32 %v2214, %v2326
    %v2343 = vadd.f32 %v2215, %v2328
    %s2344 = sadd.s32 %s569, 224
    %s2345 = scalar_lea.vmem [#allocation2], %s2344
    %v2346 = vld [vmem:[%s2345] sm:$0xff]
    %v2347 = vld [vmem:[%s2345 + $0x8] sm:$0xff]
    %v2348 = vld [vmem:[%s2345 + $0x10] sm:$0xff]
    %v2349 = vld [vmem:[%s2345 + $0x18] sm:$0xff]
    %v2350 = vld [vmem:[%s2345 + $0x20] sm:$0xff]
    %v2351 = vld [vmem:[%s2345 + $0x28] sm:$0xff]
    %v2352 = vld [vmem:[%s2345 + $0x30] sm:$0xff]
    %v2353 = vld [vmem:[%s2345 + $0x38] sm:$0xff]
    %v2354 = vld [vmem:[%s2345 + $0x40] sm:$0xff]
    %v2355 = vld [vmem:[%s2345 + $0x48] sm:$0xff]
    %v2356 = vld [vmem:[%s2345 + $0x50] sm:$0xff]
    %v2357 = vld [vmem:[%s2345 + $0x58] sm:$0xff]
    %v2358 = vpack.c.bf16 %v2347, %v2346
    %v2359 = vpack.c.bf16 %v2349, %v2348
    %v2360 = vpack.c.bf16 %v2351, %v2350
    %v2361 = vpack.c.bf16 %v2353, %v2352
    %v2362 = vpack.c.bf16 %v2355, %v2354
    %v2363 = vpack.c.bf16 %v2357, %v2356
    %s2364 = scalar_lea.vmem %s6, 896
    %v2365 = vld [vmem:[%s2364] sm:$0xf]
    %v2366 = vld [vmem:[%s2364 + $0x4] sm:$0xf]
    %v2367 = vld [vmem:[%s2364 + $0x8] sm:$0xf]
    %v2368 = vld [vmem:[%s2364 + $0xc] sm:$0xf]
    %v2369 = vld [vmem:[%s2364 + $0x10] sm:$0xf]
    %v2370 = vld [vmem:[%s2364 + $0x14] sm:$0xf]
    %v2371 = vld [vmem:[%s2364 + $0x18] sm:$0xf]
    %v2372 = vld [vmem:[%s2364 + $0x1c] sm:$0xf]
    %v2373 = vld [vmem:[%s2364 + $0x20] sm:$0xf]
    %v2374 = vld [vmem:[%s2364 + $0x24] sm:$0xf]
    %v2375 = vld [vmem:[%s2364 + $0x28] sm:$0xf]
    %v2376 = vld [vmem:[%s2364 + $0x2c] sm:$0xf]
    %v2377 = vld [vmem:[%s2364 + $0x30] sm:$0xf]
    %v2378 = vld [vmem:[%s2364 + $0x34] sm:$0xf]
    %v2379 = vld [vmem:[%s2364 + $0x38] sm:$0xf]
    %v2380 = vld [vmem:[%s2364 + $0x3c] sm:$0xf]
    %v2397 = vunpack.c.l.b16 %v2365
    %v2398 = vunpack.c.l.b16 %v2366
    %v2399 = vunpack.c.l.b16 %v2367
    %v2400 = vunpack.c.l.b16 %v2368
    %v2401 = vunpack.c.l.b16 %v2369
    %v2402 = vunpack.c.l.b16 %v2370
    %v2403 = vunpack.c.l.b16 %v2371
    %v2404 = vunpack.c.l.b16 %v2372
    %v2405 = vunpack.c.l.b16 %v2373
    %v2406 = vunpack.c.l.b16 %v2374
    %v2407 = vunpack.c.l.b16 %v2375
    %v2408 = vunpack.c.l.b16 %v2376
    %v2409 = vunpack.c.l.b16 %v2377
    %v2410 = vunpack.c.l.b16 %v2378
    %v2411 = vunpack.c.l.b16 %v2379
    %v2412 = vunpack.c.l.b16 %v2380
    %v2413 = vpack.c.b16 %v2398, %v2397
    %v2414 = vpack.c.b16 %v2400, %v2399
    %v2415 = vpack.c.b16 %v2402, %v2401
    %v2416 = vpack.c.b16 %v2404, %v2403
    %v2417 = vpack.c.b16 %v2406, %v2405
    %v2418 = vpack.c.b16 %v2408, %v2407
    %v2419 = vpack.c.b16 %v2410, %v2409
    %v2420 = vpack.c.b16 %v2412, %v2411
    %2429 = vmatpush.bf16.msra.mxu0 %v2420
    %2430 = vmatpush.bf16.msra.mxu0 %v2419
    %2431 = vmatpush.bf16.msra.mxu0 %v2418
    %2432 = vmatpush.bf16.msra.mxu0 %v2417
    %2433 = vmatpush.bf16.msra.mxu0 %v2416
    %2434 = vmatpush.bf16.msra.mxu0 %v2415
    %2435 = vmatpush.bf16.msra.mxu0 %v2414
    %2436 = vmatpush.bf16.msra.mxu0 %v2413
    %2437 = vmatmul.bf16.gmra.mxu0 %v2358
    %v2438 = vpop.f32.mrf.mxu0
    %v2439 = vadd.f32 0.0, %v2438
    %v2440 = vpop.f32.mrf.mxu0
    %v2441 = vadd.f32 0.0, %v2440
    %2442 = vmatmul.bf16.gmra.mxu0 %v2359
    %v2443 = vpop.f32.mrf.mxu0
    %v2444 = vadd.f32 0.0, %v2443
    %v2445 = vpop.f32.mrf.mxu0
    %v2446 = vadd.f32 0.0, %v2445
    %2447 = vmatmul.bf16.gmra.mxu0 %v2360
    %v2448 = vpop.f32.mrf.mxu0
    %v2449 = vadd.f32 0.0, %v2448
    %v2450 = vpop.f32.mrf.mxu0
    %v2451 = vadd.f32 0.0, %v2450
    %2452 = vmatmul.bf16.gmra.mxu0 %v2361
    %v2453 = vpop.f32.mrf.mxu0
    %v2454 = vadd.f32 0.0, %v2453
    %v2455 = vpop.f32.mrf.mxu0
    %v2456 = vadd.f32 0.0, %v2455
    %2457 = vmatmul.bf16.gmra.mxu0 %v2362
    %v2458 = vpop.f32.mrf.mxu0
    %v2459 = vpop.f32.mrf.mxu0
    %2460 = vmatmul.bf16.gmra.mxu0 %v2363
    %v2461 = vpop.f32.mrf.mxu0
    %v2462 = vpop.f32.mrf.mxu0
    %2463 = vdwg.mxu0
    %v2464 = vadd.f32 %v2336, %v2439
    %v2465 = vadd.f32 %v2337, %v2441
    %v2466 = vadd.f32 %v2338, %v2444
    %v2467 = vadd.f32 %v2339, %v2446
    %v2468 = vadd.f32 %v2340, %v2449
    %v2469 = vadd.f32 %v2341, %v2451
    %v2470 = vadd.f32 %v2342, %v2454
    %v2471 = vadd.f32 %v2343, %v2456
    %s2472 = sadd.s32 %s569, 288
    %s2473 = scalar_lea.vmem [#allocation2], %s2472
    %v2474 = vld [vmem:[%s2473] sm:$0xff]
    %v2475 = vld [vmem:[%s2473 + $0x8] sm:$0xff]
    %v2476 = vld [vmem:[%s2473 + $0x10] sm:$0xff]
    %v2477 = vld [vmem:[%s2473 + $0x18] sm:$0xff]
    %v2478 = vld [vmem:[%s2473 + $0x20] sm:$0xff]
    %v2479 = vld [vmem:[%s2473 + $0x28] sm:$0xff]
    %v2480 = vld [vmem:[%s2473 + $0x30] sm:$0xff]
    %v2481 = vld [vmem:[%s2473 + $0x38] sm:$0xff]
    %v2482 = vld [vmem:[%s2473 + $0x40] sm:$0xff]
    %v2483 = vld [vmem:[%s2473 + $0x48] sm:$0xff]
    %v2484 = vld [vmem:[%s2473 + $0x50] sm:$0xff]
    %v2485 = vld [vmem:[%s2473 + $0x58] sm:$0xff]
    %v2486 = vpack.c.bf16 %v2475, %v2474
    %v2487 = vpack.c.bf16 %v2477, %v2476
    %v2488 = vpack.c.bf16 %v2479, %v2478
    %v2489 = vpack.c.bf16 %v2481, %v2480
    %v2490 = vpack.c.bf16 %v2483, %v2482
    %v2491 = vpack.c.bf16 %v2485, %v2484
    %s2492 = scalar_lea.vmem %s6, 960
    %v2493 = vld [vmem:[%s2492] sm:$0xf]
    %v2494 = vld [vmem:[%s2492 + $0x4] sm:$0xf]
    %v2495 = vld [vmem:[%s2492 + $0x8] sm:$0xf]
    %v2496 = vld [vmem:[%s2492 + $0xc] sm:$0xf]
    %v2497 = vld [vmem:[%s2492 + $0x10] sm:$0xf]
    %v2498 = vld [vmem:[%s2492 + $0x14] sm:$0xf]
    %v2499 = vld [vmem:[%s2492 + $0x18] sm:$0xf]
    %v2500 = vld [vmem:[%s2492 + $0x1c] sm:$0xf]
    %v2501 = vld [vmem:[%s2492 + $0x20] sm:$0xf]
    %v2502 = vld [vmem:[%s2492 + $0x24] sm:$0xf]
    %v2503 = vld [vmem:[%s2492 + $0x28] sm:$0xf]
    %v2504 = vld [vmem:[%s2492 + $0x2c] sm:$0xf]
    %v2505 = vld [vmem:[%s2492 + $0x30] sm:$0xf]
    %v2506 = vld [vmem:[%s2492 + $0x34] sm:$0xf]
    %v2507 = vld [vmem:[%s2492 + $0x38] sm:$0xf]
    %v2508 = vld [vmem:[%s2492 + $0x3c] sm:$0xf]
    %v2525 = vunpack.c.l.b16 %v2493
    %v2526 = vunpack.c.l.b16 %v2494
    %v2527 = vunpack.c.l.b16 %v2495
    %v2528 = vunpack.c.l.b16 %v2496
    %v2529 = vunpack.c.l.b16 %v2497
    %v2530 = vunpack.c.l.b16 %v2498
    %v2531 = vunpack.c.l.b16 %v2499
    %v2532 = vunpack.c.l.b16 %v2500
    %v2533 = vunpack.c.l.b16 %v2501
    %v2534 = vunpack.c.l.b16 %v2502
    %v2535 = vunpack.c.l.b16 %v2503
    %v2536 = vunpack.c.l.b16 %v2504
    %v2537 = vunpack.c.l.b16 %v2505
    %v2538 = vunpack.c.l.b16 %v2506
    %v2539 = vunpack.c.l.b16 %v2507
    %v2540 = vunpack.c.l.b16 %v2508
    %v2541 = vpack.c.b16 %v2526, %v2525
    %v2542 = vpack.c.b16 %v2528, %v2527
    %v2543 = vpack.c.b16 %v2530, %v2529
    %v2544 = vpack.c.b16 %v2532, %v2531
    %v2545 = vpack.c.b16 %v2534, %v2533
    %v2546 = vpack.c.b16 %v2536, %v2535
    %v2547 = vpack.c.b16 %v2538, %v2537
    %v2548 = vpack.c.b16 %v2540, %v2539
    %2557 = vmatpush.bf16.msra.mxu0 %v2548
    %2558 = vmatpush.bf16.msra.mxu0 %v2547
    %2559 = vmatpush.bf16.msra.mxu0 %v2546
    %2560 = vmatpush.bf16.msra.mxu0 %v2545
    %2561 = vmatpush.bf16.msra.mxu0 %v2544
    %2562 = vmatpush.bf16.msra.mxu0 %v2543
    %2563 = vmatpush.bf16.msra.mxu0 %v2542
    %2564 = vmatpush.bf16.msra.mxu0 %v2541
    %2565 = vmatmul.bf16.gmra.mxu0 %v2486
    %v2566 = vpop.f32.mrf.mxu0
    %v2567 = vadd.f32 0.0, %v2566
    %v2568 = vpop.f32.mrf.mxu0
    %v2569 = vadd.f32 0.0, %v2568
    %2570 = vmatmul.bf16.gmra.mxu0 %v2487
    %v2571 = vpop.f32.mrf.mxu0
    %v2572 = vadd.f32 0.0, %v2571
    %v2573 = vpop.f32.mrf.mxu0
    %v2574 = vadd.f32 0.0, %v2573
    %2575 = vmatmul.bf16.gmra.mxu0 %v2488
    %v2576 = vpop.f32.mrf.mxu0
    %v2577 = vadd.f32 0.0, %v2576
    %v2578 = vpop.f32.mrf.mxu0
    %v2579 = vadd.f32 0.0, %v2578
    %2580 = vmatmul.bf16.gmra.mxu0 %v2489
    %v2581 = vpop.f32.mrf.mxu0
    %v2582 = vadd.f32 0.0, %v2581
    %v2583 = vpop.f32.mrf.mxu0
    %v2584 = vadd.f32 0.0, %v2583
    %2585 = vmatmul.bf16.gmra.mxu0 %v2490
    %v2586 = vpop.f32.mrf.mxu0
    %v2587 = vpop.f32.mrf.mxu0
    %2588 = vmatmul.bf16.gmra.mxu0 %v2491
    %v2589 = vpop.f32.mrf.mxu0
    %v2590 = vpop.f32.mrf.mxu0
    %2591 = vdwg.mxu0
    %v2592 = vadd.f32 %v2464, %v2567
    %v2593 = vadd.f32 %v2465, %v2569
    %v2594 = vadd.f32 %v2466, %v2572
    %v2595 = vadd.f32 %v2467, %v2574
    %v2596 = vadd.f32 %v2468, %v2577
    %v2597 = vadd.f32 %v2469, %v2579
    %v2598 = vadd.f32 %v2470, %v2582
    %v2599 = vadd.f32 %v2471, %v2584
    %s2600 = sadd.s32 %s569, 296
    %s2601 = scalar_lea.vmem [#allocation2], %s2600
    %v2602 = vld [vmem:[%s2601] sm:$0xff]
    %v2603 = vld [vmem:[%s2601 + $0x8] sm:$0xff]
    %v2604 = vld [vmem:[%s2601 + $0x10] sm:$0xff]
    %v2605 = vld [vmem:[%s2601 + $0x18] sm:$0xff]
    %v2606 = vld [vmem:[%s2601 + $0x20] sm:$0xff]
    %v2607 = vld [vmem:[%s2601 + $0x28] sm:$0xff]
    %v2608 = vld [vmem:[%s2601 + $0x30] sm:$0xff]
    %v2609 = vld [vmem:[%s2601 + $0x38] sm:$0xff]
    %v2610 = vld [vmem:[%s2601 + $0x40] sm:$0xff]
    %v2611 = vld [vmem:[%s2601 + $0x48] sm:$0xff]
    %v2612 = vld [vmem:[%s2601 + $0x50] sm:$0xff]
    %v2613 = vld [vmem:[%s2601 + $0x58] sm:$0xff]
    %v2614 = vpack.c.bf16 %v2603, %v2602
    %v2615 = vpack.c.bf16 %v2605, %v2604
    %v2616 = vpack.c.bf16 %v2607, %v2606
    %v2617 = vpack.c.bf16 %v2609, %v2608
    %v2618 = vpack.c.bf16 %v2611, %v2610
    %v2619 = vpack.c.bf16 %v2613, %v2612
    %s2620 = scalar_lea.vmem %s6, 1024
    %v2621 = vld [vmem:[%s2620] sm:$0xf]
    %v2622 = vld [vmem:[%s2620 + $0x4] sm:$0xf]
    %v2623 = vld [vmem:[%s2620 + $0x8] sm:$0xf]
    %v2624 = vld [vmem:[%s2620 + $0xc] sm:$0xf]
    %v2625 = vld [vmem:[%s2620 + $0x10] sm:$0xf]
    %v2626 = vld [vmem:[%s2620 + $0x14] sm:$0xf]
    %v2627 = vld [vmem:[%s2620 + $0x18] sm:$0xf]
    %v2628 = vld [vmem:[%s2620 + $0x1c] sm:$0xf]
    %v2629 = vld [vmem:[%s2620 + $0x20] sm:$0xf]
    %v2630 = vld [vmem:[%s2620 + $0x24] sm:$0xf]
    %v2631 = vld [vmem:[%s2620 + $0x28] sm:$0xf]
    %v2632 = vld [vmem:[%s2620 + $0x2c] sm:$0xf]
    %v2633 = vld [vmem:[%s2620 + $0x30] sm:$0xf]
    %v2634 = vld [vmem:[%s2620 + $0x34] sm:$0xf]
    %v2635 = vld [vmem:[%s2620 + $0x38] sm:$0xf]
    %v2636 = vld [vmem:[%s2620 + $0x3c] sm:$0xf]
    %v2653 = vunpack.c.l.b16 %v2621
    %v2654 = vunpack.c.l.b16 %v2622
    %v2655 = vunpack.c.l.b16 %v2623
    %v2656 = vunpack.c.l.b16 %v2624
    %v2657 = vunpack.c.l.b16 %v2625
    %v2658 = vunpack.c.l.b16 %v2626
    %v2659 = vunpack.c.l.b16 %v2627
    %v2660 = vunpack.c.l.b16 %v2628
    %v2661 = vunpack.c.l.b16 %v2629
    %v2662 = vunpack.c.l.b16 %v2630
    %v2663 = vunpack.c.l.b16 %v2631
    %v2664 = vunpack.c.l.b16 %v2632
    %v2665 = vunpack.c.l.b16 %v2633
    %v2666 = vunpack.c.l.b16 %v2634
    %v2667 = vunpack.c.l.b16 %v2635
    %v2668 = vunpack.c.l.b16 %v2636
    %v2669 = vpack.c.b16 %v2654, %v2653
    %v2670 = vpack.c.b16 %v2656, %v2655
    %v2671 = vpack.c.b16 %v2658, %v2657
    %v2672 = vpack.c.b16 %v2660, %v2659
    %v2673 = vpack.c.b16 %v2662, %v2661
    %v2674 = vpack.c.b16 %v2664, %v2663
    %v2675 = vpack.c.b16 %v2666, %v2665
    %v2676 = vpack.c.b16 %v2668, %v2667
    %2685 = vmatpush.bf16.msra.mxu0 %v2676
    %2686 = vmatpush.bf16.msra.mxu0 %v2675
    %2687 = vmatpush.bf16.msra.mxu0 %v2674
    %2688 = vmatpush.bf16.msra.mxu0 %v2673
    %2689 = vmatpush.bf16.msra.mxu0 %v2672
    %2690 = vmatpush.bf16.msra.mxu0 %v2671
    %2691 = vmatpush.bf16.msra.mxu0 %v2670
    %2692 = vmatpush.bf16.msra.mxu0 %v2669
    %2693 = vmatmul.bf16.gmra.mxu0 %v2614
    %v2694 = vpop.f32.mrf.mxu0
    %v2695 = vadd.f32 0.0, %v2694
    %v2696 = vpop.f32.mrf.mxu0
    %v2697 = vadd.f32 0.0, %v2696
    %2698 = vmatmul.bf16.gmra.mxu0 %v2615
    %v2699 = vpop.f32.mrf.mxu0
    %v2700 = vadd.f32 0.0, %v2699
    %v2701 = vpop.f32.mrf.mxu0
    %v2702 = vadd.f32 0.0, %v2701
    %2703 = vmatmul.bf16.gmra.mxu0 %v2616
    %v2704 = vpop.f32.mrf.mxu0
    %v2705 = vadd.f32 0.0, %v2704
    %v2706 = vpop.f32.mrf.mxu0
    %v2707 = vadd.f32 0.0, %v2706
    %2708 = vmatmul.bf16.gmra.mxu0 %v2617
    %v2709 = vpop.f32.mrf.mxu0
    %v2710 = vadd.f32 0.0, %v2709
    %v2711 = vpop.f32.mrf.mxu0
    %v2712 = vadd.f32 0.0, %v2711
    %2713 = vmatmul.bf16.gmra.mxu0 %v2618
    %v2714 = vpop.f32.mrf.mxu0
    %v2715 = vpop.f32.mrf.mxu0
    %2716 = vmatmul.bf16.gmra.mxu0 %v2619
    %v2717 = vpop.f32.mrf.mxu0
    %v2718 = vpop.f32.mrf.mxu0
    %2719 = vdwg.mxu0
    %v2720 = vadd.f32 %v2592, %v2695
    %v2721 = vadd.f32 %v2593, %v2697
    %v2722 = vadd.f32 %v2594, %v2700
    %v2723 = vadd.f32 %v2595, %v2702
    %v2724 = vadd.f32 %v2596, %v2705
    %v2725 = vadd.f32 %v2597, %v2707
    %v2726 = vadd.f32 %v2598, %v2710
    %v2727 = vadd.f32 %v2599, %v2712
    %s2728 = sadd.s32 %s569, 304
    %s2729 = scalar_lea.vmem [#allocation2], %s2728
    %v2730 = vld [vmem:[%s2729] sm:$0xff]
    %v2731 = vld [vmem:[%s2729 + $0x8] sm:$0xff]
    %v2732 = vld [vmem:[%s2729 + $0x10] sm:$0xff]
    %v2733 = vld [vmem:[%s2729 + $0x18] sm:$0xff]
    %v2734 = vld [vmem:[%s2729 + $0x20] sm:$0xff]
    %v2735 = vld [vmem:[%s2729 + $0x28] sm:$0xff]
    %v2736 = vld [vmem:[%s2729 + $0x30] sm:$0xff]
    %v2737 = vld [vmem:[%s2729 + $0x38] sm:$0xff]
    %v2738 = vld [vmem:[%s2729 + $0x40] sm:$0xff]
    %v2739 = vld [vmem:[%s2729 + $0x48] sm:$0xff]
    %v2740 = vld [vmem:[%s2729 + $0x50] sm:$0xff]
    %v2741 = vld [vmem:[%s2729 + $0x58] sm:$0xff]
    %v2742 = vpack.c.bf16 %v2731, %v2730
    %v2743 = vpack.c.bf16 %v2733, %v2732
    %v2744 = vpack.c.bf16 %v2735, %v2734
    %v2745 = vpack.c.bf16 %v2737, %v2736
    %v2746 = vpack.c.bf16 %v2739, %v2738
    %v2747 = vpack.c.bf16 %v2741, %v2740
    %s2748 = scalar_lea.vmem %s6, 1088
    %v2749 = vld [vmem:[%s2748] sm:$0xf]
    %v2750 = vld [vmem:[%s2748 + $0x4] sm:$0xf]
    %v2751 = vld [vmem:[%s2748 + $0x8] sm:$0xf]
    %v2752 = vld [vmem:[%s2748 + $0xc] sm:$0xf]
    %v2753 = vld [vmem:[%s2748 + $0x10] sm:$0xf]
    %v2754 = vld [vmem:[%s2748 + $0x14] sm:$0xf]
    %v2755 = vld [vmem:[%s2748 + $0x18] sm:$0xf]
    %v2756 = vld [vmem:[%s2748 + $0x1c] sm:$0xf]
    %v2757 = vld [vmem:[%s2748 + $0x20] sm:$0xf]
    %v2758 = vld [vmem:[%s2748 + $0x24] sm:$0xf]
    %v2759 = vld [vmem:[%s2748 + $0x28] sm:$0xf]
    %v2760 = vld [vmem:[%s2748 + $0x2c] sm:$0xf]
    %v2761 = vld [vmem:[%s2748 + $0x30] sm:$0xf]
    %v2762 = vld [vmem:[%s2748 + $0x34] sm:$0xf]
    %v2763 = vld [vmem:[%s2748 + $0x38] sm:$0xf]
    %v2764 = vld [vmem:[%s2748 + $0x3c] sm:$0xf]
    %v2781 = vunpack.c.l.b16 %v2749
    %v2782 = vunpack.c.l.b16 %v2750
    %v2783 = vunpack.c.l.b16 %v2751
    %v2784 = vunpack.c.l.b16 %v2752
    %v2785 = vunpack.c.l.b16 %v2753
    %v2786 = vunpack.c.l.b16 %v2754
    %v2787 = vunpack.c.l.b16 %v2755
    %v2788 = vunpack.c.l.b16 %v2756
    %v2789 = vunpack.c.l.b16 %v2757
    %v2790 = vunpack.c.l.b16 %v2758
    %v2791 = vunpack.c.l.b16 %v2759
    %v2792 = vunpack.c.l.b16 %v2760
    %v2793 = vunpack.c.l.b16 %v2761
    %v2794 = vunpack.c.l.b16 %v2762
    %v2795 = vunpack.c.l.b16 %v2763
    %v2796 = vunpack.c.l.b16 %v2764
    %v2797 = vpack.c.b16 %v2782, %v2781
    %v2798 = vpack.c.b16 %v2784, %v2783
    %v2799 = vpack.c.b16 %v2786, %v2785
    %v2800 = vpack.c.b16 %v2788, %v2787
    %v2801 = vpack.c.b16 %v2790, %v2789
    %v2802 = vpack.c.b16 %v2792, %v2791
    %v2803 = vpack.c.b16 %v2794, %v2793
    %v2804 = vpack.c.b16 %v2796, %v2795
    %2813 = vmatpush.bf16.msra.mxu0 %v2804
    %2814 = vmatpush.bf16.msra.mxu0 %v2803
    %2815 = vmatpush.bf16.msra.mxu0 %v2802
    %2816 = vmatpush.bf16.msra.mxu0 %v2801
    %2817 = vmatpush.bf16.msra.mxu0 %v2800
    %2818 = vmatpush.bf16.msra.mxu0 %v2799
    %2819 = vmatpush.bf16.msra.mxu0 %v2798
    %2820 = vmatpush.bf16.msra.mxu0 %v2797
    %2821 = vmatmul.bf16.gmra.mxu0 %v2742
    %v2822 = vpop.f32.mrf.mxu0
    %v2823 = vadd.f32 0.0, %v2822
    %v2824 = vpop.f32.mrf.mxu0
    %v2825 = vadd.f32 0.0, %v2824
    %2826 = vmatmul.bf16.gmra.mxu0 %v2743
    %v2827 = vpop.f32.mrf.mxu0
    %v2828 = vadd.f32 0.0, %v2827
    %v2829 = vpop.f32.mrf.mxu0
    %v2830 = vadd.f32 0.0, %v2829
    %2831 = vmatmul.bf16.gmra.mxu0 %v2744
    %v2832 = vpop.f32.mrf.mxu0
    %v2833 = vadd.f32 0.0, %v2832
    %v2834 = vpop.f32.mrf.mxu0
    %v2835 = vadd.f32 0.0, %v2834
    %2836 = vmatmul.bf16.gmra.mxu0 %v2745
    %v2837 = vpop.f32.mrf.mxu0
    %v2838 = vadd.f32 0.0, %v2837
    %v2839 = vpop.f32.mrf.mxu0
    %v2840 = vadd.f32 0.0, %v2839
    %2841 = vmatmul.bf16.gmra.mxu0 %v2746
    %v2842 = vpop.f32.mrf.mxu0
    %v2843 = vpop.f32.mrf.mxu0
    %2844 = vmatmul.bf16.gmra.mxu0 %v2747
    %v2845 = vpop.f32.mrf.mxu0
    %v2846 = vpop.f32.mrf.mxu0
    %2847 = vdwg.mxu0
    %v2848 = vadd.f32 %v2720, %v2823
    %v2849 = vadd.f32 %v2721, %v2825
    %v2850 = vadd.f32 %v2722, %v2828
    %v2851 = vadd.f32 %v2723, %v2830
    %v2852 = vadd.f32 %v2724, %v2833
    %v2853 = vadd.f32 %v2725, %v2835
    %v2854 = vadd.f32 %v2726, %v2838
    %v2855 = vadd.f32 %v2727, %v2840
    %s2856 = sadd.s32 %s569, 312
    %s2857 = scalar_lea.vmem [#allocation2], %s2856
    %v2858 = vld [vmem:[%s2857] sm:$0xff]
    %v2859 = vld [vmem:[%s2857 + $0x8] sm:$0xff]
    %v2860 = vld [vmem:[%s2857 + $0x10] sm:$0xff]
    %v2861 = vld [vmem:[%s2857 + $0x18] sm:$0xff]
    %v2862 = vld [vmem:[%s2857 + $0x20] sm:$0xff]
    %v2863 = vld [vmem:[%s2857 + $0x28] sm:$0xff]
    %v2864 = vld [vmem:[%s2857 + $0x30] sm:$0xff]
    %v2865 = vld [vmem:[%s2857 + $0x38] sm:$0xff]
    %v2866 = vld [vmem:[%s2857 + $0x40] sm:$0xff]
    %v2867 = vld [vmem:[%s2857 + $0x48] sm:$0xff]
    %v2868 = vld [vmem:[%s2857 + $0x50] sm:$0xff]
    %v2869 = vld [vmem:[%s2857 + $0x58] sm:$0xff]
    %v2870 = vpack.c.bf16 %v2859, %v2858
    %v2871 = vpack.c.bf16 %v2861, %v2860
    %v2872 = vpack.c.bf16 %v2863, %v2862
    %v2873 = vpack.c.bf16 %v2865, %v2864
    %v2874 = vpack.c.bf16 %v2867, %v2866
    %v2875 = vpack.c.bf16 %v2869, %v2868
    %s2876 = scalar_lea.vmem %s6, 1152
    %v2877 = vld [vmem:[%s2876] sm:$0xf]
    %v2878 = vld [vmem:[%s2876 + $0x4] sm:$0xf]
    %v2879 = vld [vmem:[%s2876 + $0x8] sm:$0xf]
    %v2880 = vld [vmem:[%s2876 + $0xc] sm:$0xf]
    %v2881 = vld [vmem:[%s2876 + $0x10] sm:$0xf]
    %v2882 = vld [vmem:[%s2876 + $0x14] sm:$0xf]
    %v2883 = vld [vmem:[%s2876 + $0x18] sm:$0xf]
    %v2884 = vld [vmem:[%s2876 + $0x1c] sm:$0xf]
    %v2885 = vld [vmem:[%s2876 + $0x20] sm:$0xf]
    %v2886 = vld [vmem:[%s2876 + $0x24] sm:$0xf]
    %v2887 = vld [vmem:[%s2876 + $0x28] sm:$0xf]
    %v2888 = vld [vmem:[%s2876 + $0x2c] sm:$0xf]
    %v2889 = vld [vmem:[%s2876 + $0x30] sm:$0xf]
    %v2890 = vld [vmem:[%s2876 + $0x34] sm:$0xf]
    %v2891 = vld [vmem:[%s2876 + $0x38] sm:$0xf]
    %v2892 = vld [vmem:[%s2876 + $0x3c] sm:$0xf]
    %v2909 = vunpack.c.l.b16 %v2877
    %v2910 = vunpack.c.l.b16 %v2878
    %v2911 = vunpack.c.l.b16 %v2879
    %v2912 = vunpack.c.l.b16 %v2880
    %v2913 = vunpack.c.l.b16 %v2881
    %v2914 = vunpack.c.l.b16 %v2882
    %v2915 = vunpack.c.l.b16 %v2883
    %v2916 = vunpack.c.l.b16 %v2884
    %v2917 = vunpack.c.l.b16 %v2885
    %v2918 = vunpack.c.l.b16 %v2886
    %v2919 = vunpack.c.l.b16 %v2887
    %v2920 = vunpack.c.l.b16 %v2888
    %v2921 = vunpack.c.l.b16 %v2889
    %v2922 = vunpack.c.l.b16 %v2890
    %v2923 = vunpack.c.l.b16 %v2891
    %v2924 = vunpack.c.l.b16 %v2892
    %v2925 = vpack.c.b16 %v2910, %v2909
    %v2926 = vpack.c.b16 %v2912, %v2911
    %v2927 = vpack.c.b16 %v2914, %v2913
    %v2928 = vpack.c.b16 %v2916, %v2915
    %v2929 = vpack.c.b16 %v2918, %v2917
    %v2930 = vpack.c.b16 %v2920, %v2919
    %v2931 = vpack.c.b16 %v2922, %v2921
    %v2932 = vpack.c.b16 %v2924, %v2923
    %2941 = vmatpush.bf16.msra.mxu0 %v2932
    %2942 = vmatpush.bf16.msra.mxu0 %v2931
    %2943 = vmatpush.bf16.msra.mxu0 %v2930
    %2944 = vmatpush.bf16.msra.mxu0 %v2929
    %2945 = vmatpush.bf16.msra.mxu0 %v2928
    %2946 = vmatpush.bf16.msra.mxu0 %v2927
    %2947 = vmatpush.bf16.msra.mxu0 %v2926
    %2948 = vmatpush.bf16.msra.mxu0 %v2925
    %2949 = vmatmul.bf16.gmra.mxu0 %v2870
    %v2950 = vpop.f32.mrf.mxu0
    %v2951 = vadd.f32 0.0, %v2950
    %v2952 = vpop.f32.mrf.mxu0
    %v2953 = vadd.f32 0.0, %v2952
    %2954 = vmatmul.bf16.gmra.mxu0 %v2871
    %v2955 = vpop.f32.mrf.mxu0
    %v2956 = vadd.f32 0.0, %v2955
    %v2957 = vpop.f32.mrf.mxu0
    %v2958 = vadd.f32 0.0, %v2957
    %2959 = vmatmul.bf16.gmra.mxu0 %v2872
    %v2960 = vpop.f32.mrf.mxu0
    %v2961 = vadd.f32 0.0, %v2960
    %v2962 = vpop.f32.mrf.mxu0
    %v2963 = vadd.f32 0.0, %v2962
    %2964 = vmatmul.bf16.gmra.mxu0 %v2873
    %v2965 = vpop.f32.mrf.mxu0
    %v2966 = vadd.f32 0.0, %v2965
    %v2967 = vpop.f32.mrf.mxu0
    %v2968 = vadd.f32 0.0, %v2967
    %2969 = vmatmul.bf16.gmra.mxu0 %v2874
    %v2970 = vpop.f32.mrf.mxu0
    %v2971 = vpop.f32.mrf.mxu0
    %2972 = vmatmul.bf16.gmra.mxu0 %v2875
    %v2973 = vpop.f32.mrf.mxu0
    %v2974 = vpop.f32.mrf.mxu0
    %2975 = vdwg.mxu0
    %v2976 = vadd.f32 %v2848, %v2951
    %v2977 = vadd.f32 %v2849, %v2953
    %v2978 = vadd.f32 %v2850, %v2956
    %v2979 = vadd.f32 %v2851, %v2958
    %v2980 = vadd.f32 %v2852, %v2961
    %v2981 = vadd.f32 %v2853, %v2963
    %v2982 = vadd.f32 %v2854, %v2966
    %v2983 = vadd.f32 %v2855, %v2968
    %s2984 = sadd.s32 %s569, 320
    %s2985 = scalar_lea.vmem [#allocation2], %s2984
    %v2986 = vld [vmem:[%s2985] sm:$0xff]
    %v2987 = vld [vmem:[%s2985 + $0x8] sm:$0xff]
    %v2988 = vld [vmem:[%s2985 + $0x10] sm:$0xff]
    %v2989 = vld [vmem:[%s2985 + $0x18] sm:$0xff]
    %v2990 = vld [vmem:[%s2985 + $0x20] sm:$0xff]
    %v2991 = vld [vmem:[%s2985 + $0x28] sm:$0xff]
    %v2992 = vld [vmem:[%s2985 + $0x30] sm:$0xff]
    %v2993 = vld [vmem:[%s2985 + $0x38] sm:$0xff]
    %v2994 = vld [vmem:[%s2985 + $0x40] sm:$0xff]
    %v2995 = vld [vmem:[%s2985 + $0x48] sm:$0xff]
    %v2996 = vld [vmem:[%s2985 + $0x50] sm:$0xff]
    %v2997 = vld [vmem:[%s2985 + $0x58] sm:$0xff]
    %v2998 = vpack.c.bf16 %v2987, %v2986
    %v2999 = vpack.c.bf16 %v2989, %v2988
    %v3000 = vpack.c.bf16 %v2991, %v2990
    %v3001 = vpack.c.bf16 %v2993, %v2992
    %v3002 = vpack.c.bf16 %v2995, %v2994
    %v3003 = vpack.c.bf16 %v2997, %v2996
    %s3004 = scalar_lea.vmem %s6, 1216
    %v3005 = vld [vmem:[%s3004] sm:$0xf]
    %v3006 = vld [vmem:[%s3004 + $0x4] sm:$0xf]
    %v3007 = vld [vmem:[%s3004 + $0x8] sm:$0xf]
    %v3008 = vld [vmem:[%s3004 + $0xc] sm:$0xf]
    %v3009 = vld [vmem:[%s3004 + $0x10] sm:$0xf]
    %v3010 = vld [vmem:[%s3004 + $0x14] sm:$0xf]
    %v3011 = vld [vmem:[%s3004 + $0x18] sm:$0xf]
    %v3012 = vld [vmem:[%s3004 + $0x1c] sm:$0xf]
    %v3013 = vld [vmem:[%s3004 + $0x20] sm:$0xf]
    %v3014 = vld [vmem:[%s3004 + $0x24] sm:$0xf]
    %v3015 = vld [vmem:[%s3004 + $0x28] sm:$0xf]
    %v3016 = vld [vmem:[%s3004 + $0x2c] sm:$0xf]
    %v3017 = vld [vmem:[%s3004 + $0x30] sm:$0xf]
    %v3018 = vld [vmem:[%s3004 + $0x34] sm:$0xf]
    %v3019 = vld [vmem:[%s3004 + $0x38] sm:$0xf]
    %v3020 = vld [vmem:[%s3004 + $0x3c] sm:$0xf]
    %v3037 = vunpack.c.l.b16 %v3005
    %v3038 = vunpack.c.l.b16 %v3006
    %v3039 = vunpack.c.l.b16 %v3007
    %v3040 = vunpack.c.l.b16 %v3008
    %v3041 = vunpack.c.l.b16 %v3009
    %v3042 = vunpack.c.l.b16 %v3010
    %v3043 = vunpack.c.l.b16 %v3011
    %v3044 = vunpack.c.l.b16 %v3012
    %v3045 = vunpack.c.l.b16 %v3013
    %v3046 = vunpack.c.l.b16 %v3014
    %v3047 = vunpack.c.l.b16 %v3015
    %v3048 = vunpack.c.l.b16 %v3016
    %v3049 = vunpack.c.l.b16 %v3017
    %v3050 = vunpack.c.l.b16 %v3018
    %v3051 = vunpack.c.l.b16 %v3019
    %v3052 = vunpack.c.l.b16 %v3020
    %v3053 = vpack.c.b16 %v3038, %v3037
    %v3054 = vpack.c.b16 %v3040, %v3039
    %v3055 = vpack.c.b16 %v3042, %v3041
    %v3056 = vpack.c.b16 %v3044, %v3043
    %v3057 = vpack.c.b16 %v3046, %v3045
    %v3058 = vpack.c.b16 %v3048, %v3047
    %v3059 = vpack.c.b16 %v3050, %v3049
    %v3060 = vpack.c.b16 %v3052, %v3051
    %3069 = vmatpush.bf16.msra.mxu0 %v3060
    %3070 = vmatpush.bf16.msra.mxu0 %v3059
    %3071 = vmatpush.bf16.msra.mxu0 %v3058
    %3072 = vmatpush.bf16.msra.mxu0 %v3057
    %3073 = vmatpush.bf16.msra.mxu0 %v3056
    %3074 = vmatpush.bf16.msra.mxu0 %v3055
    %3075 = vmatpush.bf16.msra.mxu0 %v3054
    %3076 = vmatpush.bf16.msra.mxu0 %v3053
    %3077 = vmatmul.bf16.gmra.mxu0 %v2998
    %v3078 = vpop.f32.mrf.mxu0
    %v3079 = vadd.f32 0.0, %v3078
    %v3080 = vpop.f32.mrf.mxu0
    %v3081 = vadd.f32 0.0, %v3080
    %3082 = vmatmul.bf16.gmra.mxu0 %v2999
    %v3083 = vpop.f32.mrf.mxu0
    %v3084 = vadd.f32 0.0, %v3083
    %v3085 = vpop.f32.mrf.mxu0
    %v3086 = vadd.f32 0.0, %v3085
    %3087 = vmatmul.bf16.gmra.mxu0 %v3000
    %v3088 = vpop.f32.mrf.mxu0
    %v3089 = vadd.f32 0.0, %v3088
    %v3090 = vpop.f32.mrf.mxu0
    %v3091 = vadd.f32 0.0, %v3090
    %3092 = vmatmul.bf16.gmra.mxu0 %v3001
    %v3093 = vpop.f32.mrf.mxu0
    %v3094 = vadd.f32 0.0, %v3093
    %v3095 = vpop.f32.mrf.mxu0
    %v3096 = vadd.f32 0.0, %v3095
    %3097 = vmatmul.bf16.gmra.mxu0 %v3002
    %v3098 = vpop.f32.mrf.mxu0
    %v3099 = vpop.f32.mrf.mxu0
    %3100 = vmatmul.bf16.gmra.mxu0 %v3003
    %v3101 = vpop.f32.mrf.mxu0
    %v3102 = vpop.f32.mrf.mxu0
    %3103 = vdwg.mxu0
    %v3104 = vadd.f32 %v2976, %v3079
    %v3105 = vadd.f32 %v2977, %v3081
    %v3106 = vadd.f32 %v2978, %v3084
    %v3107 = vadd.f32 %v2979, %v3086
    %v3108 = vadd.f32 %v2980, %v3089
    %v3109 = vadd.f32 %v2981, %v3091
    %v3110 = vadd.f32 %v2982, %v3094
    %v3111 = vadd.f32 %v2983, %v3096
    %s3112 = sadd.s32 %s569, 384
    %s3113 = scalar_lea.vmem [#allocation2], %s3112
    %v3114 = vld [vmem:[%s3113] sm:$0xff]
    %v3115 = vld [vmem:[%s3113 + $0x8] sm:$0xff]
    %v3116 = vld [vmem:[%s3113 + $0x10] sm:$0xff]
    %v3117 = vld [vmem:[%s3113 + $0x18] sm:$0xff]
    %v3118 = vld [vmem:[%s3113 + $0x20] sm:$0xff]
    %v3119 = vld [vmem:[%s3113 + $0x28] sm:$0xff]
    %v3120 = vld [vmem:[%s3113 + $0x30] sm:$0xff]
    %v3121 = vld [vmem:[%s3113 + $0x38] sm:$0xff]
    %v3122 = vld [vmem:[%s3113 + $0x40] sm:$0xff]
    %v3123 = vld [vmem:[%s3113 + $0x48] sm:$0xff]
    %v3124 = vld [vmem:[%s3113 + $0x50] sm:$0xff]
    %v3125 = vld [vmem:[%s3113 + $0x58] sm:$0xff]
    %v3126 = vpack.c.bf16 %v3115, %v3114
    %v3127 = vpack.c.bf16 %v3117, %v3116
    %v3128 = vpack.c.bf16 %v3119, %v3118
    %v3129 = vpack.c.bf16 %v3121, %v3120
    %v3130 = vpack.c.bf16 %v3123, %v3122
    %v3131 = vpack.c.bf16 %v3125, %v3124
    %s3132 = scalar_lea.vmem %s6, 1280
    %v3133 = vld [vmem:[%s3132] sm:$0xf]
    %v3134 = vld [vmem:[%s3132 + $0x4] sm:$0xf]
    %v3135 = vld [vmem:[%s3132 + $0x8] sm:$0xf]
    %v3136 = vld [vmem:[%s3132 + $0xc] sm:$0xf]
    %v3137 = vld [vmem:[%s3132 + $0x10] sm:$0xf]
    %v3138 = vld [vmem:[%s3132 + $0x14] sm:$0xf]
    %v3139 = vld [vmem:[%s3132 + $0x18] sm:$0xf]
    %v3140 = vld [vmem:[%s3132 + $0x1c] sm:$0xf]
    %v3141 = vld [vmem:[%s3132 + $0x20] sm:$0xf]
    %v3142 = vld [vmem:[%s3132 + $0x24] sm:$0xf]
    %v3143 = vld [vmem:[%s3132 + $0x28] sm:$0xf]
    %v3144 = vld [vmem:[%s3132 + $0x2c] sm:$0xf]
    %v3145 = vld [vmem:[%s3132 + $0x30] sm:$0xf]
    %v3146 = vld [vmem:[%s3132 + $0x34] sm:$0xf]
    %v3147 = vld [vmem:[%s3132 + $0x38] sm:$0xf]
    %v3148 = vld [vmem:[%s3132 + $0x3c] sm:$0xf]
    %v3165 = vunpack.c.l.b16 %v3133
    %v3166 = vunpack.c.l.b16 %v3134
    %v3167 = vunpack.c.l.b16 %v3135
    %v3168 = vunpack.c.l.b16 %v3136
    %v3169 = vunpack.c.l.b16 %v3137
    %v3170 = vunpack.c.l.b16 %v3138
    %v3171 = vunpack.c.l.b16 %v3139
    %v3172 = vunpack.c.l.b16 %v3140
    %v3173 = vunpack.c.l.b16 %v3141
    %v3174 = vunpack.c.l.b16 %v3142
    %v3175 = vunpack.c.l.b16 %v3143
    %v3176 = vunpack.c.l.b16 %v3144
    %v3177 = vunpack.c.l.b16 %v3145
    %v3178 = vunpack.c.l.b16 %v3146
    %v3179 = vunpack.c.l.b16 %v3147
    %v3180 = vunpack.c.l.b16 %v3148
    %v3181 = vpack.c.b16 %v3166, %v3165
    %v3182 = vpack.c.b16 %v3168, %v3167
    %v3183 = vpack.c.b16 %v3170, %v3169
    %v3184 = vpack.c.b16 %v3172, %v3171
    %v3185 = vpack.c.b16 %v3174, %v3173
    %v3186 = vpack.c.b16 %v3176, %v3175
    %v3187 = vpack.c.b16 %v3178, %v3177
    %v3188 = vpack.c.b16 %v3180, %v3179
    %3197 = vmatpush.bf16.msra.mxu0 %v3188
    %3198 = vmatpush.bf16.msra.mxu0 %v3187
    %3199 = vmatpush.bf16.msra.mxu0 %v3186
    %3200 = vmatpush.bf16.msra.mxu0 %v3185
    %3201 = vmatpush.bf16.msra.mxu0 %v3184
    %3202 = vmatpush.bf16.msra.mxu0 %v3183
    %3203 = vmatpush.bf16.msra.mxu0 %v3182
    %3204 = vmatpush.bf16.msra.mxu0 %v3181
    %3205 = vmatmul.bf16.gmra.mxu0 %v3126
    %v3206 = vpop.f32.mrf.mxu0
    %v3207 = vadd.f32 0.0, %v3206
    %v3208 = vpop.f32.mrf.mxu0
    %v3209 = vadd.f32 0.0, %v3208
    %3210 = vmatmul.bf16.gmra.mxu0 %v3127
    %v3211 = vpop.f32.mrf.mxu0
    %v3212 = vadd.f32 0.0, %v3211
    %v3213 = vpop.f32.mrf.mxu0
    %v3214 = vadd.f32 0.0, %v3213
    %3215 = vmatmul.bf16.gmra.mxu0 %v3128
    %v3216 = vpop.f32.mrf.mxu0
    %v3217 = vadd.f32 0.0, %v3216
    %v3218 = vpop.f32.mrf.mxu0
    %v3219 = vadd.f32 0.0, %v3218
    %3220 = vmatmul.bf16.gmra.mxu0 %v3129
    %v3221 = vpop.f32.mrf.mxu0
    %v3222 = vadd.f32 0.0, %v3221
    %v3223 = vpop.f32.mrf.mxu0
    %v3224 = vadd.f32 0.0, %v3223
    %3225 = vmatmul.bf16.gmra.mxu0 %v3130
    %v3226 = vpop.f32.mrf.mxu0
    %v3227 = vpop.f32.mrf.mxu0
    %3228 = vmatmul.bf16.gmra.mxu0 %v3131
    %v3229 = vpop.f32.mrf.mxu0
    %v3230 = vpop.f32.mrf.mxu0
    %3231 = vdwg.mxu0
    %v3232 = vadd.f32 %v3104, %v3207
    %v3233 = vadd.f32 %v3105, %v3209
    %v3234 = vadd.f32 %v3106, %v3212
    %v3235 = vadd.f32 %v3107, %v3214
    %v3236 = vadd.f32 %v3108, %v3217
    %v3237 = vadd.f32 %v3109, %v3219
    %v3238 = vadd.f32 %v3110, %v3222
    %v3239 = vadd.f32 %v3111, %v3224
    %s3240 = sadd.s32 %s569, 392
    %s3241 = scalar_lea.vmem [#allocation2], %s3240
    %v3242 = vld [vmem:[%s3241] sm:$0xff]
    %v3243 = vld [vmem:[%s3241 + $0x8] sm:$0xff]
    %v3244 = vld [vmem:[%s3241 + $0x10] sm:$0xff]
    %v3245 = vld [vmem:[%s3241 + $0x18] sm:$0xff]
    %v3246 = vld [vmem:[%s3241 + $0x20] sm:$0xff]
    %v3247 = vld [vmem:[%s3241 + $0x28] sm:$0xff]
    %v3248 = vld [vmem:[%s3241 + $0x30] sm:$0xff]
    %v3249 = vld [vmem:[%s3241 + $0x38] sm:$0xff]
    %v3250 = vld [vmem:[%s3241 + $0x40] sm:$0xff]
    %v3251 = vld [vmem:[%s3241 + $0x48] sm:$0xff]
    %v3252 = vld [vmem:[%s3241 + $0x50] sm:$0xff]
    %v3253 = vld [vmem:[%s3241 + $0x58] sm:$0xff]
    %v3254 = vpack.c.bf16 %v3243, %v3242
    %v3255 = vpack.c.bf16 %v3245, %v3244
    %v3256 = vpack.c.bf16 %v3247, %v3246
    %v3257 = vpack.c.bf16 %v3249, %v3248
    %v3258 = vpack.c.bf16 %v3251, %v3250
    %v3259 = vpack.c.bf16 %v3253, %v3252
    %s3260 = scalar_lea.vmem %s6, 1344
    %v3261 = vld [vmem:[%s3260] sm:$0xf]
    %v3262 = vld [vmem:[%s3260 + $0x4] sm:$0xf]
    %v3263 = vld [vmem:[%s3260 + $0x8] sm:$0xf]
    %v3264 = vld [vmem:[%s3260 + $0xc] sm:$0xf]
    %v3265 = vld [vmem:[%s3260 + $0x10] sm:$0xf]
    %v3266 = vld [vmem:[%s3260 + $0x14] sm:$0xf]
    %v3267 = vld [vmem:[%s3260 + $0x18] sm:$0xf]
    %v3268 = vld [vmem:[%s3260 + $0x1c] sm:$0xf]
    %v3269 = vld [vmem:[%s3260 + $0x20] sm:$0xf]
    %v3270 = vld [vmem:[%s3260 + $0x24] sm:$0xf]
    %v3271 = vld [vmem:[%s3260 + $0x28] sm:$0xf]
    %v3272 = vld [vmem:[%s3260 + $0x2c] sm:$0xf]
    %v3273 = vld [vmem:[%s3260 + $0x30] sm:$0xf]
    %v3274 = vld [vmem:[%s3260 + $0x34] sm:$0xf]
    %v3275 = vld [vmem:[%s3260 + $0x38] sm:$0xf]
    %v3276 = vld [vmem:[%s3260 + $0x3c] sm:$0xf]
    %v3293 = vunpack.c.l.b16 %v3261
    %v3294 = vunpack.c.l.b16 %v3262
    %v3295 = vunpack.c.l.b16 %v3263
    %v3296 = vunpack.c.l.b16 %v3264
    %v3297 = vunpack.c.l.b16 %v3265
    %v3298 = vunpack.c.l.b16 %v3266
    %v3299 = vunpack.c.l.b16 %v3267
    %v3300 = vunpack.c.l.b16 %v3268
    %v3301 = vunpack.c.l.b16 %v3269
    %v3302 = vunpack.c.l.b16 %v3270
    %v3303 = vunpack.c.l.b16 %v3271
    %v3304 = vunpack.c.l.b16 %v3272
    %v3305 = vunpack.c.l.b16 %v3273
    %v3306 = vunpack.c.l.b16 %v3274
    %v3307 = vunpack.c.l.b16 %v3275
    %v3308 = vunpack.c.l.b16 %v3276
    %v3309 = vpack.c.b16 %v3294, %v3293
    %v3310 = vpack.c.b16 %v3296, %v3295
    %v3311 = vpack.c.b16 %v3298, %v3297
    %v3312 = vpack.c.b16 %v3300, %v3299
    %v3313 = vpack.c.b16 %v3302, %v3301
    %v3314 = vpack.c.b16 %v3304, %v3303
    %v3315 = vpack.c.b16 %v3306, %v3305
    %v3316 = vpack.c.b16 %v3308, %v3307
    %3325 = vmatpush.bf16.msra.mxu0 %v3316
    %3326 = vmatpush.bf16.msra.mxu0 %v3315
    %3327 = vmatpush.bf16.msra.mxu0 %v3314
    %3328 = vmatpush.bf16.msra.mxu0 %v3313
    %3329 = vmatpush.bf16.msra.mxu0 %v3312
    %3330 = vmatpush.bf16.msra.mxu0 %v3311
    %3331 = vmatpush.bf16.msra.mxu0 %v3310
    %3332 = vmatpush.bf16.msra.mxu0 %v3309
    %3333 = vmatmul.bf16.gmra.mxu0 %v3254
    %v3334 = vpop.f32.mrf.mxu0
    %v3335 = vadd.f32 0.0, %v3334
    %v3336 = vpop.f32.mrf.mxu0
    %v3337 = vadd.f32 0.0, %v3336
    %3338 = vmatmul.bf16.gmra.mxu0 %v3255
    %v3339 = vpop.f32.mrf.mxu0
    %v3340 = vadd.f32 0.0, %v3339
    %v3341 = vpop.f32.mrf.mxu0
    %v3342 = vadd.f32 0.0, %v3341
    %3343 = vmatmul.bf16.gmra.mxu0 %v3256
    %v3344 = vpop.f32.mrf.mxu0
    %v3345 = vadd.f32 0.0, %v3344
    %v3346 = vpop.f32.mrf.mxu0
    %v3347 = vadd.f32 0.0, %v3346
    %3348 = vmatmul.bf16.gmra.mxu0 %v3257
    %v3349 = vpop.f32.mrf.mxu0
    %v3350 = vadd.f32 0.0, %v3349
    %v3351 = vpop.f32.mrf.mxu0
    %v3352 = vadd.f32 0.0, %v3351
    %3353 = vmatmul.bf16.gmra.mxu0 %v3258
    %v3354 = vpop.f32.mrf.mxu0
    %v3355 = vpop.f32.mrf.mxu0
    %3356 = vmatmul.bf16.gmra.mxu0 %v3259
    %v3357 = vpop.f32.mrf.mxu0
    %v3358 = vpop.f32.mrf.mxu0
    %3359 = vdwg.mxu0
    %v3360 = vadd.f32 %v3232, %v3335
    %v3361 = vadd.f32 %v3233, %v3337
    %v3362 = vadd.f32 %v3234, %v3340
    %v3363 = vadd.f32 %v3235, %v3342
    %v3364 = vadd.f32 %v3236, %v3345
    %v3365 = vadd.f32 %v3237, %v3347
    %v3366 = vadd.f32 %v3238, %v3350
    %v3367 = vadd.f32 %v3239, %v3352
    %s3368 = sadd.s32 %s569, 400
    %s3369 = scalar_lea.vmem [#allocation2], %s3368
    %v3370 = vld [vmem:[%s3369] sm:$0xff]
    %v3371 = vld [vmem:[%s3369 + $0x8] sm:$0xff]
    %v3372 = vld [vmem:[%s3369 + $0x10] sm:$0xff]
    %v3373 = vld [vmem:[%s3369 + $0x18] sm:$0xff]
    %v3374 = vld [vmem:[%s3369 + $0x20] sm:$0xff]
    %v3375 = vld [vmem:[%s3369 + $0x28] sm:$0xff]
    %v3376 = vld [vmem:[%s3369 + $0x30] sm:$0xff]
    %v3377 = vld [vmem:[%s3369 + $0x38] sm:$0xff]
    %v3378 = vld [vmem:[%s3369 + $0x40] sm:$0xff]
    %v3379 = vld [vmem:[%s3369 + $0x48] sm:$0xff]
    %v3380 = vld [vmem:[%s3369 + $0x50] sm:$0xff]
    %v3381 = vld [vmem:[%s3369 + $0x58] sm:$0xff]
    %v3382 = vpack.c.bf16 %v3371, %v3370
    %v3383 = vpack.c.bf16 %v3373, %v3372
    %v3384 = vpack.c.bf16 %v3375, %v3374
    %v3385 = vpack.c.bf16 %v3377, %v3376
    %v3386 = vpack.c.bf16 %v3379, %v3378
    %v3387 = vpack.c.bf16 %v3381, %v3380
    %s3388 = scalar_lea.vmem %s6, 1408
    %v3389 = vld [vmem:[%s3388] sm:$0xf]
    %v3390 = vld [vmem:[%s3388 + $0x4] sm:$0xf]
    %v3391 = vld [vmem:[%s3388 + $0x8] sm:$0xf]
    %v3392 = vld [vmem:[%s3388 + $0xc] sm:$0xf]
    %v3393 = vld [vmem:[%s3388 + $0x10] sm:$0xf]
    %v3394 = vld [vmem:[%s3388 + $0x14] sm:$0xf]
    %v3395 = vld [vmem:[%s3388 + $0x18] sm:$0xf]
    %v3396 = vld [vmem:[%s3388 + $0x1c] sm:$0xf]
    %v3397 = vld [vmem:[%s3388 + $0x20] sm:$0xf]
    %v3398 = vld [vmem:[%s3388 + $0x24] sm:$0xf]
    %v3399 = vld [vmem:[%s3388 + $0x28] sm:$0xf]
    %v3400 = vld [vmem:[%s3388 + $0x2c] sm:$0xf]
    %v3401 = vld [vmem:[%s3388 + $0x30] sm:$0xf]
    %v3402 = vld [vmem:[%s3388 + $0x34] sm:$0xf]
    %v3403 = vld [vmem:[%s3388 + $0x38] sm:$0xf]
    %v3404 = vld [vmem:[%s3388 + $0x3c] sm:$0xf]
    %v3421 = vunpack.c.l.b16 %v3389
    %v3422 = vunpack.c.l.b16 %v3390
    %v3423 = vunpack.c.l.b16 %v3391
    %v3424 = vunpack.c.l.b16 %v3392
    %v3425 = vunpack.c.l.b16 %v3393
    %v3426 = vunpack.c.l.b16 %v3394
    %v3427 = vunpack.c.l.b16 %v3395
    %v3428 = vunpack.c.l.b16 %v3396
    %v3429 = vunpack.c.l.b16 %v3397
    %v3430 = vunpack.c.l.b16 %v3398
    %v3431 = vunpack.c.l.b16 %v3399
    %v3432 = vunpack.c.l.b16 %v3400
    %v3433 = vunpack.c.l.b16 %v3401
    %v3434 = vunpack.c.l.b16 %v3402
    %v3435 = vunpack.c.l.b16 %v3403
    %v3436 = vunpack.c.l.b16 %v3404
    %v3437 = vpack.c.b16 %v3422, %v3421
    %v3438 = vpack.c.b16 %v3424, %v3423
    %v3439 = vpack.c.b16 %v3426, %v3425
    %v3440 = vpack.c.b16 %v3428, %v3427
    %v3441 = vpack.c.b16 %v3430, %v3429
    %v3442 = vpack.c.b16 %v3432, %v3431
    %v3443 = vpack.c.b16 %v3434, %v3433
    %v3444 = vpack.c.b16 %v3436, %v3435
    %3453 = vmatpush.bf16.msra.mxu0 %v3444
    %3454 = vmatpush.bf16.msra.mxu0 %v3443
    %3455 = vmatpush.bf16.msra.mxu0 %v3442
    %3456 = vmatpush.bf16.msra.mxu0 %v3441
    %3457 = vmatpush.bf16.msra.mxu0 %v3440
    %3458 = vmatpush.bf16.msra.mxu0 %v3439
    %3459 = vmatpush.bf16.msra.mxu0 %v3438
    %3460 = vmatpush.bf16.msra.mxu0 %v3437
    %3461 = vmatmul.bf16.gmra.mxu0 %v3382
    %v3462 = vpop.f32.mrf.mxu0
    %v3463 = vadd.f32 0.0, %v3462
    %v3464 = vpop.f32.mrf.mxu0
    %v3465 = vadd.f32 0.0, %v3464
    %3466 = vmatmul.bf16.gmra.mxu0 %v3383
    %v3467 = vpop.f32.mrf.mxu0
    %v3468 = vadd.f32 0.0, %v3467
    %v3469 = vpop.f32.mrf.mxu0
    %v3470 = vadd.f32 0.0, %v3469
    %3471 = vmatmul.bf16.gmra.mxu0 %v3384
    %v3472 = vpop.f32.mrf.mxu0
    %v3473 = vadd.f32 0.0, %v3472
    %v3474 = vpop.f32.mrf.mxu0
    %v3475 = vadd.f32 0.0, %v3474
    %3476 = vmatmul.bf16.gmra.mxu0 %v3385
    %v3477 = vpop.f32.mrf.mxu0
    %v3478 = vadd.f32 0.0, %v3477
    %v3479 = vpop.f32.mrf.mxu0
    %v3480 = vadd.f32 0.0, %v3479
    %3481 = vmatmul.bf16.gmra.mxu0 %v3386
    %v3482 = vpop.f32.mrf.mxu0
    %v3483 = vpop.f32.mrf.mxu0
    %3484 = vmatmul.bf16.gmra.mxu0 %v3387
    %v3485 = vpop.f32.mrf.mxu0
    %v3486 = vpop.f32.mrf.mxu0
    %3487 = vdwg.mxu0
    %v3488 = vadd.f32 %v3360, %v3463
    %v3489 = vadd.f32 %v3361, %v3465
    %v3490 = vadd.f32 %v3362, %v3468
    %v3491 = vadd.f32 %v3363, %v3470
    %v3492 = vadd.f32 %v3364, %v3473
    %v3493 = vadd.f32 %v3365, %v3475
    %v3494 = vadd.f32 %v3366, %v3478
    %v3495 = vadd.f32 %v3367, %v3480
    %s3496 = sadd.s32 %s569, 408
    %s3497 = scalar_lea.vmem [#allocation2], %s3496
    %v3498 = vld [vmem:[%s3497] sm:$0xff]
    %v3499 = vld [vmem:[%s3497 + $0x8] sm:$0xff]
    %v3500 = vld [vmem:[%s3497 + $0x10] sm:$0xff]
    %v3501 = vld [vmem:[%s3497 + $0x18] sm:$0xff]
    %v3502 = vld [vmem:[%s3497 + $0x20] sm:$0xff]
    %v3503 = vld [vmem:[%s3497 + $0x28] sm:$0xff]
    %v3504 = vld [vmem:[%s3497 + $0x30] sm:$0xff]
    %v3505 = vld [vmem:[%s3497 + $0x38] sm:$0xff]
    %v3506 = vld [vmem:[%s3497 + $0x40] sm:$0xff]
    %v3507 = vld [vmem:[%s3497 + $0x48] sm:$0xff]
    %v3508 = vld [vmem:[%s3497 + $0x50] sm:$0xff]
    %v3509 = vld [vmem:[%s3497 + $0x58] sm:$0xff]
    %v3510 = vpack.c.bf16 %v3499, %v3498
    %v3511 = vpack.c.bf16 %v3501, %v3500
    %v3512 = vpack.c.bf16 %v3503, %v3502
    %v3513 = vpack.c.bf16 %v3505, %v3504
    %v3514 = vpack.c.bf16 %v3507, %v3506
    %v3515 = vpack.c.bf16 %v3509, %v3508
    %s3516 = scalar_lea.vmem %s6, 1472
    %v3517 = vld [vmem:[%s3516] sm:$0xf]
    %v3518 = vld [vmem:[%s3516 + $0x4] sm:$0xf]
    %v3519 = vld [vmem:[%s3516 + $0x8] sm:$0xf]
    %v3520 = vld [vmem:[%s3516 + $0xc] sm:$0xf]
    %v3521 = vld [vmem:[%s3516 + $0x10] sm:$0xf]
    %v3522 = vld [vmem:[%s3516 + $0x14] sm:$0xf]
    %v3523 = vld [vmem:[%s3516 + $0x18] sm:$0xf]
    %v3524 = vld [vmem:[%s3516 + $0x1c] sm:$0xf]
    %v3525 = vld [vmem:[%s3516 + $0x20] sm:$0xf]
    %v3526 = vld [vmem:[%s3516 + $0x24] sm:$0xf]
    %v3527 = vld [vmem:[%s3516 + $0x28] sm:$0xf]
    %v3528 = vld [vmem:[%s3516 + $0x2c] sm:$0xf]
    %v3529 = vld [vmem:[%s3516 + $0x30] sm:$0xf]
    %v3530 = vld [vmem:[%s3516 + $0x34] sm:$0xf]
    %v3531 = vld [vmem:[%s3516 + $0x38] sm:$0xf]
    %v3532 = vld [vmem:[%s3516 + $0x3c] sm:$0xf]
    %v3549 = vunpack.c.l.b16 %v3517
    %v3550 = vunpack.c.l.b16 %v3518
    %v3551 = vunpack.c.l.b16 %v3519
    %v3552 = vunpack.c.l.b16 %v3520
    %v3553 = vunpack.c.l.b16 %v3521
    %v3554 = vunpack.c.l.b16 %v3522
    %v3555 = vunpack.c.l.b16 %v3523
    %v3556 = vunpack.c.l.b16 %v3524
    %v3557 = vunpack.c.l.b16 %v3525
    %v3558 = vunpack.c.l.b16 %v3526
    %v3559 = vunpack.c.l.b16 %v3527
    %v3560 = vunpack.c.l.b16 %v3528
    %v3561 = vunpack.c.l.b16 %v3529
    %v3562 = vunpack.c.l.b16 %v3530
    %v3563 = vunpack.c.l.b16 %v3531
    %v3564 = vunpack.c.l.b16 %v3532
    %v3565 = vpack.c.b16 %v3550, %v3549
    %v3566 = vpack.c.b16 %v3552, %v3551
    %v3567 = vpack.c.b16 %v3554, %v3553
    %v3568 = vpack.c.b16 %v3556, %v3555
    %v3569 = vpack.c.b16 %v3558, %v3557
    %v3570 = vpack.c.b16 %v3560, %v3559
    %v3571 = vpack.c.b16 %v3562, %v3561
    %v3572 = vpack.c.b16 %v3564, %v3563
    %3581 = vmatpush.bf16.msra.mxu0 %v3572
    %3582 = vmatpush.bf16.msra.mxu0 %v3571
    %3583 = vmatpush.bf16.msra.mxu0 %v3570
    %3584 = vmatpush.bf16.msra.mxu0 %v3569
    %3585 = vmatpush.bf16.msra.mxu0 %v3568
    %3586 = vmatpush.bf16.msra.mxu0 %v3567
    %3587 = vmatpush.bf16.msra.mxu0 %v3566
    %3588 = vmatpush.bf16.msra.mxu0 %v3565
    %3589 = vmatmul.bf16.gmra.mxu0 %v3510
    %v3590 = vpop.f32.mrf.mxu0
    %v3591 = vadd.f32 0.0, %v3590
    %v3592 = vpop.f32.mrf.mxu0
    %v3593 = vadd.f32 0.0, %v3592
    %3594 = vmatmul.bf16.gmra.mxu0 %v3511
    %v3595 = vpop.f32.mrf.mxu0
    %v3596 = vadd.f32 0.0, %v3595
    %v3597 = vpop.f32.mrf.mxu0
    %v3598 = vadd.f32 0.0, %v3597
    %3599 = vmatmul.bf16.gmra.mxu0 %v3512
    %v3600 = vpop.f32.mrf.mxu0
    %v3601 = vadd.f32 0.0, %v3600
    %v3602 = vpop.f32.mrf.mxu0
    %v3603 = vadd.f32 0.0, %v3602
    %3604 = vmatmul.bf16.gmra.mxu0 %v3513
    %v3605 = vpop.f32.mrf.mxu0
    %v3606 = vadd.f32 0.0, %v3605
    %v3607 = vpop.f32.mrf.mxu0
    %v3608 = vadd.f32 0.0, %v3607
    %3609 = vmatmul.bf16.gmra.mxu0 %v3514
    %v3610 = vpop.f32.mrf.mxu0
    %v3611 = vpop.f32.mrf.mxu0
    %3612 = vmatmul.bf16.gmra.mxu0 %v3515
    %v3613 = vpop.f32.mrf.mxu0
    %v3614 = vpop.f32.mrf.mxu0
    %3615 = vdwg.mxu0
    %v3616 = vadd.f32 %v3488, %v3591
    %v3617 = vadd.f32 %v3489, %v3593
    %v3618 = vadd.f32 %v3490, %v3596
    %v3619 = vadd.f32 %v3491, %v3598
    %v3620 = vadd.f32 %v3492, %v3601
    %v3621 = vadd.f32 %v3493, %v3603
    %v3622 = vadd.f32 %v3494, %v3606
    %v3623 = vadd.f32 %v3495, %v3608
    %s3624 = sadd.s32 %s569, 416
    %s3625 = scalar_lea.vmem [#allocation2], %s3624
    %v3626 = vld [vmem:[%s3625] sm:$0xff]
    %v3627 = vld [vmem:[%s3625 + $0x8] sm:$0xff]
    %v3628 = vld [vmem:[%s3625 + $0x10] sm:$0xff]
    %v3629 = vld [vmem:[%s3625 + $0x18] sm:$0xff]
    %v3630 = vld [vmem:[%s3625 + $0x20] sm:$0xff]
    %v3631 = vld [vmem:[%s3625 + $0x28] sm:$0xff]
    %v3632 = vld [vmem:[%s3625 + $0x30] sm:$0xff]
    %v3633 = vld [vmem:[%s3625 + $0x38] sm:$0xff]
    %v3634 = vld [vmem:[%s3625 + $0x40] sm:$0xff]
    %v3635 = vld [vmem:[%s3625 + $0x48] sm:$0xff]
    %v3636 = vld [vmem:[%s3625 + $0x50] sm:$0xff]
    %v3637 = vld [vmem:[%s3625 + $0x58] sm:$0xff]
    %v3638 = vpack.c.bf16 %v3627, %v3626
    %v3639 = vpack.c.bf16 %v3629, %v3628
    %v3640 = vpack.c.bf16 %v3631, %v3630
    %v3641 = vpack.c.bf16 %v3633, %v3632
    %v3642 = vpack.c.bf16 %v3635, %v3634
    %v3643 = vpack.c.bf16 %v3637, %v3636
    %s3644 = scalar_lea.vmem %s6, 1536
    %v3645 = vld [vmem:[%s3644] sm:$0xf]
    %v3646 = vld [vmem:[%s3644 + $0x4] sm:$0xf]
    %v3647 = vld [vmem:[%s3644 + $0x8] sm:$0xf]
    %v3648 = vld [vmem:[%s3644 + $0xc] sm:$0xf]
    %v3649 = vld [vmem:[%s3644 + $0x10] sm:$0xf]
    %v3650 = vld [vmem:[%s3644 + $0x14] sm:$0xf]
    %v3651 = vld [vmem:[%s3644 + $0x18] sm:$0xf]
    %v3652 = vld [vmem:[%s3644 + $0x1c] sm:$0xf]
    %v3653 = vld [vmem:[%s3644 + $0x20] sm:$0xf]
    %v3654 = vld [vmem:[%s3644 + $0x24] sm:$0xf]
    %v3655 = vld [vmem:[%s3644 + $0x28] sm:$0xf]
    %v3656 = vld [vmem:[%s3644 + $0x2c] sm:$0xf]
    %v3657 = vld [vmem:[%s3644 + $0x30] sm:$0xf]
    %v3658 = vld [vmem:[%s3644 + $0x34] sm:$0xf]
    %v3659 = vld [vmem:[%s3644 + $0x38] sm:$0xf]
    %v3660 = vld [vmem:[%s3644 + $0x3c] sm:$0xf]
    %v3677 = vunpack.c.l.b16 %v3645
    %v3678 = vunpack.c.l.b16 %v3646
    %v3679 = vunpack.c.l.b16 %v3647
    %v3680 = vunpack.c.l.b16 %v3648
    %v3681 = vunpack.c.l.b16 %v3649
    %v3682 = vunpack.c.l.b16 %v3650
    %v3683 = vunpack.c.l.b16 %v3651
    %v3684 = vunpack.c.l.b16 %v3652
    %v3685 = vunpack.c.l.b16 %v3653
    %v3686 = vunpack.c.l.b16 %v3654
    %v3687 = vunpack.c.l.b16 %v3655
    %v3688 = vunpack.c.l.b16 %v3656
    %v3689 = vunpack.c.l.b16 %v3657
    %v3690 = vunpack.c.l.b16 %v3658
    %v3691 = vunpack.c.l.b16 %v3659
    %v3692 = vunpack.c.l.b16 %v3660
    %v3693 = vpack.c.b16 %v3678, %v3677
    %v3694 = vpack.c.b16 %v3680, %v3679
    %v3695 = vpack.c.b16 %v3682, %v3681
    %v3696 = vpack.c.b16 %v3684, %v3683
    %v3697 = vpack.c.b16 %v3686, %v3685
    %v3698 = vpack.c.b16 %v3688, %v3687
    %v3699 = vpack.c.b16 %v3690, %v3689
    %v3700 = vpack.c.b16 %v3692, %v3691
    %3709 = vmatpush.bf16.msra.mxu0 %v3700
    %3710 = vmatpush.bf16.msra.mxu0 %v3699
    %3711 = vmatpush.bf16.msra.mxu0 %v3698
    %3712 = vmatpush.bf16.msra.mxu0 %v3697
    %3713 = vmatpush.bf16.msra.mxu0 %v3696
    %3714 = vmatpush.bf16.msra.mxu0 %v3695
    %3715 = vmatpush.bf16.msra.mxu0 %v3694
    %3716 = vmatpush.bf16.msra.mxu0 %v3693
    %3717 = vmatmul.bf16.gmra.mxu0 %v3638
    %v3718 = vpop.f32.mrf.mxu0
    %v3719 = vadd.f32 0.0, %v3718
    %v3720 = vpop.f32.mrf.mxu0
    %v3721 = vadd.f32 0.0, %v3720
    %3722 = vmatmul.bf16.gmra.mxu0 %v3639
    %v3723 = vpop.f32.mrf.mxu0
    %v3724 = vadd.f32 0.0, %v3723
    %v3725 = vpop.f32.mrf.mxu0
    %v3726 = vadd.f32 0.0, %v3725
    %3727 = vmatmul.bf16.gmra.mxu0 %v3640
    %v3728 = vpop.f32.mrf.mxu0
    %v3729 = vadd.f32 0.0, %v3728
    %v3730 = vpop.f32.mrf.mxu0
    %v3731 = vadd.f32 0.0, %v3730
    %3732 = vmatmul.bf16.gmra.mxu0 %v3641
    %v3733 = vpop.f32.mrf.mxu0
    %v3734 = vadd.f32 0.0, %v3733
    %v3735 = vpop.f32.mrf.mxu0
    %v3736 = vadd.f32 0.0, %v3735
    %3737 = vmatmul.bf16.gmra.mxu0 %v3642
    %v3738 = vpop.f32.mrf.mxu0
    %v3739 = vpop.f32.mrf.mxu0
    %3740 = vmatmul.bf16.gmra.mxu0 %v3643
    %v3741 = vpop.f32.mrf.mxu0
    %v3742 = vpop.f32.mrf.mxu0
    %3743 = vdwg.mxu0
    %v3744 = vadd.f32 %v3616, %v3719
    %v3745 = vadd.f32 %v3617, %v3721
    %v3746 = vadd.f32 %v3618, %v3724
    %v3747 = vadd.f32 %v3619, %v3726
    %v3748 = vadd.f32 %v3620, %v3729
    %v3749 = vadd.f32 %v3621, %v3731
    %v3750 = vadd.f32 %v3622, %v3734
    %v3751 = vadd.f32 %v3623, %v3736
    %v3752 = vmax.f32 %v3744, %v3745
    %v3753 = vmax.f32 %v3746, %v3747
    %v3754 = vmax.f32 %v3748, %v3749
    %v3755 = vmax.f32 %v3750, %v3751
    %s3756 = smul.u32 %s562, 2
    %s3757 = sadd.s32 %s3756, 1
    %s3758 = smul.u32 %s3757, 96
    %s3759 = scalar_lea.vmem [#allocation2], %s3758
    %v3760 = vld [vmem:[%s3759] sm:$0xff]
    %v3761 = vld [vmem:[%s3759 + $0x8] sm:$0xff]
    %v3762 = vld [vmem:[%s3759 + $0x10] sm:$0xff]
    %v3763 = vld [vmem:[%s3759 + $0x18] sm:$0xff]
    %v3764 = vld [vmem:[%s3759 + $0x20] sm:$0xff]
    %v3765 = vld [vmem:[%s3759 + $0x28] sm:$0xff]
    %v3766 = vld [vmem:[%s3759 + $0x30] sm:$0xff]
    %v3767 = vld [vmem:[%s3759 + $0x38] sm:$0xff]
    %v3768 = vld [vmem:[%s3759 + $0x40] sm:$0xff]
    %v3769 = vld [vmem:[%s3759 + $0x48] sm:$0xff]
    %v3770 = vld [vmem:[%s3759 + $0x50] sm:$0xff]
    %v3771 = vld [vmem:[%s3759 + $0x58] sm:$0xff]
    %v3772 = vpack.c.bf16 %v3761, %v3760
    %v3773 = vpack.c.bf16 %v3763, %v3762
    %v3774 = vpack.c.bf16 %v3765, %v3764
    %v3775 = vpack.c.bf16 %v3767, %v3766
    %v3776 = vpack.c.bf16 %v3769, %v3768
    %v3777 = vpack.c.bf16 %v3771, %v3770
    %s3778 = sadd.s32 %s3758, 8
    %s3779 = scalar_lea.vmem [#allocation2], %s3778
    %v3780 = vld [vmem:[%s3779] sm:$0xff]
    %v3781 = vld [vmem:[%s3779 + $0x8] sm:$0xff]
    %v3782 = vld [vmem:[%s3779 + $0x10] sm:$0xff]
    %v3783 = vld [vmem:[%s3779 + $0x18] sm:$0xff]
    %v3784 = vld [vmem:[%s3779 + $0x20] sm:$0xff]
    %v3785 = vld [vmem:[%s3779 + $0x28] sm:$0xff]
    %v3786 = vld [vmem:[%s3779 + $0x30] sm:$0xff]
    %v3787 = vld [vmem:[%s3779 + $0x38] sm:$0xff]
    %v3788 = vld [vmem:[%s3779 + $0x40] sm:$0xff]
    %v3789 = vld [vmem:[%s3779 + $0x48] sm:$0xff]
    %v3790 = vld [vmem:[%s3779 + $0x50] sm:$0xff]
    %v3791 = vld [vmem:[%s3779 + $0x58] sm:$0xff]
    %v3792 = vpack.c.bf16 %v3781, %v3780
    %v3793 = vpack.c.bf16 %v3783, %v3782
    %v3794 = vpack.c.bf16 %v3785, %v3784
    %v3795 = vpack.c.bf16 %v3787, %v3786
    %v3796 = vpack.c.bf16 %v3789, %v3788
    %v3797 = vpack.c.bf16 %v3791, %v3790
    %3798 = vmatpush.bf16.msra.mxu0 %v681
    %3799 = vmatpush.bf16.msra.mxu0 %v680
    %3800 = vmatpush.bf16.msra.mxu0 %v679
    %3801 = vmatpush.bf16.msra.mxu0 %v678
    %3802 = vmatpush.bf16.msra.mxu0 %v677
    %3803 = vmatpush.bf16.msra.mxu0 %v676
    %3804 = vmatpush.bf16.msra.mxu0 %v675
    %3805 = vmatpush.bf16.msra.mxu0 %v674
    %3806 = vmatmul.bf16.gmra.mxu0 %v3792
    %v3807 = vpop.f32.mrf.mxu0
    %v3808 = vadd.f32 0.0, %v3807
    %v3809 = vpop.f32.mrf.mxu0
    %v3810 = vadd.f32 0.0, %v3809
    %3811 = vmatmul.bf16.gmra.mxu0 %v3793
    %v3812 = vpop.f32.mrf.mxu0
    %v3813 = vadd.f32 0.0, %v3812
    %v3814 = vpop.f32.mrf.mxu0
    %v3815 = vadd.f32 0.0, %v3814
    %3816 = vmatmul.bf16.gmra.mxu0 %v3794
    %v3817 = vpop.f32.mrf.mxu0
    %v3818 = vadd.f32 0.0, %v3817
    %v3819 = vpop.f32.mrf.mxu0
    %v3820 = vadd.f32 0.0, %v3819
    %3821 = vmatmul.bf16.gmra.mxu0 %v3795
    %v3822 = vpop.f32.mrf.mxu0
    %v3823 = vadd.f32 0.0, %v3822
    %v3824 = vpop.f32.mrf.mxu0
    %v3825 = vadd.f32 0.0, %v3824
    %3826 = vmatmul.bf16.gmra.mxu0 %v3796
    %v3827 = vpop.f32.mrf.mxu0
    %v3828 = vpop.f32.mrf.mxu0
    %3829 = vmatmul.bf16.gmra.mxu0 %v3797
    %v3830 = vpop.f32.mrf.mxu0
    %v3831 = vpop.f32.mrf.mxu0
    %3832 = vdwg.mxu0
    %3833 = vmatpush.bf16.msra.mxu0 %v764
    %3834 = vmatpush.bf16.msra.mxu0 %v763
    %3835 = vmatpush.bf16.msra.mxu0 %v762
    %3836 = vmatpush.bf16.msra.mxu0 %v761
    %3837 = vmatpush.bf16.msra.mxu0 %v760
    %3838 = vmatpush.bf16.msra.mxu0 %v759
    %3839 = vmatpush.bf16.msra.mxu0 %v758
    %3840 = vmatpush.bf16.msra.mxu0 %v757
    %3841 = vmatmul.bf16.gmra.mxu0 %v3772
    %v3842 = vpop.f32.mrf.mxu0
    %v3843 = vadd.f32 %v3808, %v3842
    %v3844 = vpop.f32.mrf.mxu0
    %v3845 = vadd.f32 %v3810, %v3844
    %3846 = vmatmul.bf16.gmra.mxu0 %v3773
    %v3847 = vpop.f32.mrf.mxu0
    %v3848 = vadd.f32 %v3813, %v3847
    %v3849 = vpop.f32.mrf.mxu0
    %v3850 = vadd.f32 %v3815, %v3849
    %3851 = vmatmul.bf16.gmra.mxu0 %v3774
    %v3852 = vpop.f32.mrf.mxu0
    %v3853 = vadd.f32 %v3818, %v3852
    %v3854 = vpop.f32.mrf.mxu0
    %v3855 = vadd.f32 %v3820, %v3854
    %3856 = vmatmul.bf16.gmra.mxu0 %v3775
    %v3857 = vpop.f32.mrf.mxu0
    %v3858 = vadd.f32 %v3823, %v3857
    %v3859 = vpop.f32.mrf.mxu0
    %v3860 = vadd.f32 %v3825, %v3859
    %3861 = vmatmul.bf16.gmra.mxu0 %v3776
    %v3862 = vpop.f32.mrf.mxu0
    %v3863 = vpop.f32.mrf.mxu0
    %3864 = vmatmul.bf16.gmra.mxu0 %v3777
    %v3865 = vpop.f32.mrf.mxu0
    %v3866 = vpop.f32.mrf.mxu0
    %3867 = vdwg.mxu0
    %s3868 = sadd.s32 %s3758, 16
    %s3869 = scalar_lea.vmem [#allocation2], %s3868
    %v3870 = vld [vmem:[%s3869] sm:$0xff]
    %v3871 = vld [vmem:[%s3869 + $0x8] sm:$0xff]
    %v3872 = vld [vmem:[%s3869 + $0x10] sm:$0xff]
    %v3873 = vld [vmem:[%s3869 + $0x18] sm:$0xff]
    %v3874 = vld [vmem:[%s3869 + $0x20] sm:$0xff]
    %v3875 = vld [vmem:[%s3869 + $0x28] sm:$0xff]
    %v3876 = vld [vmem:[%s3869 + $0x30] sm:$0xff]
    %v3877 = vld [vmem:[%s3869 + $0x38] sm:$0xff]
    %v3878 = vld [vmem:[%s3869 + $0x40] sm:$0xff]
    %v3879 = vld [vmem:[%s3869 + $0x48] sm:$0xff]
    %v3880 = vld [vmem:[%s3869 + $0x50] sm:$0xff]
    %v3881 = vld [vmem:[%s3869 + $0x58] sm:$0xff]
    %v3882 = vpack.c.bf16 %v3871, %v3870
    %v3883 = vpack.c.bf16 %v3873, %v3872
    %v3884 = vpack.c.bf16 %v3875, %v3874
    %v3885 = vpack.c.bf16 %v3877, %v3876
    %v3886 = vpack.c.bf16 %v3879, %v3878
    %v3887 = vpack.c.bf16 %v3881, %v3880
    %3888 = vmatpush.bf16.msra.mxu0 %v884
    %3889 = vmatpush.bf16.msra.mxu0 %v883
    %3890 = vmatpush.bf16.msra.mxu0 %v882
    %3891 = vmatpush.bf16.msra.mxu0 %v881
    %3892 = vmatpush.bf16.msra.mxu0 %v880
    %3893 = vmatpush.bf16.msra.mxu0 %v879
    %3894 = vmatpush.bf16.msra.mxu0 %v878
    %3895 = vmatpush.bf16.msra.mxu0 %v877
    %3896 = vmatmul.bf16.gmra.mxu0 %v3882
    %v3897 = vpop.f32.mrf.mxu0
    %v3898 = vadd.f32 0.0, %v3897
    %v3899 = vpop.f32.mrf.mxu0
    %v3900 = vadd.f32 0.0, %v3899
    %3901 = vmatmul.bf16.gmra.mxu0 %v3883
    %v3902 = vpop.f32.mrf.mxu0
    %v3903 = vadd.f32 0.0, %v3902
    %v3904 = vpop.f32.mrf.mxu0
    %v3905 = vadd.f32 0.0, %v3904
    %3906 = vmatmul.bf16.gmra.mxu0 %v3884
    %v3907 = vpop.f32.mrf.mxu0
    %v3908 = vadd.f32 0.0, %v3907
    %v3909 = vpop.f32.mrf.mxu0
    %v3910 = vadd.f32 0.0, %v3909
    %3911 = vmatmul.bf16.gmra.mxu0 %v3885
    %v3912 = vpop.f32.mrf.mxu0
    %v3913 = vadd.f32 0.0, %v3912
    %v3914 = vpop.f32.mrf.mxu0
    %v3915 = vadd.f32 0.0, %v3914
    %3916 = vmatmul.bf16.gmra.mxu0 %v3886
    %v3917 = vpop.f32.mrf.mxu0
    %v3918 = vpop.f32.mrf.mxu0
    %3919 = vmatmul.bf16.gmra.mxu0 %v3887
    %v3920 = vpop.f32.mrf.mxu0
    %v3921 = vpop.f32.mrf.mxu0
    %3922 = vdwg.mxu0
    %v3923 = vadd.f32 %v3843, %v3898
    %v3924 = vadd.f32 %v3845, %v3900
    %v3925 = vadd.f32 %v3848, %v3903
    %v3926 = vadd.f32 %v3850, %v3905
    %v3927 = vadd.f32 %v3853, %v3908
    %v3928 = vadd.f32 %v3855, %v3910
    %v3929 = vadd.f32 %v3858, %v3913
    %v3930 = vadd.f32 %v3860, %v3915
    %s3931 = sadd.s32 %s3758, 24
    %s3932 = scalar_lea.vmem [#allocation2], %s3931
    %v3933 = vld [vmem:[%s3932] sm:$0xff]
    %v3934 = vld [vmem:[%s3932 + $0x8] sm:$0xff]
    %v3935 = vld [vmem:[%s3932 + $0x10] sm:$0xff]
    %v3936 = vld [vmem:[%s3932 + $0x18] sm:$0xff]
    %v3937 = vld [vmem:[%s3932 + $0x20] sm:$0xff]
    %v3938 = vld [vmem:[%s3932 + $0x28] sm:$0xff]
    %v3939 = vld [vmem:[%s3932 + $0x30] sm:$0xff]
    %v3940 = vld [vmem:[%s3932 + $0x38] sm:$0xff]
    %v3941 = vld [vmem:[%s3932 + $0x40] sm:$0xff]
    %v3942 = vld [vmem:[%s3932 + $0x48] sm:$0xff]
    %v3943 = vld [vmem:[%s3932 + $0x50] sm:$0xff]
    %v3944 = vld [vmem:[%s3932 + $0x58] sm:$0xff]
    %v3945 = vpack.c.bf16 %v3934, %v3933
    %v3946 = vpack.c.bf16 %v3936, %v3935
    %v3947 = vpack.c.bf16 %v3938, %v3937
    %v3948 = vpack.c.bf16 %v3940, %v3939
    %v3949 = vpack.c.bf16 %v3942, %v3941
    %v3950 = vpack.c.bf16 %v3944, %v3943
    %3951 = vmatpush.bf16.msra.mxu0 %v1012
    %3952 = vmatpush.bf16.msra.mxu0 %v1011
    %3953 = vmatpush.bf16.msra.mxu0 %v1010
    %3954 = vmatpush.bf16.msra.mxu0 %v1009
    %3955 = vmatpush.bf16.msra.mxu0 %v1008
    %3956 = vmatpush.bf16.msra.mxu0 %v1007
    %3957 = vmatpush.bf16.msra.mxu0 %v1006
    %3958 = vmatpush.bf16.msra.mxu0 %v1005
    %3959 = vmatmul.bf16.gmra.mxu0 %v3945
    %v3960 = vpop.f32.mrf.mxu0
    %v3961 = vadd.f32 0.0, %v3960
    %v3962 = vpop.f32.mrf.mxu0
    %v3963 = vadd.f32 0.0, %v3962
    %3964 = vmatmul.bf16.gmra.mxu0 %v3946
    %v3965 = vpop.f32.mrf.mxu0
    %v3966 = vadd.f32 0.0, %v3965
    %v3967 = vpop.f32.mrf.mxu0
    %v3968 = vadd.f32 0.0, %v3967
    %3969 = vmatmul.bf16.gmra.mxu0 %v3947
    %v3970 = vpop.f32.mrf.mxu0
    %v3971 = vadd.f32 0.0, %v3970
    %v3972 = vpop.f32.mrf.mxu0
    %v3973 = vadd.f32 0.0, %v3972
    %3974 = vmatmul.bf16.gmra.mxu0 %v3948
    %v3975 = vpop.f32.mrf.mxu0
    %v3976 = vadd.f32 0.0, %v3975
    %v3977 = vpop.f32.mrf.mxu0
    %v3978 = vadd.f32 0.0, %v3977
    %3979 = vmatmul.bf16.gmra.mxu0 %v3949
    %v3980 = vpop.f32.mrf.mxu0
    %v3981 = vpop.f32.mrf.mxu0
    %3982 = vmatmul.bf16.gmra.mxu0 %v3950
    %v3983 = vpop.f32.mrf.mxu0
    %v3984 = vpop.f32.mrf.mxu0
    %3985 = vdwg.mxu0
    %v3986 = vadd.f32 %v3923, %v3961
    %v3987 = vadd.f32 %v3924, %v3963
    %v3988 = vadd.f32 %v3925, %v3966
    %v3989 = vadd.f32 %v3926, %v3968
    %v3990 = vadd.f32 %v3927, %v3971
    %v3991 = vadd.f32 %v3928, %v3973
    %v3992 = vadd.f32 %v3929, %v3976
    %v3993 = vadd.f32 %v3930, %v3978
    %s3994 = sadd.s32 %s3758, 32
    %s3995 = scalar_lea.vmem [#allocation2], %s3994
    %v3996 = vld [vmem:[%s3995] sm:$0xff]
    %v3997 = vld [vmem:[%s3995 + $0x8] sm:$0xff]
    %v3998 = vld [vmem:[%s3995 + $0x10] sm:$0xff]
    %v3999 = vld [vmem:[%s3995 + $0x18] sm:$0xff]
    %v4000 = vld [vmem:[%s3995 + $0x20] sm:$0xff]
    %v4001 = vld [vmem:[%s3995 + $0x28] sm:$0xff]
    %v4002 = vld [vmem:[%s3995 + $0x30] sm:$0xff]
    %v4003 = vld [vmem:[%s3995 + $0x38] sm:$0xff]
    %v4004 = vld [vmem:[%s3995 + $0x40] sm:$0xff]
    %v4005 = vld [vmem:[%s3995 + $0x48] sm:$0xff]
    %v4006 = vld [vmem:[%s3995 + $0x50] sm:$0xff]
    %v4007 = vld [vmem:[%s3995 + $0x58] sm:$0xff]
    %v4008 = vpack.c.bf16 %v3997, %v3996
    %v4009 = vpack.c.bf16 %v3999, %v3998
    %v4010 = vpack.c.bf16 %v4001, %v4000
    %v4011 = vpack.c.bf16 %v4003, %v4002
    %v4012 = vpack.c.bf16 %v4005, %v4004
    %v4013 = vpack.c.bf16 %v4007, %v4006
    %4014 = vmatpush.bf16.msra.mxu0 %v1140
    %4015 = vmatpush.bf16.msra.mxu0 %v1139
    %4016 = vmatpush.bf16.msra.mxu0 %v1138
    %4017 = vmatpush.bf16.msra.mxu0 %v1137
    %4018 = vmatpush.bf16.msra.mxu0 %v1136
    %4019 = vmatpush.bf16.msra.mxu0 %v1135
    %4020 = vmatpush.bf16.msra.mxu0 %v1134
    %4021 = vmatpush.bf16.msra.mxu0 %v1133
    %4022 = vmatmul.bf16.gmra.mxu0 %v4008
    %v4023 = vpop.f32.mrf.mxu0
    %v4024 = vadd.f32 0.0, %v4023
    %v4025 = vpop.f32.mrf.mxu0
    %v4026 = vadd.f32 0.0, %v4025
    %4027 = vmatmul.bf16.gmra.mxu0 %v4009
    %v4028 = vpop.f32.mrf.mxu0
    %v4029 = vadd.f32 0.0, %v4028
    %v4030 = vpop.f32.mrf.mxu0
    %v4031 = vadd.f32 0.0, %v4030
    %4032 = vmatmul.bf16.gmra.mxu0 %v4010
    %v4033 = vpop.f32.mrf.mxu0
    %v4034 = vadd.f32 0.0, %v4033
    %v4035 = vpop.f32.mrf.mxu0
    %v4036 = vadd.f32 0.0, %v4035
    %4037 = vmatmul.bf16.gmra.mxu0 %v4011
    %v4038 = vpop.f32.mrf.mxu0
    %v4039 = vadd.f32 0.0, %v4038
    %v4040 = vpop.f32.mrf.mxu0
    %v4041 = vadd.f32 0.0, %v4040
    %4042 = vmatmul.bf16.gmra.mxu0 %v4012
    %v4043 = vpop.f32.mrf.mxu0
    %v4044 = vpop.f32.mrf.mxu0
    %4045 = vmatmul.bf16.gmra.mxu0 %v4013
    %v4046 = vpop.f32.mrf.mxu0
    %v4047 = vpop.f32.mrf.mxu0
    %4048 = vdwg.mxu0
    %v4049 = vadd.f32 %v3986, %v4024
    %v4050 = vadd.f32 %v3987, %v4026
    %v4051 = vadd.f32 %v3988, %v4029
    %v4052 = vadd.f32 %v3989, %v4031
    %v4053 = vadd.f32 %v3990, %v4034
    %v4054 = vadd.f32 %v3991, %v4036
    %v4055 = vadd.f32 %v3992, %v4039
    %v4056 = vadd.f32 %v3993, %v4041
    %s4057 = sadd.s32 %s3758, 96
    %s4058 = scalar_lea.vmem [#allocation2], %s4057
    %v4059 = vld [vmem:[%s4058] sm:$0xff]
    %v4060 = vld [vmem:[%s4058 + $0x8] sm:$0xff]
    %v4061 = vld [vmem:[%s4058 + $0x10] sm:$0xff]
    %v4062 = vld [vmem:[%s4058 + $0x18] sm:$0xff]
    %v4063 = vld [vmem:[%s4058 + $0x20] sm:$0xff]
    %v4064 = vld [vmem:[%s4058 + $0x28] sm:$0xff]
    %v4065 = vld [vmem:[%s4058 + $0x30] sm:$0xff]
    %v4066 = vld [vmem:[%s4058 + $0x38] sm:$0xff]
    %v4067 = vld [vmem:[%s4058 + $0x40] sm:$0xff]
    %v4068 = vld [vmem:[%s4058 + $0x48] sm:$0xff]
    %v4069 = vld [vmem:[%s4058 + $0x50] sm:$0xff]
    %v4070 = vld [vmem:[%s4058 + $0x58] sm:$0xff]
    %v4071 = vpack.c.bf16 %v4060, %v4059
    %v4072 = vpack.c.bf16 %v4062, %v4061
    %v4073 = vpack.c.bf16 %v4064, %v4063
    %v4074 = vpack.c.bf16 %v4066, %v4065
    %v4075 = vpack.c.bf16 %v4068, %v4067
    %v4076 = vpack.c.bf16 %v4070, %v4069
    %4077 = vmatpush.bf16.msra.mxu0 %v1268
    %4078 = vmatpush.bf16.msra.mxu0 %v1267
    %4079 = vmatpush.bf16.msra.mxu0 %v1266
    %4080 = vmatpush.bf16.msra.mxu0 %v1265
    %4081 = vmatpush.bf16.msra.mxu0 %v1264
    %4082 = vmatpush.bf16.msra.mxu0 %v1263
    %4083 = vmatpush.bf16.msra.mxu0 %v1262
    %4084 = vmatpush.bf16.msra.mxu0 %v1261
    %4085 = vmatmul.bf16.gmra.mxu0 %v4071
    %v4086 = vpop.f32.mrf.mxu0
    %v4087 = vadd.f32 0.0, %v4086
    %v4088 = vpop.f32.mrf.mxu0
    %v4089 = vadd.f32 0.0, %v4088
    %4090 = vmatmul.bf16.gmra.mxu0 %v4072
    %v4091 = vpop.f32.mrf.mxu0
    %v4092 = vadd.f32 0.0, %v4091
    %v4093 = vpop.f32.mrf.mxu0
    %v4094 = vadd.f32 0.0, %v4093
    %4095 = vmatmul.bf16.gmra.mxu0 %v4073
    %v4096 = vpop.f32.mrf.mxu0
    %v4097 = vadd.f32 0.0, %v4096
    %v4098 = vpop.f32.mrf.mxu0
    %v4099 = vadd.f32 0.0, %v4098
    %4100 = vmatmul.bf16.gmra.mxu0 %v4074
    %v4101 = vpop.f32.mrf.mxu0
    %v4102 = vadd.f32 0.0, %v4101
    %v4103 = vpop.f32.mrf.mxu0
    %v4104 = vadd.f32 0.0, %v4103
    %4105 = vmatmul.bf16.gmra.mxu0 %v4075
    %v4106 = vpop.f32.mrf.mxu0
    %v4107 = vpop.f32.mrf.mxu0
    %4108 = vmatmul.bf16.gmra.mxu0 %v4076
    %v4109 = vpop.f32.mrf.mxu0
    %v4110 = vpop.f32.mrf.mxu0
    %4111 = vdwg.mxu0
    %v4112 = vadd.f32 %v4049, %v4087
    %v4113 = vadd.f32 %v4050, %v4089
    %v4114 = vadd.f32 %v4051, %v4092
    %v4115 = vadd.f32 %v4052, %v4094
    %v4116 = vadd.f32 %v4053, %v4097
    %v4117 = vadd.f32 %v4054, %v4099
    %v4118 = vadd.f32 %v4055, %v4102
    %v4119 = vadd.f32 %v4056, %v4104
    %s4120 = sadd.s32 %s3758, 104
    %s4121 = scalar_lea.vmem [#allocation2], %s4120
    %v4122 = vld [vmem:[%s4121] sm:$0xff]
    %v4123 = vld [vmem:[%s4121 + $0x8] sm:$0xff]
    %v4124 = vld [vmem:[%s4121 + $0x10] sm:$0xff]
    %v4125 = vld [vmem:[%s4121 + $0x18] sm:$0xff]
    %v4126 = vld [vmem:[%s4121 + $0x20] sm:$0xff]
    %v4127 = vld [vmem:[%s4121 + $0x28] sm:$0xff]
    %v4128 = vld [vmem:[%s4121 + $0x30] sm:$0xff]
    %v4129 = vld [vmem:[%s4121 + $0x38] sm:$0xff]
    %v4130 = vld [vmem:[%s4121 + $0x40] sm:$0xff]
    %v4131 = vld [vmem:[%s4121 + $0x48] sm:$0xff]
    %v4132 = vld [vmem:[%s4121 + $0x50] sm:$0xff]
    %v4133 = vld [vmem:[%s4121 + $0x58] sm:$0xff]
    %v4134 = vpack.c.bf16 %v4123, %v4122
    %v4135 = vpack.c.bf16 %v4125, %v4124
    %v4136 = vpack.c.bf16 %v4127, %v4126
    %v4137 = vpack.c.bf16 %v4129, %v4128
    %v4138 = vpack.c.bf16 %v4131, %v4130
    %v4139 = vpack.c.bf16 %v4133, %v4132
    %4140 = vmatpush.bf16.msra.mxu0 %v1396
    %4141 = vmatpush.bf16.msra.mxu0 %v1395
    %4142 = vmatpush.bf16.msra.mxu0 %v1394
    %4143 = vmatpush.bf16.msra.mxu0 %v1393
    %4144 = vmatpush.bf16.msra.mxu0 %v1392
    %4145 = vmatpush.bf16.msra.mxu0 %v1391
    %4146 = vmatpush.bf16.msra.mxu0 %v1390
    %4147 = vmatpush.bf16.msra.mxu0 %v1389
    %4148 = vmatmul.bf16.gmra.mxu0 %v4134
    %v4149 = vpop.f32.mrf.mxu0
    %v4150 = vadd.f32 0.0, %v4149
    %v4151 = vpop.f32.mrf.mxu0
    %v4152 = vadd.f32 0.0, %v4151
    %4153 = vmatmul.bf16.gmra.mxu0 %v4135
    %v4154 = vpop.f32.mrf.mxu0
    %v4155 = vadd.f32 0.0, %v4154
    %v4156 = vpop.f32.mrf.mxu0
    %v4157 = vadd.f32 0.0, %v4156
    %4158 = vmatmul.bf16.gmra.mxu0 %v4136
    %v4159 = vpop.f32.mrf.mxu0
    %v4160 = vadd.f32 0.0, %v4159
    %v4161 = vpop.f32.mrf.mxu0
    %v4162 = vadd.f32 0.0, %v4161
    %4163 = vmatmul.bf16.gmra.mxu0 %v4137
    %v4164 = vpop.f32.mrf.mxu0
    %v4165 = vadd.f32 0.0, %v4164
    %v4166 = vpop.f32.mrf.mxu0
    %v4167 = vadd.f32 0.0, %v4166
    %4168 = vmatmul.bf16.gmra.mxu0 %v4138
    %v4169 = vpop.f32.mrf.mxu0
    %v4170 = vpop.f32.mrf.mxu0
    %4171 = vmatmul.bf16.gmra.mxu0 %v4139
    %v4172 = vpop.f32.mrf.mxu0
    %v4173 = vpop.f32.mrf.mxu0
    %4174 = vdwg.mxu0
    %v4175 = vadd.f32 %v4112, %v4150
    %v4176 = vadd.f32 %v4113, %v4152
    %v4177 = vadd.f32 %v4114, %v4155
    %v4178 = vadd.f32 %v4115, %v4157
    %v4179 = vadd.f32 %v4116, %v4160
    %v4180 = vadd.f32 %v4117, %v4162
    %v4181 = vadd.f32 %v4118, %v4165
    %v4182 = vadd.f32 %v4119, %v4167
    %s4183 = sadd.s32 %s3758, 112
    %s4184 = scalar_lea.vmem [#allocation2], %s4183
    %v4185 = vld [vmem:[%s4184] sm:$0xff]
    %v4186 = vld [vmem:[%s4184 + $0x8] sm:$0xff]
    %v4187 = vld [vmem:[%s4184 + $0x10] sm:$0xff]
    %v4188 = vld [vmem:[%s4184 + $0x18] sm:$0xff]
    %v4189 = vld [vmem:[%s4184 + $0x20] sm:$0xff]
    %v4190 = vld [vmem:[%s4184 + $0x28] sm:$0xff]
    %v4191 = vld [vmem:[%s4184 + $0x30] sm:$0xff]
    %v4192 = vld [vmem:[%s4184 + $0x38] sm:$0xff]
    %v4193 = vld [vmem:[%s4184 + $0x40] sm:$0xff]
    %v4194 = vld [vmem:[%s4184 + $0x48] sm:$0xff]
    %v4195 = vld [vmem:[%s4184 + $0x50] sm:$0xff]
    %v4196 = vld [vmem:[%s4184 + $0x58] sm:$0xff]
    %v4197 = vpack.c.bf16 %v4186, %v4185
    %v4198 = vpack.c.bf16 %v4188, %v4187
    %v4199 = vpack.c.bf16 %v4190, %v4189
    %v4200 = vpack.c.bf16 %v4192, %v4191
    %v4201 = vpack.c.bf16 %v4194, %v4193
    %v4202 = vpack.c.bf16 %v4196, %v4195
    %4203 = vmatpush.bf16.msra.mxu0 %v1524
    %4204 = vmatpush.bf16.msra.mxu0 %v1523
    %4205 = vmatpush.bf16.msra.mxu0 %v1522
    %4206 = vmatpush.bf16.msra.mxu0 %v1521
    %4207 = vmatpush.bf16.msra.mxu0 %v1520
    %4208 = vmatpush.bf16.msra.mxu0 %v1519
    %4209 = vmatpush.bf16.msra.mxu0 %v1518
    %4210 = vmatpush.bf16.msra.mxu0 %v1517
    %4211 = vmatmul.bf16.gmra.mxu0 %v4197
    %v4212 = vpop.f32.mrf.mxu0
    %v4213 = vadd.f32 0.0, %v4212
    %v4214 = vpop.f32.mrf.mxu0
    %v4215 = vadd.f32 0.0, %v4214
    %4216 = vmatmul.bf16.gmra.mxu0 %v4198
    %v4217 = vpop.f32.mrf.mxu0
    %v4218 = vadd.f32 0.0, %v4217
    %v4219 = vpop.f32.mrf.mxu0
    %v4220 = vadd.f32 0.0, %v4219
    %4221 = vmatmul.bf16.gmra.mxu0 %v4199
    %v4222 = vpop.f32.mrf.mxu0
    %v4223 = vadd.f32 0.0, %v4222
    %v4224 = vpop.f32.mrf.mxu0
    %v4225 = vadd.f32 0.0, %v4224
    %4226 = vmatmul.bf16.gmra.mxu0 %v4200
    %v4227 = vpop.f32.mrf.mxu0
    %v4228 = vadd.f32 0.0, %v4227
    %v4229 = vpop.f32.mrf.mxu0
    %v4230 = vadd.f32 0.0, %v4229
    %4231 = vmatmul.bf16.gmra.mxu0 %v4201
    %v4232 = vpop.f32.mrf.mxu0
    %v4233 = vpop.f32.mrf.mxu0
    %4234 = vmatmul.bf16.gmra.mxu0 %v4202
    %v4235 = vpop.f32.mrf.mxu0
    %v4236 = vpop.f32.mrf.mxu0
    %4237 = vdwg.mxu0
    %v4238 = vadd.f32 %v4175, %v4213
    %v4239 = vadd.f32 %v4176, %v4215
    %v4240 = vadd.f32 %v4177, %v4218
    %v4241 = vadd.f32 %v4178, %v4220
    %v4242 = vadd.f32 %v4179, %v4223
    %v4243 = vadd.f32 %v4180, %v4225
    %v4244 = vadd.f32 %v4181, %v4228
    %v4245 = vadd.f32 %v4182, %v4230
    %s4246 = sadd.s32 %s3758, 120
    %s4247 = scalar_lea.vmem [#allocation2], %s4246
    %v4248 = vld [vmem:[%s4247] sm:$0xff]
    %v4249 = vld [vmem:[%s4247 + $0x8] sm:$0xff]
    %v4250 = vld [vmem:[%s4247 + $0x10] sm:$0xff]
    %v4251 = vld [vmem:[%s4247 + $0x18] sm:$0xff]
    %v4252 = vld [vmem:[%s4247 + $0x20] sm:$0xff]
    %v4253 = vld [vmem:[%s4247 + $0x28] sm:$0xff]
    %v4254 = vld [vmem:[%s4247 + $0x30] sm:$0xff]
    %v4255 = vld [vmem:[%s4247 + $0x38] sm:$0xff]
    %v4256 = vld [vmem:[%s4247 + $0x40] sm:$0xff]
    %v4257 = vld [vmem:[%s4247 + $0x48] sm:$0xff]
    %v4258 = vld [vmem:[%s4247 + $0x50] sm:$0xff]
    %v4259 = vld [vmem:[%s4247 + $0x58] sm:$0xff]
    %v4260 = vpack.c.bf16 %v4249, %v4248
    %v4261 = vpack.c.bf16 %v4251, %v4250
    %v4262 = vpack.c.bf16 %v4253, %v4252
    %v4263 = vpack.c.bf16 %v4255, %v4254
    %v4264 = vpack.c.bf16 %v4257, %v4256
    %v4265 = vpack.c.bf16 %v4259, %v4258
    %4266 = vmatpush.bf16.msra.mxu0 %v1652
    %4267 = vmatpush.bf16.msra.mxu0 %v1651
    %4268 = vmatpush.bf16.msra.mxu0 %v1650
    %4269 = vmatpush.bf16.msra.mxu0 %v1649
    %4270 = vmatpush.bf16.msra.mxu0 %v1648
    %4271 = vmatpush.bf16.msra.mxu0 %v1647
    %4272 = vmatpush.bf16.msra.mxu0 %v1646
    %4273 = vmatpush.bf16.msra.mxu0 %v1645
    %4274 = vmatmul.bf16.gmra.mxu0 %v4260
    %v4275 = vpop.f32.mrf.mxu0
    %v4276 = vadd.f32 0.0, %v4275
    %v4277 = vpop.f32.mrf.mxu0
    %v4278 = vadd.f32 0.0, %v4277
    %4279 = vmatmul.bf16.gmra.mxu0 %v4261
    %v4280 = vpop.f32.mrf.mxu0
    %v4281 = vadd.f32 0.0, %v4280
    %v4282 = vpop.f32.mrf.mxu0
    %v4283 = vadd.f32 0.0, %v4282
    %4284 = vmatmul.bf16.gmra.mxu0 %v4262
    %v4285 = vpop.f32.mrf.mxu0
    %v4286 = vadd.f32 0.0, %v4285
    %v4287 = vpop.f32.mrf.mxu0
    %v4288 = vadd.f32 0.0, %v4287
    %4289 = vmatmul.bf16.gmra.mxu0 %v4263
    %v4290 = vpop.f32.mrf.mxu0
    %v4291 = vadd.f32 0.0, %v4290
    %v4292 = vpop.f32.mrf.mxu0
    %v4293 = vadd.f32 0.0, %v4292
    %4294 = vmatmul.bf16.gmra.mxu0 %v4264
    %v4295 = vpop.f32.mrf.mxu0
    %v4296 = vpop.f32.mrf.mxu0
    %4297 = vmatmul.bf16.gmra.mxu0 %v4265
    %v4298 = vpop.f32.mrf.mxu0
    %v4299 = vpop.f32.mrf.mxu0
    %4300 = vdwg.mxu0
    %v4301 = vadd.f32 %v4238, %v4276
    %v4302 = vadd.f32 %v4239, %v4278
    %v4303 = vadd.f32 %v4240, %v4281
    %v4304 = vadd.f32 %v4241, %v4283
    %v4305 = vadd.f32 %v4242, %v4286
    %v4306 = vadd.f32 %v4243, %v4288
    %v4307 = vadd.f32 %v4244, %v4291
    %v4308 = vadd.f32 %v4245, %v4293
    %s4309 = sadd.s32 %s3758, 128
    %s4310 = scalar_lea.vmem [#allocation2], %s4309
    %v4311 = vld [vmem:[%s4310] sm:$0xff]
    %v4312 = vld [vmem:[%s4310 + $0x8] sm:$0xff]
    %v4313 = vld [vmem:[%s4310 + $0x10] sm:$0xff]
    %v4314 = vld [vmem:[%s4310 + $0x18] sm:$0xff]
    %v4315 = vld [vmem:[%s4310 + $0x20] sm:$0xff]
    %v4316 = vld [vmem:[%s4310 + $0x28] sm:$0xff]
    %v4317 = vld [vmem:[%s4310 + $0x30] sm:$0xff]
    %v4318 = vld [vmem:[%s4310 + $0x38] sm:$0xff]
    %v4319 = vld [vmem:[%s4310 + $0x40] sm:$0xff]
    %v4320 = vld [vmem:[%s4310 + $0x48] sm:$0xff]
    %v4321 = vld [vmem:[%s4310 + $0x50] sm:$0xff]
    %v4322 = vld [vmem:[%s4310 + $0x58] sm:$0xff]
    %v4323 = vpack.c.bf16 %v4312, %v4311
    %v4324 = vpack.c.bf16 %v4314, %v4313
    %v4325 = vpack.c.bf16 %v4316, %v4315
    %v4326 = vpack.c.bf16 %v4318, %v4317
    %v4327 = vpack.c.bf16 %v4320, %v4319
    %v4328 = vpack.c.bf16 %v4322, %v4321
    %4329 = vmatpush.bf16.msra.mxu0 %v1780
    %4330 = vmatpush.bf16.msra.mxu0 %v1779
    %4331 = vmatpush.bf16.msra.mxu0 %v1778
    %4332 = vmatpush.bf16.msra.mxu0 %v1777
    %4333 = vmatpush.bf16.msra.mxu0 %v1776
    %4334 = vmatpush.bf16.msra.mxu0 %v1775
    %4335 = vmatpush.bf16.msra.mxu0 %v1774
    %4336 = vmatpush.bf16.msra.mxu0 %v1773
    %4337 = vmatmul.bf16.gmra.mxu0 %v4323
    %v4338 = vpop.f32.mrf.mxu0
    %v4339 = vadd.f32 0.0, %v4338
    %v4340 = vpop.f32.mrf.mxu0
    %v4341 = vadd.f32 0.0, %v4340
    %4342 = vmatmul.bf16.gmra.mxu0 %v4324
    %v4343 = vpop.f32.mrf.mxu0
    %v4344 = vadd.f32 0.0, %v4343
    %v4345 = vpop.f32.mrf.mxu0
    %v4346 = vadd.f32 0.0, %v4345
    %4347 = vmatmul.bf16.gmra.mxu0 %v4325
    %v4348 = vpop.f32.mrf.mxu0
    %v4349 = vadd.f32 0.0, %v4348
    %v4350 = vpop.f32.mrf.mxu0
    %v4351 = vadd.f32 0.0, %v4350
    %4352 = vmatmul.bf16.gmra.mxu0 %v4326
    %v4353 = vpop.f32.mrf.mxu0
    %v4354 = vadd.f32 0.0, %v4353
    %v4355 = vpop.f32.mrf.mxu0
    %v4356 = vadd.f32 0.0, %v4355
    %4357 = vmatmul.bf16.gmra.mxu0 %v4327
    %v4358 = vpop.f32.mrf.mxu0
    %v4359 = vpop.f32.mrf.mxu0
    %4360 = vmatmul.bf16.gmra.mxu0 %v4328
    %v4361 = vpop.f32.mrf.mxu0
    %v4362 = vpop.f32.mrf.mxu0
    %4363 = vdwg.mxu0
    %v4364 = vadd.f32 %v4301, %v4339
    %v4365 = vadd.f32 %v4302, %v4341
    %v4366 = vadd.f32 %v4303, %v4344
    %v4367 = vadd.f32 %v4304, %v4346
    %v4368 = vadd.f32 %v4305, %v4349
    %v4369 = vadd.f32 %v4306, %v4351
    %v4370 = vadd.f32 %v4307, %v4354
    %v4371 = vadd.f32 %v4308, %v4356
    %s4372 = sadd.s32 %s3758, 192
    %s4373 = scalar_lea.vmem [#allocation2], %s4372
    %v4374 = vld [vmem:[%s4373] sm:$0xff]
    %v4375 = vld [vmem:[%s4373 + $0x8] sm:$0xff]
    %v4376 = vld [vmem:[%s4373 + $0x10] sm:$0xff]
    %v4377 = vld [vmem:[%s4373 + $0x18] sm:$0xff]
    %v4378 = vld [vmem:[%s4373 + $0x20] sm:$0xff]
    %v4379 = vld [vmem:[%s4373 + $0x28] sm:$0xff]
    %v4380 = vld [vmem:[%s4373 + $0x30] sm:$0xff]
    %v4381 = vld [vmem:[%s4373 + $0x38] sm:$0xff]
    %v4382 = vld [vmem:[%s4373 + $0x40] sm:$0xff]
    %v4383 = vld [vmem:[%s4373 + $0x48] sm:$0xff]
    %v4384 = vld [vmem:[%s4373 + $0x50] sm:$0xff]
    %v4385 = vld [vmem:[%s4373 + $0x58] sm:$0xff]
    %v4386 = vpack.c.bf16 %v4375, %v4374
    %v4387 = vpack.c.bf16 %v4377, %v4376
    %v4388 = vpack.c.bf16 %v4379, %v4378
    %v4389 = vpack.c.bf16 %v4381, %v4380
    %v4390 = vpack.c.bf16 %v4383, %v4382
    %v4391 = vpack.c.bf16 %v4385, %v4384
    %4392 = vmatpush.bf16.msra.mxu0 %v1908
    %4393 = vmatpush.bf16.msra.mxu0 %v1907
    %4394 = vmatpush.bf16.msra.mxu0 %v1906
    %4395 = vmatpush.bf16.msra.mxu0 %v1905
    %4396 = vmatpush.bf16.msra.mxu0 %v1904
    %4397 = vmatpush.bf16.msra.mxu0 %v1903
    %4398 = vmatpush.bf16.msra.mxu0 %v1902
    %4399 = vmatpush.bf16.msra.mxu0 %v1901
    %4400 = vmatmul.bf16.gmra.mxu0 %v4386
    %v4401 = vpop.f32.mrf.mxu0
    %v4402 = vadd.f32 0.0, %v4401
    %v4403 = vpop.f32.mrf.mxu0
    %v4404 = vadd.f32 0.0, %v4403
    %4405 = vmatmul.bf16.gmra.mxu0 %v4387
    %v4406 = vpop.f32.mrf.mxu0
    %v4407 = vadd.f32 0.0, %v4406
    %v4408 = vpop.f32.mrf.mxu0
    %v4409 = vadd.f32 0.0, %v4408
    %4410 = vmatmul.bf16.gmra.mxu0 %v4388
    %v4411 = vpop.f32.mrf.mxu0
    %v4412 = vadd.f32 0.0, %v4411
    %v4413 = vpop.f32.mrf.mxu0
    %v4414 = vadd.f32 0.0, %v4413
    %4415 = vmatmul.bf16.gmra.mxu0 %v4389
    %v4416 = vpop.f32.mrf.mxu0
    %v4417 = vadd.f32 0.0, %v4416
    %v4418 = vpop.f32.mrf.mxu0
    %v4419 = vadd.f32 0.0, %v4418
    %4420 = vmatmul.bf16.gmra.mxu0 %v4390
    %v4421 = vpop.f32.mrf.mxu0
    %v4422 = vpop.f32.mrf.mxu0
    %4423 = vmatmul.bf16.gmra.mxu0 %v4391
    %v4424 = vpop.f32.mrf.mxu0
    %v4425 = vpop.f32.mrf.mxu0
    %4426 = vdwg.mxu0
    %v4427 = vadd.f32 %v4364, %v4402
    %v4428 = vadd.f32 %v4365, %v4404
    %v4429 = vadd.f32 %v4366, %v4407
    %v4430 = vadd.f32 %v4367, %v4409
    %v4431 = vadd.f32 %v4368, %v4412
    %v4432 = vadd.f32 %v4369, %v4414
    %v4433 = vadd.f32 %v4370, %v4417
    %v4434 = vadd.f32 %v4371, %v4419
    %s4435 = sadd.s32 %s3758, 200
    %s4436 = scalar_lea.vmem [#allocation2], %s4435
    %v4437 = vld [vmem:[%s4436] sm:$0xff]
    %v4438 = vld [vmem:[%s4436 + $0x8] sm:$0xff]
    %v4439 = vld [vmem:[%s4436 + $0x10] sm:$0xff]
    %v4440 = vld [vmem:[%s4436 + $0x18] sm:$0xff]
    %v4441 = vld [vmem:[%s4436 + $0x20] sm:$0xff]
    %v4442 = vld [vmem:[%s4436 + $0x28] sm:$0xff]
    %v4443 = vld [vmem:[%s4436 + $0x30] sm:$0xff]
    %v4444 = vld [vmem:[%s4436 + $0x38] sm:$0xff]
    %v4445 = vld [vmem:[%s4436 + $0x40] sm:$0xff]
    %v4446 = vld [vmem:[%s4436 + $0x48] sm:$0xff]
    %v4447 = vld [vmem:[%s4436 + $0x50] sm:$0xff]
    %v4448 = vld [vmem:[%s4436 + $0x58] sm:$0xff]
    %v4449 = vpack.c.bf16 %v4438, %v4437
    %v4450 = vpack.c.bf16 %v4440, %v4439
    %v4451 = vpack.c.bf16 %v4442, %v4441
    %v4452 = vpack.c.bf16 %v4444, %v4443
    %v4453 = vpack.c.bf16 %v4446, %v4445
    %v4454 = vpack.c.bf16 %v4448, %v4447
    %4455 = vmatpush.bf16.msra.mxu0 %v2036
    %4456 = vmatpush.bf16.msra.mxu0 %v2035
    %4457 = vmatpush.bf16.msra.mxu0 %v2034
    %4458 = vmatpush.bf16.msra.mxu0 %v2033
    %4459 = vmatpush.bf16.msra.mxu0 %v2032
    %4460 = vmatpush.bf16.msra.mxu0 %v2031
    %4461 = vmatpush.bf16.msra.mxu0 %v2030
    %4462 = vmatpush.bf16.msra.mxu0 %v2029
    %4463 = vmatmul.bf16.gmra.mxu0 %v4449
    %v4464 = vpop.f32.mrf.mxu0
    %v4465 = vadd.f32 0.0, %v4464
    %v4466 = vpop.f32.mrf.mxu0
    %v4467 = vadd.f32 0.0, %v4466
    %4468 = vmatmul.bf16.gmra.mxu0 %v4450
    %v4469 = vpop.f32.mrf.mxu0
    %v4470 = vadd.f32 0.0, %v4469
    %v4471 = vpop.f32.mrf.mxu0
    %v4472 = vadd.f32 0.0, %v4471
    %4473 = vmatmul.bf16.gmra.mxu0 %v4451
    %v4474 = vpop.f32.mrf.mxu0
    %v4475 = vadd.f32 0.0, %v4474
    %v4476 = vpop.f32.mrf.mxu0
    %v4477 = vadd.f32 0.0, %v4476
    %4478 = vmatmul.bf16.gmra.mxu0 %v4452
    %v4479 = vpop.f32.mrf.mxu0
    %v4480 = vadd.f32 0.0, %v4479
    %v4481 = vpop.f32.mrf.mxu0
    %v4482 = vadd.f32 0.0, %v4481
    %4483 = vmatmul.bf16.gmra.mxu0 %v4453
    %v4484 = vpop.f32.mrf.mxu0
    %v4485 = vpop.f32.mrf.mxu0
    %4486 = vmatmul.bf16.gmra.mxu0 %v4454
    %v4487 = vpop.f32.mrf.mxu0
    %v4488 = vpop.f32.mrf.mxu0
    %4489 = vdwg.mxu0
    %v4490 = vadd.f32 %v4427, %v4465
    %v4491 = vadd.f32 %v4428, %v4467
    %v4492 = vadd.f32 %v4429, %v4470
    %v4493 = vadd.f32 %v4430, %v4472
    %v4494 = vadd.f32 %v4431, %v4475
    %v4495 = vadd.f32 %v4432, %v4477
    %v4496 = vadd.f32 %v4433, %v4480
    %v4497 = vadd.f32 %v4434, %v4482
    %s4498 = sadd.s32 %s3758, 208
    %s4499 = scalar_lea.vmem [#allocation2], %s4498
    %v4500 = vld [vmem:[%s4499] sm:$0xff]
    %v4501 = vld [vmem:[%s4499 + $0x8] sm:$0xff]
    %v4502 = vld [vmem:[%s4499 + $0x10] sm:$0xff]
    %v4503 = vld [vmem:[%s4499 + $0x18] sm:$0xff]
    %v4504 = vld [vmem:[%s4499 + $0x20] sm:$0xff]
    %v4505 = vld [vmem:[%s4499 + $0x28] sm:$0xff]
    %v4506 = vld [vmem:[%s4499 + $0x30] sm:$0xff]
    %v4507 = vld [vmem:[%s4499 + $0x38] sm:$0xff]
    %v4508 = vld [vmem:[%s4499 + $0x40] sm:$0xff]
    %v4509 = vld [vmem:[%s4499 + $0x48] sm:$0xff]
    %v4510 = vld [vmem:[%s4499 + $0x50] sm:$0xff]
    %v4511 = vld [vmem:[%s4499 + $0x58] sm:$0xff]
    %v4512 = vpack.c.bf16 %v4501, %v4500
    %v4513 = vpack.c.bf16 %v4503, %v4502
    %v4514 = vpack.c.bf16 %v4505, %v4504
    %v4515 = vpack.c.bf16 %v4507, %v4506
    %v4516 = vpack.c.bf16 %v4509, %v4508
    %v4517 = vpack.c.bf16 %v4511, %v4510
    %4518 = vmatpush.bf16.msra.mxu0 %v2164
    %4519 = vmatpush.bf16.msra.mxu0 %v2163
    %4520 = vmatpush.bf16.msra.mxu0 %v2162
    %4521 = vmatpush.bf16.msra.mxu0 %v2161
    %4522 = vmatpush.bf16.msra.mxu0 %v2160
    %4523 = vmatpush.bf16.msra.mxu0 %v2159
    %4524 = vmatpush.bf16.msra.mxu0 %v2158
    %4525 = vmatpush.bf16.msra.mxu0 %v2157
    %4526 = vmatmul.bf16.gmra.mxu0 %v4512
    %v4527 = vpop.f32.mrf.mxu0
    %v4528 = vadd.f32 0.0, %v4527
    %v4529 = vpop.f32.mrf.mxu0
    %v4530 = vadd.f32 0.0, %v4529
    %4531 = vmatmul.bf16.gmra.mxu0 %v4513
    %v4532 = vpop.f32.mrf.mxu0
    %v4533 = vadd.f32 0.0, %v4532
    %v4534 = vpop.f32.mrf.mxu0
    %v4535 = vadd.f32 0.0, %v4534
    %4536 = vmatmul.bf16.gmra.mxu0 %v4514
    %v4537 = vpop.f32.mrf.mxu0
    %v4538 = vadd.f32 0.0, %v4537
    %v4539 = vpop.f32.mrf.mxu0
    %v4540 = vadd.f32 0.0, %v4539
    %4541 = vmatmul.bf16.gmra.mxu0 %v4515
    %v4542 = vpop.f32.mrf.mxu0
    %v4543 = vadd.f32 0.0, %v4542
    %v4544 = vpop.f32.mrf.mxu0
    %v4545 = vadd.f32 0.0, %v4544
    %4546 = vmatmul.bf16.gmra.mxu0 %v4516
    %v4547 = vpop.f32.mrf.mxu0
    %v4548 = vpop.f32.mrf.mxu0
    %4549 = vmatmul.bf16.gmra.mxu0 %v4517
    %v4550 = vpop.f32.mrf.mxu0
    %v4551 = vpop.f32.mrf.mxu0
    %4552 = vdwg.mxu0
    %v4553 = vadd.f32 %v4490, %v4528
    %v4554 = vadd.f32 %v4491, %v4530
    %v4555 = vadd.f32 %v4492, %v4533
    %v4556 = vadd.f32 %v4493, %v4535
    %v4557 = vadd.f32 %v4494, %v4538
    %v4558 = vadd.f32 %v4495, %v4540
    %v4559 = vadd.f32 %v4496, %v4543
    %v4560 = vadd.f32 %v4497, %v4545
    %s4561 = sadd.s32 %s3758, 216
    %s4562 = scalar_lea.vmem [#allocation2], %s4561
    %v4563 = vld [vmem:[%s4562] sm:$0xff]
    %v4564 = vld [vmem:[%s4562 + $0x8] sm:$0xff]
    %v4565 = vld [vmem:[%s4562 + $0x10] sm:$0xff]
    %v4566 = vld [vmem:[%s4562 + $0x18] sm:$0xff]
    %v4567 = vld [vmem:[%s4562 + $0x20] sm:$0xff]
    %v4568 = vld [vmem:[%s4562 + $0x28] sm:$0xff]
    %v4569 = vld [vmem:[%s4562 + $0x30] sm:$0xff]
    %v4570 = vld [vmem:[%s4562 + $0x38] sm:$0xff]
    %v4571 = vld [vmem:[%s4562 + $0x40] sm:$0xff]
    %v4572 = vld [vmem:[%s4562 + $0x48] sm:$0xff]
    %v4573 = vld [vmem:[%s4562 + $0x50] sm:$0xff]
    %v4574 = vld [vmem:[%s4562 + $0x58] sm:$0xff]
    %v4575 = vpack.c.bf16 %v4564, %v4563
    %v4576 = vpack.c.bf16 %v4566, %v4565
    %v4577 = vpack.c.bf16 %v4568, %v4567
    %v4578 = vpack.c.bf16 %v4570, %v4569
    %v4579 = vpack.c.bf16 %v4572, %v4571
    %v4580 = vpack.c.bf16 %v4574, %v4573
    %4581 = vmatpush.bf16.msra.mxu0 %v2292
    %4582 = vmatpush.bf16.msra.mxu0 %v2291
    %4583 = vmatpush.bf16.msra.mxu0 %v2290
    %4584 = vmatpush.bf16.msra.mxu0 %v2289
    %4585 = vmatpush.bf16.msra.mxu0 %v2288
    %4586 = vmatpush.bf16.msra.mxu0 %v2287
    %4587 = vmatpush.bf16.msra.mxu0 %v2286
    %4588 = vmatpush.bf16.msra.mxu0 %v2285
    %4589 = vmatmul.bf16.gmra.mxu0 %v4575
    %v4590 = vpop.f32.mrf.mxu0
    %v4591 = vadd.f32 0.0, %v4590
    %v4592 = vpop.f32.mrf.mxu0
    %v4593 = vadd.f32 0.0, %v4592
    %4594 = vmatmul.bf16.gmra.mxu0 %v4576
    %v4595 = vpop.f32.mrf.mxu0
    %v4596 = vadd.f32 0.0, %v4595
    %v4597 = vpop.f32.mrf.mxu0
    %v4598 = vadd.f32 0.0, %v4597
    %4599 = vmatmul.bf16.gmra.mxu0 %v4577
    %v4600 = vpop.f32.mrf.mxu0
    %v4601 = vadd.f32 0.0, %v4600
    %v4602 = vpop.f32.mrf.mxu0
    %v4603 = vadd.f32 0.0, %v4602
    %4604 = vmatmul.bf16.gmra.mxu0 %v4578
    %v4605 = vpop.f32.mrf.mxu0
    %v4606 = vadd.f32 0.0, %v4605
    %v4607 = vpop.f32.mrf.mxu0
    %v4608 = vadd.f32 0.0, %v4607
    %4609 = vmatmul.bf16.gmra.mxu0 %v4579
    %v4610 = vpop.f32.mrf.mxu0
    %v4611 = vpop.f32.mrf.mxu0
    %4612 = vmatmul.bf16.gmra.mxu0 %v4580
    %v4613 = vpop.f32.mrf.mxu0
    %v4614 = vpop.f32.mrf.mxu0
    %4615 = vdwg.mxu0
    %v4616 = vadd.f32 %v4553, %v4591
    %v4617 = vadd.f32 %v4554, %v4593
    %v4618 = vadd.f32 %v4555, %v4596
    %v4619 = vadd.f32 %v4556, %v4598
    %v4620 = vadd.f32 %v4557, %v4601
    %v4621 = vadd.f32 %v4558, %v4603
    %v4622 = vadd.f32 %v4559, %v4606
    %v4623 = vadd.f32 %v4560, %v4608
    %s4624 = sadd.s32 %s3758, 224
    %s4625 = scalar_lea.vmem [#allocation2], %s4624
    %v4626 = vld [vmem:[%s4625] sm:$0xff]
    %v4627 = vld [vmem:[%s4625 + $0x8] sm:$0xff]
    %v4628 = vld [vmem:[%s4625 + $0x10] sm:$0xff]
    %v4629 = vld [vmem:[%s4625 + $0x18] sm:$0xff]
    %v4630 = vld [vmem:[%s4625 + $0x20] sm:$0xff]
    %v4631 = vld [vmem:[%s4625 + $0x28] sm:$0xff]
    %v4632 = vld [vmem:[%s4625 + $0x30] sm:$0xff]
    %v4633 = vld [vmem:[%s4625 + $0x38] sm:$0xff]
    %v4634 = vld [vmem:[%s4625 + $0x40] sm:$0xff]
    %v4635 = vld [vmem:[%s4625 + $0x48] sm:$0xff]
    %v4636 = vld [vmem:[%s4625 + $0x50] sm:$0xff]
    %v4637 = vld [vmem:[%s4625 + $0x58] sm:$0xff]
    %v4638 = vpack.c.bf16 %v4627, %v4626
    %v4639 = vpack.c.bf16 %v4629, %v4628
    %v4640 = vpack.c.bf16 %v4631, %v4630
    %v4641 = vpack.c.bf16 %v4633, %v4632
    %v4642 = vpack.c.bf16 %v4635, %v4634
    %v4643 = vpack.c.bf16 %v4637, %v4636
    %4644 = vmatpush.bf16.msra.mxu0 %v2420
    %4645 = vmatpush.bf16.msra.mxu0 %v2419
    %4646 = vmatpush.bf16.msra.mxu0 %v2418
    %4647 = vmatpush.bf16.msra.mxu0 %v2417
    %4648 = vmatpush.bf16.msra.mxu0 %v2416
    %4649 = vmatpush.bf16.msra.mxu0 %v2415
    %4650 = vmatpush.bf16.msra.mxu0 %v2414
    %4651 = vmatpush.bf16.msra.mxu0 %v2413
    %4652 = vmatmul.bf16.gmra.mxu0 %v4638
    %v4653 = vpop.f32.mrf.mxu0
    %v4654 = vadd.f32 0.0, %v4653
    %v4655 = vpop.f32.mrf.mxu0
    %v4656 = vadd.f32 0.0, %v4655
    %4657 = vmatmul.bf16.gmra.mxu0 %v4639
    %v4658 = vpop.f32.mrf.mxu0
    %v4659 = vadd.f32 0.0, %v4658
    %v4660 = vpop.f32.mrf.mxu0
    %v4661 = vadd.f32 0.0, %v4660
    %4662 = vmatmul.bf16.gmra.mxu0 %v4640
    %v4663 = vpop.f32.mrf.mxu0
    %v4664 = vadd.f32 0.0, %v4663
    %v4665 = vpop.f32.mrf.mxu0
    %v4666 = vadd.f32 0.0, %v4665
    %4667 = vmatmul.bf16.gmra.mxu0 %v4641
    %v4668 = vpop.f32.mrf.mxu0
    %v4669 = vadd.f32 0.0, %v4668
    %v4670 = vpop.f32.mrf.mxu0
    %v4671 = vadd.f32 0.0, %v4670
    %4672 = vmatmul.bf16.gmra.mxu0 %v4642
    %v4673 = vpop.f32.mrf.mxu0
    %v4674 = vpop.f32.mrf.mxu0
    %4675 = vmatmul.bf16.gmra.mxu0 %v4643
    %v4676 = vpop.f32.mrf.mxu0
    %v4677 = vpop.f32.mrf.mxu0
    %4678 = vdwg.mxu0
    %v4679 = vadd.f32 %v4616, %v4654
    %v4680 = vadd.f32 %v4617, %v4656
    %v4681 = vadd.f32 %v4618, %v4659
    %v4682 = vadd.f32 %v4619, %v4661
    %v4683 = vadd.f32 %v4620, %v4664
    %v4684 = vadd.f32 %v4621, %v4666
    %v4685 = vadd.f32 %v4622, %v4669
    %v4686 = vadd.f32 %v4623, %v4671
    %s4687 = sadd.s32 %s3758, 288
    %s4688 = scalar_lea.vmem [#allocation2], %s4687
    %v4689 = vld [vmem:[%s4688] sm:$0xff]
    %v4690 = vld [vmem:[%s4688 + $0x8] sm:$0xff]
    %v4691 = vld [vmem:[%s4688 + $0x10] sm:$0xff]
    %v4692 = vld [vmem:[%s4688 + $0x18] sm:$0xff]
    %v4693 = vld [vmem:[%s4688 + $0x20] sm:$0xff]
    %v4694 = vld [vmem:[%s4688 + $0x28] sm:$0xff]
    %v4695 = vld [vmem:[%s4688 + $0x30] sm:$0xff]
    %v4696 = vld [vmem:[%s4688 + $0x38] sm:$0xff]
    %v4697 = vld [vmem:[%s4688 + $0x40] sm:$0xff]
    %v4698 = vld [vmem:[%s4688 + $0x48] sm:$0xff]
    %v4699 = vld [vmem:[%s4688 + $0x50] sm:$0xff]
    %v4700 = vld [vmem:[%s4688 + $0x58] sm:$0xff]
    %v4701 = vpack.c.bf16 %v4690, %v4689
    %v4702 = vpack.c.bf16 %v4692, %v4691
    %v4703 = vpack.c.bf16 %v4694, %v4693
    %v4704 = vpack.c.bf16 %v4696, %v4695
    %v4705 = vpack.c.bf16 %v4698, %v4697
    %v4706 = vpack.c.bf16 %v4700, %v4699
    %4707 = vmatpush.bf16.msra.mxu0 %v2548
    %4708 = vmatpush.bf16.msra.mxu0 %v2547
    %4709 = vmatpush.bf16.msra.mxu0 %v2546
    %4710 = vmatpush.bf16.msra.mxu0 %v2545
    %4711 = vmatpush.bf16.msra.mxu0 %v2544
    %4712 = vmatpush.bf16.msra.mxu0 %v2543
    %4713 = vmatpush.bf16.msra.mxu0 %v2542
    %4714 = vmatpush.bf16.msra.mxu0 %v2541
    %4715 = vmatmul.bf16.gmra.mxu0 %v4701
    %v4716 = vpop.f32.mrf.mxu0
    %v4717 = vadd.f32 0.0, %v4716
    %v4718 = vpop.f32.mrf.mxu0
    %v4719 = vadd.f32 0.0, %v4718
    %4720 = vmatmul.bf16.gmra.mxu0 %v4702
    %v4721 = vpop.f32.mrf.mxu0
    %v4722 = vadd.f32 0.0, %v4721
    %v4723 = vpop.f32.mrf.mxu0
    %v4724 = vadd.f32 0.0, %v4723
    %4725 = vmatmul.bf16.gmra.mxu0 %v4703
    %v4726 = vpop.f32.mrf.mxu0
    %v4727 = vadd.f32 0.0, %v4726
    %v4728 = vpop.f32.mrf.mxu0
    %v4729 = vadd.f32 0.0, %v4728
    %4730 = vmatmul.bf16.gmra.mxu0 %v4704
    %v4731 = vpop.f32.mrf.mxu0
    %v4732 = vadd.f32 0.0, %v4731
    %v4733 = vpop.f32.mrf.mxu0
    %v4734 = vadd.f32 0.0, %v4733
    %4735 = vmatmul.bf16.gmra.mxu0 %v4705
    %v4736 = vpop.f32.mrf.mxu0
    %v4737 = vpop.f32.mrf.mxu0
    %4738 = vmatmul.bf16.gmra.mxu0 %v4706
    %v4739 = vpop.f32.mrf.mxu0
    %v4740 = vpop.f32.mrf.mxu0
    %4741 = vdwg.mxu0
    %v4742 = vadd.f32 %v4679, %v4717
    %v4743 = vadd.f32 %v4680, %v4719
    %v4744 = vadd.f32 %v4681, %v4722
    %v4745 = vadd.f32 %v4682, %v4724
    %v4746 = vadd.f32 %v4683, %v4727
    %v4747 = vadd.f32 %v4684, %v4729
    %v4748 = vadd.f32 %v4685, %v4732
    %v4749 = vadd.f32 %v4686, %v4734
    %s4750 = sadd.s32 %s3758, 296
    %s4751 = scalar_lea.vmem [#allocation2], %s4750
    %v4752 = vld [vmem:[%s4751] sm:$0xff]
    %v4753 = vld [vmem:[%s4751 + $0x8] sm:$0xff]
    %v4754 = vld [vmem:[%s4751 + $0x10] sm:$0xff]
    %v4755 = vld [vmem:[%s4751 + $0x18] sm:$0xff]
    %v4756 = vld [vmem:[%s4751 + $0x20] sm:$0xff]
    %v4757 = vld [vmem:[%s4751 + $0x28] sm:$0xff]
    %v4758 = vld [vmem:[%s4751 + $0x30] sm:$0xff]
    %v4759 = vld [vmem:[%s4751 + $0x38] sm:$0xff]
    %v4760 = vld [vmem:[%s4751 + $0x40] sm:$0xff]
    %v4761 = vld [vmem:[%s4751 + $0x48] sm:$0xff]
    %v4762 = vld [vmem:[%s4751 + $0x50] sm:$0xff]
    %v4763 = vld [vmem:[%s4751 + $0x58] sm:$0xff]
    %v4764 = vpack.c.bf16 %v4753, %v4752
    %v4765 = vpack.c.bf16 %v4755, %v4754
    %v4766 = vpack.c.bf16 %v4757, %v4756
    %v4767 = vpack.c.bf16 %v4759, %v4758
    %v4768 = vpack.c.bf16 %v4761, %v4760
    %v4769 = vpack.c.bf16 %v4763, %v4762
    %4770 = vmatpush.bf16.msra.mxu0 %v2676
    %4771 = vmatpush.bf16.msra.mxu0 %v2675
    %4772 = vmatpush.bf16.msra.mxu0 %v2674
    %4773 = vmatpush.bf16.msra.mxu0 %v2673
    %4774 = vmatpush.bf16.msra.mxu0 %v2672
    %4775 = vmatpush.bf16.msra.mxu0 %v2671
    %4776 = vmatpush.bf16.msra.mxu0 %v2670
    %4777 = vmatpush.bf16.msra.mxu0 %v2669
    %4778 = vmatmul.bf16.gmra.mxu0 %v4764
    %v4779 = vpop.f32.mrf.mxu0
    %v4780 = vadd.f32 0.0, %v4779
    %v4781 = vpop.f32.mrf.mxu0
    %v4782 = vadd.f32 0.0, %v4781
    %4783 = vmatmul.bf16.gmra.mxu0 %v4765
    %v4784 = vpop.f32.mrf.mxu0
    %v4785 = vadd.f32 0.0, %v4784
    %v4786 = vpop.f32.mrf.mxu0
    %v4787 = vadd.f32 0.0, %v4786
    %4788 = vmatmul.bf16.gmra.mxu0 %v4766
    %v4789 = vpop.f32.mrf.mxu0
    %v4790 = vadd.f32 0.0, %v4789
    %v4791 = vpop.f32.mrf.mxu0
    %v4792 = vadd.f32 0.0, %v4791
    %4793 = vmatmul.bf16.gmra.mxu0 %v4767
    %v4794 = vpop.f32.mrf.mxu0
    %v4795 = vadd.f32 0.0, %v4794
    %v4796 = vpop.f32.mrf.mxu0
    %v4797 = vadd.f32 0.0, %v4796
    %4798 = vmatmul.bf16.gmra.mxu0 %v4768
    %v4799 = vpop.f32.mrf.mxu0
    %v4800 = vpop.f32.mrf.mxu0
    %4801 = vmatmul.bf16.gmra.mxu0 %v4769
    %v4802 = vpop.f32.mrf.mxu0
    %v4803 = vpop.f32.mrf.mxu0
    %4804 = vdwg.mxu0
    %v4805 = vadd.f32 %v4742, %v4780
    %v4806 = vadd.f32 %v4743, %v4782
    %v4807 = vadd.f32 %v4744, %v4785
    %v4808 = vadd.f32 %v4745, %v4787
    %v4809 = vadd.f32 %v4746, %v4790
    %v4810 = vadd.f32 %v4747, %v4792
    %v4811 = vadd.f32 %v4748, %v4795
    %v4812 = vadd.f32 %v4749, %v4797
    %s4813 = sadd.s32 %s3758, 304
    %s4814 = scalar_lea.vmem [#allocation2], %s4813
    %v4815 = vld [vmem:[%s4814] sm:$0xff]
    %v4816 = vld [vmem:[%s4814 + $0x8] sm:$0xff]
    %v4817 = vld [vmem:[%s4814 + $0x10] sm:$0xff]
    %v4818 = vld [vmem:[%s4814 + $0x18] sm:$0xff]
    %v4819 = vld [vmem:[%s4814 + $0x20] sm:$0xff]
    %v4820 = vld [vmem:[%s4814 + $0x28] sm:$0xff]
    %v4821 = vld [vmem:[%s4814 + $0x30] sm:$0xff]
    %v4822 = vld [vmem:[%s4814 + $0x38] sm:$0xff]
    %v4823 = vld [vmem:[%s4814 + $0x40] sm:$0xff]
    %v4824 = vld [vmem:[%s4814 + $0x48] sm:$0xff]
    %v4825 = vld [vmem:[%s4814 + $0x50] sm:$0xff]
    %v4826 = vld [vmem:[%s4814 + $0x58] sm:$0xff]
    %v4827 = vpack.c.bf16 %v4816, %v4815
    %v4828 = vpack.c.bf16 %v4818, %v4817
    %v4829 = vpack.c.bf16 %v4820, %v4819
    %v4830 = vpack.c.bf16 %v4822, %v4821
    %v4831 = vpack.c.bf16 %v4824, %v4823
    %v4832 = vpack.c.bf16 %v4826, %v4825
    %4833 = vmatpush.bf16.msra.mxu0 %v2804
    %4834 = vmatpush.bf16.msra.mxu0 %v2803
    %4835 = vmatpush.bf16.msra.mxu0 %v2802
    %4836 = vmatpush.bf16.msra.mxu0 %v2801
    %4837 = vmatpush.bf16.msra.mxu0 %v2800
    %4838 = vmatpush.bf16.msra.mxu0 %v2799
    %4839 = vmatpush.bf16.msra.mxu0 %v2798
    %4840 = vmatpush.bf16.msra.mxu0 %v2797
    %4841 = vmatmul.bf16.gmra.mxu0 %v4827
    %v4842 = vpop.f32.mrf.mxu0
    %v4843 = vadd.f32 0.0, %v4842
    %v4844 = vpop.f32.mrf.mxu0
    %v4845 = vadd.f32 0.0, %v4844
    %4846 = vmatmul.bf16.gmra.mxu0 %v4828
    %v4847 = vpop.f32.mrf.mxu0
    %v4848 = vadd.f32 0.0, %v4847
    %v4849 = vpop.f32.mrf.mxu0
    %v4850 = vadd.f32 0.0, %v4849
    %4851 = vmatmul.bf16.gmra.mxu0 %v4829
    %v4852 = vpop.f32.mrf.mxu0
    %v4853 = vadd.f32 0.0, %v4852
    %v4854 = vpop.f32.mrf.mxu0
    %v4855 = vadd.f32 0.0, %v4854
    %4856 = vmatmul.bf16.gmra.mxu0 %v4830
    %v4857 = vpop.f32.mrf.mxu0
    %v4858 = vadd.f32 0.0, %v4857
    %v4859 = vpop.f32.mrf.mxu0
    %v4860 = vadd.f32 0.0, %v4859
    %4861 = vmatmul.bf16.gmra.mxu0 %v4831
    %v4862 = vpop.f32.mrf.mxu0
    %v4863 = vpop.f32.mrf.mxu0
    %4864 = vmatmul.bf16.gmra.mxu0 %v4832
    %v4865 = vpop.f32.mrf.mxu0
    %v4866 = vpop.f32.mrf.mxu0
    %4867 = vdwg.mxu0
    %v4868 = vadd.f32 %v4805, %v4843
    %v4869 = vadd.f32 %v4806, %v4845
    %v4870 = vadd.f32 %v4807, %v4848
    %v4871 = vadd.f32 %v4808, %v4850
    %v4872 = vadd.f32 %v4809, %v4853
    %v4873 = vadd.f32 %v4810, %v4855
    %v4874 = vadd.f32 %v4811, %v4858
    %v4875 = vadd.f32 %v4812, %v4860
    %s4876 = sadd.s32 %s3758, 312
    %s4877 = scalar_lea.vmem [#allocation2], %s4876
    %v4878 = vld [vmem:[%s4877] sm:$0xff]
    %v4879 = vld [vmem:[%s4877 + $0x8] sm:$0xff]
    %v4880 = vld [vmem:[%s4877 + $0x10] sm:$0xff]
    %v4881 = vld [vmem:[%s4877 + $0x18] sm:$0xff]
    %v4882 = vld [vmem:[%s4877 + $0x20] sm:$0xff]
    %v4883 = vld [vmem:[%s4877 + $0x28] sm:$0xff]
    %v4884 = vld [vmem:[%s4877 + $0x30] sm:$0xff]
    %v4885 = vld [vmem:[%s4877 + $0x38] sm:$0xff]
    %v4886 = vld [vmem:[%s4877 + $0x40] sm:$0xff]
    %v4887 = vld [vmem:[%s4877 + $0x48] sm:$0xff]
    %v4888 = vld [vmem:[%s4877 + $0x50] sm:$0xff]
    %v4889 = vld [vmem:[%s4877 + $0x58] sm:$0xff]
    %v4890 = vpack.c.bf16 %v4879, %v4878
    %v4891 = vpack.c.bf16 %v4881, %v4880
    %v4892 = vpack.c.bf16 %v4883, %v4882
    %v4893 = vpack.c.bf16 %v4885, %v4884
    %v4894 = vpack.c.bf16 %v4887, %v4886
    %v4895 = vpack.c.bf16 %v4889, %v4888
    %4896 = vmatpush.bf16.msra.mxu0 %v2932
    %4897 = vmatpush.bf16.msra.mxu0 %v2931
    %4898 = vmatpush.bf16.msra.mxu0 %v2930
    %4899 = vmatpush.bf16.msra.mxu0 %v2929
    %4900 = vmatpush.bf16.msra.mxu0 %v2928
    %4901 = vmatpush.bf16.msra.mxu0 %v2927
    %4902 = vmatpush.bf16.msra.mxu0 %v2926
    %4903 = vmatpush.bf16.msra.mxu0 %v2925
    %4904 = vmatmul.bf16.gmra.mxu0 %v4890
    %v4905 = vpop.f32.mrf.mxu0
    %v4906 = vadd.f32 0.0, %v4905
    %v4907 = vpop.f32.mrf.mxu0
    %v4908 = vadd.f32 0.0, %v4907
    %4909 = vmatmul.bf16.gmra.mxu0 %v4891
    %v4910 = vpop.f32.mrf.mxu0
    %v4911 = vadd.f32 0.0, %v4910
    %v4912 = vpop.f32.mrf.mxu0
    %v4913 = vadd.f32 0.0, %v4912
    %4914 = vmatmul.bf16.gmra.mxu0 %v4892
    %v4915 = vpop.f32.mrf.mxu0
    %v4916 = vadd.f32 0.0, %v4915
    %v4917 = vpop.f32.mrf.mxu0
    %v4918 = vadd.f32 0.0, %v4917
    %4919 = vmatmul.bf16.gmra.mxu0 %v4893
    %v4920 = vpop.f32.mrf.mxu0
    %v4921 = vadd.f32 0.0, %v4920
    %v4922 = vpop.f32.mrf.mxu0
    %v4923 = vadd.f32 0.0, %v4922
    %4924 = vmatmul.bf16.gmra.mxu0 %v4894
    %v4925 = vpop.f32.mrf.mxu0
    %v4926 = vpop.f32.mrf.mxu0
    %4927 = vmatmul.bf16.gmra.mxu0 %v4895
    %v4928 = vpop.f32.mrf.mxu0
    %v4929 = vpop.f32.mrf.mxu0
    %4930 = vdwg.mxu0
    %v4931 = vadd.f32 %v4868, %v4906
    %v4932 = vadd.f32 %v4869, %v4908
    %v4933 = vadd.f32 %v4870, %v4911
    %v4934 = vadd.f32 %v4871, %v4913
    %v4935 = vadd.f32 %v4872, %v4916
    %v4936 = vadd.f32 %v4873, %v4918
    %v4937 = vadd.f32 %v4874, %v4921
    %v4938 = vadd.f32 %v4875, %v4923
    %s4939 = sadd.s32 %s3758, 320
    %s4940 = scalar_lea.vmem [#allocation2], %s4939
    %v4941 = vld [vmem:[%s4940] sm:$0xff]
    %v4942 = vld [vmem:[%s4940 + $0x8] sm:$0xff]
    %v4943 = vld [vmem:[%s4940 + $0x10] sm:$0xff]
    %v4944 = vld [vmem:[%s4940 + $0x18] sm:$0xff]
    %v4945 = vld [vmem:[%s4940 + $0x20] sm:$0xff]
    %v4946 = vld [vmem:[%s4940 + $0x28] sm:$0xff]
    %v4947 = vld [vmem:[%s4940 + $0x30] sm:$0xff]
    %v4948 = vld [vmem:[%s4940 + $0x38] sm:$0xff]
    %v4949 = vld [vmem:[%s4940 + $0x40] sm:$0xff]
    %v4950 = vld [vmem:[%s4940 + $0x48] sm:$0xff]
    %v4951 = vld [vmem:[%s4940 + $0x50] sm:$0xff]
    %v4952 = vld [vmem:[%s4940 + $0x58] sm:$0xff]
    %v4953 = vpack.c.bf16 %v4942, %v4941
    %v4954 = vpack.c.bf16 %v4944, %v4943
    %v4955 = vpack.c.bf16 %v4946, %v4945
    %v4956 = vpack.c.bf16 %v4948, %v4947
    %v4957 = vpack.c.bf16 %v4950, %v4949
    %v4958 = vpack.c.bf16 %v4952, %v4951
    %4959 = vmatpush.bf16.msra.mxu0 %v3060
    %4960 = vmatpush.bf16.msra.mxu0 %v3059
    %4961 = vmatpush.bf16.msra.mxu0 %v3058
    %4962 = vmatpush.bf16.msra.mxu0 %v3057
    %4963 = vmatpush.bf16.msra.mxu0 %v3056
    %4964 = vmatpush.bf16.msra.mxu0 %v3055
    %4965 = vmatpush.bf16.msra.mxu0 %v3054
    %4966 = vmatpush.bf16.msra.mxu0 %v3053
    %4967 = vmatmul.bf16.gmra.mxu0 %v4953
    %v4968 = vpop.f32.mrf.mxu0
    %v4969 = vadd.f32 0.0, %v4968
    %v4970 = vpop.f32.mrf.mxu0
    %v4971 = vadd.f32 0.0, %v4970
    %4972 = vmatmul.bf16.gmra.mxu0 %v4954
    %v4973 = vpop.f32.mrf.mxu0
    %v4974 = vadd.f32 0.0, %v4973
    %v4975 = vpop.f32.mrf.mxu0
    %v4976 = vadd.f32 0.0, %v4975
    %4977 = vmatmul.bf16.gmra.mxu0 %v4955
    %v4978 = vpop.f32.mrf.mxu0
    %v4979 = vadd.f32 0.0, %v4978
    %v4980 = vpop.f32.mrf.mxu0
    %v4981 = vadd.f32 0.0, %v4980
    %4982 = vmatmul.bf16.gmra.mxu0 %v4956
    %v4983 = vpop.f32.mrf.mxu0
    %v4984 = vadd.f32 0.0, %v4983
    %v4985 = vpop.f32.mrf.mxu0
    %v4986 = vadd.f32 0.0, %v4985
    %4987 = vmatmul.bf16.gmra.mxu0 %v4957
    %v4988 = vpop.f32.mrf.mxu0
    %v4989 = vpop.f32.mrf.mxu0
    %4990 = vmatmul.bf16.gmra.mxu0 %v4958
    %v4991 = vpop.f32.mrf.mxu0
    %v4992 = vpop.f32.mrf.mxu0
    %4993 = vdwg.mxu0
    %v4994 = vadd.f32 %v4931, %v4969
    %v4995 = vadd.f32 %v4932, %v4971
    %v4996 = vadd.f32 %v4933, %v4974
    %v4997 = vadd.f32 %v4934, %v4976
    %v4998 = vadd.f32 %v4935, %v4979
    %v4999 = vadd.f32 %v4936, %v4981
    %v5000 = vadd.f32 %v4937, %v4984
    %v5001 = vadd.f32 %v4938, %v4986
    %s5002 = sadd.s32 %s3758, 384
    %s5003 = scalar_lea.vmem [#allocation2], %s5002
    %v5004 = vld [vmem:[%s5003] sm:$0xff]
    %v5005 = vld [vmem:[%s5003 + $0x8] sm:$0xff]
    %v5006 = vld [vmem:[%s5003 + $0x10] sm:$0xff]
    %v5007 = vld [vmem:[%s5003 + $0x18] sm:$0xff]
    %v5008 = vld [vmem:[%s5003 + $0x20] sm:$0xff]
    %v5009 = vld [vmem:[%s5003 + $0x28] sm:$0xff]
    %v5010 = vld [vmem:[%s5003 + $0x30] sm:$0xff]
    %v5011 = vld [vmem:[%s5003 + $0x38] sm:$0xff]
    %v5012 = vld [vmem:[%s5003 + $0x40] sm:$0xff]
    %v5013 = vld [vmem:[%s5003 + $0x48] sm:$0xff]
    %v5014 = vld [vmem:[%s5003 + $0x50] sm:$0xff]
    %v5015 = vld [vmem:[%s5003 + $0x58] sm:$0xff]
    %v5016 = vpack.c.bf16 %v5005, %v5004
    %v5017 = vpack.c.bf16 %v5007, %v5006
    %v5018 = vpack.c.bf16 %v5009, %v5008
    %v5019 = vpack.c.bf16 %v5011, %v5010
    %v5020 = vpack.c.bf16 %v5013, %v5012
    %v5021 = vpack.c.bf16 %v5015, %v5014
    %5022 = vmatpush.bf16.msra.mxu0 %v3188
    %5023 = vmatpush.bf16.msra.mxu0 %v3187
    %5024 = vmatpush.bf16.msra.mxu0 %v3186
    %5025 = vmatpush.bf16.msra.mxu0 %v3185
    %5026 = vmatpush.bf16.msra.mxu0 %v3184
    %5027 = vmatpush.bf16.msra.mxu0 %v3183
    %5028 = vmatpush.bf16.msra.mxu0 %v3182
    %5029 = vmatpush.bf16.msra.mxu0 %v3181
    %5030 = vmatmul.bf16.gmra.mxu0 %v5016
    %v5031 = vpop.f32.mrf.mxu0
    %v5032 = vadd.f32 0.0, %v5031
    %v5033 = vpop.f32.mrf.mxu0
    %v5034 = vadd.f32 0.0, %v5033
    %5035 = vmatmul.bf16.gmra.mxu0 %v5017
    %v5036 = vpop.f32.mrf.mxu0
    %v5037 = vadd.f32 0.0, %v5036
    %v5038 = vpop.f32.mrf.mxu0
    %v5039 = vadd.f32 0.0, %v5038
    %5040 = vmatmul.bf16.gmra.mxu0 %v5018
    %v5041 = vpop.f32.mrf.mxu0
    %v5042 = vadd.f32 0.0, %v5041
    %v5043 = vpop.f32.mrf.mxu0
    %v5044 = vadd.f32 0.0, %v5043
    %5045 = vmatmul.bf16.gmra.mxu0 %v5019
    %v5046 = vpop.f32.mrf.mxu0
    %v5047 = vadd.f32 0.0, %v5046
    %v5048 = vpop.f32.mrf.mxu0
    %v5049 = vadd.f32 0.0, %v5048
    %5050 = vmatmul.bf16.gmra.mxu0 %v5020
    %v5051 = vpop.f32.mrf.mxu0
    %v5052 = vpop.f32.mrf.mxu0
    %5053 = vmatmul.bf16.gmra.mxu0 %v5021
    %v5054 = vpop.f32.mrf.mxu0
    %v5055 = vpop.f32.mrf.mxu0
    %5056 = vdwg.mxu0
    %v5057 = vadd.f32 %v4994, %v5032
    %v5058 = vadd.f32 %v4995, %v5034
    %v5059 = vadd.f32 %v4996, %v5037
    %v5060 = vadd.f32 %v4997, %v5039
    %v5061 = vadd.f32 %v4998, %v5042
    %v5062 = vadd.f32 %v4999, %v5044
    %v5063 = vadd.f32 %v5000, %v5047
    %v5064 = vadd.f32 %v5001, %v5049
    %s5065 = sadd.s32 %s3758, 392
    %s5066 = scalar_lea.vmem [#allocation2], %s5065
    %v5067 = vld [vmem:[%s5066] sm:$0xff]
    %v5068 = vld [vmem:[%s5066 + $0x8] sm:$0xff]
    %v5069 = vld [vmem:[%s5066 + $0x10] sm:$0xff]
    %v5070 = vld [vmem:[%s5066 + $0x18] sm:$0xff]
    %v5071 = vld [vmem:[%s5066 + $0x20] sm:$0xff]
    %v5072 = vld [vmem:[%s5066 + $0x28] sm:$0xff]
    %v5073 = vld [vmem:[%s5066 + $0x30] sm:$0xff]
    %v5074 = vld [vmem:[%s5066 + $0x38] sm:$0xff]
    %v5075 = vld [vmem:[%s5066 + $0x40] sm:$0xff]
    %v5076 = vld [vmem:[%s5066 + $0x48] sm:$0xff]
    %v5077 = vld [vmem:[%s5066 + $0x50] sm:$0xff]
    %v5078 = vld [vmem:[%s5066 + $0x58] sm:$0xff]
    %v5079 = vpack.c.bf16 %v5068, %v5067
    %v5080 = vpack.c.bf16 %v5070, %v5069
    %v5081 = vpack.c.bf16 %v5072, %v5071
    %v5082 = vpack.c.bf16 %v5074, %v5073
    %v5083 = vpack.c.bf16 %v5076, %v5075
    %v5084 = vpack.c.bf16 %v5078, %v5077
    %5085 = vmatpush.bf16.msra.mxu0 %v3316
    %5086 = vmatpush.bf16.msra.mxu0 %v3315
    %5087 = vmatpush.bf16.msra.mxu0 %v3314
    %5088 = vmatpush.bf16.msra.mxu0 %v3313
    %5089 = vmatpush.bf16.msra.mxu0 %v3312
    %5090 = vmatpush.bf16.msra.mxu0 %v3311
    %5091 = vmatpush.bf16.msra.mxu0 %v3310
    %5092 = vmatpush.bf16.msra.mxu0 %v3309
    %5093 = vmatmul.bf16.gmra.mxu0 %v5079
    %v5094 = vpop.f32.mrf.mxu0
    %v5095 = vadd.f32 0.0, %v5094
    %v5096 = vpop.f32.mrf.mxu0
    %v5097 = vadd.f32 0.0, %v5096
    %5098 = vmatmul.bf16.gmra.mxu0 %v5080
    %v5099 = vpop.f32.mrf.mxu0
    %v5100 = vadd.f32 0.0, %v5099
    %v5101 = vpop.f32.mrf.mxu0
    %v5102 = vadd.f32 0.0, %v5101
    %5103 = vmatmul.bf16.gmra.mxu0 %v5081
    %v5104 = vpop.f32.mrf.mxu0
    %v5105 = vadd.f32 0.0, %v5104
    %v5106 = vpop.f32.mrf.mxu0
    %v5107 = vadd.f32 0.0, %v5106
    %5108 = vmatmul.bf16.gmra.mxu0 %v5082
    %v5109 = vpop.f32.mrf.mxu0
    %v5110 = vadd.f32 0.0, %v5109
    %v5111 = vpop.f32.mrf.mxu0
    %v5112 = vadd.f32 0.0, %v5111
    %5113 = vmatmul.bf16.gmra.mxu0 %v5083
    %v5114 = vpop.f32.mrf.mxu0
    %v5115 = vpop.f32.mrf.mxu0
    %5116 = vmatmul.bf16.gmra.mxu0 %v5084
    %v5117 = vpop.f32.mrf.mxu0
    %v5118 = vpop.f32.mrf.mxu0
    %5119 = vdwg.mxu0
    %v5120 = vadd.f32 %v5057, %v5095
    %v5121 = vadd.f32 %v5058, %v5097
    %v5122 = vadd.f32 %v5059, %v5100
    %v5123 = vadd.f32 %v5060, %v5102
    %v5124 = vadd.f32 %v5061, %v5105
    %v5125 = vadd.f32 %v5062, %v5107
    %v5126 = vadd.f32 %v5063, %v5110
    %v5127 = vadd.f32 %v5064, %v5112
    %s5128 = sadd.s32 %s3758, 400
    %s5129 = scalar_lea.vmem [#allocation2], %s5128
    %v5130 = vld [vmem:[%s5129] sm:$0xff]
    %v5131 = vld [vmem:[%s5129 + $0x8] sm:$0xff]
    %v5132 = vld [vmem:[%s5129 + $0x10] sm:$0xff]
    %v5133 = vld [vmem:[%s5129 + $0x18] sm:$0xff]
    %v5134 = vld [vmem:[%s5129 + $0x20] sm:$0xff]
    %v5135 = vld [vmem:[%s5129 + $0x28] sm:$0xff]
    %v5136 = vld [vmem:[%s5129 + $0x30] sm:$0xff]
    %v5137 = vld [vmem:[%s5129 + $0x38] sm:$0xff]
    %v5138 = vld [vmem:[%s5129 + $0x40] sm:$0xff]
    %v5139 = vld [vmem:[%s5129 + $0x48] sm:$0xff]
    %v5140 = vld [vmem:[%s5129 + $0x50] sm:$0xff]
    %v5141 = vld [vmem:[%s5129 + $0x58] sm:$0xff]
    %v5142 = vpack.c.bf16 %v5131, %v5130
    %v5143 = vpack.c.bf16 %v5133, %v5132
    %v5144 = vpack.c.bf16 %v5135, %v5134
    %v5145 = vpack.c.bf16 %v5137, %v5136
    %v5146 = vpack.c.bf16 %v5139, %v5138
    %v5147 = vpack.c.bf16 %v5141, %v5140
    %5148 = vmatpush.bf16.msra.mxu0 %v3444
    %5149 = vmatpush.bf16.msra.mxu0 %v3443
    %5150 = vmatpush.bf16.msra.mxu0 %v3442
    %5151 = vmatpush.bf16.msra.mxu0 %v3441
    %5152 = vmatpush.bf16.msra.mxu0 %v3440
    %5153 = vmatpush.bf16.msra.mxu0 %v3439
    %5154 = vmatpush.bf16.msra.mxu0 %v3438
    %5155 = vmatpush.bf16.msra.mxu0 %v3437
    %5156 = vmatmul.bf16.gmra.mxu0 %v5142
    %v5157 = vpop.f32.mrf.mxu0
    %v5158 = vadd.f32 0.0, %v5157
    %v5159 = vpop.f32.mrf.mxu0
    %v5160 = vadd.f32 0.0, %v5159
    %5161 = vmatmul.bf16.gmra.mxu0 %v5143
    %v5162 = vpop.f32.mrf.mxu0
    %v5163 = vadd.f32 0.0, %v5162
    %v5164 = vpop.f32.mrf.mxu0
    %v5165 = vadd.f32 0.0, %v5164
    %5166 = vmatmul.bf16.gmra.mxu0 %v5144
    %v5167 = vpop.f32.mrf.mxu0
    %v5168 = vadd.f32 0.0, %v5167
    %v5169 = vpop.f32.mrf.mxu0
    %v5170 = vadd.f32 0.0, %v5169
    %5171 = vmatmul.bf16.gmra.mxu0 %v5145
    %v5172 = vpop.f32.mrf.mxu0
    %v5173 = vadd.f32 0.0, %v5172
    %v5174 = vpop.f32.mrf.mxu0
    %v5175 = vadd.f32 0.0, %v5174
    %5176 = vmatmul.bf16.gmra.mxu0 %v5146
    %v5177 = vpop.f32.mrf.mxu0
    %v5178 = vpop.f32.mrf.mxu0
    %5179 = vmatmul.bf16.gmra.mxu0 %v5147
    %v5180 = vpop.f32.mrf.mxu0
    %v5181 = vpop.f32.mrf.mxu0
    %5182 = vdwg.mxu0
    %v5183 = vadd.f32 %v5120, %v5158
    %v5184 = vadd.f32 %v5121, %v5160
    %v5185 = vadd.f32 %v5122, %v5163
    %v5186 = vadd.f32 %v5123, %v5165
    %v5187 = vadd.f32 %v5124, %v5168
    %v5188 = vadd.f32 %v5125, %v5170
    %v5189 = vadd.f32 %v5126, %v5173
    %v5190 = vadd.f32 %v5127, %v5175
    %s5191 = sadd.s32 %s3758, 408
    %s5192 = scalar_lea.vmem [#allocation2], %s5191
    %v5193 = vld [vmem:[%s5192] sm:$0xff]
    %v5194 = vld [vmem:[%s5192 + $0x8] sm:$0xff]
    %v5195 = vld [vmem:[%s5192 + $0x10] sm:$0xff]
    %v5196 = vld [vmem:[%s5192 + $0x18] sm:$0xff]
    %v5197 = vld [vmem:[%s5192 + $0x20] sm:$0xff]
    %v5198 = vld [vmem:[%s5192 + $0x28] sm:$0xff]
    %v5199 = vld [vmem:[%s5192 + $0x30] sm:$0xff]
    %v5200 = vld [vmem:[%s5192 + $0x38] sm:$0xff]
    %v5201 = vld [vmem:[%s5192 + $0x40] sm:$0xff]
    %v5202 = vld [vmem:[%s5192 + $0x48] sm:$0xff]
    %v5203 = vld [vmem:[%s5192 + $0x50] sm:$0xff]
    %v5204 = vld [vmem:[%s5192 + $0x58] sm:$0xff]
    %v5205 = vpack.c.bf16 %v5194, %v5193
    %v5206 = vpack.c.bf16 %v5196, %v5195
    %v5207 = vpack.c.bf16 %v5198, %v5197
    %v5208 = vpack.c.bf16 %v5200, %v5199
    %v5209 = vpack.c.bf16 %v5202, %v5201
    %v5210 = vpack.c.bf16 %v5204, %v5203
    %5211 = vmatpush.bf16.msra.mxu0 %v3572
    %5212 = vmatpush.bf16.msra.mxu0 %v3571
    %5213 = vmatpush.bf16.msra.mxu0 %v3570
    %5214 = vmatpush.bf16.msra.mxu0 %v3569
    %5215 = vmatpush.bf16.msra.mxu0 %v3568
    %5216 = vmatpush.bf16.msra.mxu0 %v3567
    %5217 = vmatpush.bf16.msra.mxu0 %v3566
    %5218 = vmatpush.bf16.msra.mxu0 %v3565
    %5219 = vmatmul.bf16.gmra.mxu0 %v5205
    %v5220 = vpop.f32.mrf.mxu0
    %v5221 = vadd.f32 0.0, %v5220
    %v5222 = vpop.f32.mrf.mxu0
    %v5223 = vadd.f32 0.0, %v5222
    %5224 = vmatmul.bf16.gmra.mxu0 %v5206
    %v5225 = vpop.f32.mrf.mxu0
    %v5226 = vadd.f32 0.0, %v5225
    %v5227 = vpop.f32.mrf.mxu0
    %v5228 = vadd.f32 0.0, %v5227
    %5229 = vmatmul.bf16.gmra.mxu0 %v5207
    %v5230 = vpop.f32.mrf.mxu0
    %v5231 = vadd.f32 0.0, %v5230
    %v5232 = vpop.f32.mrf.mxu0
    %v5233 = vadd.f32 0.0, %v5232
    %5234 = vmatmul.bf16.gmra.mxu0 %v5208
    %v5235 = vpop.f32.mrf.mxu0
    %v5236 = vadd.f32 0.0, %v5235
    %v5237 = vpop.f32.mrf.mxu0
    %v5238 = vadd.f32 0.0, %v5237
    %5239 = vmatmul.bf16.gmra.mxu0 %v5209
    %v5240 = vpop.f32.mrf.mxu0
    %v5241 = vpop.f32.mrf.mxu0
    %5242 = vmatmul.bf16.gmra.mxu0 %v5210
    %v5243 = vpop.f32.mrf.mxu0
    %v5244 = vpop.f32.mrf.mxu0
    %5245 = vdwg.mxu0
    %v5246 = vadd.f32 %v5183, %v5221
    %v5247 = vadd.f32 %v5184, %v5223
    %v5248 = vadd.f32 %v5185, %v5226
    %v5249 = vadd.f32 %v5186, %v5228
    %v5250 = vadd.f32 %v5187, %v5231
    %v5251 = vadd.f32 %v5188, %v5233
    %v5252 = vadd.f32 %v5189, %v5236
    %v5253 = vadd.f32 %v5190, %v5238
    %s5254 = sadd.s32 %s3758, 416
    %s5255 = scalar_lea.vmem [#allocation2], %s5254
    %v5256 = vld [vmem:[%s5255] sm:$0xff]
    %v5257 = vld [vmem:[%s5255 + $0x8] sm:$0xff]
    %v5258 = vld [vmem:[%s5255 + $0x10] sm:$0xff]
    %v5259 = vld [vmem:[%s5255 + $0x18] sm:$0xff]
    %v5260 = vld [vmem:[%s5255 + $0x20] sm:$0xff]
    %v5261 = vld [vmem:[%s5255 + $0x28] sm:$0xff]
    %v5262 = vld [vmem:[%s5255 + $0x30] sm:$0xff]
    %v5263 = vld [vmem:[%s5255 + $0x38] sm:$0xff]
    %v5264 = vld [vmem:[%s5255 + $0x40] sm:$0xff]
    %v5265 = vld [vmem:[%s5255 + $0x48] sm:$0xff]
    %v5266 = vld [vmem:[%s5255 + $0x50] sm:$0xff]
    %v5267 = vld [vmem:[%s5255 + $0x58] sm:$0xff]
    %v5268 = vpack.c.bf16 %v5257, %v5256
    %v5269 = vpack.c.bf16 %v5259, %v5258
    %v5270 = vpack.c.bf16 %v5261, %v5260
    %v5271 = vpack.c.bf16 %v5263, %v5262
    %v5272 = vpack.c.bf16 %v5265, %v5264
    %v5273 = vpack.c.bf16 %v5267, %v5266
    %5274 = vmatpush.bf16.msra.mxu0 %v3700
    %5275 = vmatpush.bf16.msra.mxu0 %v3699
    %5276 = vmatpush.bf16.msra.mxu0 %v3698
    %5277 = vmatpush.bf16.msra.mxu0 %v3697
    %5278 = vmatpush.bf16.msra.mxu0 %v3696
    %5279 = vmatpush.bf16.msra.mxu0 %v3695
    %5280 = vmatpush.bf16.msra.mxu0 %v3694
    %5281 = vmatpush.bf16.msra.mxu0 %v3693
    %5282 = vmatmul.bf16.gmra.mxu0 %v5268
    %v5283 = vpop.f32.mrf.mxu0
    %v5284 = vadd.f32 0.0, %v5283
    %v5285 = vpop.f32.mrf.mxu0
    %v5286 = vadd.f32 0.0, %v5285
    %5287 = vmatmul.bf16.gmra.mxu0 %v5269
    %v5288 = vpop.f32.mrf.mxu0
    %v5289 = vadd.f32 0.0, %v5288
    %v5290 = vpop.f32.mrf.mxu0
    %v5291 = vadd.f32 0.0, %v5290
    %5292 = vmatmul.bf16.gmra.mxu0 %v5270
    %v5293 = vpop.f32.mrf.mxu0
    %v5294 = vadd.f32 0.0, %v5293
    %v5295 = vpop.f32.mrf.mxu0
    %v5296 = vadd.f32 0.0, %v5295
    %5297 = vmatmul.bf16.gmra.mxu0 %v5271
    %v5298 = vpop.f32.mrf.mxu0
    %v5299 = vadd.f32 0.0, %v5298
    %v5300 = vpop.f32.mrf.mxu0
    %v5301 = vadd.f32 0.0, %v5300
    %5302 = vmatmul.bf16.gmra.mxu0 %v5272
    %v5303 = vpop.f32.mrf.mxu0
    %v5304 = vpop.f32.mrf.mxu0
    %5305 = vmatmul.bf16.gmra.mxu0 %v5273
    %v5306 = vpop.f32.mrf.mxu0
    %v5307 = vpop.f32.mrf.mxu0
    %5308 = vdwg.mxu0
    %v5309 = vadd.f32 %v5246, %v5284
    %v5310 = vadd.f32 %v5247, %v5286
    %v5311 = vadd.f32 %v5248, %v5289
    %v5312 = vadd.f32 %v5249, %v5291
    %v5313 = vadd.f32 %v5250, %v5294
    %v5314 = vadd.f32 %v5251, %v5296
    %v5315 = vadd.f32 %v5252, %v5299
    %v5316 = vadd.f32 %v5253, %v5301
    %v5317 = vmax.f32 %v5309, %v5310
    %v5318 = vmax.f32 %v5311, %v5312
    %v5319 = vmax.f32 %v5313, %v5314
    %v5320 = vmax.f32 %v5315, %v5316
    %v5321 = vmax.f32 %v3752, %v5317
    %v5322 = vmax.f32 %v3753, %v5318
    %v5323 = vmax.f32 %v3754, %v5319
    %v5324 = vmax.f32 %v3755, %v5320
    %v5325 = vld [vmem:[%s7] sm:$0x1]
    %v5327 = vperm.slane %v5325, 0
    %v5329 = vadd.f32 %v5321, %v5327
    %v5330 = vadd.f32 %v5322, %v5327
    %v5331 = vadd.f32 %v5323, %v5327
    %v5332 = vadd.f32 %v5324, %v5327
    %v5333 = vmax.f32 %v5329, 0.0
    %v5334 = vmax.f32 %v5330, 0.0
    %v5335 = vmax.f32 %v5331, 0.0
    %v5336 = vmax.f32 %v5332, 0.0
    %v5337 = vmul.f32 %v5333, %v557
    %v5338 = vmul.f32 %v5334, %v558
    %v5339 = vmul.f32 %v5335, %v559
    %v5340 = vmul.f32 %v5336, %v560
    %s5341 = smul.u32 %s562, 32
    %s5342 = scalar_lea.vmem [#allocation3], %s5341
    %5343 = vst [vmem:[%s5342] sm:$0xff] %v5337
    %5344 = vst [vmem:[%s5342 + $0x8] sm:$0xff] %v5338
    %5345 = vst [vmem:[%s5342 + $0x10] sm:$0xff] %v5339
    %5346 = vst [vmem:[%s5342 + $0x18] sm:$0xff] %v5340
    %v5347 = vadd.f32 %v5337, %v5338
    %v5348 = vadd.f32 %v5347, %v5339
    %v5349 = vadd.f32 %v5348, %v5340
    %v5350 = vrot.slane %v5349, 4
    %v5351 = vadd.f32 %v5349, %v5350
    %v5352 = vrot.slane %v5351, 2
    %v5353 = vadd.f32 %v5351, %v5352
    %v5354 = vrot.slane %v5353, 1
    %v5355 = vadd.f32 %v5353, %v5354
    %v5356 = vadd.f32 %v567, %v5355
    %v5357 = vmul.f32 %v5337, %v5337
    %v5358 = vmul.f32 %v5338, %v5338
    %v5359 = vmul.f32 %v5339, %v5339
    %v5360 = vmul.f32 %v5340, %v5340
    %v5361 = vadd.f32 %v5357, %v5358
    %v5362 = vadd.f32 %v5361, %v5359
    %v5363 = vadd.f32 %v5362, %v5360
    %v5364 = vrot.slane %v5363, 4
    %v5365 = vadd.f32 %v5363, %v5364
    %v5366 = vrot.slane %v5365, 2
    %v5367 = vadd.f32 %v5365, %v5366
    %v5368 = vrot.slane %v5367, 1
    %v5369 = vadd.f32 %v5367, %v5368
    %v5370 = vadd.f32 %v568, %v5369
  $region76: #{mnist_forward.1} parent=0 // loop_footer
    %s566 = sadd.s32 1, %s562
  $region77: #{mnist_forward.1} parent=0 // loop_footer_branch
    %561 = sbr.rel target = $region73
  $region78: #{mnist_forward.1} parent=0 // loop_exit
    _
  %v5371 = vmul.f32 %v567, 0.03125
  %v5372 = vmul.f32 %v568, 0.03125
  %v5373 = vmul.f32 %v5371, %v5371
  %v5374 = vsub.f32 %v5372, %v5373
  %v5375 = vmax.f32 %v5374, 0.0
  %v5376 = vadd.f32 %v5375, 1e-05
  %v5377 = vrsqrt.pop %v5376
  %v5378 = vmul.f32 %v5377, %v5376
  %v5379 = vmul.f32 %v5378, %v5377
  %v5380 = vmul.f32 0.5, %v5379
  %v5381 = vsub.f32 1.5, %v5380
  %v5382 = vmul.f32 %v5377, %v5381
  %vm5383 = vweird.f32 %v5376
  %vm5384 = vweird.f32 %v5377
  %vm5385 = vmor %vm5383, %vm5384
  %v5386 = vsel %vm5385, %v5377, %v5382
  %v5387 = vld [vmem:[%s8] sm:$0x1]
  %v5388 = vmul.f32 %v5386, %v5387
  %v5389 = vld [vmem:[%s9] sm:$0x1]
  %v5390 = vmul.f32 %v5371, %v5388
  %v5391 = vsub.f32 %v5389, %v5390
  %v5392 = vld [vmem:[#allocation3] sm:$0xff]
  %v5393 = vperm.slane %v5388, 0
  %v5394 = vmul.f32 %v5392, %v5393
  %v5396 = vperm.slane %v5391, 0
  %v5398 = vadd.f32 %v5394, %v5396
  %v5399 = vpack.c.bf16 %v5398, %v5398
  %v5400 = vld [vmem:[%s10] sm:$0xf]
  %v5401 = vld [vmem:[%s10 + $0x4] sm:$0xf]
  %v5402 = vld [vmem:[%s10 + $0x8] sm:$0xf]
  %v5403 = vld [vmem:[%s10 + $0xc] sm:$0xf]
  %v5404 = vld [vmem:[%s10 + $0x10] sm:$0xf]
  %v5405 = vld [vmem:[%s10 + $0x14] sm:$0xf]
  %v5406 = vld [vmem:[%s10 + $0x18] sm:$0xf]
  %v5407 = vld [vmem:[%s10 + $0x1c] sm:$0xf]
  %v5408 = vld [vmem:[%s10 + $0x20] sm:$0xf]
  %v5409 = vld [vmem:[%s10 + $0x24] sm:$0xf]
  %v5410 = vld [vmem:[%s10 + $0x28] sm:$0xf]
  %v5411 = vld [vmem:[%s10 + $0x2c] sm:$0xf]
  %v5412 = vld [vmem:[%s10 + $0x30] sm:$0xf]
  %v5413 = vld [vmem:[%s10 + $0x34] sm:$0xf]
  %v5414 = vld [vmem:[%s10 + $0x38] sm:$0xf]
  %v5415 = vld [vmem:[%s10 + $0x3c] sm:$0xf]
  %v5416 = vld [vmem:[#allocation3 + $0x8] sm:$0xff]
  %v5417 = vmul.f32 %v5416, %v5393
  %v5418 = vadd.f32 %v5417, %v5396
  %v5419 = vpack.c.bf16 %v5418, %v5418
  %s5420 = scalar_lea.vmem %s10, 64
  %v5421 = vld [vmem:[%s5420] sm:$0xf]
  %v5422 = vld [vmem:[%s5420 + $0x4] sm:$0xf]
  %v5423 = vld [vmem:[%s5420 + $0x8] sm:$0xf]
  %v5424 = vld [vmem:[%s5420 + $0xc] sm:$0xf]
  %v5425 = vld [vmem:[%s5420 + $0x10] sm:$0xf]
  %v5426 = vld [vmem:[%s5420 + $0x14] sm:$0xf]
  %v5427 = vld [vmem:[%s5420 + $0x18] sm:$0xf]
  %v5428 = vld [vmem:[%s5420 + $0x1c] sm:$0xf]
  %v5429 = vld [vmem:[%s5420 + $0x20] sm:$0xf]
  %v5430 = vld [vmem:[%s5420 + $0x24] sm:$0xf]
  %v5431 = vld [vmem:[%s5420 + $0x28] sm:$0xf]
  %v5432 = vld [vmem:[%s5420 + $0x2c] sm:$0xf]
  %v5433 = vld [vmem:[%s5420 + $0x30] sm:$0xf]
  %v5434 = vld [vmem:[%s5420 + $0x34] sm:$0xf]
  %v5435 = vld [vmem:[%s5420 + $0x38] sm:$0xf]
  %v5436 = vld [vmem:[%s5420 + $0x3c] sm:$0xf]
  %v5453 = vunpack.c.l.b16 %v5421
  %v5454 = vunpack.c.l.b16 %v5422
  %v5455 = vunpack.c.l.b16 %v5423
  %v5456 = vunpack.c.l.b16 %v5424
  %v5457 = vunpack.c.l.b16 %v5425
  %v5458 = vunpack.c.l.b16 %v5426
  %v5459 = vunpack.c.l.b16 %v5427
  %v5460 = vunpack.c.l.b16 %v5428
  %v5461 = vunpack.c.l.b16 %v5429
  %v5462 = vunpack.c.l.b16 %v5430
  %v5463 = vunpack.c.l.b16 %v5431
  %v5464 = vunpack.c.l.b16 %v5432
  %v5465 = vunpack.c.l.b16 %v5433
  %v5466 = vunpack.c.l.b16 %v5434
  %v5467 = vunpack.c.l.b16 %v5435
  %v5468 = vunpack.c.l.b16 %v5436
  %v5469 = vpack.c.b16 %v5454, %v5453
  %v5470 = vpack.c.b16 %v5456, %v5455
  %v5471 = vpack.c.b16 %v5458, %v5457
  %v5472 = vpack.c.b16 %v5460, %v5459
  %v5473 = vpack.c.b16 %v5462, %v5461
  %v5474 = vpack.c.b16 %v5464, %v5463
  %v5475 = vpack.c.b16 %v5466, %v5465
  %v5476 = vpack.c.b16 %v5468, %v5467
  %5485 = vmatpush.bf16.msra.mxu0 %v5476
  %5486 = vmatpush.bf16.msra.mxu0 %v5475
  %5487 = vmatpush.bf16.msra.mxu0 %v5474
  %5488 = vmatpush.bf16.msra.mxu0 %v5473
  %5489 = vmatpush.bf16.msra.mxu0 %v5472
  %5490 = vmatpush.bf16.msra.mxu0 %v5471
  %5491 = vmatpush.bf16.msra.mxu0 %v5470
  %5492 = vmatpush.bf16.msra.mxu0 %v5469
  %5493 = vmatmul.bf16.gmra.mxu0 %v5419
  %v5494 = vpop.f32.mrf.mxu0
  %v5495 = vadd.f32 0.0, %v5494
  %v5496 = vpop.f32.mrf.mxu0
  %5497 = vdwg.mxu0
  %v5514 = vunpack.c.l.b16 %v5400
  %v5515 = vunpack.c.l.b16 %v5401
  %v5516 = vunpack.c.l.b16 %v5402
  %v5517 = vunpack.c.l.b16 %v5403
  %v5518 = vunpack.c.l.b16 %v5404
  %v5519 = vunpack.c.l.b16 %v5405
  %v5520 = vunpack.c.l.b16 %v5406
  %v5521 = vunpack.c.l.b16 %v5407
  %v5522 = vunpack.c.l.b16 %v5408
  %v5523 = vunpack.c.l.b16 %v5409
  %v5524 = vunpack.c.l.b16 %v5410
  %v5525 = vunpack.c.l.b16 %v5411
  %v5526 = vunpack.c.l.b16 %v5412
  %v5527 = vunpack.c.l.b16 %v5413
  %v5528 = vunpack.c.l.b16 %v5414
  %v5529 = vunpack.c.l.b16 %v5415
  %v5530 = vpack.c.b16 %v5515, %v5514
  %v5531 = vpack.c.b16 %v5517, %v5516
  %v5532 = vpack.c.b16 %v5519, %v5518
  %v5533 = vpack.c.b16 %v5521, %v5520
  %v5534 = vpack.c.b16 %v5523, %v5522
  %v5535 = vpack.c.b16 %v5525, %v5524
  %v5536 = vpack.c.b16 %v5527, %v5526
  %v5537 = vpack.c.b16 %v5529, %v5528
  %5546 = vmatpush.bf16.msra.mxu0 %v5537
  %5547 = vmatpush.bf16.msra.mxu0 %v5536
  %5548 = vmatpush.bf16.msra.mxu0 %v5535
  %5549 = vmatpush.bf16.msra.mxu0 %v5534
  %5550 = vmatpush.bf16.msra.mxu0 %v5533
  %5551 = vmatpush.bf16.msra.mxu0 %v5532
  %5552 = vmatpush.bf16.msra.mxu0 %v5531
  %5553 = vmatpush.bf16.msra.mxu0 %v5530
  %5554 = vmatmul.bf16.gmra.mxu0 %v5399
  %v5555 = vpop.f32.mrf.mxu0
  %v5556 = vadd.f32 %v5495, %v5555
  %v5557 = vpop.f32.mrf.mxu0
  %5558 = vdwg.mxu0
  %v5559 = vld [vmem:[#allocation3 + $0x10] sm:$0xff]
  %v5560 = vmul.f32 %v5559, %v5393
  %v5561 = vadd.f32 %v5560, %v5396
  %v5562 = vpack.c.bf16 %v5561, %v5561
  %s5563 = scalar_lea.vmem %s10, 128
  %v5564 = vld [vmem:[%s5563] sm:$0xf]
  %v5565 = vld [vmem:[%s5563 + $0x4] sm:$0xf]
  %v5566 = vld [vmem:[%s5563 + $0x8] sm:$0xf]
  %v5567 = vld [vmem:[%s5563 + $0xc] sm:$0xf]
  %v5568 = vld [vmem:[%s5563 + $0x10] sm:$0xf]
  %v5569 = vld [vmem:[%s5563 + $0x14] sm:$0xf]
  %v5570 = vld [vmem:[%s5563 + $0x18] sm:$0xf]
  %v5571 = vld [vmem:[%s5563 + $0x1c] sm:$0xf]
  %v5572 = vld [vmem:[%s5563 + $0x20] sm:$0xf]
  %v5573 = vld [vmem:[%s5563 + $0x24] sm:$0xf]
  %v5574 = vld [vmem:[%s5563 + $0x28] sm:$0xf]
  %v5575 = vld [vmem:[%s5563 + $0x2c] sm:$0xf]
  %v5576 = vld [vmem:[%s5563 + $0x30] sm:$0xf]
  %v5577 = vld [vmem:[%s5563 + $0x34] sm:$0xf]
  %v5578 = vld [vmem:[%s5563 + $0x38] sm:$0xf]
  %v5579 = vld [vmem:[%s5563 + $0x3c] sm:$0xf]
  %v5596 = vunpack.c.l.b16 %v5564
  %v5597 = vunpack.c.l.b16 %v5565
  %v5598 = vunpack.c.l.b16 %v5566
  %v5599 = vunpack.c.l.b16 %v5567
  %v5600 = vunpack.c.l.b16 %v5568
  %v5601 = vunpack.c.l.b16 %v5569
  %v5602 = vunpack.c.l.b16 %v5570
  %v5603 = vunpack.c.l.b16 %v5571
  %v5604 = vunpack.c.l.b16 %v5572
  %v5605 = vunpack.c.l.b16 %v5573
  %v5606 = vunpack.c.l.b16 %v5574
  %v5607 = vunpack.c.l.b16 %v5575
  %v5608 = vunpack.c.l.b16 %v5576
  %v5609 = vunpack.c.l.b16 %v5577
  %v5610 = vunpack.c.l.b16 %v5578
  %v5611 = vunpack.c.l.b16 %v5579
  %v5612 = vpack.c.b16 %v5597, %v5596
  %v5613 = vpack.c.b16 %v5599, %v5598
  %v5614 = vpack.c.b16 %v5601, %v5600
  %v5615 = vpack.c.b16 %v5603, %v5602
  %v5616 = vpack.c.b16 %v5605, %v5604
  %v5617 = vpack.c.b16 %v5607, %v5606
  %v5618 = vpack.c.b16 %v5609, %v5608
  %v5619 = vpack.c.b16 %v5611, %v5610
  %5628 = vmatpush.bf16.msra.mxu0 %v5619
  %5629 = vmatpush.bf16.msra.mxu0 %v5618
  %5630 = vmatpush.bf16.msra.mxu0 %v5617
  %5631 = vmatpush.bf16.msra.mxu0 %v5616
  %5632 = vmatpush.bf16.msra.mxu0 %v5615
  %5633 = vmatpush.bf16.msra.mxu0 %v5614
  %5634 = vmatpush.bf16.msra.mxu0 %v5613
  %5635 = vmatpush.bf16.msra.mxu0 %v5612
  %5636 = vmatmul.bf16.gmra.mxu0 %v5562
  %v5637 = vpop.f32.mrf.mxu0
  %v5638 = vadd.f32 0.0, %v5637
  %v5639 = vpop.f32.mrf.mxu0
  %5640 = vdwg.mxu0
  %v5641 = vadd.f32 %v5556, %v5638
  %v5642 = vld [vmem:[#allocation3 + $0x18] sm:$0xff]
  %v5643 = vmul.f32 %v5642, %v5393
  %v5644 = vadd.f32 %v5643, %v5396
  %v5645 = vpack.c.bf16 %v5644, %v5644
  %s5646 = scalar_lea.vmem %s10, 192
  %v5647 = vld [vmem:[%s5646] sm:$0xf]
  %v5648 = vld [vmem:[%s5646 + $0x4] sm:$0xf]
  %v5649 = vld [vmem:[%s5646 + $0x8] sm:$0xf]
  %v5650 = vld [vmem:[%s5646 + $0xc] sm:$0xf]
  %v5651 = vld [vmem:[%s5646 + $0x10] sm:$0xf]
  %v5652 = vld [vmem:[%s5646 + $0x14] sm:$0xf]
  %v5653 = vld [vmem:[%s5646 + $0x18] sm:$0xf]
  %v5654 = vld [vmem:[%s5646 + $0x1c] sm:$0xf]
  %v5655 = vld [vmem:[%s5646 + $0x20] sm:$0xf]
  %v5656 = vld [vmem:[%s5646 + $0x24] sm:$0xf]
  %v5657 = vld [vmem:[%s5646 + $0x28] sm:$0xf]
  %v5658 = vld [vmem:[%s5646 + $0x2c] sm:$0xf]
  %v5659 = vld [vmem:[%s5646 + $0x30] sm:$0xf]
  %v5660 = vld [vmem:[%s5646 + $0x34] sm:$0xf]
  %v5661 = vld [vmem:[%s5646 + $0x38] sm:$0xf]
  %v5662 = vld [vmem:[%s5646 + $0x3c] sm:$0xf]
  %v5679 = vunpack.c.l.b16 %v5647
  %v5680 = vunpack.c.l.b16 %v5648
  %v5681 = vunpack.c.l.b16 %v5649
  %v5682 = vunpack.c.l.b16 %v5650
  %v5683 = vunpack.c.l.b16 %v5651
  %v5684 = vunpack.c.l.b16 %v5652
  %v5685 = vunpack.c.l.b16 %v5653
  %v5686 = vunpack.c.l.b16 %v5654
  %v5687 = vunpack.c.l.b16 %v5655
  %v5688 = vunpack.c.l.b16 %v5656
  %v5689 = vunpack.c.l.b16 %v5657
  %v5690 = vunpack.c.l.b16 %v5658
  %v5691 = vunpack.c.l.b16 %v5659
  %v5692 = vunpack.c.l.b16 %v5660
  %v5693 = vunpack.c.l.b16 %v5661
  %v5694 = vunpack.c.l.b16 %v5662
  %v5695 = vpack.c.b16 %v5680, %v5679
  %v5696 = vpack.c.b16 %v5682, %v5681
  %v5697 = vpack.c.b16 %v5684, %v5683
  %v5698 = vpack.c.b16 %v5686, %v5685
  %v5699 = vpack.c.b16 %v5688, %v5687
  %v5700 = vpack.c.b16 %v5690, %v5689
  %v5701 = vpack.c.b16 %v5692, %v5691
  %v5702 = vpack.c.b16 %v5694, %v5693
  %5711 = vmatpush.bf16.msra.mxu0 %v5702
  %5712 = vmatpush.bf16.msra.mxu0 %v5701
  %5713 = vmatpush.bf16.msra.mxu0 %v5700
  %5714 = vmatpush.bf16.msra.mxu0 %v5699
  %5715 = vmatpush.bf16.msra.mxu0 %v5698
  %5716 = vmatpush.bf16.msra.mxu0 %v5697
  %5717 = vmatpush.bf16.msra.mxu0 %v5696
  %5718 = vmatpush.bf16.msra.mxu0 %v5695
  %5719 = vmatmul.bf16.gmra.mxu0 %v5645
  %v5720 = vpop.f32.mrf.mxu0
  %v5721 = vadd.f32 0.0, %v5720
  %v5722 = vpop.f32.mrf.mxu0
  %5723 = vdwg.mxu0
  %v5724 = vadd.f32 %v5641, %v5721
  %v5725 = vld [vmem:[#allocation3 + $0x20] sm:$0xff]
  %v5726 = vmul.f32 %v5725, %v5393
  %v5727 = vadd.f32 %v5726, %v5396
  %v5728 = vpack.c.bf16 %v5727, %v5727
  %s5729 = scalar_lea.vmem %s10, 256
  %v5730 = vld [vmem:[%s5729] sm:$0xf]
  %v5731 = vld [vmem:[%s5729 + $0x4] sm:$0xf]
  %v5732 = vld [vmem:[%s5729 + $0x8] sm:$0xf]
  %v5733 = vld [vmem:[%s5729 + $0xc] sm:$0xf]
  %v5734 = vld [vmem:[%s5729 + $0x10] sm:$0xf]
  %v5735 = vld [vmem:[%s5729 + $0x14] sm:$0xf]
  %v5736 = vld [vmem:[%s5729 + $0x18] sm:$0xf]
  %v5737 = vld [vmem:[%s5729 + $0x1c] sm:$0xf]
  %v5738 = vld [vmem:[%s5729 + $0x20] sm:$0xf]
  %v5739 = vld [vmem:[%s5729 + $0x24] sm:$0xf]
  %v5740 = vld [vmem:[%s5729 + $0x28] sm:$0xf]
  %v5741 = vld [vmem:[%s5729 + $0x2c] sm:$0xf]
  %v5742 = vld [vmem:[%s5729 + $0x30] sm:$0xf]
  %v5743 = vld [vmem:[%s5729 + $0x34] sm:$0xf]
  %v5744 = vld [vmem:[%s5729 + $0x38] sm:$0xf]
  %v5745 = vld [vmem:[%s5729 + $0x3c] sm:$0xf]
  %v5762 = vunpack.c.l.b16 %v5730
  %v5763 = vunpack.c.l.b16 %v5731
  %v5764 = vunpack.c.l.b16 %v5732
  %v5765 = vunpack.c.l.b16 %v5733
  %v5766 = vunpack.c.l.b16 %v5734
  %v5767 = vunpack.c.l.b16 %v5735
  %v5768 = vunpack.c.l.b16 %v5736
  %v5769 = vunpack.c.l.b16 %v5737
  %v5770 = vunpack.c.l.b16 %v5738
  %v5771 = vunpack.c.l.b16 %v5739
  %v5772 = vunpack.c.l.b16 %v5740
  %v5773 = vunpack.c.l.b16 %v5741
  %v5774 = vunpack.c.l.b16 %v5742
  %v5775 = vunpack.c.l.b16 %v5743
  %v5776 = vunpack.c.l.b16 %v5744
  %v5777 = vunpack.c.l.b16 %v5745
  %v5778 = vpack.c.b16 %v5763, %v5762
  %v5779 = vpack.c.b16 %v5765, %v5764
  %v5780 = vpack.c.b16 %v5767, %v5766
  %v5781 = vpack.c.b16 %v5769, %v5768
  %v5782 = vpack.c.b16 %v5771, %v5770
  %v5783 = vpack.c.b16 %v5773, %v5772
  %v5784 = vpack.c.b16 %v5775, %v5774
  %v5785 = vpack.c.b16 %v5777, %v5776
  %5794 = vmatpush.bf16.msra.mxu0 %v5785
  %5795 = vmatpush.bf16.msra.mxu0 %v5784
  %5796 = vmatpush.bf16.msra.mxu0 %v5783
  %5797 = vmatpush.bf16.msra.mxu0 %v5782
  %5798 = vmatpush.bf16.msra.mxu0 %v5781
  %5799 = vmatpush.bf16.msra.mxu0 %v5780
  %5800 = vmatpush.bf16.msra.mxu0 %v5779
  %5801 = vmatpush.bf16.msra.mxu0 %v5778
  %5802 = vmatmul.bf16.gmra.mxu0 %v5728
  %v5803 = vpop.f32.mrf.mxu0
  %v5804 = vadd.f32 0.0, %v5803
  %v5805 = vpop.f32.mrf.mxu0
  %5806 = vdwg.mxu0
  %v5807 = vadd.f32 %v5724, %v5804
  %v5808 = vld [vmem:[#allocation3 + $0x28] sm:$0xff]
  %v5809 = vmul.f32 %v5808, %v5393
  %v5810 = vadd.f32 %v5809, %v5396
  %v5811 = vpack.c.bf16 %v5810, %v5810
  %s5812 = scalar_lea.vmem %s10, 320
  %v5813 = vld [vmem:[%s5812] sm:$0xf]
  %v5814 = vld [vmem:[%s5812 + $0x4] sm:$0xf]
  %v5815 = vld [vmem:[%s5812 + $0x8] sm:$0xf]
  %v5816 = vld [vmem:[%s5812 + $0xc] sm:$0xf]
  %v5817 = vld [vmem:[%s5812 + $0x10] sm:$0xf]
  %v5818 = vld [vmem:[%s5812 + $0x14] sm:$0xf]
  %v5819 = vld [vmem:[%s5812 + $0x18] sm:$0xf]
  %v5820 = vld [vmem:[%s5812 + $0x1c] sm:$0xf]
  %v5821 = vld [vmem:[%s5812 + $0x20] sm:$0xf]
  %v5822 = vld [vmem:[%s5812 + $0x24] sm:$0xf]
  %v5823 = vld [vmem:[%s5812 + $0x28] sm:$0xf]
  %v5824 = vld [vmem:[%s5812 + $0x2c] sm:$0xf]
  %v5825 = vld [vmem:[%s5812 + $0x30] sm:$0xf]
  %v5826 = vld [vmem:[%s5812 + $0x34] sm:$0xf]
  %v5827 = vld [vmem:[%s5812 + $0x38] sm:$0xf]
  %v5828 = vld [vmem:[%s5812 + $0x3c] sm:$0xf]
  %v5845 = vunpack.c.l.b16 %v5813
  %v5846 = vunpack.c.l.b16 %v5814
  %v5847 = vunpack.c.l.b16 %v5815
  %v5848 = vunpack.c.l.b16 %v5816
  %v5849 = vunpack.c.l.b16 %v5817
  %v5850 = vunpack.c.l.b16 %v5818
  %v5851 = vunpack.c.l.b16 %v5819
  %v5852 = vunpack.c.l.b16 %v5820
  %v5853 = vunpack.c.l.b16 %v5821
  %v5854 = vunpack.c.l.b16 %v5822
  %v5855 = vunpack.c.l.b16 %v5823
  %v5856 = vunpack.c.l.b16 %v5824
  %v5857 = vunpack.c.l.b16 %v5825
  %v5858 = vunpack.c.l.b16 %v5826
  %v5859 = vunpack.c.l.b16 %v5827
  %v5860 = vunpack.c.l.b16 %v5828
  %v5861 = vpack.c.b16 %v5846, %v5845
  %v5862 = vpack.c.b16 %v5848, %v5847
  %v5863 = vpack.c.b16 %v5850, %v5849
  %v5864 = vpack.c.b16 %v5852, %v5851
  %v5865 = vpack.c.b16 %v5854, %v5853
  %v5866 = vpack.c.b16 %v5856, %v5855
  %v5867 = vpack.c.b16 %v5858, %v5857
  %v5868 = vpack.c.b16 %v5860, %v5859
  %5877 = vmatpush.bf16.msra.mxu0 %v5868
  %5878 = vmatpush.bf16.msra.mxu0 %v5867
  %5879 = vmatpush.bf16.msra.mxu0 %v5866
  %5880 = vmatpush.bf16.msra.mxu0 %v5865
  %5881 = vmatpush.bf16.msra.mxu0 %v5864
  %5882 = vmatpush.bf16.msra.mxu0 %v5863
  %5883 = vmatpush.bf16.msra.mxu0 %v5862
  %5884 = vmatpush.bf16.msra.mxu0 %v5861
  %5885 = vmatmul.bf16.gmra.mxu0 %v5811
  %v5886 = vpop.f32.mrf.mxu0
  %v5887 = vadd.f32 0.0, %v5886
  %v5888 = vpop.f32.mrf.mxu0
  %5889 = vdwg.mxu0
  %v5890 = vadd.f32 %v5807, %v5887
  %v5891 = vld [vmem:[#allocation3 + $0x30] sm:$0xff]
  %v5892 = vmul.f32 %v5891, %v5393
  %v5893 = vadd.f32 %v5892, %v5396
  %v5894 = vpack.c.bf16 %v5893, %v5893
  %s5895 = scalar_lea.vmem %s10, 384
  %v5896 = vld [vmem:[%s5895] sm:$0xf]
  %v5897 = vld [vmem:[%s5895 + $0x4] sm:$0xf]
  %v5898 = vld [vmem:[%s5895 + $0x8] sm:$0xf]
  %v5899 = vld [vmem:[%s5895 + $0xc] sm:$0xf]
  %v5900 = vld [vmem:[%s5895 + $0x10] sm:$0xf]
  %v5901 = vld [vmem:[%s5895 + $0x14] sm:$0xf]
  %v5902 = vld [vmem:[%s5895 + $0x18] sm:$0xf]
  %v5903 = vld [vmem:[%s5895 + $0x1c] sm:$0xf]
  %v5904 = vld [vmem:[%s5895 + $0x20] sm:$0xf]
  %v5905 = vld [vmem:[%s5895 + $0x24] sm:$0xf]
  %v5906 = vld [vmem:[%s5895 + $0x28] sm:$0xf]
  %v5907 = vld [vmem:[%s5895 + $0x2c] sm:$0xf]
  %v5908 = vld [vmem:[%s5895 + $0x30] sm:$0xf]
  %v5909 = vld [vmem:[%s5895 + $0x34] sm:$0xf]
  %v5910 = vld [vmem:[%s5895 + $0x38] sm:$0xf]
  %v5911 = vld [vmem:[%s5895 + $0x3c] sm:$0xf]
  %v5928 = vunpack.c.l.b16 %v5896
  %v5929 = vunpack.c.l.b16 %v5897
  %v5930 = vunpack.c.l.b16 %v5898
  %v5931 = vunpack.c.l.b16 %v5899
  %v5932 = vunpack.c.l.b16 %v5900
  %v5933 = vunpack.c.l.b16 %v5901
  %v5934 = vunpack.c.l.b16 %v5902
  %v5935 = vunpack.c.l.b16 %v5903
  %v5936 = vunpack.c.l.b16 %v5904
  %v5937 = vunpack.c.l.b16 %v5905
  %v5938 = vunpack.c.l.b16 %v5906
  %v5939 = vunpack.c.l.b16 %v5907
  %v5940 = vunpack.c.l.b16 %v5908
  %v5941 = vunpack.c.l.b16 %v5909
  %v5942 = vunpack.c.l.b16 %v5910
  %v5943 = vunpack.c.l.b16 %v5911
  %v5944 = vpack.c.b16 %v5929, %v5928
  %v5945 = vpack.c.b16 %v5931, %v5930
  %v5946 = vpack.c.b16 %v5933, %v5932
  %v5947 = vpack.c.b16 %v5935, %v5934
  %v5948 = vpack.c.b16 %v5937, %v5936
  %v5949 = vpack.c.b16 %v5939, %v5938
  %v5950 = vpack.c.b16 %v5941, %v5940
  %v5951 = vpack.c.b16 %v5943, %v5942
  %5960 = vmatpush.bf16.msra.mxu0 %v5951
  %5961 = vmatpush.bf16.msra.mxu0 %v5950
  %5962 = vmatpush.bf16.msra.mxu0 %v5949
  %5963 = vmatpush.bf16.msra.mxu0 %v5948
  %5964 = vmatpush.bf16.msra.mxu0 %v5947
  %5965 = vmatpush.bf16.msra.mxu0 %v5946
  %5966 = vmatpush.bf16.msra.mxu0 %v5945
  %5967 = vmatpush.bf16.msra.mxu0 %v5944
  %5968 = vmatmul.bf16.gmra.mxu0 %v5894
  %v5969 = vpop.f32.mrf.mxu0
  %v5970 = vadd.f32 0.0, %v5969
  %v5971 = vpop.f32.mrf.mxu0
  %5972 = vdwg.mxu0
  %v5973 = vadd.f32 %v5890, %v5970
  %v5974 = vld [vmem:[#allocation3 + $0x38] sm:$0xff]
  %v5975 = vmul.f32 %v5974, %v5393
  %v5976 = vadd.f32 %v5975, %v5396
  %v5977 = vpack.c.bf16 %v5976, %v5976
  %s5978 = scalar_lea.vmem %s10, 448
  %v5979 = vld [vmem:[%s5978] sm:$0xf]
  %v5980 = vld [vmem:[%s5978 + $0x4] sm:$0xf]
  %v5981 = vld [vmem:[%s5978 + $0x8] sm:$0xf]
  %v5982 = vld [vmem:[%s5978 + $0xc] sm:$0xf]
  %v5983 = vld [vmem:[%s5978 + $0x10] sm:$0xf]
  %v5984 = vld [vmem:[%s5978 + $0x14] sm:$0xf]
  %v5985 = vld [vmem:[%s5978 + $0x18] sm:$0xf]
  %v5986 = vld [vmem:[%s5978 + $0x1c] sm:$0xf]
  %v5987 = vld [vmem:[%s5978 + $0x20] sm:$0xf]
  %v5988 = vld [vmem:[%s5978 + $0x24] sm:$0xf]
  %v5989 = vld [vmem:[%s5978 + $0x28] sm:$0xf]
  %v5990 = vld [vmem:[%s5978 + $0x2c] sm:$0xf]
  %v5991 = vld [vmem:[%s5978 + $0x30] sm:$0xf]
  %v5992 = vld [vmem:[%s5978 + $0x34] sm:$0xf]
  %v5993 = vld [vmem:[%s5978 + $0x38] sm:$0xf]
  %v5994 = vld [vmem:[%s5978 + $0x3c] sm:$0xf]
  %v6011 = vunpack.c.l.b16 %v5979
  %v6012 = vunpack.c.l.b16 %v5980
  %v6013 = vunpack.c.l.b16 %v5981
  %v6014 = vunpack.c.l.b16 %v5982
  %v6015 = vunpack.c.l.b16 %v5983
  %v6016 = vunpack.c.l.b16 %v5984
  %v6017 = vunpack.c.l.b16 %v5985
  %v6018 = vunpack.c.l.b16 %v5986
  %v6019 = vunpack.c.l.b16 %v5987
  %v6020 = vunpack.c.l.b16 %v5988
  %v6021 = vunpack.c.l.b16 %v5989
  %v6022 = vunpack.c.l.b16 %v5990
  %v6023 = vunpack.c.l.b16 %v5991
  %v6024 = vunpack.c.l.b16 %v5992
  %v6025 = vunpack.c.l.b16 %v5993
  %v6026 = vunpack.c.l.b16 %v5994
  %v6027 = vpack.c.b16 %v6012, %v6011
  %v6028 = vpack.c.b16 %v6014, %v6013
  %v6029 = vpack.c.b16 %v6016, %v6015
  %v6030 = vpack.c.b16 %v6018, %v6017
  %v6031 = vpack.c.b16 %v6020, %v6019
  %v6032 = vpack.c.b16 %v6022, %v6021
  %v6033 = vpack.c.b16 %v6024, %v6023
  %v6034 = vpack.c.b16 %v6026, %v6025
  %6043 = vmatpush.bf16.msra.mxu0 %v6034
  %6044 = vmatpush.bf16.msra.mxu0 %v6033
  %6045 = vmatpush.bf16.msra.mxu0 %v6032
  %6046 = vmatpush.bf16.msra.mxu0 %v6031
  %6047 = vmatpush.bf16.msra.mxu0 %v6030
  %6048 = vmatpush.bf16.msra.mxu0 %v6029
  %6049 = vmatpush.bf16.msra.mxu0 %v6028
  %6050 = vmatpush.bf16.msra.mxu0 %v6027
  %6051 = vmatmul.bf16.gmra.mxu0 %v5977
  %v6052 = vpop.f32.mrf.mxu0
  %v6053 = vadd.f32 0.0, %v6052
  %v6054 = vpop.f32.mrf.mxu0
  %6055 = vdwg.mxu0
  %v6056 = vadd.f32 %v5973, %v6053
  %v6057 = vld [vmem:[#allocation3 + $0x40] sm:$0xff]
  %v6058 = vmul.f32 %v6057, %v5393
  %v6059 = vadd.f32 %v6058, %v5396
  %v6060 = vpack.c.bf16 %v6059, %v6059
  %s6061 = scalar_lea.vmem %s10, 512
  %v6062 = vld [vmem:[%s6061] sm:$0xf]
  %v6063 = vld [vmem:[%s6061 + $0x4] sm:$0xf]
  %v6064 = vld [vmem:[%s6061 + $0x8] sm:$0xf]
  %v6065 = vld [vmem:[%s6061 + $0xc] sm:$0xf]
  %v6066 = vld [vmem:[%s6061 + $0x10] sm:$0xf]
  %v6067 = vld [vmem:[%s6061 + $0x14] sm:$0xf]
  %v6068 = vld [vmem:[%s6061 + $0x18] sm:$0xf]
  %v6069 = vld [vmem:[%s6061 + $0x1c] sm:$0xf]
  %v6070 = vld [vmem:[%s6061 + $0x20] sm:$0xf]
  %v6071 = vld [vmem:[%s6061 + $0x24] sm:$0xf]
  %v6072 = vld [vmem:[%s6061 + $0x28] sm:$0xf]
  %v6073 = vld [vmem:[%s6061 + $0x2c] sm:$0xf]
  %v6074 = vld [vmem:[%s6061 + $0x30] sm:$0xf]
  %v6075 = vld [vmem:[%s6061 + $0x34] sm:$0xf]
  %v6076 = vld [vmem:[%s6061 + $0x38] sm:$0xf]
  %v6077 = vld [vmem:[%s6061 + $0x3c] sm:$0xf]
  %v6094 = vunpack.c.l.b16 %v6062
  %v6095 = vunpack.c.l.b16 %v6063
  %v6096 = vunpack.c.l.b16 %v6064
  %v6097 = vunpack.c.l.b16 %v6065
  %v6098 = vunpack.c.l.b16 %v6066
  %v6099 = vunpack.c.l.b16 %v6067
  %v6100 = vunpack.c.l.b16 %v6068
  %v6101 = vunpack.c.l.b16 %v6069
  %v6102 = vunpack.c.l.b16 %v6070
  %v6103 = vunpack.c.l.b16 %v6071
  %v6104 = vunpack.c.l.b16 %v6072
  %v6105 = vunpack.c.l.b16 %v6073
  %v6106 = vunpack.c.l.b16 %v6074
  %v6107 = vunpack.c.l.b16 %v6075
  %v6108 = vunpack.c.l.b16 %v6076
  %v6109 = vunpack.c.l.b16 %v6077
  %v6110 = vpack.c.b16 %v6095, %v6094
  %v6111 = vpack.c.b16 %v6097, %v6096
  %v6112 = vpack.c.b16 %v6099, %v6098
  %v6113 = vpack.c.b16 %v6101, %v6100
  %v6114 = vpack.c.b16 %v6103, %v6102
  %v6115 = vpack.c.b16 %v6105, %v6104
  %v6116 = vpack.c.b16 %v6107, %v6106
  %v6117 = vpack.c.b16 %v6109, %v6108
  %6126 = vmatpush.bf16.msra.mxu0 %v6117
  %6127 = vmatpush.bf16.msra.mxu0 %v6116
  %6128 = vmatpush.bf16.msra.mxu0 %v6115
  %6129 = vmatpush.bf16.msra.mxu0 %v6114
  %6130 = vmatpush.bf16.msra.mxu0 %v6113
  %6131 = vmatpush.bf16.msra.mxu0 %v6112
  %6132 = vmatpush.bf16.msra.mxu0 %v6111
  %6133 = vmatpush.bf16.msra.mxu0 %v6110
  %6134 = vmatmul.bf16.gmra.mxu0 %v6060
  %v6135 = vpop.f32.mrf.mxu0
  %v6136 = vadd.f32 0.0, %v6135
  %v6137 = vpop.f32.mrf.mxu0
  %6138 = vdwg.mxu0
  %v6139 = vadd.f32 %v6056, %v6136
  %v6140 = vld [vmem:[#allocation3 + $0x48] sm:$0xff]
  %v6141 = vmul.f32 %v6140, %v5393
  %v6142 = vadd.f32 %v6141, %v5396
  %v6143 = vpack.c.bf16 %v6142, %v6142
  %s6144 = scalar_lea.vmem %s10, 576
  %v6145 = vld [vmem:[%s6144] sm:$0xf]
  %v6146 = vld [vmem:[%s6144 + $0x4] sm:$0xf]
  %v6147 = vld [vmem:[%s6144 + $0x8] sm:$0xf]
  %v6148 = vld [vmem:[%s6144 + $0xc] sm:$0xf]
  %v6149 = vld [vmem:[%s6144 + $0x10] sm:$0xf]
  %v6150 = vld [vmem:[%s6144 + $0x14] sm:$0xf]
  %v6151 = vld [vmem:[%s6144 + $0x18] sm:$0xf]
  %v6152 = vld [vmem:[%s6144 + $0x1c] sm:$0xf]
  %v6153 = vld [vmem:[%s6144 + $0x20] sm:$0xf]
  %v6154 = vld [vmem:[%s6144 + $0x24] sm:$0xf]
  %v6155 = vld [vmem:[%s6144 + $0x28] sm:$0xf]
  %v6156 = vld [vmem:[%s6144 + $0x2c] sm:$0xf]
  %v6157 = vld [vmem:[%s6144 + $0x30] sm:$0xf]
  %v6158 = vld [vmem:[%s6144 + $0x34] sm:$0xf]
  %v6159 = vld [vmem:[%s6144 + $0x38] sm:$0xf]
  %v6160 = vld [vmem:[%s6144 + $0x3c] sm:$0xf]
  %v6177 = vunpack.c.l.b16 %v6145
  %v6178 = vunpack.c.l.b16 %v6146
  %v6179 = vunpack.c.l.b16 %v6147
  %v6180 = vunpack.c.l.b16 %v6148
  %v6181 = vunpack.c.l.b16 %v6149
  %v6182 = vunpack.c.l.b16 %v6150
  %v6183 = vunpack.c.l.b16 %v6151
  %v6184 = vunpack.c.l.b16 %v6152
  %v6185 = vunpack.c.l.b16 %v6153
  %v6186 = vunpack.c.l.b16 %v6154
  %v6187 = vunpack.c.l.b16 %v6155
  %v6188 = vunpack.c.l.b16 %v6156
  %v6189 = vunpack.c.l.b16 %v6157
  %v6190 = vunpack.c.l.b16 %v6158
  %v6191 = vunpack.c.l.b16 %v6159
  %v6192 = vunpack.c.l.b16 %v6160
  %v6193 = vpack.c.b16 %v6178, %v6177
  %v6194 = vpack.c.b16 %v6180, %v6179
  %v6195 = vpack.c.b16 %v6182, %v6181
  %v6196 = vpack.c.b16 %v6184, %v6183
  %v6197 = vpack.c.b16 %v6186, %v6185
  %v6198 = vpack.c.b16 %v6188, %v6187
  %v6199 = vpack.c.b16 %v6190, %v6189
  %v6200 = vpack.c.b16 %v6192, %v6191
  %6209 = vmatpush.bf16.msra.mxu0 %v6200
  %6210 = vmatpush.bf16.msra.mxu0 %v6199
  %6211 = vmatpush.bf16.msra.mxu0 %v6198
  %6212 = vmatpush.bf16.msra.mxu0 %v6197
  %6213 = vmatpush.bf16.msra.mxu0 %v6196
  %6214 = vmatpush.bf16.msra.mxu0 %v6195
  %6215 = vmatpush.bf16.msra.mxu0 %v6194
  %6216 = vmatpush.bf16.msra.mxu0 %v6193
  %6217 = vmatmul.bf16.gmra.mxu0 %v6143
  %v6218 = vpop.f32.mrf.mxu0
  %v6219 = vadd.f32 0.0, %v6218
  %v6220 = vpop.f32.mrf.mxu0
  %6221 = vdwg.mxu0
  %v6222 = vadd.f32 %v6139, %v6219
  %v6223 = vld [vmem:[#allocation3 + $0x50] sm:$0xff]
  %v6224 = vmul.f32 %v6223, %v5393
  %v6225 = vadd.f32 %v6224, %v5396
  %v6226 = vpack.c.bf16 %v6225, %v6225
  %s6227 = scalar_lea.vmem %s10, 640
  %v6228 = vld [vmem:[%s6227] sm:$0xf]
  %v6229 = vld [vmem:[%s6227 + $0x4] sm:$0xf]
  %v6230 = vld [vmem:[%s6227 + $0x8] sm:$0xf]
  %v6231 = vld [vmem:[%s6227 + $0xc] sm:$0xf]
  %v6232 = vld [vmem:[%s6227 + $0x10] sm:$0xf]
  %v6233 = vld [vmem:[%s6227 + $0x14] sm:$0xf]
  %v6234 = vld [vmem:[%s6227 + $0x18] sm:$0xf]
  %v6235 = vld [vmem:[%s6227 + $0x1c] sm:$0xf]
  %v6236 = vld [vmem:[%s6227 + $0x20] sm:$0xf]
  %v6237 = vld [vmem:[%s6227 + $0x24] sm:$0xf]
  %v6238 = vld [vmem:[%s6227 + $0x28] sm:$0xf]
  %v6239 = vld [vmem:[%s6227 + $0x2c] sm:$0xf]
  %v6240 = vld [vmem:[%s6227 + $0x30] sm:$0xf]
  %v6241 = vld [vmem:[%s6227 + $0x34] sm:$0xf]
  %v6242 = vld [vmem:[%s6227 + $0x38] sm:$0xf]
  %v6243 = vld [vmem:[%s6227 + $0x3c] sm:$0xf]
  %v6260 = vunpack.c.l.b16 %v6228
  %v6261 = vunpack.c.l.b16 %v6229
  %v6262 = vunpack.c.l.b16 %v6230
  %v6263 = vunpack.c.l.b16 %v6231
  %v6264 = vunpack.c.l.b16 %v6232
  %v6265 = vunpack.c.l.b16 %v6233
  %v6266 = vunpack.c.l.b16 %v6234
  %v6267 = vunpack.c.l.b16 %v6235
  %v6268 = vunpack.c.l.b16 %v6236
  %v6269 = vunpack.c.l.b16 %v6237
  %v6270 = vunpack.c.l.b16 %v6238
  %v6271 = vunpack.c.l.b16 %v6239
  %v6272 = vunpack.c.l.b16 %v6240
  %v6273 = vunpack.c.l.b16 %v6241
  %v6274 = vunpack.c.l.b16 %v6242
  %v6275 = vunpack.c.l.b16 %v6243
  %v6276 = vpack.c.b16 %v6261, %v6260
  %v6277 = vpack.c.b16 %v6263, %v6262
  %v6278 = vpack.c.b16 %v6265, %v6264
  %v6279 = vpack.c.b16 %v6267, %v6266
  %v6280 = vpack.c.b16 %v6269, %v6268
  %v6281 = vpack.c.b16 %v6271, %v6270
  %v6282 = vpack.c.b16 %v6273, %v6272
  %v6283 = vpack.c.b16 %v6275, %v6274
  %6292 = vmatpush.bf16.msra.mxu0 %v6283
  %6293 = vmatpush.bf16.msra.mxu0 %v6282
  %6294 = vmatpush.bf16.msra.mxu0 %v6281
  %6295 = vmatpush.bf16.msra.mxu0 %v6280
  %6296 = vmatpush.bf16.msra.mxu0 %v6279
  %6297 = vmatpush.bf16.msra.mxu0 %v6278
  %6298 = vmatpush.bf16.msra.mxu0 %v6277
  %6299 = vmatpush.bf16.msra.mxu0 %v6276
  %6300 = vmatmul.bf16.gmra.mxu0 %v6226
  %v6301 = vpop.f32.mrf.mxu0
  %v6302 = vadd.f32 0.0, %v6301
  %v6303 = vpop.f32.mrf.mxu0
  %6304 = vdwg.mxu0
  %v6305 = vadd.f32 %v6222, %v6302
  %v6306 = vld [vmem:[#allocation3 + $0x58] sm:$0xff]
  %v6307 = vmul.f32 %v6306, %v5393
  %v6308 = vadd.f32 %v6307, %v5396
  %v6309 = vpack.c.bf16 %v6308, %v6308
  %s6310 = scalar_lea.vmem %s10, 704
  %v6311 = vld [vmem:[%s6310] sm:$0xf]
  %v6312 = vld [vmem:[%s6310 + $0x4] sm:$0xf]
  %v6313 = vld [vmem:[%s6310 + $0x8] sm:$0xf]
  %v6314 = vld [vmem:[%s6310 + $0xc] sm:$0xf]
  %v6315 = vld [vmem:[%s6310 + $0x10] sm:$0xf]
  %v6316 = vld [vmem:[%s6310 + $0x14] sm:$0xf]
  %v6317 = vld [vmem:[%s6310 + $0x18] sm:$0xf]
  %v6318 = vld [vmem:[%s6310 + $0x1c] sm:$0xf]
  %v6319 = vld [vmem:[%s6310 + $0x20] sm:$0xf]
  %v6320 = vld [vmem:[%s6310 + $0x24] sm:$0xf]
  %v6321 = vld [vmem:[%s6310 + $0x28] sm:$0xf]
  %v6322 = vld [vmem:[%s6310 + $0x2c] sm:$0xf]
  %v6323 = vld [vmem:[%s6310 + $0x30] sm:$0xf]
  %v6324 = vld [vmem:[%s6310 + $0x34] sm:$0xf]
  %v6325 = vld [vmem:[%s6310 + $0x38] sm:$0xf]
  %v6326 = vld [vmem:[%s6310 + $0x3c] sm:$0xf]
  %v6343 = vunpack.c.l.b16 %v6311
  %v6344 = vunpack.c.l.b16 %v6312
  %v6345 = vunpack.c.l.b16 %v6313
  %v6346 = vunpack.c.l.b16 %v6314
  %v6347 = vunpack.c.l.b16 %v6315
  %v6348 = vunpack.c.l.b16 %v6316
  %v6349 = vunpack.c.l.b16 %v6317
  %v6350 = vunpack.c.l.b16 %v6318
  %v6351 = vunpack.c.l.b16 %v6319
  %v6352 = vunpack.c.l.b16 %v6320
  %v6353 = vunpack.c.l.b16 %v6321
  %v6354 = vunpack.c.l.b16 %v6322
  %v6355 = vunpack.c.l.b16 %v6323
  %v6356 = vunpack.c.l.b16 %v6324
  %v6357 = vunpack.c.l.b16 %v6325
  %v6358 = vunpack.c.l.b16 %v6326
  %v6359 = vpack.c.b16 %v6344, %v6343
  %v6360 = vpack.c.b16 %v6346, %v6345
  %v6361 = vpack.c.b16 %v6348, %v6347
  %v6362 = vpack.c.b16 %v6350, %v6349
  %v6363 = vpack.c.b16 %v6352, %v6351
  %v6364 = vpack.c.b16 %v6354, %v6353
  %v6365 = vpack.c.b16 %v6356, %v6355
  %v6366 = vpack.c.b16 %v6358, %v6357
  %6375 = vmatpush.bf16.msra.mxu0 %v6366
  %6376 = vmatpush.bf16.msra.mxu0 %v6365
  %6377 = vmatpush.bf16.msra.mxu0 %v6364
  %6378 = vmatpush.bf16.msra.mxu0 %v6363
  %6379 = vmatpush.bf16.msra.mxu0 %v6362
  %6380 = vmatpush.bf16.msra.mxu0 %v6361
  %6381 = vmatpush.bf16.msra.mxu0 %v6360
  %6382 = vmatpush.bf16.msra.mxu0 %v6359
  %6383 = vmatmul.bf16.gmra.mxu0 %v6309
  %v6384 = vpop.f32.mrf.mxu0
  %v6385 = vadd.f32 0.0, %v6384
  %v6386 = vpop.f32.mrf.mxu0
  %6387 = vdwg.mxu0
  %v6388 = vadd.f32 %v6305, %v6385
  %v6389 = vld [vmem:[#allocation3 + $0x60] sm:$0xff]
  %v6390 = vmul.f32 %v6389, %v5393
  %v6391 = vadd.f32 %v6390, %v5396
  %v6392 = vpack.c.bf16 %v6391, %v6391
  %s6393 = scalar_lea.vmem %s10, 768
  %v6394 = vld [vmem:[%s6393] sm:$0xf]
  %v6395 = vld [vmem:[%s6393 + $0x4] sm:$0xf]
  %v6396 = vld [vmem:[%s6393 + $0x8] sm:$0xf]
  %v6397 = vld [vmem:[%s6393 + $0xc] sm:$0xf]
  %v6398 = vld [vmem:[%s6393 + $0x10] sm:$0xf]
  %v6399 = vld [vmem:[%s6393 + $0x14] sm:$0xf]
  %v6400 = vld [vmem:[%s6393 + $0x18] sm:$0xf]
  %v6401 = vld [vmem:[%s6393 + $0x1c] sm:$0xf]
  %v6402 = vld [vmem:[%s6393 + $0x20] sm:$0xf]
  %v6403 = vld [vmem:[%s6393 + $0x24] sm:$0xf]
  %v6404 = vld [vmem:[%s6393 + $0x28] sm:$0xf]
  %v6405 = vld [vmem:[%s6393 + $0x2c] sm:$0xf]
  %v6406 = vld [vmem:[%s6393 + $0x30] sm:$0xf]
  %v6407 = vld [vmem:[%s6393 + $0x34] sm:$0xf]
  %v6408 = vld [vmem:[%s6393 + $0x38] sm:$0xf]
  %v6409 = vld [vmem:[%s6393 + $0x3c] sm:$0xf]
  %v6426 = vunpack.c.l.b16 %v6394
  %v6427 = vunpack.c.l.b16 %v6395
  %v6428 = vunpack.c.l.b16 %v6396
  %v6429 = vunpack.c.l.b16 %v6397
  %v6430 = vunpack.c.l.b16 %v6398
  %v6431 = vunpack.c.l.b16 %v6399
  %v6432 = vunpack.c.l.b16 %v6400
  %v6433 = vunpack.c.l.b16 %v6401
  %v6434 = vunpack.c.l.b16 %v6402
  %v6435 = vunpack.c.l.b16 %v6403
  %v6436 = vunpack.c.l.b16 %v6404
  %v6437 = vunpack.c.l.b16 %v6405
  %v6438 = vunpack.c.l.b16 %v6406
  %v6439 = vunpack.c.l.b16 %v6407
  %v6440 = vunpack.c.l.b16 %v6408
  %v6441 = vunpack.c.l.b16 %v6409
  %v6442 = vpack.c.b16 %v6427, %v6426
  %v6443 = vpack.c.b16 %v6429, %v6428
  %v6444 = vpack.c.b16 %v6431, %v6430
  %v6445 = vpack.c.b16 %v6433, %v6432
  %v6446 = vpack.c.b16 %v6435, %v6434
  %v6447 = vpack.c.b16 %v6437, %v6436
  %v6448 = vpack.c.b16 %v6439, %v6438
  %v6449 = vpack.c.b16 %v6441, %v6440
  %6458 = vmatpush.bf16.msra.mxu0 %v6449
  %6459 = vmatpush.bf16.msra.mxu0 %v6448
  %6460 = vmatpush.bf16.msra.mxu0 %v6447
  %6461 = vmatpush.bf16.msra.mxu0 %v6446
  %6462 = vmatpush.bf16.msra.mxu0 %v6445
  %6463 = vmatpush.bf16.msra.mxu0 %v6444
  %6464 = vmatpush.bf16.msra.mxu0 %v6443
  %6465 = vmatpush.bf16.msra.mxu0 %v6442
  %6466 = vmatmul.bf16.gmra.mxu0 %v6392
  %v6467 = vpop.f32.mrf.mxu0
  %v6468 = vadd.f32 0.0, %v6467
  %v6469 = vpop.f32.mrf.mxu0
  %6470 = vdwg.mxu0
  %v6471 = vadd.f32 %v6388, %v6468
  %v6472 = vld [vmem:[#allocation3 + $0x68] sm:$0xff]
  %v6473 = vmul.f32 %v6472, %v5393
  %v6474 = vadd.f32 %v6473, %v5396
  %v6475 = vpack.c.bf16 %v6474, %v6474
  %s6476 = scalar_lea.vmem %s10, 832
  %v6477 = vld [vmem:[%s6476] sm:$0xf]
  %v6478 = vld [vmem:[%s6476 + $0x4] sm:$0xf]
  %v6479 = vld [vmem:[%s6476 + $0x8] sm:$0xf]
  %v6480 = vld [vmem:[%s6476 + $0xc] sm:$0xf]
  %v6481 = vld [vmem:[%s6476 + $0x10] sm:$0xf]
  %v6482 = vld [vmem:[%s6476 + $0x14] sm:$0xf]
  %v6483 = vld [vmem:[%s6476 + $0x18] sm:$0xf]
  %v6484 = vld [vmem:[%s6476 + $0x1c] sm:$0xf]
  %v6485 = vld [vmem:[%s6476 + $0x20] sm:$0xf]
  %v6486 = vld [vmem:[%s6476 + $0x24] sm:$0xf]
  %v6487 = vld [vmem:[%s6476 + $0x28] sm:$0xf]
  %v6488 = vld [vmem:[%s6476 + $0x2c] sm:$0xf]
  %v6489 = vld [vmem:[%s6476 + $0x30] sm:$0xf]
  %v6490 = vld [vmem:[%s6476 + $0x34] sm:$0xf]
  %v6491 = vld [vmem:[%s6476 + $0x38] sm:$0xf]
  %v6492 = vld [vmem:[%s6476 + $0x3c] sm:$0xf]
  %v6509 = vunpack.c.l.b16 %v6477
  %v6510 = vunpack.c.l.b16 %v6478
  %v6511 = vunpack.c.l.b16 %v6479
  %v6512 = vunpack.c.l.b16 %v6480
  %v6513 = vunpack.c.l.b16 %v6481
  %v6514 = vunpack.c.l.b16 %v6482
  %v6515 = vunpack.c.l.b16 %v6483
  %v6516 = vunpack.c.l.b16 %v6484
  %v6517 = vunpack.c.l.b16 %v6485
  %v6518 = vunpack.c.l.b16 %v6486
  %v6519 = vunpack.c.l.b16 %v6487
  %v6520 = vunpack.c.l.b16 %v6488
  %v6521 = vunpack.c.l.b16 %v6489
  %v6522 = vunpack.c.l.b16 %v6490
  %v6523 = vunpack.c.l.b16 %v6491
  %v6524 = vunpack.c.l.b16 %v6492
  %v6525 = vpack.c.b16 %v6510, %v6509
  %v6526 = vpack.c.b16 %v6512, %v6511
  %v6527 = vpack.c.b16 %v6514, %v6513
  %v6528 = vpack.c.b16 %v6516, %v6515
  %v6529 = vpack.c.b16 %v6518, %v6517
  %v6530 = vpack.c.b16 %v6520, %v6519
  %v6531 = vpack.c.b16 %v6522, %v6521
  %v6532 = vpack.c.b16 %v6524, %v6523
  %6541 = vmatpush.bf16.msra.mxu0 %v6532
  %6542 = vmatpush.bf16.msra.mxu0 %v6531
  %6543 = vmatpush.bf16.msra.mxu0 %v6530
  %6544 = vmatpush.bf16.msra.mxu0 %v6529
  %6545 = vmatpush.bf16.msra.mxu0 %v6528
  %6546 = vmatpush.bf16.msra.mxu0 %v6527
  %6547 = vmatpush.bf16.msra.mxu0 %v6526
  %6548 = vmatpush.bf16.msra.mxu0 %v6525
  %6549 = vmatmul.bf16.gmra.mxu0 %v6475
  %v6550 = vpop.f32.mrf.mxu0
  %v6551 = vadd.f32 0.0, %v6550
  %v6552 = vpop.f32.mrf.mxu0
  %6553 = vdwg.mxu0
  %v6554 = vadd.f32 %v6471, %v6551
  %v6555 = vld [vmem:[#allocation3 + $0x70] sm:$0xff]
  %v6556 = vmul.f32 %v6555, %v5393
  %v6557 = vadd.f32 %v6556, %v5396
  %v6558 = vpack.c.bf16 %v6557, %v6557
  %s6559 = scalar_lea.vmem %s10, 896
  %v6560 = vld [vmem:[%s6559] sm:$0xf]
  %v6561 = vld [vmem:[%s6559 + $0x4] sm:$0xf]
  %v6562 = vld [vmem:[%s6559 + $0x8] sm:$0xf]
  %v6563 = vld [vmem:[%s6559 + $0xc] sm:$0xf]
  %v6564 = vld [vmem:[%s6559 + $0x10] sm:$0xf]
  %v6565 = vld [vmem:[%s6559 + $0x14] sm:$0xf]
  %v6566 = vld [vmem:[%s6559 + $0x18] sm:$0xf]
  %v6567 = vld [vmem:[%s6559 + $0x1c] sm:$0xf]
  %v6568 = vld [vmem:[%s6559 + $0x20] sm:$0xf]
  %v6569 = vld [vmem:[%s6559 + $0x24] sm:$0xf]
  %v6570 = vld [vmem:[%s6559 + $0x28] sm:$0xf]
  %v6571 = vld [vmem:[%s6559 + $0x2c] sm:$0xf]
  %v6572 = vld [vmem:[%s6559 + $0x30] sm:$0xf]
  %v6573 = vld [vmem:[%s6559 + $0x34] sm:$0xf]
  %v6574 = vld [vmem:[%s6559 + $0x38] sm:$0xf]
  %v6575 = vld [vmem:[%s6559 + $0x3c] sm:$0xf]
  %v6592 = vunpack.c.l.b16 %v6560
  %v6593 = vunpack.c.l.b16 %v6561
  %v6594 = vunpack.c.l.b16 %v6562
  %v6595 = vunpack.c.l.b16 %v6563
  %v6596 = vunpack.c.l.b16 %v6564
  %v6597 = vunpack.c.l.b16 %v6565
  %v6598 = vunpack.c.l.b16 %v6566
  %v6599 = vunpack.c.l.b16 %v6567
  %v6600 = vunpack.c.l.b16 %v6568
  %v6601 = vunpack.c.l.b16 %v6569
  %v6602 = vunpack.c.l.b16 %v6570
  %v6603 = vunpack.c.l.b16 %v6571
  %v6604 = vunpack.c.l.b16 %v6572
  %v6605 = vunpack.c.l.b16 %v6573
  %v6606 = vunpack.c.l.b16 %v6574
  %v6607 = vunpack.c.l.b16 %v6575
  %v6608 = vpack.c.b16 %v6593, %v6592
  %v6609 = vpack.c.b16 %v6595, %v6594
  %v6610 = vpack.c.b16 %v6597, %v6596
  %v6611 = vpack.c.b16 %v6599, %v6598
  %v6612 = vpack.c.b16 %v6601, %v6600
  %v6613 = vpack.c.b16 %v6603, %v6602
  %v6614 = vpack.c.b16 %v6605, %v6604
  %v6615 = vpack.c.b16 %v6607, %v6606
  %6624 = vmatpush.bf16.msra.mxu0 %v6615
  %6625 = vmatpush.bf16.msra.mxu0 %v6614
  %6626 = vmatpush.bf16.msra.mxu0 %v6613
  %6627 = vmatpush.bf16.msra.mxu0 %v6612
  %6628 = vmatpush.bf16.msra.mxu0 %v6611
  %6629 = vmatpush.bf16.msra.mxu0 %v6610
  %6630 = vmatpush.bf16.msra.mxu0 %v6609
  %6631 = vmatpush.bf16.msra.mxu0 %v6608
  %6632 = vmatmul.bf16.gmra.mxu0 %v6558
  %v6633 = vpop.f32.mrf.mxu0
  %v6634 = vadd.f32 0.0, %v6633
  %v6635 = vpop.f32.mrf.mxu0
  %6636 = vdwg.mxu0
  %v6637 = vadd.f32 %v6554, %v6634
  %v6638 = vld [vmem:[#allocation3 + $0x78] sm:$0xff]
  %v6639 = vmul.f32 %v6638, %v5393
  %v6640 = vadd.f32 %v6639, %v5396
  %v6641 = vpack.c.bf16 %v6640, %v6640
  %s6642 = scalar_lea.vmem %s10, 960
  %v6643 = vld [vmem:[%s6642] sm:$0xf]
  %v6644 = vld [vmem:[%s6642 + $0x4] sm:$0xf]
  %v6645 = vld [vmem:[%s6642 + $0x8] sm:$0xf]
  %v6646 = vld [vmem:[%s6642 + $0xc] sm:$0xf]
  %v6647 = vld [vmem:[%s6642 + $0x10] sm:$0xf]
  %v6648 = vld [vmem:[%s6642 + $0x14] sm:$0xf]
  %v6649 = vld [vmem:[%s6642 + $0x18] sm:$0xf]
  %v6650 = vld [vmem:[%s6642 + $0x1c] sm:$0xf]
  %v6651 = vld [vmem:[%s6642 + $0x20] sm:$0xf]
  %v6652 = vld [vmem:[%s6642 + $0x24] sm:$0xf]
  %v6653 = vld [vmem:[%s6642 + $0x28] sm:$0xf]
  %v6654 = vld [vmem:[%s6642 + $0x2c] sm:$0xf]
  %v6655 = vld [vmem:[%s6642 + $0x30] sm:$0xf]
  %v6656 = vld [vmem:[%s6642 + $0x34] sm:$0xf]
  %v6657 = vld [vmem:[%s6642 + $0x38] sm:$0xf]
  %v6658 = vld [vmem:[%s6642 + $0x3c] sm:$0xf]
  %v6675 = vunpack.c.l.b16 %v6643
  %v6676 = vunpack.c.l.b16 %v6644
  %v6677 = vunpack.c.l.b16 %v6645
  %v6678 = vunpack.c.l.b16 %v6646
  %v6679 = vunpack.c.l.b16 %v6647
  %v6680 = vunpack.c.l.b16 %v6648
  %v6681 = vunpack.c.l.b16 %v6649
  %v6682 = vunpack.c.l.b16 %v6650
  %v6683 = vunpack.c.l.b16 %v6651
  %v6684 = vunpack.c.l.b16 %v6652
  %v6685 = vunpack.c.l.b16 %v6653
  %v6686 = vunpack.c.l.b16 %v6654
  %v6687 = vunpack.c.l.b16 %v6655
  %v6688 = vunpack.c.l.b16 %v6656
  %v6689 = vunpack.c.l.b16 %v6657
  %v6690 = vunpack.c.l.b16 %v6658
  %v6691 = vpack.c.b16 %v6676, %v6675
  %v6692 = vpack.c.b16 %v6678, %v6677
  %v6693 = vpack.c.b16 %v6680, %v6679
  %v6694 = vpack.c.b16 %v6682, %v6681
  %v6695 = vpack.c.b16 %v6684, %v6683
  %v6696 = vpack.c.b16 %v6686, %v6685
  %v6697 = vpack.c.b16 %v6688, %v6687
  %v6698 = vpack.c.b16 %v6690, %v6689
  %6707 = vmatpush.bf16.msra.mxu0 %v6698
  %6708 = vmatpush.bf16.msra.mxu0 %v6697
  %6709 = vmatpush.bf16.msra.mxu0 %v6696
  %6710 = vmatpush.bf16.msra.mxu0 %v6695
  %6711 = vmatpush.bf16.msra.mxu0 %v6694
  %6712 = vmatpush.bf16.msra.mxu0 %v6693
  %6713 = vmatpush.bf16.msra.mxu0 %v6692
  %6714 = vmatpush.bf16.msra.mxu0 %v6691
  %6715 = vmatmul.bf16.gmra.mxu0 %v6641
  %v6716 = vpop.f32.mrf.mxu0
  %v6717 = vadd.f32 0.0, %v6716
  %v6718 = vpop.f32.mrf.mxu0
  %6719 = vdwg.mxu0
  %v6720 = vadd.f32 %v6637, %v6717
  %v6721 = vld [vmem:[%s11] sm:$0x1]
  %v6723 = vperm.slane %v6721, 0
  %v6725 = vadd.f32 %v6720, %v6723
  %v6726 = vmax.f32 %v6725, 0.0
  %v6727 = vpack.c.bf16 %v6726, %v6726
  %v6728 = vld [vmem:[%s12] sm:$0xf]
  %v6729 = vld [vmem:[%s12 + $0x4] sm:$0xf]
  %v6730 = vld [vmem:[%s12 + $0x8] sm:$0xf]
  %v6731 = vld [vmem:[%s12 + $0xc] sm:$0xf]
  %v6732 = vld [vmem:[%s12 + $0x10] sm:$0xf]
  %v6733 = vld [vmem:[%s12 + $0x14] sm:$0xf]
  %v6734 = vld [vmem:[%s12 + $0x18] sm:$0xf]
  %v6735 = vld [vmem:[%s12 + $0x1c] sm:$0xf]
  %v6736 = vld [vmem:[%s12 + $0x20] sm:$0xf]
  %v6737 = vld [vmem:[%s12 + $0x24] sm:$0xf]
  %v6738 = vld [vmem:[%s12 + $0x28] sm:$0xf]
  %v6739 = vld [vmem:[%s12 + $0x2c] sm:$0xf]
  %v6740 = vld [vmem:[%s12 + $0x30] sm:$0xf]
  %v6741 = vld [vmem:[%s12 + $0x34] sm:$0xf]
  %v6742 = vld [vmem:[%s12 + $0x38] sm:$0xf]
  %v6743 = vld [vmem:[%s12 + $0x3c] sm:$0xf]
  %v6744 = vld [vmem:[%s13] sm:$0x1]
  %v6746 = vperm.slane %v6744, 0
  %v6764 = vunpack.c.l.b16 %v6728
  %v6765 = vunpack.c.l.b16 %v6729
  %v6766 = vunpack.c.l.b16 %v6730
  %v6767 = vunpack.c.l.b16 %v6731
  %v6768 = vunpack.c.l.b16 %v6732
  %v6769 = vunpack.c.l.b16 %v6733
  %v6770 = vunpack.c.l.b16 %v6734
  %v6771 = vunpack.c.l.b16 %v6735
  %v6772 = vunpack.c.l.b16 %v6736
  %v6773 = vunpack.c.l.b16 %v6737
  %v6774 = vunpack.c.l.b16 %v6738
  %v6775 = vunpack.c.l.b16 %v6739
  %v6776 = vunpack.c.l.b16 %v6740
  %v6777 = vunpack.c.l.b16 %v6741
  %v6778 = vunpack.c.l.b16 %v6742
  %v6779 = vunpack.c.l.b16 %v6743
  %v6780 = vpack.c.b16 %v6765, %v6764
  %v6781 = vpack.c.b16 %v6767, %v6766
  %v6782 = vpack.c.b16 %v6769, %v6768
  %v6783 = vpack.c.b16 %v6771, %v6770
  %v6784 = vpack.c.b16 %v6773, %v6772
  %v6785 = vpack.c.b16 %v6775, %v6774
  %v6786 = vpack.c.b16 %v6777, %v6776
  %v6787 = vpack.c.b16 %v6779, %v6778
  %6796 = vmatpush.bf16.msra.mxu0 %v6787
  %6797 = vmatpush.bf16.msra.mxu0 %v6786
  %6798 = vmatpush.bf16.msra.mxu0 %v6785
  %6799 = vmatpush.bf16.msra.mxu0 %v6784
  %6800 = vmatpush.bf16.msra.mxu0 %v6783
  %6801 = vmatpush.bf16.msra.mxu0 %v6782
  %6802 = vmatpush.bf16.msra.mxu0 %v6781
  %6803 = vmatpush.bf16.msra.mxu0 %v6780
  %6804 = vmatmul.bf16.gmra.mxu0 %v6727
  %v6805 = vpop.f32.mrf.mxu0
  %v6806 = vadd.f32 %v6746, %v6805
  %v6807 = vpop.f32.mrf.mxu0
  %6808 = vdwg.mxu0
  %v6809 = vlaneseq
  %v6810 = vand.u32 %v6809, 127
  %vm6811 = vcmp.lt.s32.totalorder %v6810, 10
  %v6812 = vsel %vm6811, %v6806, -1e+30
  %6813 = vmax.xlane.f32.xlu0 %v6812
  %v6814 = vpop.xlane.xlu0 %6813
  %v6815 = vsub.f32 %v6812, %v6814
  %v6816 = vmul.f32 %v6815, 1.442695
  %v6817 = vpow.pop %v6816
  %6818 = vadd.xlane.f32.xlu0 %v6817
  %v6819 = vpop.xlane.xlu0 %6818
  %v6820 = vlog2.pop %v6819
  %v6821 = vmul.f32 %v6820, 0.6931472
  %v6822 = vsub.f32 %v6815, %v6821
  %6823 = vst [vmem:[%s14] sm:$0xff] %v6822
  // Predicated region
  $region79: #{mnist_forward.1} parent=0 // pred_check
    _
  $region80: #{mnist_forward.1} parent=0 // pred_check_branch
    %6825 = sbr.rel (0) target = $region82
  $region81: #{mnist_forward.1} parent=0 // pred_region
    _
  $region82: #{mnist_forward.1} parent=0 // pred_fallthru
    _
  // Predicated region
  $region83: #{mnist_forward.1} parent=0 // pred_check
    _
  $region84: #{mnist_forward.1} parent=0 // pred_check_branch
    %6827 = sbr.rel (0) target = $region86
  $region85: #{mnist_forward.1} parent=0 // pred_region
    _
  $region86: #{mnist_forward.1} parent=0 // pred_fallthru
    _

</llo_original>
